<compile_context>
chip_gen: v5e
topology: v5e:2x2
jax: 0.10.0
libtpu: 0.0.40
codegen_flags: <defaults>
</compile_context>

<pallas_src>
import jax
import jax.numpy as jnp
from jax.experimental import pallas as pl
from jax.experimental.pallas import tpu as pltpu


def _round_up(x, m):
    return (x + m - 1) // m * m


# ----------------------------- Pallas kernel ------------------------------ #
def _encoder_lstm_kernel(gx0_ref, wih_ref, whh_ref, bias_ref,
                         hN_ref, cN_ref,
                         seq_ref, gates_ref):
    """Fused multi-layer LSTM over the whole sequence (single kernel invocation).

    gx0_ref   : (T, Bp, 4H) f32            layer-0 input gates: x @ W_ih0^T + b_ih0 + b_hh0
    wih_ref   : (max(L-1,1), H, 4H) bf16   W_ih^T for layers 1..L-1
    whh_ref   : (L, H, 4H) bf16            W_hh^T for all layers
    bias_ref  : (max(L-1,1), 1, 4H) f32    b_ih + b_hh for layers 1..L-1
    hN_ref    : (Bp, H) f32                final hidden state of the last layer
    cN_ref    : (Bp, H) f32                final cell state of the last layer
    seq_ref   : (T, Bp, H) f32             VMEM scratch: current layer's output sequence
    gates_ref : (T, Bp, 4H) f32            VMEM scratch: current layer's input gates
    """
    T, Bp, H4 = gx0_ref.shape
    H = H4 // 4
    L = whh_ref.shape[0]

    def run_layer(gates_in_ref, w_hh, write_seq):
        # Sequential recurrence: per step only h @ W_hh + gate elementwise.
        def step(t, carry):
            h, c = carry
            g = gates_in_ref[t] + jnp.dot(
                h.astype(w_hh.dtype), w_hh, preferred_element_type=jnp.float32)
            # PyTorch gate order [i, f, g, o]; H is a multiple of 128 -> lane-dense slices.
            i_g = jax.nn.sigmoid(g[:, 0 * H:1 * H])
            f_g = jax.nn.sigmoid(g[:, 1 * H:2 * H])
            g_g = jnp.tanh(g[:, 2 * H:3 * H])
            o_g = jax.nn.sigmoid(g[:, 3 * H:4 * H])
            c_new = f_g * c + i_g * g_g
            h_new = o_g * jnp.tanh(c_new)
            if write_seq:                      # static: only if another layer follows
                seq_ref[t] = h_new
            return h_new, c_new

        init = (jnp.zeros((Bp, H), jnp.float32),
                jnp.zeros((Bp, H), jnp.float32))
        return jax.lax.fori_loop(0, T, step, init, unroll=True)

    # ---- Layer 0: input projection already hoisted outside the kernel. ----
    h, c = run_layer(gx0_ref, whh_ref[0], write_seq=(L > 1))

    # ---- Layers 1..L-1: one big MXU matmul for the whole sequence's input
    # projection, then the cheap recurrence. ----
    for l in range(1, L):
        x = seq_ref[...].reshape(T * Bp, H).astype(wih_ref.dtype)
        gates_ref[...] = (
            jnp.dot(x, wih_ref[l - 1], preferred_element_type=jnp.float32)
            + bias_ref[l - 1]).reshape(T, Bp, H4)
        h, c = run_layer(gates_ref, whh_ref[l], write_seq=(l < L - 1))

    hN_ref[...] = h
    cN_ref[...] = c


def _encoder_lstm_pallas(gx0, wih_stack, whh_stack, bias_stack):
    T, Bp, H4 = gx0.shape
    H = H4 // 4
    return pl.pallas_call(
        _encoder_lstm_kernel,
        out_shape=(jax.ShapeDtypeStruct((Bp, H), jnp.float32),
                   jax.ShapeDtypeStruct((Bp, H), jnp.float32)),
        scratch_shapes=[
            pltpu.VMEM((T, Bp, H), jnp.float32),    # layer output sequence
            pltpu.VMEM((T, Bp, H4), jnp.float32),   # per-layer input gates
        ],
    )(gx0, wih_stack, whh_stack, bias_stack)


# ------------------------------ Encoder glue ------------------------------ #
def init_encoder_params(key, embedding_size, num_layers, hidden_size,
                        input_vocab_size):
    """Deterministic parameter init mirroring the nn.Module __init__ shapes."""
    params = {}
    key, k_emb = jax.random.split(key)
    params["embedding"] = jax.random.normal(
        k_emb, (input_vocab_size, embedding_size), jnp.float32)

    bound = 1.0 / jnp.sqrt(hidden_size)
    layers = []
    for layer in range(num_layers):
        in_size = embedding_size if layer == 0 else hidden_size
        key, k1, k2, k3, k4 = jax.random.split(key, 5)
        layers.append({
            "w_ih": jax.random.uniform(k1, (4 * hidden_size, in_size),
                                       jnp.float32, -bound, bound),
            "w_hh": jax.random.uniform(k2, (4 * hidden_size, hidden_size),
                                       jnp.float32, -bound, bound),
            "b_ih": jax.random.uniform(k3, (4 * hidden_size,),
                                       jnp.float32, -bound, bound),
            "b_hh": jax.random.uniform(k4, (4 * hidden_size,),
                                       jnp.float32, -bound, bound),
        })
    params["lstm"] = layers
    return params


@jax.jit
def encoder_forward(params, x_tokens):
    """x_tokens: (T, B) int32.  Returns (hidden (1,B,H), cellState (1,B,H))."""
    # Embedding lookup (glue) + dropout in eval mode (identity).
    # TODO(synk): training-mode dropout (p=0.2) not applied; eval semantics used.
    emb = jnp.take(params["embedding"], x_tokens, axis=0)      # (T, B, E)
    T, B, _ = emb.shape
    layers = params["lstm"]
    L = len(layers)
    H = layers[0]["w_hh"].shape[1]
    H4 = 4 * H

    # Pad batch to a multiple of 8 (sublane-dense tiles); padded rows are zeros
    # and are sliced away at the end (no cross-batch mixing inside an LSTM).
    Bp = _round_up(B, 8)
    if Bp != B:
        emb = jnp.pad(emb, ((0, 0), (0, Bp - B), (0, 0)))

    # Hoisted layer-0 input projection: ONE large (T*Bp, E) x (E, 4H) matmul.
    l0 = layers[0]
    b0 = (l0["b_ih"] + l0["b_hh"]).astype(jnp.float32)
    gx0 = jnp.einsum("tbe,ge->tbg", emb,
                     l0["w_ih"].astype(jnp.float32)) + b0       # (T, Bp, 4H)

    # Stacked weights: bf16 operands for the MXU (f32 accumulation in-kernel).
    whh_stack = jnp.stack([p["w_hh"].T for p in layers]).astype(jnp.bfloat16)
    if L > 1:
        wih_stack = jnp.stack(
            [p["w_ih"].T for p in layers[1:]]).astype(jnp.bfloat16)
        bias_stack = jnp.stack(
            [(p["b_ih"] + p["b_hh"]).reshape(1, H4) for p in layers[1:]]
        ).astype(jnp.float32)
    else:  # dummy (unused) stacks so the kernel signature stays static
        wih_stack = jnp.zeros((1, H, H4), jnp.bfloat16)
        bias_stack = jnp.zeros((1, 1, H4), jnp.float32)

    h_n, c_n = _encoder_lstm_pallas(gx0, wih_stack, whh_stack, bias_stack)

    hidden = h_n[:B][None, :, :]        # (1, B, H) == hidden[-1].unsqueeze(0)
    cell_state = c_n[:B][None, :, :]    # (1, B, H) == cellState[-1].unsqueeze(0)
    return hidden, cell_state


# ----------------------- pure-JAX reference (f32) -------------------------- #
def _reference_forward(params, x_tokens):
    emb = jnp.take(params["embedding"], x_tokens, axis=0)      # (T, B, E)
    T, B, _ = emb.shape
    layers = params["lstm"]
    H = layers[0]["w_hh"].shape[1]
    x = emb
    h_last = c_last = None
    for p in layers:
        h = jnp.zeros((B, H), jnp.float32)
        c = jnp.zeros((B, H), jnp.float32)
        outs = []
        for t in range(T):
            g = x[t] @ p["w_ih"].T + p["b_ih"] + h @ p["w_hh"].T + p["b_hh"]
            i_g = jax.nn.sigmoid(g[:, 0 * H:1 * H])
            f_g = jax.nn.sigmoid(g[:, 1 * H:2 * H])
            g_g = jnp.tanh(g[:, 2 * H:3 * H])
            o_g = jax.nn.sigmoid(g[:, 3 * H:4 * H])
            c = f_g * c + i_g * g_g
            h = o_g * jnp.tanh(c)
            outs.append(h)
        x = jnp.stack(outs)
        h_last, c_last = h, c
    return h_last[None], c_last[None]


# --------------------------------- main ----------------------------------- #
if __name__ == "__main__":
    # Small shapes matching the module defaults (embeddingSize=128, hiddenSize=256).
    SEQ_LEN = 8
    BATCH = 2
    EMBEDDING_SIZE = 128
    HIDDEN_SIZE = 256
    NUM_LAYERS = 2
    INPUT_VOCAB_SIZE = 50

    key = jax.random.PRNGKey(0)
    key, k_params, k_tokens = jax.random.split(key, 3)

    params = init_encoder_params(
        k_params, EMBEDDING_SIZE, NUM_LAYERS, HIDDEN_SIZE, INPUT_VOCAB_SIZE)

    x = jax.random.randint(
        k_tokens, (SEQ_LEN, BATCH), 0, INPUT_VOCAB_SIZE, dtype=jnp.int32)

    hidden, cell_state = encoder_forward(params, x)
    jax.block_until_ready((hidden, cell_state))

    assert hidden.shape == (1, BATCH, HIDDEN_SIZE)
    assert cell_state.shape == (1, BATCH, HIDDEN_SIZE)
    assert jnp.all(jnp.isfinite(hidden)) and jnp.all(jnp.isfinite(cell_state))

    # Loose-tolerance check vs an f32 pure-JAX reference (kernel recurrence uses
    # bf16 MXU operands with f32 accumulation, so small deviations are expected).
    h_ref, c_ref = _reference_forward(params, x)
    assert jnp.max(jnp.abs(hidden - h_ref)) < 1e-1
    assert jnp.max(jnp.abs(cell_state - c_ref)) < 1e-1

    print("KERNEL_OK")
</pallas_src>

<mosaic_0001>
module attributes {stable_mosaic.version = 11 : i64} {
  func.func @_encoder_lstm_kernel(%arg0: memref<8x8x1024xf32, #tpu.memory_space<vmem>>, %arg1: memref<1x256x1024xbf16, #tpu.memory_space<vmem>>, %arg2: memref<2x256x1024xbf16, #tpu.memory_space<vmem>>, %arg3: memref<1x1x1024xf32, #tpu.memory_space<vmem>>, %arg4: memref<8x256xf32, #tpu.memory_space<vmem>>, %arg5: memref<8x256xf32, #tpu.memory_space<vmem>>, %arg6: memref<8x8x256xf32, #tpu.memory_space<vmem>>, %arg7: memref<8x8x1024xf32, #tpu.memory_space<vmem>>) attributes {dimension_semantics = [], scalar_prefetch = 0 : i64, scratch_operands = 2 : i64, tpu.core_type = #tpu.core_type<tc>} {
    %c0 = arith.constant 0 : index
    %c0_0 = arith.constant 0 : index
    %c0_1 = arith.constant 0 : index
    %0 = vector.load %arg2[%c0, %c0_0, %c0_1] : memref<2x256x1024xbf16, #tpu.memory_space<vmem>>, vector<1x256x1024xbf16>
    %1 = vector.shape_cast %0 : vector<1x256x1024xbf16> to vector<256x1024xbf16>
    %cst = arith.constant 0.000000e+00 : f32
    %2 = vector.broadcast %cst : f32 to vector<8x256xf32>
    %cst_2 = arith.constant 0.000000e+00 : f32
    %3 = vector.broadcast %cst_2 : f32 to vector<8x256xf32>
    %c0_i32 = arith.constant 0 : i32
    %4 = arith.index_cast %c0_i32 : i32 to index
    %c0_3 = arith.constant 0 : index
    %c0_4 = arith.constant 0 : index
    %5 = vector.load %arg0[%4, %c0_3, %c0_4] : memref<8x8x1024xf32, #tpu.memory_space<vmem>>, vector<1x8x1024xf32>
    %6 = vector.shape_cast %5 : vector<1x8x1024xf32> to vector<8x1024xf32>
    %7 = arith.truncf %2 : vector<8x256xf32> to vector<8x256xbf16>
    %cst_5 = arith.constant dense<0.000000e+00> : vector<8x1024xf32>
    %8 = tpu.matmul %7, %1, %cst_5 {dimension_numbers = #tpu.dot_dimension_numbers<[1], [0], [0], [1], [0, 0, 1, 1], [], []>} : vector<8x256xbf16>, vector<256x1024xbf16>, vector<8x1024xf32> -> vector<8x1024xf32>
    %9 = arith.addf %6, %8 : vector<8x1024xf32>
    %10 = vector.extract_strided_slice %9 {offsets = [0, 0], sizes = [8, 256], strides = [1, 1]} : vector<8x1024xf32> to vector<8x256xf32>
    %11 = arith.negf %10 : vector<8x256xf32>
    %12 = math.exp %11 : vector<8x256xf32>
    %cst_6 = arith.constant 1.000000e+00 : f32
    %13 = vector.broadcast %cst_6 : f32 to vector<8x256xf32>
    %14 = arith.addf %13, %12 : vector<8x256xf32>
    %15 = arith.divf %13, %14 : vector<8x256xf32>
    %16 = vector.extract_strided_slice %9 {offsets = [0, 256], sizes = [8, 256], strides = [1, 1]} : vector<8x1024xf32> to vector<8x256xf32>
    %17 = arith.negf %16 : vector<8x256xf32>
    %18 = math.exp %17 : vector<8x256xf32>
    %cst_7 = arith.constant 1.000000e+00 : f32
    %19 = vector.broadcast %cst_7 : f32 to vector<8x256xf32>
    %20 = arith.addf %19, %18 : vector<8x256xf32>
    %21 = arith.divf %19, %20 : vector<8x256xf32>
    %22 = vector.extract_strided_slice %9 {offsets = [0, 512], sizes = [8, 256], strides = [1, 1]} : vector<8x1024xf32> to vector<8x256xf32>
    %23 = math.tanh %22 : vector<8x256xf32>
    %24 = vector.extract_strided_slice %9 {offsets = [0, 768], sizes = [8, 256], strides = [1, 1]} : vector<8x1024xf32> to vector<8x256xf32>
    %25 = arith.negf %24 : vector<8x256xf32>
    %26 = math.exp %25 : vector<8x256xf32>
    %cst_8 = arith.constant 1.000000e+00 : f32
    %27 = vector.broadcast %cst_8 : f32 to vector<8x256xf32>
    %28 = arith.addf %27, %26 : vector<8x256xf32>
    %29 = arith.divf %27, %28 : vector<8x256xf32>
    %30 = arith.mulf %21, %3 : vector<8x256xf32>
    %31 = arith.mulf %15, %23 : vector<8x256xf32>
    %32 = arith.addf %30, %31 : vector<8x256xf32>
    %33 = math.tanh %32 : vector<8x256xf32>
    %34 = arith.mulf %29, %33 : vector<8x256xf32>
    %35 = arith.index_cast %c0_i32 : i32 to index
    %c0_9 = arith.constant 0 : index
    %c0_10 = arith.constant 0 : index
    %36 = vector.load %arg6[%35, %c0_9, %c0_10] : memref<8x8x256xf32, #tpu.memory_space<vmem>>, vector<1x8x256xf32>
    %37 = vector.shape_cast %36 : vector<1x8x256xf32> to vector<8x256xf32>
    %38 = vector.shape_cast %34 : vector<8x256xf32> to vector<1x8x256xf32>
    tpu.vector_store %arg6[%35, %c0_9, %c0_10], %38 {strides = array<i32>} : memref<8x8x256xf32, #tpu.memory_space<vmem>>, vector<1x8x256xf32>,
    %c1_i32 = arith.constant 1 : i32
    %39 = arith.index_cast %c1_i32 : i32 to index
    %c0_11 = arith.constant 0 : index
    %c0_12 = arith.constant 0 : index
    %40 = vector.load %arg0[%39, %c0_11, %c0_12] : memref<8x8x1024xf32, #tpu.memory_space<vmem>>, vector<1x8x1024xf32>
    %41 = vector.shape_cast %40 : vector<1x8x1024xf32> to vector<8x1024xf32>
    %42 = arith.truncf %34 : vector<8x256xf32> to vector<8x256xbf16>
    %cst_13 = arith.constant dense<0.000000e+00> : vector<8x1024xf32>
    %43 = tpu.matmul %42, %1, %cst_13 {dimension_numbers = #tpu.dot_dimension_numbers<[1], [0], [0], [1], [0, 0, 1, 1], [], []>} : vector<8x256xbf16>, vector<256x1024xbf16>, vector<8x1024xf32> -> vector<8x1024xf32>
    %44 = arith.addf %41, %43 : vector<8x1024xf32>
    %45 = vector.extract_strided_slice %44 {offsets = [0, 0], sizes = [8, 256], strides = [1, 1]} : vector<8x1024xf32> to vector<8x256xf32>
    %46 = arith.negf %45 : vector<8x256xf32>
    %47 = math.exp %46 : vector<8x256xf32>
    %cst_14 = arith.constant 1.000000e+00 : f32
    %48 = vector.broadcast %cst_14 : f32 to vector<8x256xf32>
    %49 = arith.addf %48, %47 : vector<8x256xf32>
    %50 = arith.divf %48, %49 : vector<8x256xf32>
    %51 = vector.extract_strided_slice %44 {offsets = [0, 256], sizes = [8, 256], strides = [1, 1]} : vector<8x1024xf32> to vector<8x256xf32>
    %52 = arith.negf %51 : vector<8x256xf32>
    %53 = math.exp %52 : vector<8x256xf32>
    %cst_15 = arith.constant 1.000000e+00 : f32
    %54 = vector.broadcast %cst_15 : f32 to vector<8x256xf32>
    %55 = arith.addf %54, %53 : vector<8x256xf32>
    %56 = arith.divf %54, %55 : vector<8x256xf32>
    %57 = vector.extract_strided_slice %44 {offsets = [0, 512], sizes = [8, 256], strides = [1, 1]} : vector<8x1024xf32> to vector<8x256xf32>
    %58 = math.tanh %57 : vector<8x256xf32>
    %59 = vector.extract_strided_slice %44 {offsets = [0, 768], sizes = [8, 256], strides = [1, 1]} : vector<8x1024xf32> to vector<8x256xf32>
    %60 = arith.negf %59 : vector<8x256xf32>
    %61 = math.exp %60 : vector<8x256xf32>
    %cst_16 = arith.constant 1.000000e+00 : f32
    %62 = vector.broadcast %cst_16 : f32 to vector<8x256xf32>
    %63 = arith.addf %62, %61 : vector<8x256xf32>
    %64 = arith.divf %62, %63 : vector<8x256xf32>
    %65 = arith.mulf %56, %32 : vector<8x256xf32>
    %66 = arith.mulf %50, %58 : vector<8x256xf32>
    %67 = arith.addf %65, %66 : vector<8x256xf32>
    %68 = math.tanh %67 : vector<8x256xf32>
    %69 = arith.mulf %64, %68 : vector<8x256xf32>
    %70 = arith.index_cast %c1_i32 : i32 to index
    %c0_17 = arith.constant 0 : index
    %c0_18 = arith.constant 0 : index
    %71 = vector.load %arg6[%70, %c0_17, %c0_18] : memref<8x8x256xf32, #tpu.memory_space<vmem>>, vector<1x8x256xf32>
    %72 = vector.shape_cast %71 : vector<1x8x256xf32> to vector<8x256xf32>
    %73 = vector.shape_cast %69 : vector<8x256xf32> to vector<1x8x256xf32>
    tpu.vector_store %arg6[%70, %c0_17, %c0_18], %73 {strides = array<i32>} : memref<8x8x256xf32, #tpu.memory_space<vmem>>, vector<1x8x256xf32>,
    %c2_i32 = arith.constant 2 : i32
    %74 = arith.index_cast %c2_i32 : i32 to index
    %c0_19 = arith.constant 0 : index
    %c0_20 = arith.constant 0 : index
    %75 = vector.load %arg0[%74, %c0_19, %c0_20] : memref<8x8x1024xf32, #tpu.memory_space<vmem>>, vector<1x8x1024xf32>
    %76 = vector.shape_cast %75 : vector<1x8x1024xf32> to vector<8x1024xf32>
    %77 = arith.truncf %69 : vector<8x256xf32> to vector<8x256xbf16>
    %cst_21 = arith.constant dense<0.000000e+00> : vector<8x1024xf32>
    %78 = tpu.matmul %77, %1, %cst_21 {dimension_numbers = #tpu.dot_dimension_numbers<[1], [0], [0], [1], [0, 0, 1, 1], [], []>} : vector<8x256xbf16>, vector<256x1024xbf16>, vector<8x1024xf32> -> vector<8x1024xf32>
    %79 = arith.addf %76, %78 : vector<8x1024xf32>
    %80 = vector.extract_strided_slice %79 {offsets = [0, 0], sizes = [8, 256], strides = [1, 1]} : vector<8x1024xf32> to vector<8x256xf32>
    %81 = arith.negf %80 : vector<8x256xf32>
    %82 = math.exp %81 : vector<8x256xf32>
    %cst_22 = arith.constant 1.000000e+00 : f32
    %83 = vector.broadcast %cst_22 : f32 to vector<8x256xf32>
    %84 = arith.addf %83, %82 : vector<8x256xf32>
    %85 = arith.divf %83, %84 : vector<8x256xf32>
    %86 = vector.extract_strided_slice %79 {offsets = [0, 256], sizes = [8, 256], strides = [1, 1]} : vector<8x1024xf32> to vector<8x256xf32>
    %87 = arith.negf %86 : vector<8x256xf32>
    %88 = math.exp %87 : vector<8x256xf32>
    %cst_23 = arith.constant 1.000000e+00 : f32
    %89 = vector.broadcast %cst_23 : f32 to vector<8x256xf32>
    %90 = arith.addf %89, %88 : vector<8x256xf32>
    %91 = arith.divf %89, %90 : vector<8x256xf32>
    %92 = vector.extract_strided_slice %79 {offsets = [0, 512], sizes = [8, 256], strides = [1, 1]} : vector<8x1024xf32> to vector<8x256xf32>
    %93 = math.tanh %92 : vector<8x256xf32>
    %94 = vector.extract_strided_slice %79 {offsets = [0, 768], sizes = [8, 256], strides = [1, 1]} : vector<8x1024xf32> to vector<8x256xf32>
    %95 = arith.negf %94 : vector<8x256xf32>
    %96 = math.exp %95 : vector<8x256xf32>
    %cst_24 = arith.constant 1.000000e+00 : f32
    %97 = vector.broadcast %cst_24 : f32 to vector<8x256xf32>
    %98 = arith.addf %97, %96 : vector<8x256xf32>
    %99 = arith.divf %97, %98 : vector<8x256xf32>
    %100 = arith.mulf %91, %67 : vector<8x256xf32>
    %101 = arith.mulf %85, %93 : vector<8x256xf32>
    %102 = arith.addf %100, %101 : vector<8x256xf32>
    %103 = math.tanh %102 : vector<8x256xf32>
    %104 = arith.mulf %99, %103 : vector<8x256xf32>
    %105 = arith.index_cast %c2_i32 : i32 to index
    %c0_25 = arith.constant 0 : index
    %c0_26 = arith.constant 0 : index
    %106 = vector.load %arg6[%105, %c0_25, %c0_26] : memref<8x8x256xf32, #tpu.memory_space<vmem>>, vector<1x8x256xf32>
    %107 = vector.shape_cast %106 : vector<1x8x256xf32> to vector<8x256xf32>
    %108 = vector.shape_cast %104 : vector<8x256xf32> to vector<1x8x256xf32>
    tpu.vector_store %arg6[%105, %c0_25, %c0_26], %108 {strides = array<i32>} : memref<8x8x256xf32, #tpu.memory_space<vmem>>, vector<1x8x256xf32>,
    %c3_i32 = arith.constant 3 : i32
    %109 = arith.index_cast %c3_i32 : i32 to index
    %c0_27 = arith.constant 0 : index
    %c0_28 = arith.constant 0 : index
    %110 = vector.load %arg0[%109, %c0_27, %c0_28] : memref<8x8x1024xf32, #tpu.memory_space<vmem>>, vector<1x8x1024xf32>
    %111 = vector.shape_cast %110 : vector<1x8x1024xf32> to vector<8x1024xf32>
    %112 = arith.truncf %104 : vector<8x256xf32> to vector<8x256xbf16>
    %cst_29 = arith.constant dense<0.000000e+00> : vector<8x1024xf32>
    %113 = tpu.matmul %112, %1, %cst_29 {dimension_numbers = #tpu.dot_dimension_numbers<[1], [0], [0], [1], [0, 0, 1, 1], [], []>} : vector<8x256xbf16>, vector<256x1024xbf16>, vector<8x1024xf32> -> vector<8x1024xf32>
    %114 = arith.addf %111, %113 : vector<8x1024xf32>
    %115 = vector.extract_strided_slice %114 {offsets = [0, 0], sizes = [8, 256], strides = [1, 1]} : vector<8x1024xf32> to vector<8x256xf32>
    %116 = arith.negf %115 : vector<8x256xf32>
    %117 = math.exp %116 : vector<8x256xf32>
    %cst_30 = arith.constant 1.000000e+00 : f32
    %118 = vector.broadcast %cst_30 : f32 to vector<8x256xf32>
    %119 = arith.addf %118, %117 : vector<8x256xf32>
    %120 = arith.divf %118, %119 : vector<8x256xf32>
    %121 = vector.extract_strided_slice %114 {offsets = [0, 256], sizes = [8, 256], strides = [1, 1]} : vector<8x1024xf32> to vector<8x256xf32>
    %122 = arith.negf %121 : vector<8x256xf32>
    %123 = math.exp %122 : vector<8x256xf32>
    %cst_31 = arith.constant 1.000000e+00 : f32
    %124 = vector.broadcast %cst_31 : f32 to vector<8x256xf32>
    %125 = arith.addf %124, %123 : vector<8x256xf32>
    %126 = arith.divf %124, %125 : vector<8x256xf32>
    %127 = vector.extract_strided_slice %114 {offsets = [0, 512], sizes = [8, 256], strides = [1, 1]} : vector<8x1024xf32> to vector<8x256xf32>
    %128 = math.tanh %127 : vector<8x256xf32>
    %129 = vector.extract_strided_slice %114 {offsets = [0, 768], sizes = [8, 256], strides = [1, 1]} : vector<8x1024xf32> to vector<8x256xf32>
    %130 = arith.negf %129 : vector<8x256xf32>
    %131 = math.exp %130 : vector<8x256xf32>
    %cst_32 = arith.constant 1.000000e+00 : f32
    %132 = vector.broadcast %cst_32 : f32 to vector<8x256xf32>
    %133 = arith.addf %132, %131 : vector<8x256xf32>
    %134 = arith.divf %132, %133 : vector<8x256xf32>
    %135 = arith.mulf %126, %102 : vector<8x256xf32>
    %136 = arith.mulf %120, %128 : vector<8x256xf32>
    %137 = arith.addf %135, %136 : vector<8x256xf32>
    %138 = math.tanh %137 : vector<8x256xf32>
    %139 = arith.mulf %134, %138 : vector<8x256xf32>
    %140 = arith.index_cast %c3_i32 : i32 to index
    %c0_33 = arith.constant 0 : index
    %c0_34 = arith.constant 0 : index
    %141 = vector.load %arg6[%140, %c0_33, %c0_34] : memref<8x8x256xf32, #tpu.memory_space<vmem>>, vector<1x8x256xf32>
    %142 = vector.shape_cast %141 : vector<1x8x256xf32> to vector<8x256xf32>
    %143 = vector.shape_cast %139 : vector<8x256xf32> to vector<1x8x256xf32>
    tpu.vector_store %arg6[%140, %c0_33, %c0_34], %143 {strides = array<i32>} : memref<8x8x256xf32, #tpu.memory_space<vmem>>, vector<1x8x256xf32>,
    %c4_i32 = arith.constant 4 : i32
    %144 = arith.index_cast %c4_i32 : i32 to index
    %c0_35 = arith.constant 0 : index
    %c0_36 = arith.constant 0 : index
    %145 = vector.load %arg0[%144, %c0_35, %c0_36] : memref<8x8x1024xf32, #tpu.memory_space<vmem>>, vector<1x8x1024xf32>
    %146 = vector.shape_cast %145 : vector<1x8x1024xf32> to vector<8x1024xf32>
    %147 = arith.truncf %139 : vector<8x256xf32> to vector<8x256xbf16>
    %cst_37 = arith.constant dense<0.000000e+00> : vector<8x1024xf32>
    %148 = tpu.matmul %147, %1, %cst_37 {dimension_numbers = #tpu.dot_dimension_numbers<[1], [0], [0], [1], [0, 0, 1, 1], [], []>} : vector<8x256xbf16>, vector<256x1024xbf16>, vector<8x1024xf32> -> vector<8x1024xf32>
    %149 = arith.addf %146, %148 : vector<8x1024xf32>
    %150 = vector.extract_strided_slice %149 {offsets = [0, 0], sizes = [8, 256], strides = [1, 1]} : vector<8x1024xf32> to vector<8x256xf32>
    %151 = arith.negf %150 : vector<8x256xf32>
    %152 = math.exp %151 : vector<8x256xf32>
    %cst_38 = arith.constant 1.000000e+00 : f32
    %153 = vector.broadcast %cst_38 : f32 to vector<8x256xf32>
    %154 = arith.addf %153, %152 : vector<8x256xf32>
    %155 = arith.divf %153, %154 : vector<8x256xf32>
    %156 = vector.extract_strided_slice %149 {offsets = [0, 256], sizes = [8, 256], strides = [1, 1]} : vector<8x1024xf32> to vector<8x256xf32>
    %157 = arith.negf %156 : vector<8x256xf32>
    %158 = math.exp %157 : vector<8x256xf32>
    %cst_39 = arith.constant 1.000000e+00 : f32
    %159 = vector.broadcast %cst_39 : f32 to vector<8x256xf32>
    %160 = arith.addf %159, %158 : vector<8x256xf32>
    %161 = arith.divf %159, %160 : vector<8x256xf32>
    %162 = vector.extract_strided_slice %149 {offsets = [0, 512], sizes = [8, 256], strides = [1, 1]} : vector<8x1024xf32> to vector<8x256xf32>
    %163 = math.tanh %162 : vector<8x256xf32>
    %164 = vector.extract_strided_slice %149 {offsets = [0, 768], sizes = [8, 256], strides = [1, 1]} : vector<8x1024xf32> to vector<8x256xf32>
    %165 = arith.negf %164 : vector<8x256xf32>
    %166 = math.exp %165 : vector<8x256xf32>
    %cst_40 = arith.constant 1.000000e+00 : f32
    %167 = vector.broadcast %cst_40 : f32 to vector<8x256xf32>
    %168 = arith.addf %167, %166 : vector<8x256xf32>
    %169 = arith.divf %167, %168 : vector<8x256xf32>
    %170 = arith.mulf %161, %137 : vector<8x256xf32>
    %171 = arith.mulf %155, %163 : vector<8x256xf32>
    %172 = arith.addf %170, %171 : vector<8x256xf32>
    %173 = math.tanh %172 : vector<8x256xf32>
    %174 = arith.mulf %169, %173 : vector<8x256xf32>
    %175 = arith.index_cast %c4_i32 : i32 to index
    %c0_41 = arith.constant 0 : index
    %c0_42 = arith.constant 0 : index
    %176 = vector.load %arg6[%175, %c0_41, %c0_42] : memref<8x8x256xf32, #tpu.memory_space<vmem>>, vector<1x8x256xf32>
    %177 = vector.shape_cast %176 : vector<1x8x256xf32> to vector<8x256xf32>
    %178 = vector.shape_cast %174 : vector<8x256xf32> to vector<1x8x256xf32>
    tpu.vector_store %arg6[%175, %c0_41, %c0_42], %178 {strides = array<i32>} : memref<8x8x256xf32, #tpu.memory_space<vmem>>, vector<1x8x256xf32>,
    %c5_i32 = arith.constant 5 : i32
    %179 = arith.index_cast %c5_i32 : i32 to index
    %c0_43 = arith.constant 0 : index
    %c0_44 = arith.constant 0 : index
    %180 = vector.load %arg0[%179, %c0_43, %c0_44] : memref<8x8x1024xf32, #tpu.memory_space<vmem>>, vector<1x8x1024xf32>
    %181 = vector.shape_cast %180 : vector<1x8x1024xf32> to vector<8x1024xf32>
    %182 = arith.truncf %174 : vector<8x256xf32> to vector<8x256xbf16>
    %cst_45 = arith.constant dense<0.000000e+00> : vector<8x1024xf32>
    %183 = tpu.matmul %182, %1, %cst_45 {dimension_numbers = #tpu.dot_dimension_numbers<[1], [0], [0], [1], [0, 0, 1, 1], [], []>} : vector<8x256xbf16>, vector<256x1024xbf16>, vector<8x1024xf32> -> vector<8x1024xf32>
    %184 = arith.addf %181, %183 : vector<8x1024xf32>
    %185 = vector.extract_strided_slice %184 {offsets = [0, 0], sizes = [8, 256], strides = [1, 1]} : vector<8x1024xf32> to vector<8x256xf32>
    %186 = arith.negf %185 : vector<8x256xf32>
    %187 = math.exp %186 : vector<8x256xf32>
    %cst_46 = arith.constant 1.000000e+00 : f32
    %188 = vector.broadcast %cst_46 : f32 to vector<8x256xf32>
    %189 = arith.addf %188, %187 : vector<8x256xf32>
    %190 = arith.divf %188, %189 : vector<8x256xf32>
    %191 = vector.extract_strided_slice %184 {offsets = [0, 256], sizes = [8, 256], strides = [1, 1]} : vector<8x1024xf32> to vector<8x256xf32>
    %192 = arith.negf %191 : vector<8x256xf32>
    %193 = math.exp %192 : vector<8x256xf32>
    %cst_47 = arith.constant 1.000000e+00 : f32
    %194 = vector.broadcast %cst_47 : f32 to vector<8x256xf32>
    %195 = arith.addf %194, %193 : vector<8x256xf32>
    %196 = arith.divf %194, %195 : vector<8x256xf32>
    %197 = vector.extract_strided_slice %184 {offsets = [0, 512], sizes = [8, 256], strides = [1, 1]} : vector<8x1024xf32> to vector<8x256xf32>
    %198 = math.tanh %197 : vector<8x256xf32>
    %199 = vector.extract_strided_slice %184 {offsets = [0, 768], sizes = [8, 256], strides = [1, 1]} : vector<8x1024xf32> to vector<8x256xf32>
    %200 = arith.negf %199 : vector<8x256xf32>
    %201 = math.exp %200 : vector<8x256xf32>
    %cst_48 = arith.constant 1.000000e+00 : f32
    %202 = vector.broadcast %cst_48 : f32 to vector<8x256xf32>
    %203 = arith.addf %202, %201 : vector<8x256xf32>
    %204 = arith.divf %202, %203 : vector<8x256xf32>
    %205 = arith.mulf %196, %172 : vector<8x256xf32>
    %206 = arith.mulf %190, %198 : vector<8x256xf32>
    %207 = arith.addf %205, %206 : vector<8x256xf32>
    %208 = math.tanh %207 : vector<8x256xf32>
    %209 = arith.mulf %204, %208 : vector<8x256xf32>
    %210 = arith.index_cast %c5_i32 : i32 to index
    %c0_49 = arith.constant 0 : index
    %c0_50 = arith.constant 0 : index
    %211 = vector.load %arg6[%210, %c0_49, %c0_50] : memref<8x8x256xf32, #tpu.memory_space<vmem>>, vector<1x8x256xf32>
    %212 = vector.shape_cast %211 : vector<1x8x256xf32> to vector<8x256xf32>
    %213 = vector.shape_cast %209 : vector<8x256xf32> to vector<1x8x256xf32>
    tpu.vector_store %arg6[%210, %c0_49, %c0_50], %213 {strides = array<i32>} : memref<8x8x256xf32, #tpu.memory_space<vmem>>, vector<1x8x256xf32>,
    %c6_i32 = arith.constant 6 : i32
    %214 = arith.index_cast %c6_i32 : i32 to index
    %c0_51 = arith.constant 0 : index
    %c0_52 = arith.constant 0 : index
    %215 = vector.load %arg0[%214, %c0_51, %c0_52] : memref<8x8x1024xf32, #tpu.memory_space<vmem>>, vector<1x8x1024xf32>
    %216 = vector.shape_cast %215 : vector<1x8x1024xf32> to vector<8x1024xf32>
    %217 = arith.truncf %209 : vector<8x256xf32> to vector<8x256xbf16>
    %cst_53 = arith.constant dense<0.000000e+00> : vector<8x1024xf32>
    %218 = tpu.matmul %217, %1, %cst_53 {dimension_numbers = #tpu.dot_dimension_numbers<[1], [0], [0], [1], [0, 0, 1, 1], [], []>} : vector<8x256xbf16>, vector<256x1024xbf16>, vector<8x1024xf32> -> vector<8x1024xf32>
    %219 = arith.addf %216, %218 : vector<8x1024xf32>
    %220 = vector.extract_strided_slice %219 {offsets = [0, 0], sizes = [8, 256], strides = [1, 1]} : vector<8x1024xf32> to vector<8x256xf32>
    %221 = arith.negf %220 : vector<8x256xf32>
    %222 = math.exp %221 : vector<8x256xf32>
    %cst_54 = arith.constant 1.000000e+00 : f32
    %223 = vector.broadcast %cst_54 : f32 to vector<8x256xf32>
    %224 = arith.addf %223, %222 : vector<8x256xf32>
    %225 = arith.divf %223, %224 : vector<8x256xf32>
    %226 = vector.extract_strided_slice %219 {offsets = [0, 256], sizes = [8, 256], strides = [1, 1]} : vector<8x1024xf32> to vector<8x256xf32>
    %227 = arith.negf %226 : vector<8x256xf32>
    %228 = math.exp %227 : vector<8x256xf32>
    %cst_55 = arith.constant 1.000000e+00 : f32
    %229 = vector.broadcast %cst_55 : f32 to vector<8x256xf32>
    %230 = arith.addf %229, %228 : vector<8x256xf32>
    %231 = arith.divf %229, %230 : vector<8x256xf32>
    %232 = vector.extract_strided_slice %219 {offsets = [0, 512], sizes = [8, 256], strides = [1, 1]} : vector<8x1024xf32> to vector<8x256xf32>
    %233 = math.tanh %232 : vector<8x256xf32>
    %234 = vector.extract_strided_slice %219 {offsets = [0, 768], sizes = [8, 256], strides = [1, 1]} : vector<8x1024xf32> to vector<8x256xf32>
    %235 = arith.negf %234 : vector<8x256xf32>
    %236 = math.exp %235 : vector<8x256xf32>
    %cst_56 = arith.constant 1.000000e+00 : f32
    %237 = vector.broadcast %cst_56 : f32 to vector<8x256xf32>
    %238 = arith.addf %237, %236 : vector<8x256xf32>
    %239 = arith.divf %237, %238 : vector<8x256xf32>
    %240 = arith.mulf %231, %207 : vector<8x256xf32>
    %241 = arith.mulf %225, %233 : vector<8x256xf32>
    %242 = arith.addf %240, %241 : vector<8x256xf32>
    %243 = math.tanh %242 : vector<8x256xf32>
    %244 = arith.mulf %239, %243 : vector<8x256xf32>
    %245 = arith.index_cast %c6_i32 : i32 to index
    %c0_57 = arith.constant 0 : index
    %c0_58 = arith.constant 0 : index
    %246 = vector.load %arg6[%245, %c0_57, %c0_58] : memref<8x8x256xf32, #tpu.memory_space<vmem>>, vector<1x8x256xf32>
    %247 = vector.shape_cast %246 : vector<1x8x256xf32> to vector<8x256xf32>
    %248 = vector.shape_cast %244 : vector<8x256xf32> to vector<1x8x256xf32>
    tpu.vector_store %arg6[%245, %c0_57, %c0_58], %248 {strides = array<i32>} : memref<8x8x256xf32, #tpu.memory_space<vmem>>, vector<1x8x256xf32>,
    %c7_i32 = arith.constant 7 : i32
    %249 = arith.index_cast %c7_i32 : i32 to index
    %c0_59 = arith.constant 0 : index
    %c0_60 = arith.constant 0 : index
    %250 = vector.load %arg0[%249, %c0_59, %c0_60] : memref<8x8x1024xf32, #tpu.memory_space<vmem>>, vector<1x8x1024xf32>
    %251 = vector.shape_cast %250 : vector<1x8x1024xf32> to vector<8x1024xf32>
    %252 = arith.truncf %244 : vector<8x256xf32> to vector<8x256xbf16>
    %cst_61 = arith.constant dense<0.000000e+00> : vector<8x1024xf32>
    %253 = tpu.matmul %252, %1, %cst_61 {dimension_numbers = #tpu.dot_dimension_numbers<[1], [0], [0], [1], [0, 0, 1, 1], [], []>} : vector<8x256xbf16>, vector<256x1024xbf16>, vector<8x1024xf32> -> vector<8x1024xf32>
    %254 = arith.addf %251, %253 : vector<8x1024xf32>
    %255 = vector.extract_strided_slice %254 {offsets = [0, 0], sizes = [8, 256], strides = [1, 1]} : vector<8x1024xf32> to vector<8x256xf32>
    %256 = arith.negf %255 : vector<8x256xf32>
    %257 = math.exp %256 : vector<8x256xf32>
    %cst_62 = arith.constant 1.000000e+00 : f32
    %258 = vector.broadcast %cst_62 : f32 to vector<8x256xf32>
    %259 = arith.addf %258, %257 : vector<8x256xf32>
    %260 = arith.divf %258, %259 : vector<8x256xf32>
    %261 = vector.extract_strided_slice %254 {offsets = [0, 256], sizes = [8, 256], strides = [1, 1]} : vector<8x1024xf32> to vector<8x256xf32>
    %262 = arith.negf %261 : vector<8x256xf32>
    %263 = math.exp %262 : vector<8x256xf32>
    %cst_63 = arith.constant 1.000000e+00 : f32
    %264 = vector.broadcast %cst_63 : f32 to vector<8x256xf32>
    %265 = arith.addf %264, %263 : vector<8x256xf32>
    %266 = arith.divf %264, %265 : vector<8x256xf32>
    %267 = vector.extract_strided_slice %254 {offsets = [0, 512], sizes = [8, 256], strides = [1, 1]} : vector<8x1024xf32> to vector<8x256xf32>
    %268 = math.tanh %267 : vector<8x256xf32>
    %269 = vector.extract_strided_slice %254 {offsets = [0, 768], sizes = [8, 256], strides = [1, 1]} : vector<8x1024xf32> to vector<8x256xf32>
    %270 = arith.negf %269 : vector<8x256xf32>
    %271 = math.exp %270 : vector<8x256xf32>
    %cst_64 = arith.constant 1.000000e+00 : f32
    %272 = vector.broadcast %cst_64 : f32 to vector<8x256xf32>
    %273 = arith.addf %272, %271 : vector<8x256xf32>
    %274 = arith.divf %272, %273 : vector<8x256xf32>
    %275 = arith.mulf %266, %242 : vector<8x256xf32>
    %276 = arith.mulf %260, %268 : vector<8x256xf32>
    %277 = arith.addf %275, %276 : vector<8x256xf32>
    %278 = math.tanh %277 : vector<8x256xf32>
    %279 = arith.mulf %274, %278 : vector<8x256xf32>
    %280 = arith.index_cast %c7_i32 : i32 to index
    %c0_65 = arith.constant 0 : index
    %c0_66 = arith.constant 0 : index
    %281 = vector.load %arg6[%280, %c0_65, %c0_66] : memref<8x8x256xf32, #tpu.memory_space<vmem>>, vector<1x8x256xf32>
    %282 = vector.shape_cast %281 : vector<1x8x256xf32> to vector<8x256xf32>
    %283 = vector.shape_cast %279 : vector<8x256xf32> to vector<1x8x256xf32>
    tpu.vector_store %arg6[%280, %c0_65, %c0_66], %283 {strides = array<i32>} : memref<8x8x256xf32, #tpu.memory_space<vmem>>, vector<1x8x256xf32>,
    %c8_i32 = arith.constant 8 : i32
    %c0_67 = arith.constant 0 : index
    %c0_68 = arith.constant 0 : index
    %c0_69 = arith.constant 0 : index
    %284 = vector.load %arg6[%c0_67, %c0_68, %c0_69] : memref<8x8x256xf32, #tpu.memory_space<vmem>>, vector<8x8x256xf32>
    %285 = vector.shape_cast %284 : vector<8x8x256xf32> to vector<64x256xf32>
    %286 = arith.truncf %285 : vector<64x256xf32> to vector<64x256xbf16>
    %c0_70 = arith.constant 0 : index
    %c0_71 = arith.constant 0 : index
    %c0_72 = arith.constant 0 : index
    %287 = vector.load %arg1[%c0_70, %c0_71, %c0_72] : memref<1x256x1024xbf16, #tpu.memory_space<vmem>>, vector<1x256x1024xbf16>
    %288 = vector.shape_cast %287 : vector<1x256x1024xbf16> to vector<256x1024xbf16>
    %cst_73 = arith.constant dense<0.000000e+00> : vector<64x1024xf32>
    %289 = tpu.matmul %286, %288, %cst_73 {dimension_numbers = #tpu.dot_dimension_numbers<[1], [0], [0], [1], [0, 0, 1, 1], [], []>} : vector<64x256xbf16>, vector<256x1024xbf16>, vector<64x1024xf32> -> vector<64x1024xf32>
    %c0_74 = arith.constant 0 : index
    %c0_75 = arith.constant 0 : index
    %c0_76 = arith.constant 0 : index
    %290 = vector.load %arg3[%c0_74, %c0_75, %c0_76] : memref<1x1x1024xf32, #tpu.memory_space<vmem>>, vector<1x1x1024xf32>
    %291 = vector.shape_cast %290 : vector<1x1x1024xf32> to vector<1x1024xf32>
    %292 = vector.broadcast %291 : vector<1x1024xf32> to vector<64x1024xf32>
    %293 = arith.addf %289, %292 : vector<64x1024xf32>
    %294 = vector.shape_cast %293 : vector<64x1024xf32> to vector<8x8x1024xf32>
    %c0_77 = arith.constant 0 : index
    %c0_78 = arith.constant 0 : index
    %c0_79 = arith.constant 0 : index
    %295 = vector.load %arg7[%c0_77, %c0_78, %c0_79] : memref<8x8x1024xf32, #tpu.memory_space<vmem>>, vector<8x8x1024xf32>
    tpu.vector_store %arg7[%c0_77, %c0_78, %c0_79], %294 {strides = array<i32>} : memref<8x8x1024xf32, #tpu.memory_space<vmem>>, vector<8x8x1024xf32>,
    %c1 = arith.constant 1 : index
    %c0_80 = arith.constant 0 : index
    %c0_81 = arith.constant 0 : index
    %296 = vector.load %arg2[%c1, %c0_80, %c0_81] : memref<2x256x1024xbf16, #tpu.memory_space<vmem>>, vector<1x256x1024xbf16>
    %297 = vector.shape_cast %296 : vector<1x256x1024xbf16> to vector<256x1024xbf16>
    %cst_82 = arith.constant 0.000000e+00 : f32
    %298 = vector.broadcast %cst_82 : f32 to vector<8x256xf32>
    %cst_83 = arith.constant 0.000000e+00 : f32
    %299 = vector.broadcast %cst_83 : f32 to vector<8x256xf32>
    %c0_i32_84 = arith.constant 0 : i32
    %300 = arith.index_cast %c0_i32_84 : i32 to index
    %c0_85 = arith.constant 0 : index
    %c0_86 = arith.constant 0 : index
    %301 = vector.load %arg7[%300, %c0_85, %c0_86] : memref<8x8x1024xf32, #tpu.memory_space<vmem>>, vector<1x8x1024xf32>
    %302 = vector.shape_cast %301 : vector<1x8x1024xf32> to vector<8x1024xf32>
    %303 = arith.truncf %298 : vector<8x256xf32> to vector<8x256xbf16>
    %cst_87 = arith.constant dense<0.000000e+00> : vector<8x1024xf32>
    %304 = tpu.matmul %303, %297, %cst_87 {dimension_numbers = #tpu.dot_dimension_numbers<[1], [0], [0], [1], [0, 0, 1, 1], [], []>} : vector<8x256xbf16>, vector<256x1024xbf16>, vector<8x1024xf32> -> vector<8x1024xf32>
    %305 = arith.addf %302, %304 : vector<8x1024xf32>
    %306 = vector.extract_strided_slice %305 {offsets = [0, 0], sizes = [8, 256], strides = [1, 1]} : vector<8x1024xf32> to vector<8x256xf32>
    %307 = arith.negf %306 : vector<8x256xf32>
    %308 = math.exp %307 : vector<8x256xf32>
    %cst_88 = arith.constant 1.000000e+00 : f32
    %309 = vector.broadcast %cst_88 : f32 to vector<8x256xf32>
    %310 = arith.addf %309, %308 : vector<8x256xf32>
    %311 = arith.divf %309, %310 : vector<8x256xf32>
    %312 = vector.extract_strided_slice %305 {offsets = [0, 256], sizes = [8, 256], strides = [1, 1]} : vector<8x1024xf32> to vector<8x256xf32>
    %313 = arith.negf %312 : vector<8x256xf32>
    %314 = math.exp %313 : vector<8x256xf32>
    %cst_89 = arith.constant 1.000000e+00 : f32
    %315 = vector.broadcast %cst_89 : f32 to vector<8x256xf32>
    %316 = arith.addf %315, %314 : vector<8x256xf32>
    %317 = arith.divf %315, %316 : vector<8x256xf32>
    %318 = vector.extract_strided_slice %305 {offsets = [0, 512], sizes = [8, 256], strides = [1, 1]} : vector<8x1024xf32> to vector<8x256xf32>
    %319 = math.tanh %318 : vector<8x256xf32>
    %320 = vector.extract_strided_slice %305 {offsets = [0, 768], sizes = [8, 256], strides = [1, 1]} : vector<8x1024xf32> to vector<8x256xf32>
    %321 = arith.negf %320 : vector<8x256xf32>
    %322 = math.exp %321 : vector<8x256xf32>
    %cst_90 = arith.constant 1.000000e+00 : f32
    %323 = vector.broadcast %cst_90 : f32 to vector<8x256xf32>
    %324 = arith.addf %323, %322 : vector<8x256xf32>
    %325 = arith.divf %323, %324 : vector<8x256xf32>
    %326 = arith.mulf %317, %299 : vector<8x256xf32>
    %327 = arith.mulf %311, %319 : vector<8x256xf32>
    %328 = arith.addf %326, %327 : vector<8x256xf32>
    %329 = math.tanh %328 : vector<8x256xf32>
    %330 = arith.mulf %325, %329 : vector<8x256xf32>
    %c1_i32_91 = arith.constant 1 : i32
    %331 = arith.index_cast %c1_i32_91 : i32 to index
    %c0_92 = arith.constant 0 : index
    %c0_93 = arith.constant 0 : index
    %332 = vector.load %arg7[%331, %c0_92, %c0_93] : memref<8x8x1024xf32, #tpu.memory_space<vmem>>, vector<1x8x1024xf32>
    %333 = vector.shape_cast %332 : vector<1x8x1024xf32> to vector<8x1024xf32>
    %334 = arith.truncf %330 : vector<8x256xf32> to vector<8x256xbf16>
    %cst_94 = arith.constant dense<0.000000e+00> : vector<8x1024xf32>
    %335 = tpu.matmul %334, %297, %cst_94 {dimension_numbers = #tpu.dot_dimension_numbers<[1], [0], [0], [1], [0, 0, 1, 1], [], []>} : vector<8x256xbf16>, vector<256x1024xbf16>, vector<8x1024xf32> -> vector<8x1024xf32>
    %336 = arith.addf %333, %335 : vector<8x1024xf32>
    %337 = vector.extract_strided_slice %336 {offsets = [0, 0], sizes = [8, 256], strides = [1, 1]} : vector<8x1024xf32> to vector<8x256xf32>
    %338 = arith.negf %337 : vector<8x256xf32>
    %339 = math.exp %338 : vector<8x256xf32>
    %cst_95 = arith.constant 1.000000e+00 : f32
    %340 = vector.broadcast %cst_95 : f32 to vector<8x256xf32>
    %341 = arith.addf %340, %339 : vector<8x256xf32>
    %342 = arith.divf %340, %341 : vector<8x256xf32>
    %343 = vector.extract_strided_slice %336 {offsets = [0, 256], sizes = [8, 256], strides = [1, 1]} : vector<8x1024xf32> to vector<8x256xf32>
    %344 = arith.negf %343 : vector<8x256xf32>
    %345 = math.exp %344 : vector<8x256xf32>
    %cst_96 = arith.constant 1.000000e+00 : f32
    %346 = vector.broadcast %cst_96 : f32 to vector<8x256xf32>
    %347 = arith.addf %346, %345 : vector<8x256xf32>
    %348 = arith.divf %346, %347 : vector<8x256xf32>
    %349 = vector.extract_strided_slice %336 {offsets = [0, 512], sizes = [8, 256], strides = [1, 1]} : vector<8x1024xf32> to vector<8x256xf32>
    %350 = math.tanh %349 : vector<8x256xf32>
    %351 = vector.extract_strided_slice %336 {offsets = [0, 768], sizes = [8, 256], strides = [1, 1]} : vector<8x1024xf32> to vector<8x256xf32>
    %352 = arith.negf %351 : vector<8x256xf32>
    %353 = math.exp %352 : vector<8x256xf32>
    %cst_97 = arith.constant 1.000000e+00 : f32
    %354 = vector.broadcast %cst_97 : f32 to vector<8x256xf32>
    %355 = arith.addf %354, %353 : vector<8x256xf32>
    %356 = arith.divf %354, %355 : vector<8x256xf32>
    %357 = arith.mulf %348, %328 : vector<8x256xf32>
    %358 = arith.mulf %342, %350 : vector<8x256xf32>
    %359 = arith.addf %357, %358 : vector<8x256xf32>
    %360 = math.tanh %359 : vector<8x256xf32>
    %361 = arith.mulf %356, %360 : vector<8x256xf32>
    %c2_i32_98 = arith.constant 2 : i32
    %362 = arith.index_cast %c2_i32_98 : i32 to index
    %c0_99 = arith.constant 0 : index
    %c0_100 = arith.constant 0 : index
    %363 = vector.load %arg7[%362, %c0_99, %c0_100] : memref<8x8x1024xf32, #tpu.memory_space<vmem>>, vector<1x8x1024xf32>
    %364 = vector.shape_cast %363 : vector<1x8x1024xf32> to vector<8x1024xf32>
    %365 = arith.truncf %361 : vector<8x256xf32> to vector<8x256xbf16>
    %cst_101 = arith.constant dense<0.000000e+00> : vector<8x1024xf32>
    %366 = tpu.matmul %365, %297, %cst_101 {dimension_numbers = #tpu.dot_dimension_numbers<[1], [0], [0], [1], [0, 0, 1, 1], [], []>} : vector<8x256xbf16>, vector<256x1024xbf16>, vector<8x1024xf32> -> vector<8x1024xf32>
    %367 = arith.addf %364, %366 : vector<8x1024xf32>
    %368 = vector.extract_strided_slice %367 {offsets = [0, 0], sizes = [8, 256], strides = [1, 1]} : vector<8x1024xf32> to vector<8x256xf32>
    %369 = arith.negf %368 : vector<8x256xf32>
    %370 = math.exp %369 : vector<8x256xf32>
    %cst_102 = arith.constant 1.000000e+00 : f32
    %371 = vector.broadcast %cst_102 : f32 to vector<8x256xf32>
    %372 = arith.addf %371, %370 : vector<8x256xf32>
    %373 = arith.divf %371, %372 : vector<8x256xf32>
    %374 = vector.extract_strided_slice %367 {offsets = [0, 256], sizes = [8, 256], strides = [1, 1]} : vector<8x1024xf32> to vector<8x256xf32>
    %375 = arith.negf %374 : vector<8x256xf32>
    %376 = math.exp %375 : vector<8x256xf32>
    %cst_103 = arith.constant 1.000000e+00 : f32
    %377 = vector.broadcast %cst_103 : f32 to vector<8x256xf32>
    %378 = arith.addf %377, %376 : vector<8x256xf32>
    %379 = arith.divf %377, %378 : vector<8x256xf32>
    %380 = vector.extract_strided_slice %367 {offsets = [0, 512], sizes = [8, 256], strides = [1, 1]} : vector<8x1024xf32> to vector<8x256xf32>
    %381 = math.tanh %380 : vector<8x256xf32>
    %382 = vector.extract_strided_slice %367 {offsets = [0, 768], sizes = [8, 256], strides = [1, 1]} : vector<8x1024xf32> to vector<8x256xf32>
    %383 = arith.negf %382 : vector<8x256xf32>
    %384 = math.exp %383 : vector<8x256xf32>
    %cst_104 = arith.constant 1.000000e+00 : f32
    %385 = vector.broadcast %cst_104 : f32 to vector<8x256xf32>
    %386 = arith.addf %385, %384 : vector<8x256xf32>
    %387 = arith.divf %385, %386 : vector<8x256xf32>
    %388 = arith.mulf %379, %359 : vector<8x256xf32>
    %389 = arith.mulf %373, %381 : vector<8x256xf32>
    %390 = arith.addf %388, %389 : vector<8x256xf32>
    %391 = math.tanh %390 : vector<8x256xf32>
    %392 = arith.mulf %387, %391 : vector<8x256xf32>
    %c3_i32_105 = arith.constant 3 : i32
    %393 = arith.index_cast %c3_i32_105 : i32 to index
    %c0_106 = arith.constant 0 : index
    %c0_107 = arith.constant 0 : index
    %394 = vector.load %arg7[%393, %c0_106, %c0_107] : memref<8x8x1024xf32, #tpu.memory_space<vmem>>, vector<1x8x1024xf32>
    %395 = vector.shape_cast %394 : vector<1x8x1024xf32> to vector<8x1024xf32>
    %396 = arith.truncf %392 : vector<8x256xf32> to vector<8x256xbf16>
    %cst_108 = arith.constant dense<0.000000e+00> : vector<8x1024xf32>
    %397 = tpu.matmul %396, %297, %cst_108 {dimension_numbers = #tpu.dot_dimension_numbers<[1], [0], [0], [1], [0, 0, 1, 1], [], []>} : vector<8x256xbf16>, vector<256x1024xbf16>, vector<8x1024xf32> -> vector<8x1024xf32>
    %398 = arith.addf %395, %397 : vector<8x1024xf32>
    %399 = vector.extract_strided_slice %398 {offsets = [0, 0], sizes = [8, 256], strides = [1, 1]} : vector<8x1024xf32> to vector<8x256xf32>
    %400 = arith.negf %399 : vector<8x256xf32>
    %401 = math.exp %400 : vector<8x256xf32>
    %cst_109 = arith.constant 1.000000e+00 : f32
    %402 = vector.broadcast %cst_109 : f32 to vector<8x256xf32>
    %403 = arith.addf %402, %401 : vector<8x256xf32>
    %404 = arith.divf %402, %403 : vector<8x256xf32>
    %405 = vector.extract_strided_slice %398 {offsets = [0, 256], sizes = [8, 256], strides = [1, 1]} : vector<8x1024xf32> to vector<8x256xf32>
    %406 = arith.negf %405 : vector<8x256xf32>
    %407 = math.exp %406 : vector<8x256xf32>
    %cst_110 = arith.constant 1.000000e+00 : f32
    %408 = vector.broadcast %cst_110 : f32 to vector<8x256xf32>
    %409 = arith.addf %408, %407 : vector<8x256xf32>
    %410 = arith.divf %408, %409 : vector<8x256xf32>
    %411 = vector.extract_strided_slice %398 {offsets = [0, 512], sizes = [8, 256], strides = [1, 1]} : vector<8x1024xf32> to vector<8x256xf32>
    %412 = math.tanh %411 : vector<8x256xf32>
    %413 = vector.extract_strided_slice %398 {offsets = [0, 768], sizes = [8, 256], strides = [1, 1]} : vector<8x1024xf32> to vector<8x256xf32>
    %414 = arith.negf %413 : vector<8x256xf32>
    %415 = math.exp %414 : vector<8x256xf32>
    %cst_111 = arith.constant 1.000000e+00 : f32
    %416 = vector.broadcast %cst_111 : f32 to vector<8x256xf32>
    %417 = arith.addf %416, %415 : vector<8x256xf32>
    %418 = arith.divf %416, %417 : vector<8x256xf32>
    %419 = arith.mulf %410, %390 : vector<8x256xf32>
    %420 = arith.mulf %404, %412 : vector<8x256xf32>
    %421 = arith.addf %419, %420 : vector<8x256xf32>
    %422 = math.tanh %421 : vector<8x256xf32>
    %423 = arith.mulf %418, %422 : vector<8x256xf32>
    %c4_i32_112 = arith.constant 4 : i32
    %424 = arith.index_cast %c4_i32_112 : i32 to index
    %c0_113 = arith.constant 0 : index
    %c0_114 = arith.constant 0 : index
    %425 = vector.load %arg7[%424, %c0_113, %c0_114] : memref<8x8x1024xf32, #tpu.memory_space<vmem>>, vector<1x8x1024xf32>
    %426 = vector.shape_cast %425 : vector<1x8x1024xf32> to vector<8x1024xf32>
    %427 = arith.truncf %423 : vector<8x256xf32> to vector<8x256xbf16>
    %cst_115 = arith.constant dense<0.000000e+00> : vector<8x1024xf32>
    %428 = tpu.matmul %427, %297, %cst_115 {dimension_numbers = #tpu.dot_dimension_numbers<[1], [0], [0], [1], [0, 0, 1, 1], [], []>} : vector<8x256xbf16>, vector<256x1024xbf16>, vector<8x1024xf32> -> vector<8x1024xf32>
    %429 = arith.addf %426, %428 : vector<8x1024xf32>
    %430 = vector.extract_strided_slice %429 {offsets = [0, 0], sizes = [8, 256], strides = [1, 1]} : vector<8x1024xf32> to vector<8x256xf32>
    %431 = arith.negf %430 : vector<8x256xf32>
    %432 = math.exp %431 : vector<8x256xf32>
    %cst_116 = arith.constant 1.000000e+00 : f32
    %433 = vector.broadcast %cst_116 : f32 to vector<8x256xf32>
    %434 = arith.addf %433, %432 : vector<8x256xf32>
    %435 = arith.divf %433, %434 : vector<8x256xf32>
    %436 = vector.extract_strided_slice %429 {offsets = [0, 256], sizes = [8, 256], strides = [1, 1]} : vector<8x1024xf32> to vector<8x256xf32>
    %437 = arith.negf %436 : vector<8x256xf32>
    %438 = math.exp %437 : vector<8x256xf32>
    %cst_117 = arith.constant 1.000000e+00 : f32
    %439 = vector.broadcast %cst_117 : f32 to vector<8x256xf32>
    %440 = arith.addf %439, %438 : vector<8x256xf32>
    %441 = arith.divf %439, %440 : vector<8x256xf32>
    %442 = vector.extract_strided_slice %429 {offsets = [0, 512], sizes = [8, 256], strides = [1, 1]} : vector<8x1024xf32> to vector<8x256xf32>
    %443 = math.tanh %442 : vector<8x256xf32>
    %444 = vector.extract_strided_slice %429 {offsets = [0, 768], sizes = [8, 256], strides = [1, 1]} : vector<8x1024xf32> to vector<8x256xf32>
    %445 = arith.negf %444 : vector<8x256xf32>
    %446 = math.exp %445 : vector<8x256xf32>
    %cst_118 = arith.constant 1.000000e+00 : f32
    %447 = vector.broadcast %cst_118 : f32 to vector<8x256xf32>
    %448 = arith.addf %447, %446 : vector<8x256xf32>
    %449 = arith.divf %447, %448 : vector<8x256xf32>
    %450 = arith.mulf %441, %421 : vector<8x256xf32>
    %451 = arith.mulf %435, %443 : vector<8x256xf32>
    %452 = arith.addf %450, %451 : vector<8x256xf32>
    %453 = math.tanh %452 : vector<8x256xf32>
    %454 = arith.mulf %449, %453 : vector<8x256xf32>
    %c5_i32_119 = arith.constant 5 : i32
    %455 = arith.index_cast %c5_i32_119 : i32 to index
    %c0_120 = arith.constant 0 : index
    %c0_121 = arith.constant 0 : index
    %456 = vector.load %arg7[%455, %c0_120, %c0_121] : memref<8x8x1024xf32, #tpu.memory_space<vmem>>, vector<1x8x1024xf32>
    %457 = vector.shape_cast %456 : vector<1x8x1024xf32> to vector<8x1024xf32>
    %458 = arith.truncf %454 : vector<8x256xf32> to vector<8x256xbf16>
    %cst_122 = arith.constant dense<0.000000e+00> : vector<8x1024xf32>
    %459 = tpu.matmul %458, %297, %cst_122 {dimension_numbers = #tpu.dot_dimension_numbers<[1], [0], [0], [1], [0, 0, 1, 1], [], []>} : vector<8x256xbf16>, vector<256x1024xbf16>, vector<8x1024xf32> -> vector<8x1024xf32>
    %460 = arith.addf %457, %459 : vector<8x1024xf32>
    %461 = vector.extract_strided_slice %460 {offsets = [0, 0], sizes = [8, 256], strides = [1, 1]} : vector<8x1024xf32> to vector<8x256xf32>
    %462 = arith.negf %461 : vector<8x256xf32>
    %463 = math.exp %462 : vector<8x256xf32>
    %cst_123 = arith.constant 1.000000e+00 : f32
    %464 = vector.broadcast %cst_123 : f32 to vector<8x256xf32>
    %465 = arith.addf %464, %463 : vector<8x256xf32>
    %466 = arith.divf %464, %465 : vector<8x256xf32>
    %467 = vector.extract_strided_slice %460 {offsets = [0, 256], sizes = [8, 256], strides = [1, 1]} : vector<8x1024xf32> to vector<8x256xf32>
    %468 = arith.negf %467 : vector<8x256xf32>
    %469 = math.exp %468 : vector<8x256xf32>
    %cst_124 = arith.constant 1.000000e+00 : f32
    %470 = vector.broadcast %cst_124 : f32 to vector<8x256xf32>
    %471 = arith.addf %470, %469 : vector<8x256xf32>
    %472 = arith.divf %470, %471 : vector<8x256xf32>
    %473 = vector.extract_strided_slice %460 {offsets = [0, 512], sizes = [8, 256], strides = [1, 1]} : vector<8x1024xf32> to vector<8x256xf32>
    %474 = math.tanh %473 : vector<8x256xf32>
    %475 = vector.extract_strided_slice %460 {offsets = [0, 768], sizes = [8, 256], strides = [1, 1]} : vector<8x1024xf32> to vector<8x256xf32>
    %476 = arith.negf %475 : vector<8x256xf32>
    %477 = math.exp %476 : vector<8x256xf32>
    %cst_125 = arith.constant 1.000000e+00 : f32
    %478 = vector.broadcast %cst_125 : f32 to vector<8x256xf32>
    %479 = arith.addf %478, %477 : vector<8x256xf32>
    %480 = arith.divf %478, %479 : vector<8x256xf32>
    %481 = arith.mulf %472, %452 : vector<8x256xf32>
    %482 = arith.mulf %466, %474 : vector<8x256xf32>
    %483 = arith.addf %481, %482 : vector<8x256xf32>
    %484 = math.tanh %483 : vector<8x256xf32>
    %485 = arith.mulf %480, %484 : vector<8x256xf32>
    %c6_i32_126 = arith.constant 6 : i32
    %486 = arith.index_cast %c6_i32_126 : i32 to index
    %c0_127 = arith.constant 0 : index
    %c0_128 = arith.constant 0 : index
    %487 = vector.load %arg7[%486, %c0_127, %c0_128] : memref<8x8x1024xf32, #tpu.memory_space<vmem>>, vector<1x8x1024xf32>
    %488 = vector.shape_cast %487 : vector<1x8x1024xf32> to vector<8x1024xf32>
    %489 = arith.truncf %485 : vector<8x256xf32> to vector<8x256xbf16>
    %cst_129 = arith.constant dense<0.000000e+00> : vector<8x1024xf32>
    %490 = tpu.matmul %489, %297, %cst_129 {dimension_numbers = #tpu.dot_dimension_numbers<[1], [0], [0], [1], [0, 0, 1, 1], [], []>} : vector<8x256xbf16>, vector<256x1024xbf16>, vector<8x1024xf32> -> vector<8x1024xf32>
    %491 = arith.addf %488, %490 : vector<8x1024xf32>
    %492 = vector.extract_strided_slice %491 {offsets = [0, 0], sizes = [8, 256], strides = [1, 1]} : vector<8x1024xf32> to vector<8x256xf32>
    %493 = arith.negf %492 : vector<8x256xf32>
    %494 = math.exp %493 : vector<8x256xf32>
    %cst_130 = arith.constant 1.000000e+00 : f32
    %495 = vector.broadcast %cst_130 : f32 to vector<8x256xf32>
    %496 = arith.addf %495, %494 : vector<8x256xf32>
    %497 = arith.divf %495, %496 : vector<8x256xf32>
    %498 = vector.extract_strided_slice %491 {offsets = [0, 256], sizes = [8, 256], strides = [1, 1]} : vector<8x1024xf32> to vector<8x256xf32>
    %499 = arith.negf %498 : vector<8x256xf32>
    %500 = math.exp %499 : vector<8x256xf32>
    %cst_131 = arith.constant 1.000000e+00 : f32
    %501 = vector.broadcast %cst_131 : f32 to vector<8x256xf32>
    %502 = arith.addf %501, %500 : vector<8x256xf32>
    %503 = arith.divf %501, %502 : vector<8x256xf32>
    %504 = vector.extract_strided_slice %491 {offsets = [0, 512], sizes = [8, 256], strides = [1, 1]} : vector<8x1024xf32> to vector<8x256xf32>
    %505 = math.tanh %504 : vector<8x256xf32>
    %506 = vector.extract_strided_slice %491 {offsets = [0, 768], sizes = [8, 256], strides = [1, 1]} : vector<8x1024xf32> to vector<8x256xf32>
    %507 = arith.negf %506 : vector<8x256xf32>
    %508 = math.exp %507 : vector<8x256xf32>
    %cst_132 = arith.constant 1.000000e+00 : f32
    %509 = vector.broadcast %cst_132 : f32 to vector<8x256xf32>
    %510 = arith.addf %509, %508 : vector<8x256xf32>
    %511 = arith.divf %509, %510 : vector<8x256xf32>
    %512 = arith.mulf %503, %483 : vector<8x256xf32>
    %513 = arith.mulf %497, %505 : vector<8x256xf32>
    %514 = arith.addf %512, %513 : vector<8x256xf32>
    %515 = math.tanh %514 : vector<8x256xf32>
    %516 = arith.mulf %511, %515 : vector<8x256xf32>
    %c7_i32_133 = arith.constant 7 : i32
    %517 = arith.index_cast %c7_i32_133 : i32 to index
    %c0_134 = arith.constant 0 : index
    %c0_135 = arith.constant 0 : index
    %518 = vector.load %arg7[%517, %c0_134, %c0_135] : memref<8x8x1024xf32, #tpu.memory_space<vmem>>, vector<1x8x1024xf32>
    %519 = vector.shape_cast %518 : vector<1x8x1024xf32> to vector<8x1024xf32>
    %520 = arith.truncf %516 : vector<8x256xf32> to vector<8x256xbf16>
    %cst_136 = arith.constant dense<0.000000e+00> : vector<8x1024xf32>
    %521 = tpu.matmul %520, %297, %cst_136 {dimension_numbers = #tpu.dot_dimension_numbers<[1], [0], [0], [1], [0, 0, 1, 1], [], []>} : vector<8x256xbf16>, vector<256x1024xbf16>, vector<8x1024xf32> -> vector<8x1024xf32>
    %522 = arith.addf %519, %521 : vector<8x1024xf32>
    %523 = vector.extract_strided_slice %522 {offsets = [0, 0], sizes = [8, 256], strides = [1, 1]} : vector<8x1024xf32> to vector<8x256xf32>
    %524 = arith.negf %523 : vector<8x256xf32>
    %525 = math.exp %524 : vector<8x256xf32>
    %cst_137 = arith.constant 1.000000e+00 : f32
    %526 = vector.broadcast %cst_137 : f32 to vector<8x256xf32>
    %527 = arith.addf %526, %525 : vector<8x256xf32>
    %528 = arith.divf %526, %527 : vector<8x256xf32>
    %529 = vector.extract_strided_slice %522 {offsets = [0, 256], sizes = [8, 256], strides = [1, 1]} : vector<8x1024xf32> to vector<8x256xf32>
    %530 = arith.negf %529 : vector<8x256xf32>
    %531 = math.exp %530 : vector<8x256xf32>
    %cst_138 = arith.constant 1.000000e+00 : f32
    %532 = vector.broadcast %cst_138 : f32 to vector<8x256xf32>
    %533 = arith.addf %532, %531 : vector<8x256xf32>
    %534 = arith.divf %532, %533 : vector<8x256xf32>
    %535 = vector.extract_strided_slice %522 {offsets = [0, 512], sizes = [8, 256], strides = [1, 1]} : vector<8x1024xf32> to vector<8x256xf32>
    %536 = math.tanh %535 : vector<8x256xf32>
    %537 = vector.extract_strided_slice %522 {offsets = [0, 768], sizes = [8, 256], strides = [1, 1]} : vector<8x1024xf32> to vector<8x256xf32>
    %538 = arith.negf %537 : vector<8x256xf32>
    %539 = math.exp %538 : vector<8x256xf32>
    %cst_139 = arith.constant 1.000000e+00 : f32
    %540 = vector.broadcast %cst_139 : f32 to vector<8x256xf32>
    %541 = arith.addf %540, %539 : vector<8x256xf32>
    %542 = arith.divf %540, %541 : vector<8x256xf32>
    %543 = arith.mulf %534, %514 : vector<8x256xf32>
    %544 = arith.mulf %528, %536 : vector<8x256xf32>
    %545 = arith.addf %543, %544 : vector<8x256xf32>
    %546 = math.tanh %545 : vector<8x256xf32>
    %547 = arith.mulf %542, %546 : vector<8x256xf32>
    %c8_i32_140 = arith.constant 8 : i32
    %c0_141 = arith.constant 0 : index
    %c0_142 = arith.constant 0 : index
    %548 = vector.load %arg4[%c0_141, %c0_142] : memref<8x256xf32, #tpu.memory_space<vmem>>, vector<8x256xf32>
    tpu.vector_store %arg4[%c0_141, %c0_142], %547 {strides = array<i32>} : memref<8x256xf32, #tpu.memory_space<vmem>>, vector<8x256xf32>,
    %c0_143 = arith.constant 0 : index
    %c0_144 = arith.constant 0 : index
    %549 = vector.load %arg5[%c0_143, %c0_144] : memref<8x256xf32, #tpu.memory_space<vmem>>, vector<8x256xf32>
    tpu.vector_store %arg5[%c0_143, %c0_144], %545 {strides = array<i32>} : memref<8x256xf32, #tpu.memory_space<vmem>>, vector<8x256xf32>,
    return
  }
}

</mosaic_0001>

<llo_original>
// kernel: encoder_forward.1
$region0: #{encoder_forward.1}
  #allocation0 [shape = 'u32[]', space=smem, size = 0x4, offset = 0x4, fixed_abs, tag = 'smem constant byte address 0x4 - core index']
  #allocation1 [shape = 'u32[72,128]{1,0:T(1,128)}', space=vmem, size = 0x9000, scoped, tag = 'internal scratch']
  #allocation2 [shape = 'f32[8,8,256]{2,1,0:T(8,128)}', space=vmem, size = 0x10000, scoped, tag = 'scratch operand']
  #allocation3 [shape = 'f32[8,8,1024]{2,1,0:T(8,128)}', space=vmem, size = 0x40000, scoped, tag = 'scratch operand']
  %s0 = inlined_call_operand.vmem [shape: f32[8,8,1024], index: 0, kind: input, shape index: {}]
  %s1 = inlined_call_operand.vmem [shape: bf16[1,256,1024], index: 1, kind: input, shape index: {}]
  %s2 = inlined_call_operand.vmem [shape: bf16[2,256,1024], index: 2, kind: input, shape index: {}]
  %s3 = inlined_call_operand.vmem [shape: f32[1,1,1024], index: 3, kind: input, shape index: {}]
  %s4 = inlined_call_operand.vmem [shape: f32[8,256], index: 4, kind: output, shape index: {0}]
  %s5 = inlined_call_operand.vmem [shape: f32[8,256], index: 5, kind: output, shape index: {1}]
  %6 = xla_tuple %s4, %s5
  %s7 = sld [smem:[#allocation0]]
  $region34: #{encoder_forward.1} parent=0
    _
  %s9 = ssub.s32 1, %s7
  %s10 = scalar_select 0, %s9, %s7
  // Predicated region
  $region2: #{encoder_forward.1} parent=0 // pred_check
    _
  $region3: #{encoder_forward.1} parent=0 // pred_check_branch
    %12 = sbr.rel (0) target = $region5
  $region4: #{encoder_forward.1} parent=0 // pred_region
    _
  $region5: #{encoder_forward.1} parent=0 // pred_fallthru
    _
  // Predicated region
  $region6: #{encoder_forward.1} parent=0 // pred_check
    _
  $region7: #{encoder_forward.1} parent=0 // pred_check_branch
    %14 = sbr.rel (0) target = $region9
  $region8: #{encoder_forward.1} parent=0 // pred_region
    _
  $region9: #{encoder_forward.1} parent=0 // pred_fallthru
    _
  // Predicated region
  $region10: #{encoder_forward.1} parent=0 // pred_check
    _
  $region11: #{encoder_forward.1} parent=0 // pred_check_branch
    %16 = sbr.rel (0) target = $region13
  $region12: #{encoder_forward.1} parent=0 // pred_region
    _
  $region13: #{encoder_forward.1} parent=0 // pred_fallthru
    _
  // Predicated region
  $region14: #{encoder_forward.1} parent=0 // pred_check
    _
  $region15: #{encoder_forward.1} parent=0 // pred_check_branch
    %18 = sbr.rel (0) target = $region17
  $region16: #{encoder_forward.1} parent=0 // pred_region
    _
  $region17: #{encoder_forward.1} parent=0 // pred_fallthru
    _
  %v20 = vld [vmem:[%s2] sm:$0xff]
  %v21 = vld [vmem:[%s2 + $0x8] sm:$0xff]
  %v22 = vld [vmem:[%s2 + $0x10] sm:$0xff]
  %v23 = vld [vmem:[%s2 + $0x18] sm:$0xff]
  %v24 = vld [vmem:[%s2 + $0x20] sm:$0xff]
  %v25 = vld [vmem:[%s2 + $0x28] sm:$0xff]
  %v26 = vld [vmem:[%s2 + $0x30] sm:$0xff]
  %v27 = vld [vmem:[%s2 + $0x38] sm:$0xff]
  %v28 = vld [vmem:[%s2 + $0x40] sm:$0xff]
  %v29 = vld [vmem:[%s2 + $0x48] sm:$0xff]
  %v30 = vld [vmem:[%s2 + $0x50] sm:$0xff]
  %v31 = vld [vmem:[%s2 + $0x58] sm:$0xff]
  %v32 = vld [vmem:[%s2 + $0x60] sm:$0xff]
  %v33 = vld [vmem:[%s2 + $0x68] sm:$0xff]
  %v34 = vld [vmem:[%s2 + $0x70] sm:$0xff]
  %v35 = vld [vmem:[%s2 + $0x78] sm:$0xff]
  %v36 = vld [vmem:[%s2 + $0x80] sm:$0xff]
  %v37 = vld [vmem:[%s2 + $0x88] sm:$0xff]
  %v38 = vld [vmem:[%s2 + $0x90] sm:$0xff]
  %v39 = vld [vmem:[%s2 + $0x98] sm:$0xff]
  %v40 = vld [vmem:[%s2 + $0xa0] sm:$0xff]
  %v41 = vld [vmem:[%s2 + $0xa8] sm:$0xff]
  %v42 = vld [vmem:[%s2 + $0xb0] sm:$0xff]
  %v43 = vld [vmem:[%s2 + $0xb8] sm:$0xff]
  %v44 = vld [vmem:[%s2 + $0xc0] sm:$0xff]
  %v45 = vld [vmem:[%s2 + $0xc8] sm:$0xff]
  %v46 = vld [vmem:[%s2 + $0xd0] sm:$0xff]
  %v47 = vld [vmem:[%s2 + $0xd8] sm:$0xff]
  %v48 = vld [vmem:[%s2 + $0xe0] sm:$0xff]
  %v49 = vld [vmem:[%s2 + $0xe8] sm:$0xff]
  %v50 = vld [vmem:[%s2 + $0xf0] sm:$0xff]
  %v51 = vld [vmem:[%s2 + $0xf8] sm:$0xff]
  %v52 = vld [vmem:[%s2 + $0x100] sm:$0xff]
  %v53 = vld [vmem:[%s2 + $0x108] sm:$0xff]
  %v54 = vld [vmem:[%s2 + $0x110] sm:$0xff]
  %v55 = vld [vmem:[%s2 + $0x118] sm:$0xff]
  %v56 = vld [vmem:[%s2 + $0x120] sm:$0xff]
  %v57 = vld [vmem:[%s2 + $0x128] sm:$0xff]
  %v58 = vld [vmem:[%s2 + $0x130] sm:$0xff]
  %v59 = vld [vmem:[%s2 + $0x138] sm:$0xff]
  %v60 = vld [vmem:[%s2 + $0x140] sm:$0xff]
  %v61 = vld [vmem:[%s2 + $0x148] sm:$0xff]
  %v62 = vld [vmem:[%s2 + $0x150] sm:$0xff]
  %v63 = vld [vmem:[%s2 + $0x158] sm:$0xff]
  %v64 = vld [vmem:[%s2 + $0x160] sm:$0xff]
  %v65 = vld [vmem:[%s2 + $0x168] sm:$0xff]
  %v66 = vld [vmem:[%s2 + $0x170] sm:$0xff]
  %v67 = vld [vmem:[%s2 + $0x178] sm:$0xff]
  %v68 = vld [vmem:[%s2 + $0x180] sm:$0xff]
  %v69 = vld [vmem:[%s2 + $0x188] sm:$0xff]
  %v70 = vld [vmem:[%s2 + $0x190] sm:$0xff]
  %v71 = vld [vmem:[%s2 + $0x198] sm:$0xff]
  %v72 = vld [vmem:[%s2 + $0x1a0] sm:$0xff]
  %v73 = vld [vmem:[%s2 + $0x1a8] sm:$0xff]
  %v74 = vld [vmem:[%s2 + $0x1b0] sm:$0xff]
  %v75 = vld [vmem:[%s2 + $0x1b8] sm:$0xff]
  %v76 = vld [vmem:[%s2 + $0x1c0] sm:$0xff]
  %v77 = vld [vmem:[%s2 + $0x1c8] sm:$0xff]
  %v78 = vld [vmem:[%s2 + $0x1d0] sm:$0xff]
  %v79 = vld [vmem:[%s2 + $0x1d8] sm:$0xff]
  %v80 = vld [vmem:[%s2 + $0x1e0] sm:$0xff]
  %v81 = vld [vmem:[%s2 + $0x1e8] sm:$0xff]
  %v82 = vld [vmem:[%s2 + $0x1f0] sm:$0xff]
  %v83 = vld [vmem:[%s2 + $0x1f8] sm:$0xff]
  %v84 = vld [vmem:[%s2 + $0x200] sm:$0xff]
  %v85 = vld [vmem:[%s2 + $0x208] sm:$0xff]
  %v86 = vld [vmem:[%s2 + $0x210] sm:$0xff]
  %v87 = vld [vmem:[%s2 + $0x218] sm:$0xff]
  %v88 = vld [vmem:[%s2 + $0x220] sm:$0xff]
  %v89 = vld [vmem:[%s2 + $0x228] sm:$0xff]
  %v90 = vld [vmem:[%s2 + $0x230] sm:$0xff]
  %v91 = vld [vmem:[%s2 + $0x238] sm:$0xff]
  %v92 = vld [vmem:[%s2 + $0x240] sm:$0xff]
  %v93 = vld [vmem:[%s2 + $0x248] sm:$0xff]
  %v94 = vld [vmem:[%s2 + $0x250] sm:$0xff]
  %v95 = vld [vmem:[%s2 + $0x258] sm:$0xff]
  %v96 = vld [vmem:[%s2 + $0x260] sm:$0xff]
  %v97 = vld [vmem:[%s2 + $0x268] sm:$0xff]
  %v98 = vld [vmem:[%s2 + $0x270] sm:$0xff]
  %v99 = vld [vmem:[%s2 + $0x278] sm:$0xff]
  %v100 = vld [vmem:[%s2 + $0x280] sm:$0xff]
  %v101 = vld [vmem:[%s2 + $0x288] sm:$0xff]
  %v102 = vld [vmem:[%s2 + $0x290] sm:$0xff]
  %v103 = vld [vmem:[%s2 + $0x298] sm:$0xff]
  %v104 = vld [vmem:[%s2 + $0x2a0] sm:$0xff]
  %v105 = vld [vmem:[%s2 + $0x2a8] sm:$0xff]
  %v106 = vld [vmem:[%s2 + $0x2b0] sm:$0xff]
  %v107 = vld [vmem:[%s2 + $0x2b8] sm:$0xff]
  %v108 = vld [vmem:[%s2 + $0x2c0] sm:$0xff]
  %v109 = vld [vmem:[%s2 + $0x2c8] sm:$0xff]
  %v110 = vld [vmem:[%s2 + $0x2d0] sm:$0xff]
  %v111 = vld [vmem:[%s2 + $0x2d8] sm:$0xff]
  %v112 = vld [vmem:[%s2 + $0x2e0] sm:$0xff]
  %v113 = vld [vmem:[%s2 + $0x2e8] sm:$0xff]
  %v114 = vld [vmem:[%s2 + $0x2f0] sm:$0xff]
  %v115 = vld [vmem:[%s2 + $0x2f8] sm:$0xff]
  %v116 = vld [vmem:[%s2 + $0x300] sm:$0xff]
  %v117 = vld [vmem:[%s2 + $0x308] sm:$0xff]
  %v118 = vld [vmem:[%s2 + $0x310] sm:$0xff]
  %v119 = vld [vmem:[%s2 + $0x318] sm:$0xff]
  %v120 = vld [vmem:[%s2 + $0x320] sm:$0xff]
  %v121 = vld [vmem:[%s2 + $0x328] sm:$0xff]
  %v122 = vld [vmem:[%s2 + $0x330] sm:$0xff]
  %v123 = vld [vmem:[%s2 + $0x338] sm:$0xff]
  %v124 = vld [vmem:[%s2 + $0x340] sm:$0xff]
  %v125 = vld [vmem:[%s2 + $0x348] sm:$0xff]
  %v126 = vld [vmem:[%s2 + $0x350] sm:$0xff]
  %v127 = vld [vmem:[%s2 + $0x358] sm:$0xff]
  %v128 = vld [vmem:[%s2 + $0x360] sm:$0xff]
  %v129 = vld [vmem:[%s2 + $0x368] sm:$0xff]
  %v130 = vld [vmem:[%s2 + $0x370] sm:$0xff]
  %v131 = vld [vmem:[%s2 + $0x378] sm:$0xff]
  %v132 = vld [vmem:[%s2 + $0x380] sm:$0xff]
  %v133 = vld [vmem:[%s2 + $0x388] sm:$0xff]
  %v134 = vld [vmem:[%s2 + $0x390] sm:$0xff]
  %v135 = vld [vmem:[%s2 + $0x398] sm:$0xff]
  %v136 = vld [vmem:[%s2 + $0x3a0] sm:$0xff]
  %v137 = vld [vmem:[%s2 + $0x3a8] sm:$0xff]
  %v138 = vld [vmem:[%s2 + $0x3b0] sm:$0xff]
  %v139 = vld [vmem:[%s2 + $0x3b8] sm:$0xff]
  %v140 = vld [vmem:[%s2 + $0x3c0] sm:$0xff]
  %v141 = vld [vmem:[%s2 + $0x3c8] sm:$0xff]
  %v142 = vld [vmem:[%s2 + $0x3d0] sm:$0xff]
  %v143 = vld [vmem:[%s2 + $0x3d8] sm:$0xff]
  %v144 = vld [vmem:[%s2 + $0x3e0] sm:$0xff]
  %v145 = vld [vmem:[%s2 + $0x3e8] sm:$0xff]
  %v146 = vld [vmem:[%s2 + $0x3f0] sm:$0xff]
  %v147 = vld [vmem:[%s2 + $0x3f8] sm:$0xff]
  %v148 = vld [vmem:[%s0] sm:$0xff]
  %v149 = vld [vmem:[%s0 + $0x8] sm:$0xff]
  %v150 = vld [vmem:[%s0 + $0x10] sm:$0xff]
  %v151 = vld [vmem:[%s0 + $0x18] sm:$0xff]
  %v152 = vld [vmem:[%s0 + $0x20] sm:$0xff]
  %v153 = vld [vmem:[%s0 + $0x28] sm:$0xff]
  %v154 = vld [vmem:[%s0 + $0x30] sm:$0xff]
  %v155 = vld [vmem:[%s0 + $0x38] sm:$0xff]
  %v284 = vunpack.c.l.b16 %v20
  %v285 = vunpack.c.h.b16 %v20
  %v286 = vunpack.c.l.b16 %v21
  %v287 = vunpack.c.h.b16 %v21
  %v288 = vunpack.c.l.b16 %v22
  %v289 = vunpack.c.h.b16 %v22
  %v290 = vunpack.c.l.b16 %v23
  %v291 = vunpack.c.h.b16 %v23
  %v292 = vunpack.c.l.b16 %v24
  %v293 = vunpack.c.h.b16 %v24
  %v294 = vunpack.c.l.b16 %v25
  %v295 = vunpack.c.h.b16 %v25
  %v296 = vunpack.c.l.b16 %v26
  %v297 = vunpack.c.h.b16 %v26
  %v298 = vunpack.c.l.b16 %v27
  %v299 = vunpack.c.h.b16 %v27
  %v300 = vunpack.c.l.b16 %v28
  %v301 = vunpack.c.h.b16 %v28
  %v302 = vunpack.c.l.b16 %v29
  %v303 = vunpack.c.h.b16 %v29
  %v304 = vunpack.c.l.b16 %v30
  %v305 = vunpack.c.h.b16 %v30
  %v306 = vunpack.c.l.b16 %v31
  %v307 = vunpack.c.h.b16 %v31
  %v308 = vunpack.c.l.b16 %v32
  %v309 = vunpack.c.h.b16 %v32
  %v310 = vunpack.c.l.b16 %v33
  %v311 = vunpack.c.h.b16 %v33
  %v312 = vunpack.c.l.b16 %v34
  %v313 = vunpack.c.h.b16 %v34
  %v314 = vunpack.c.l.b16 %v35
  %v315 = vunpack.c.h.b16 %v35
  %v316 = vunpack.c.l.b16 %v36
  %v317 = vunpack.c.h.b16 %v36
  %v318 = vunpack.c.l.b16 %v37
  %v319 = vunpack.c.h.b16 %v37
  %v320 = vunpack.c.l.b16 %v38
  %v321 = vunpack.c.h.b16 %v38
  %v322 = vunpack.c.l.b16 %v39
  %v323 = vunpack.c.h.b16 %v39
  %v324 = vunpack.c.l.b16 %v40
  %v325 = vunpack.c.h.b16 %v40
  %v326 = vunpack.c.l.b16 %v41
  %v327 = vunpack.c.h.b16 %v41
  %v328 = vunpack.c.l.b16 %v42
  %v329 = vunpack.c.h.b16 %v42
  %v330 = vunpack.c.l.b16 %v43
  %v331 = vunpack.c.h.b16 %v43
  %v332 = vunpack.c.l.b16 %v44
  %v333 = vunpack.c.h.b16 %v44
  %v334 = vunpack.c.l.b16 %v45
  %v335 = vunpack.c.h.b16 %v45
  %v336 = vunpack.c.l.b16 %v46
  %v337 = vunpack.c.h.b16 %v46
  %v338 = vunpack.c.l.b16 %v47
  %v339 = vunpack.c.h.b16 %v47
  %v340 = vunpack.c.l.b16 %v48
  %v341 = vunpack.c.h.b16 %v48
  %v342 = vunpack.c.l.b16 %v49
  %v343 = vunpack.c.h.b16 %v49
  %v344 = vunpack.c.l.b16 %v50
  %v345 = vunpack.c.h.b16 %v50
  %v346 = vunpack.c.l.b16 %v51
  %v347 = vunpack.c.h.b16 %v51
  %v348 = vunpack.c.l.b16 %v52
  %v349 = vunpack.c.h.b16 %v52
  %v350 = vunpack.c.l.b16 %v53
  %v351 = vunpack.c.h.b16 %v53
  %v352 = vunpack.c.l.b16 %v54
  %v353 = vunpack.c.h.b16 %v54
  %v354 = vunpack.c.l.b16 %v55
  %v355 = vunpack.c.h.b16 %v55
  %v356 = vunpack.c.l.b16 %v56
  %v357 = vunpack.c.h.b16 %v56
  %v358 = vunpack.c.l.b16 %v57
  %v359 = vunpack.c.h.b16 %v57
  %v360 = vunpack.c.l.b16 %v58
  %v361 = vunpack.c.h.b16 %v58
  %v362 = vunpack.c.l.b16 %v59
  %v363 = vunpack.c.h.b16 %v59
  %v364 = vunpack.c.l.b16 %v60
  %v365 = vunpack.c.h.b16 %v60
  %v366 = vunpack.c.l.b16 %v61
  %v367 = vunpack.c.h.b16 %v61
  %v368 = vunpack.c.l.b16 %v62
  %v369 = vunpack.c.h.b16 %v62
  %v370 = vunpack.c.l.b16 %v63
  %v371 = vunpack.c.h.b16 %v63
  %v372 = vunpack.c.l.b16 %v64
  %v373 = vunpack.c.h.b16 %v64
  %v374 = vunpack.c.l.b16 %v65
  %v375 = vunpack.c.h.b16 %v65
  %v376 = vunpack.c.l.b16 %v66
  %v377 = vunpack.c.h.b16 %v66
  %v378 = vunpack.c.l.b16 %v67
  %v379 = vunpack.c.h.b16 %v67
  %v380 = vunpack.c.l.b16 %v68
  %v381 = vunpack.c.h.b16 %v68
  %v382 = vunpack.c.l.b16 %v69
  %v383 = vunpack.c.h.b16 %v69
  %v384 = vunpack.c.l.b16 %v70
  %v385 = vunpack.c.h.b16 %v70
  %v386 = vunpack.c.l.b16 %v71
  %v387 = vunpack.c.h.b16 %v71
  %v388 = vunpack.c.l.b16 %v72
  %v389 = vunpack.c.h.b16 %v72
  %v390 = vunpack.c.l.b16 %v73
  %v391 = vunpack.c.h.b16 %v73
  %v392 = vunpack.c.l.b16 %v74
  %v393 = vunpack.c.h.b16 %v74
  %v394 = vunpack.c.l.b16 %v75
  %v395 = vunpack.c.h.b16 %v75
  %v396 = vunpack.c.l.b16 %v76
  %v397 = vunpack.c.h.b16 %v76
  %v398 = vunpack.c.l.b16 %v77
  %v399 = vunpack.c.h.b16 %v77
  %v400 = vunpack.c.l.b16 %v78
  %v401 = vunpack.c.h.b16 %v78
  %v402 = vunpack.c.l.b16 %v79
  %v403 = vunpack.c.h.b16 %v79
  %v404 = vunpack.c.l.b16 %v80
  %v405 = vunpack.c.h.b16 %v80
  %v406 = vunpack.c.l.b16 %v81
  %v407 = vunpack.c.h.b16 %v81
  %v408 = vunpack.c.l.b16 %v82
  %v409 = vunpack.c.h.b16 %v82
  %v410 = vunpack.c.l.b16 %v83
  %v411 = vunpack.c.h.b16 %v83
  %v412 = vunpack.c.l.b16 %v84
  %v413 = vunpack.c.h.b16 %v84
  %v414 = vunpack.c.l.b16 %v85
  %v415 = vunpack.c.h.b16 %v85
  %v416 = vunpack.c.l.b16 %v86
  %v417 = vunpack.c.h.b16 %v86
  %v418 = vunpack.c.l.b16 %v87
  %v419 = vunpack.c.h.b16 %v87
  %v420 = vunpack.c.l.b16 %v88
  %v421 = vunpack.c.h.b16 %v88
  %v422 = vunpack.c.l.b16 %v89
  %v423 = vunpack.c.h.b16 %v89
  %v424 = vunpack.c.l.b16 %v90
  %v425 = vunpack.c.h.b16 %v90
  %v426 = vunpack.c.l.b16 %v91
  %v427 = vunpack.c.h.b16 %v91
  %v428 = vunpack.c.l.b16 %v92
  %v429 = vunpack.c.h.b16 %v92
  %v430 = vunpack.c.l.b16 %v93
  %v431 = vunpack.c.h.b16 %v93
  %v432 = vunpack.c.l.b16 %v94
  %v433 = vunpack.c.h.b16 %v94
  %v434 = vunpack.c.l.b16 %v95
  %v435 = vunpack.c.h.b16 %v95
  %v436 = vunpack.c.l.b16 %v96
  %v437 = vunpack.c.h.b16 %v96
  %v438 = vunpack.c.l.b16 %v97
  %v439 = vunpack.c.h.b16 %v97
  %v440 = vunpack.c.l.b16 %v98
  %v441 = vunpack.c.h.b16 %v98
  %v442 = vunpack.c.l.b16 %v99
  %v443 = vunpack.c.h.b16 %v99
  %v444 = vunpack.c.l.b16 %v100
  %v445 = vunpack.c.h.b16 %v100
  %v446 = vunpack.c.l.b16 %v101
  %v447 = vunpack.c.h.b16 %v101
  %v448 = vunpack.c.l.b16 %v102
  %v449 = vunpack.c.h.b16 %v102
  %v450 = vunpack.c.l.b16 %v103
  %v451 = vunpack.c.h.b16 %v103
  %v452 = vunpack.c.l.b16 %v104
  %v453 = vunpack.c.h.b16 %v104
  %v454 = vunpack.c.l.b16 %v105
  %v455 = vunpack.c.h.b16 %v105
  %v456 = vunpack.c.l.b16 %v106
  %v457 = vunpack.c.h.b16 %v106
  %v458 = vunpack.c.l.b16 %v107
  %v459 = vunpack.c.h.b16 %v107
  %v460 = vunpack.c.l.b16 %v108
  %v461 = vunpack.c.h.b16 %v108
  %v462 = vunpack.c.l.b16 %v109
  %v463 = vunpack.c.h.b16 %v109
  %v464 = vunpack.c.l.b16 %v110
  %v465 = vunpack.c.h.b16 %v110
  %v466 = vunpack.c.l.b16 %v111
  %v467 = vunpack.c.h.b16 %v111
  %v468 = vunpack.c.l.b16 %v112
  %v469 = vunpack.c.h.b16 %v112
  %v470 = vunpack.c.l.b16 %v113
  %v471 = vunpack.c.h.b16 %v113
  %v472 = vunpack.c.l.b16 %v114
  %v473 = vunpack.c.h.b16 %v114
  %v474 = vunpack.c.l.b16 %v115
  %v475 = vunpack.c.h.b16 %v115
  %v476 = vunpack.c.l.b16 %v116
  %v477 = vunpack.c.h.b16 %v116
  %v478 = vunpack.c.l.b16 %v117
  %v479 = vunpack.c.h.b16 %v117
  %v480 = vunpack.c.l.b16 %v118
  %v481 = vunpack.c.h.b16 %v118
  %v482 = vunpack.c.l.b16 %v119
  %v483 = vunpack.c.h.b16 %v119
  %v484 = vunpack.c.l.b16 %v120
  %v485 = vunpack.c.h.b16 %v120
  %v486 = vunpack.c.l.b16 %v121
  %v487 = vunpack.c.h.b16 %v121
  %v488 = vunpack.c.l.b16 %v122
  %v489 = vunpack.c.h.b16 %v122
  %v490 = vunpack.c.l.b16 %v123
  %v491 = vunpack.c.h.b16 %v123
  %v492 = vunpack.c.l.b16 %v124
  %v493 = vunpack.c.h.b16 %v124
  %v494 = vunpack.c.l.b16 %v125
  %v495 = vunpack.c.h.b16 %v125
  %v496 = vunpack.c.l.b16 %v126
  %v497 = vunpack.c.h.b16 %v126
  %v498 = vunpack.c.l.b16 %v127
  %v499 = vunpack.c.h.b16 %v127
  %v500 = vunpack.c.l.b16 %v128
  %v501 = vunpack.c.h.b16 %v128
  %v502 = vunpack.c.l.b16 %v129
  %v503 = vunpack.c.h.b16 %v129
  %v504 = vunpack.c.l.b16 %v130
  %v505 = vunpack.c.h.b16 %v130
  %v506 = vunpack.c.l.b16 %v131
  %v507 = vunpack.c.h.b16 %v131
  %v508 = vunpack.c.l.b16 %v132
  %v509 = vunpack.c.h.b16 %v132
  %v510 = vunpack.c.l.b16 %v133
  %v511 = vunpack.c.h.b16 %v133
  %v512 = vunpack.c.l.b16 %v134
  %v513 = vunpack.c.h.b16 %v134
  %v514 = vunpack.c.l.b16 %v135
  %v515 = vunpack.c.h.b16 %v135
  %v516 = vunpack.c.l.b16 %v136
  %v517 = vunpack.c.h.b16 %v136
  %v518 = vunpack.c.l.b16 %v137
  %v519 = vunpack.c.h.b16 %v137
  %v520 = vunpack.c.l.b16 %v138
  %v521 = vunpack.c.h.b16 %v138
  %v522 = vunpack.c.l.b16 %v139
  %v523 = vunpack.c.h.b16 %v139
  %v524 = vunpack.c.l.b16 %v140
  %v525 = vunpack.c.h.b16 %v140
  %v526 = vunpack.c.l.b16 %v141
  %v527 = vunpack.c.h.b16 %v141
  %v528 = vunpack.c.l.b16 %v142
  %v529 = vunpack.c.h.b16 %v142
  %v530 = vunpack.c.l.b16 %v143
  %v531 = vunpack.c.h.b16 %v143
  %v532 = vunpack.c.l.b16 %v144
  %v533 = vunpack.c.h.b16 %v144
  %v534 = vunpack.c.l.b16 %v145
  %v535 = vunpack.c.h.b16 %v145
  %v536 = vunpack.c.l.b16 %v146
  %v537 = vunpack.c.h.b16 %v146
  %v538 = vunpack.c.l.b16 %v147
  %v539 = vunpack.c.h.b16 %v147
  %v540 = vpack.c.b16 %v292, %v284
  %v541 = vpack.c.b16 %v293, %v285
  %v542 = vpack.c.b16 %v294, %v286
  %v543 = vpack.c.b16 %v295, %v287
  %v544 = vpack.c.b16 %v296, %v288
  %v545 = vpack.c.b16 %v297, %v289
  %v546 = vpack.c.b16 %v298, %v290
  %v547 = vpack.c.b16 %v299, %v291
  %v548 = vpack.c.b16 %v308, %v300
  %v549 = vpack.c.b16 %v309, %v301
  %v550 = vpack.c.b16 %v310, %v302
  %v551 = vpack.c.b16 %v311, %v303
  %v552 = vpack.c.b16 %v312, %v304
  %v553 = vpack.c.b16 %v313, %v305
  %v554 = vpack.c.b16 %v314, %v306
  %v555 = vpack.c.b16 %v315, %v307
  %v556 = vpack.c.b16 %v324, %v316
  %v557 = vpack.c.b16 %v325, %v317
  %v558 = vpack.c.b16 %v326, %v318
  %v559 = vpack.c.b16 %v327, %v319
  %v560 = vpack.c.b16 %v328, %v320
  %v561 = vpack.c.b16 %v329, %v321
  %v562 = vpack.c.b16 %v330, %v322
  %v563 = vpack.c.b16 %v331, %v323
  %v564 = vpack.c.b16 %v340, %v332
  %v565 = vpack.c.b16 %v341, %v333
  %v566 = vpack.c.b16 %v342, %v334
  %v567 = vpack.c.b16 %v343, %v335
  %v568 = vpack.c.b16 %v344, %v336
  %v569 = vpack.c.b16 %v345, %v337
  %v570 = vpack.c.b16 %v346, %v338
  %v571 = vpack.c.b16 %v347, %v339
  %v572 = vpack.c.b16 %v356, %v348
  %v573 = vpack.c.b16 %v357, %v349
  %v574 = vpack.c.b16 %v358, %v350
  %v575 = vpack.c.b16 %v359, %v351
  %v576 = vpack.c.b16 %v360, %v352
  %v577 = vpack.c.b16 %v361, %v353
  %v578 = vpack.c.b16 %v362, %v354
  %v579 = vpack.c.b16 %v363, %v355
  %v580 = vpack.c.b16 %v372, %v364
  %v581 = vpack.c.b16 %v373, %v365
  %v582 = vpack.c.b16 %v374, %v366
  %v583 = vpack.c.b16 %v375, %v367
  %v584 = vpack.c.b16 %v376, %v368
  %v585 = vpack.c.b16 %v377, %v369
  %v586 = vpack.c.b16 %v378, %v370
  %v587 = vpack.c.b16 %v379, %v371
  %v588 = vpack.c.b16 %v388, %v380
  %v589 = vpack.c.b16 %v389, %v381
  %v590 = vpack.c.b16 %v390, %v382
  %v591 = vpack.c.b16 %v391, %v383
  %v592 = vpack.c.b16 %v392, %v384
  %v593 = vpack.c.b16 %v393, %v385
  %v594 = vpack.c.b16 %v394, %v386
  %v595 = vpack.c.b16 %v395, %v387
  %v596 = vpack.c.b16 %v404, %v396
  %v597 = vpack.c.b16 %v405, %v397
  %v598 = vpack.c.b16 %v406, %v398
  %v599 = vpack.c.b16 %v407, %v399
  %v600 = vpack.c.b16 %v408, %v400
  %v601 = vpack.c.b16 %v409, %v401
  %v602 = vpack.c.b16 %v410, %v402
  %v603 = vpack.c.b16 %v411, %v403
  %v604 = vpack.c.b16 %v420, %v412
  %v605 = vpack.c.b16 %v421, %v413
  %v606 = vpack.c.b16 %v422, %v414
  %v607 = vpack.c.b16 %v423, %v415
  %v608 = vpack.c.b16 %v424, %v416
  %v609 = vpack.c.b16 %v425, %v417
  %v610 = vpack.c.b16 %v426, %v418
  %v611 = vpack.c.b16 %v427, %v419
  %v612 = vpack.c.b16 %v436, %v428
  %v613 = vpack.c.b16 %v437, %v429
  %v614 = vpack.c.b16 %v438, %v430
  %v615 = vpack.c.b16 %v439, %v431
  %v616 = vpack.c.b16 %v440, %v432
  %v617 = vpack.c.b16 %v441, %v433
  %v618 = vpack.c.b16 %v442, %v434
  %v619 = vpack.c.b16 %v443, %v435
  %v620 = vpack.c.b16 %v452, %v444
  %v621 = vpack.c.b16 %v453, %v445
  %v622 = vpack.c.b16 %v454, %v446
  %v623 = vpack.c.b16 %v455, %v447
  %v624 = vpack.c.b16 %v456, %v448
  %v625 = vpack.c.b16 %v457, %v449
  %v626 = vpack.c.b16 %v458, %v450
  %v627 = vpack.c.b16 %v459, %v451
  %v628 = vpack.c.b16 %v468, %v460
  %v629 = vpack.c.b16 %v469, %v461
  %v630 = vpack.c.b16 %v470, %v462
  %v631 = vpack.c.b16 %v471, %v463
  %v632 = vpack.c.b16 %v472, %v464
  %v633 = vpack.c.b16 %v473, %v465
  %v634 = vpack.c.b16 %v474, %v466
  %v635 = vpack.c.b16 %v475, %v467
  %v636 = vpack.c.b16 %v484, %v476
  %v637 = vpack.c.b16 %v485, %v477
  %v638 = vpack.c.b16 %v486, %v478
  %v639 = vpack.c.b16 %v487, %v479
  %v640 = vpack.c.b16 %v488, %v480
  %v641 = vpack.c.b16 %v489, %v481
  %v642 = vpack.c.b16 %v490, %v482
  %v643 = vpack.c.b16 %v491, %v483
  %v644 = vpack.c.b16 %v500, %v492
  %v645 = vpack.c.b16 %v501, %v493
  %v646 = vpack.c.b16 %v502, %v494
  %v647 = vpack.c.b16 %v503, %v495
  %v648 = vpack.c.b16 %v504, %v496
  %v649 = vpack.c.b16 %v505, %v497
  %v650 = vpack.c.b16 %v506, %v498
  %v651 = vpack.c.b16 %v507, %v499
  %v652 = vpack.c.b16 %v516, %v508
  %v653 = vpack.c.b16 %v517, %v509
  %v654 = vpack.c.b16 %v518, %v510
  %v655 = vpack.c.b16 %v519, %v511
  %v656 = vpack.c.b16 %v520, %v512
  %v657 = vpack.c.b16 %v521, %v513
  %v658 = vpack.c.b16 %v522, %v514
  %v659 = vpack.c.b16 %v523, %v515
  %v660 = vpack.c.b16 %v532, %v524
  %v661 = vpack.c.b16 %v533, %v525
  %v662 = vpack.c.b16 %v534, %v526
  %v663 = vpack.c.b16 %v535, %v527
  %v664 = vpack.c.b16 %v536, %v528
  %v665 = vpack.c.b16 %v537, %v529
  %v666 = vpack.c.b16 %v538, %v530
  %v667 = vpack.c.b16 %v539, %v531
  %796 = vmatpush.bf16.msra.mxu0 %v596
  %797 = vmatpush.bf16.msra.mxu0 %v588
  %798 = vmatpush.bf16.msra.mxu0 %v580
  %799 = vmatpush.bf16.msra.mxu0 %v572
  %800 = vmatpush.bf16.msra.mxu0 %v564
  %801 = vmatpush.bf16.msra.mxu0 %v556
  %802 = vmatpush.bf16.msra.mxu0 %v548
  %803 = vmatpush.bf16.msra.mxu0 %v540
  %804 = vmatmul.bf16.gmra.mxu0 0
  %v805 = vpop.f32.mrf.mxu0
  %v806 = vadd.f32 0.0, %v805
  %v807 = vpop.f32.mrf.mxu0
  %808 = vdwg.mxu0
  %809 = vmatpush.bf16.msra.mxu0 %v660
  %810 = vmatpush.bf16.msra.mxu0 %v652
  %811 = vmatpush.bf16.msra.mxu0 %v644
  %812 = vmatpush.bf16.msra.mxu0 %v636
  %813 = vmatpush.bf16.msra.mxu0 %v628
  %814 = vmatpush.bf16.msra.mxu0 %v620
  %815 = vmatpush.bf16.msra.mxu0 %v612
  %816 = vmatpush.bf16.msra.mxu0 %v604
  %817 = vmatmul.bf16.gmra.mxu0 0
  %v818 = vpop.f32.mrf.mxu0
  %v819 = vadd.f32 %v806, %v818
  %v820 = vpop.f32.mrf.mxu0
  %821 = vdwg.mxu0
  %822 = vmatpush.bf16.msra.mxu0 %v597
  %823 = vmatpush.bf16.msra.mxu0 %v589
  %824 = vmatpush.bf16.msra.mxu0 %v581
  %825 = vmatpush.bf16.msra.mxu0 %v573
  %826 = vmatpush.bf16.msra.mxu0 %v565
  %827 = vmatpush.bf16.msra.mxu0 %v557
  %828 = vmatpush.bf16.msra.mxu0 %v549
  %829 = vmatpush.bf16.msra.mxu0 %v541
  %830 = vmatmul.bf16.gmra.mxu0 0
  %v831 = vpop.f32.mrf.mxu0
  %v832 = vadd.f32 0.0, %v831
  %v833 = vpop.f32.mrf.mxu0
  %834 = vdwg.mxu0
  %835 = vmatpush.bf16.msra.mxu0 %v661
  %836 = vmatpush.bf16.msra.mxu0 %v653
  %837 = vmatpush.bf16.msra.mxu0 %v645
  %838 = vmatpush.bf16.msra.mxu0 %v637
  %839 = vmatpush.bf16.msra.mxu0 %v629
  %840 = vmatpush.bf16.msra.mxu0 %v621
  %841 = vmatpush.bf16.msra.mxu0 %v613
  %842 = vmatpush.bf16.msra.mxu0 %v605
  %843 = vmatmul.bf16.gmra.mxu0 0
  %v844 = vpop.f32.mrf.mxu0
  %v845 = vadd.f32 %v832, %v844
  %v846 = vpop.f32.mrf.mxu0
  %847 = vdwg.mxu0
  %848 = vmatpush.bf16.msra.mxu0 %v598
  %849 = vmatpush.bf16.msra.mxu0 %v590
  %850 = vmatpush.bf16.msra.mxu0 %v582
  %851 = vmatpush.bf16.msra.mxu0 %v574
  %852 = vmatpush.bf16.msra.mxu0 %v566
  %853 = vmatpush.bf16.msra.mxu0 %v558
  %854 = vmatpush.bf16.msra.mxu0 %v550
  %855 = vmatpush.bf16.msra.mxu0 %v542
  %856 = vmatmul.bf16.gmra.mxu0 0
  %v857 = vpop.f32.mrf.mxu0
  %v858 = vadd.f32 0.0, %v857
  %v859 = vpop.f32.mrf.mxu0
  %860 = vdwg.mxu0
  %861 = vmatpush.bf16.msra.mxu0 %v662
  %862 = vmatpush.bf16.msra.mxu0 %v654
  %863 = vmatpush.bf16.msra.mxu0 %v646
  %864 = vmatpush.bf16.msra.mxu0 %v638
  %865 = vmatpush.bf16.msra.mxu0 %v630
  %866 = vmatpush.bf16.msra.mxu0 %v622
  %867 = vmatpush.bf16.msra.mxu0 %v614
  %868 = vmatpush.bf16.msra.mxu0 %v606
  %869 = vmatmul.bf16.gmra.mxu0 0
  %v870 = vpop.f32.mrf.mxu0
  %v871 = vadd.f32 %v858, %v870
  %v872 = vpop.f32.mrf.mxu0
  %873 = vdwg.mxu0
  %874 = vmatpush.bf16.msra.mxu0 %v599
  %875 = vmatpush.bf16.msra.mxu0 %v591
  %876 = vmatpush.bf16.msra.mxu0 %v583
  %877 = vmatpush.bf16.msra.mxu0 %v575
  %878 = vmatpush.bf16.msra.mxu0 %v567
  %879 = vmatpush.bf16.msra.mxu0 %v559
  %880 = vmatpush.bf16.msra.mxu0 %v551
  %881 = vmatpush.bf16.msra.mxu0 %v543
  %882 = vmatmul.bf16.gmra.mxu0 0
  %v883 = vpop.f32.mrf.mxu0
  %v884 = vadd.f32 0.0, %v883
  %v885 = vpop.f32.mrf.mxu0
  %886 = vdwg.mxu0
  %887 = vmatpush.bf16.msra.mxu0 %v663
  %888 = vmatpush.bf16.msra.mxu0 %v655
  %889 = vmatpush.bf16.msra.mxu0 %v647
  %890 = vmatpush.bf16.msra.mxu0 %v639
  %891 = vmatpush.bf16.msra.mxu0 %v631
  %892 = vmatpush.bf16.msra.mxu0 %v623
  %893 = vmatpush.bf16.msra.mxu0 %v615
  %894 = vmatpush.bf16.msra.mxu0 %v607
  %895 = vmatmul.bf16.gmra.mxu0 0
  %v896 = vpop.f32.mrf.mxu0
  %v897 = vadd.f32 %v884, %v896
  %v898 = vpop.f32.mrf.mxu0
  %899 = vdwg.mxu0
  %900 = vmatpush.bf16.msra.mxu0 %v600
  %901 = vmatpush.bf16.msra.mxu0 %v592
  %902 = vmatpush.bf16.msra.mxu0 %v584
  %903 = vmatpush.bf16.msra.mxu0 %v576
  %904 = vmatpush.bf16.msra.mxu0 %v568
  %905 = vmatpush.bf16.msra.mxu0 %v560
  %906 = vmatpush.bf16.msra.mxu0 %v552
  %907 = vmatpush.bf16.msra.mxu0 %v544
  %908 = vmatmul.bf16.gmra.mxu0 0
  %v909 = vpop.f32.mrf.mxu0
  %v910 = vadd.f32 0.0, %v909
  %v911 = vpop.f32.mrf.mxu0
  %912 = vdwg.mxu0
  %913 = vmatpush.bf16.msra.mxu0 %v664
  %914 = vmatpush.bf16.msra.mxu0 %v656
  %915 = vmatpush.bf16.msra.mxu0 %v648
  %916 = vmatpush.bf16.msra.mxu0 %v640
  %917 = vmatpush.bf16.msra.mxu0 %v632
  %918 = vmatpush.bf16.msra.mxu0 %v624
  %919 = vmatpush.bf16.msra.mxu0 %v616
  %920 = vmatpush.bf16.msra.mxu0 %v608
  %921 = vmatmul.bf16.gmra.mxu0 0
  %v922 = vpop.f32.mrf.mxu0
  %v923 = vadd.f32 %v910, %v922
  %v924 = vpop.f32.mrf.mxu0
  %925 = vdwg.mxu0
  %926 = vmatpush.bf16.msra.mxu0 %v601
  %927 = vmatpush.bf16.msra.mxu0 %v593
  %928 = vmatpush.bf16.msra.mxu0 %v585
  %929 = vmatpush.bf16.msra.mxu0 %v577
  %930 = vmatpush.bf16.msra.mxu0 %v569
  %931 = vmatpush.bf16.msra.mxu0 %v561
  %932 = vmatpush.bf16.msra.mxu0 %v553
  %933 = vmatpush.bf16.msra.mxu0 %v545
  %934 = vmatmul.bf16.gmra.mxu0 0
  %v935 = vpop.f32.mrf.mxu0
  %v936 = vadd.f32 0.0, %v935
  %v937 = vpop.f32.mrf.mxu0
  %938 = vdwg.mxu0
  %939 = vmatpush.bf16.msra.mxu0 %v665
  %940 = vmatpush.bf16.msra.mxu0 %v657
  %941 = vmatpush.bf16.msra.mxu0 %v649
  %942 = vmatpush.bf16.msra.mxu0 %v641
  %943 = vmatpush.bf16.msra.mxu0 %v633
  %944 = vmatpush.bf16.msra.mxu0 %v625
  %945 = vmatpush.bf16.msra.mxu0 %v617
  %946 = vmatpush.bf16.msra.mxu0 %v609
  %947 = vmatmul.bf16.gmra.mxu0 0
  %v948 = vpop.f32.mrf.mxu0
  %v949 = vadd.f32 %v936, %v948
  %v950 = vpop.f32.mrf.mxu0
  %951 = vdwg.mxu0
  %952 = vmatpush.bf16.msra.mxu0 %v602
  %953 = vmatpush.bf16.msra.mxu0 %v594
  %954 = vmatpush.bf16.msra.mxu0 %v586
  %955 = vmatpush.bf16.msra.mxu0 %v578
  %956 = vmatpush.bf16.msra.mxu0 %v570
  %957 = vmatpush.bf16.msra.mxu0 %v562
  %958 = vmatpush.bf16.msra.mxu0 %v554
  %959 = vmatpush.bf16.msra.mxu0 %v546
  %960 = vmatmul.bf16.gmra.mxu0 0
  %v961 = vpop.f32.mrf.mxu0
  %v962 = vadd.f32 0.0, %v961
  %v963 = vpop.f32.mrf.mxu0
  %964 = vdwg.mxu0
  %965 = vmatpush.bf16.msra.mxu0 %v666
  %966 = vmatpush.bf16.msra.mxu0 %v658
  %967 = vmatpush.bf16.msra.mxu0 %v650
  %968 = vmatpush.bf16.msra.mxu0 %v642
  %969 = vmatpush.bf16.msra.mxu0 %v634
  %970 = vmatpush.bf16.msra.mxu0 %v626
  %971 = vmatpush.bf16.msra.mxu0 %v618
  %972 = vmatpush.bf16.msra.mxu0 %v610
  %973 = vmatmul.bf16.gmra.mxu0 0
  %v974 = vpop.f32.mrf.mxu0
  %v975 = vadd.f32 %v962, %v974
  %v976 = vpop.f32.mrf.mxu0
  %977 = vdwg.mxu0
  %978 = vmatpush.bf16.msra.mxu0 %v603
  %979 = vmatpush.bf16.msra.mxu0 %v595
  %980 = vmatpush.bf16.msra.mxu0 %v587
  %981 = vmatpush.bf16.msra.mxu0 %v579
  %982 = vmatpush.bf16.msra.mxu0 %v571
  %983 = vmatpush.bf16.msra.mxu0 %v563
  %984 = vmatpush.bf16.msra.mxu0 %v555
  %985 = vmatpush.bf16.msra.mxu0 %v547
  %986 = vmatmul.bf16.gmra.mxu0 0
  %v987 = vpop.f32.mrf.mxu0
  %v988 = vadd.f32 0.0, %v987
  %v989 = vpop.f32.mrf.mxu0
  %990 = vdwg.mxu0
  %991 = vmatpush.bf16.msra.mxu0 %v667
  %992 = vmatpush.bf16.msra.mxu0 %v659
  %993 = vmatpush.bf16.msra.mxu0 %v651
  %994 = vmatpush.bf16.msra.mxu0 %v643
  %995 = vmatpush.bf16.msra.mxu0 %v635
  %996 = vmatpush.bf16.msra.mxu0 %v627
  %997 = vmatpush.bf16.msra.mxu0 %v619
  %998 = vmatpush.bf16.msra.mxu0 %v611
  %999 = vmatmul.bf16.gmra.mxu0 0
  %v1000 = vpop.f32.mrf.mxu0
  %v1001 = vadd.f32 %v988, %v1000
  %v1002 = vpop.f32.mrf.mxu0
  %1003 = vdwg.mxu0
  %v1004 = vadd.f32 %v148, %v819
  %v1005 = vadd.f32 %v149, %v845
  %v1006 = vadd.f32 %v150, %v871
  %v1007 = vadd.f32 %v151, %v897
  %v1008 = vadd.f32 %v152, %v923
  %v1009 = vadd.f32 %v153, %v949
  %v1010 = vadd.f32 %v154, %v975
  %v1011 = vadd.f32 %v155, %v1001
  %v1012 = vxor.u32 %v1004, 2147483648
  %v1013 = vxor.u32 %v1005, 2147483648
  %v1014 = vmul.f32 %v1012, 1.442695
  %v1015 = vpow.pop %v1014
  %v1016 = vmul.f32 %v1013, 1.442695
  %v1017 = vpow.pop %v1016
  %v1018 = vadd.f32 %v1015, 1.0
  %v1019 = vadd.f32 %v1017, 1.0
  %v1020 = vrcp.pop %v1018
  %v1021 = vmul.f32 %v1018, %v1020
  %v1022 = vsub.f32 1.0, %v1021
  %v1023 = vmul.f32 %v1020, %v1022
  %v1024 = vadd.f32 %v1020, %v1023
  %vm1025 = vweird.f32 %v1018
  %vm1026 = vweird.f32 %v1020
  %vm1027 = vmor %vm1025, %vm1026
  %v1028 = vsel %vm1027, %v1020, %v1024
  %v1029 = vand.u32 2147483647, %v1018
  %vm1030 = vcmp.eq.f32.partialorder %v1029, 8.507059e+37
  %v1031 = vand.u32 %v1018, 2147483648
  %v1032 = vor.u32 1.1754944e-38, %v1031
  %v1033 = vsel %vm1030, %v1032, %v1028
  %v1034 = vmul.f32 1.0, %v1033
  %v1035 = vrcp.pop %v1019
  %v1036 = vmul.f32 %v1019, %v1035
  %v1037 = vsub.f32 1.0, %v1036
  %v1038 = vmul.f32 %v1035, %v1037
  %v1039 = vadd.f32 %v1035, %v1038
  %vm1040 = vweird.f32 %v1019
  %vm1041 = vweird.f32 %v1035
  %vm1042 = vmor %vm1040, %vm1041
  %v1043 = vsel %vm1042, %v1035, %v1039
  %v1044 = vand.u32 2147483647, %v1019
  %vm1045 = vcmp.eq.f32.partialorder %v1044, 8.507059e+37
  %v1046 = vand.u32 %v1019, 2147483648
  %v1047 = vor.u32 1.1754944e-38, %v1046
  %v1048 = vsel %vm1045, %v1047, %v1043
  %v1049 = vmul.f32 1.0, %v1048
  %v1050 = vxor.u32 %v1006, 2147483648
  %v1051 = vxor.u32 %v1007, 2147483648
  %v1052 = vmul.f32 %v1050, 1.442695
  %v1053 = vpow.pop %v1052
  %v1054 = vmul.f32 %v1051, 1.442695
  %v1055 = vpow.pop %v1054
  %v1056 = vadd.f32 %v1053, 1.0
  %v1057 = vadd.f32 %v1055, 1.0
  %v1058 = vrcp.pop %v1056
  %v1059 = vmul.f32 %v1056, %v1058
  %v1060 = vsub.f32 1.0, %v1059
  %v1061 = vmul.f32 %v1058, %v1060
  %v1062 = vadd.f32 %v1058, %v1061
  %vm1063 = vweird.f32 %v1056
  %vm1064 = vweird.f32 %v1058
  %vm1065 = vmor %vm1063, %vm1064
  %v1066 = vsel %vm1065, %v1058, %v1062
  %v1067 = vand.u32 2147483647, %v1056
  %vm1068 = vcmp.eq.f32.partialorder %v1067, 8.507059e+37
  %v1069 = vand.u32 %v1056, 2147483648
  %v1070 = vor.u32 1.1754944e-38, %v1069
  %v1071 = vsel %vm1068, %v1070, %v1066
  %v1072 = vmul.f32 1.0, %v1071
  %v1073 = vrcp.pop %v1057
  %v1074 = vmul.f32 %v1057, %v1073
  %v1075 = vsub.f32 1.0, %v1074
  %v1076 = vmul.f32 %v1073, %v1075
  %v1077 = vadd.f32 %v1073, %v1076
  %vm1078 = vweird.f32 %v1057
  %vm1079 = vweird.f32 %v1073
  %vm1080 = vmor %vm1078, %vm1079
  %v1081 = vsel %vm1080, %v1073, %v1077
  %v1082 = vand.u32 2147483647, %v1057
  %vm1083 = vcmp.eq.f32.partialorder %v1082, 8.507059e+37
  %v1084 = vand.u32 %v1057, 2147483648
  %v1085 = vor.u32 1.1754944e-38, %v1084
  %v1086 = vsel %vm1083, %v1085, %v1081
  %v1087 = vmul.f32 1.0, %v1086
  %v1088 = vtanh.pop %v1008
  %v1089 = vtanh.pop %v1009
  %v1090 = vxor.u32 %v1010, 2147483648
  %v1091 = vxor.u32 %v1011, 2147483648
  %v1092 = vmul.f32 %v1090, 1.442695
  %v1093 = vpow.pop %v1092
  %v1094 = vmul.f32 %v1091, 1.442695
  %v1095 = vpow.pop %v1094
  %v1096 = vadd.f32 %v1093, 1.0
  %v1097 = vadd.f32 %v1095, 1.0
  %v1098 = vrcp.pop %v1096
  %v1099 = vmul.f32 %v1096, %v1098
  %v1100 = vsub.f32 1.0, %v1099
  %v1101 = vmul.f32 %v1098, %v1100
  %v1102 = vadd.f32 %v1098, %v1101
  %vm1103 = vweird.f32 %v1096
  %vm1104 = vweird.f32 %v1098
  %vm1105 = vmor %vm1103, %vm1104
  %v1106 = vsel %vm1105, %v1098, %v1102
  %v1107 = vand.u32 2147483647, %v1096
  %vm1108 = vcmp.eq.f32.partialorder %v1107, 8.507059e+37
  %v1109 = vand.u32 %v1096, 2147483648
  %v1110 = vor.u32 1.1754944e-38, %v1109
  %v1111 = vsel %vm1108, %v1110, %v1106
  %v1112 = vmul.f32 1.0, %v1111
  %v1113 = vrcp.pop %v1097
  %v1114 = vmul.f32 %v1097, %v1113
  %v1115 = vsub.f32 1.0, %v1114
  %v1116 = vmul.f32 %v1113, %v1115
  %v1117 = vadd.f32 %v1113, %v1116
  %vm1118 = vweird.f32 %v1097
  %vm1119 = vweird.f32 %v1113
  %vm1120 = vmor %vm1118, %vm1119
  %v1121 = vsel %vm1120, %v1113, %v1117
  %v1122 = vand.u32 2147483647, %v1097
  %vm1123 = vcmp.eq.f32.partialorder %v1122, 8.507059e+37
  %v1124 = vand.u32 %v1097, 2147483648
  %v1125 = vor.u32 1.1754944e-38, %v1124
  %v1126 = vsel %vm1123, %v1125, %v1121
  %v1127 = vmul.f32 1.0, %v1126
  %v1128 = vmul.f32 %v1072, 0.0
  %v1129 = vmul.f32 %v1087, 0.0
  %v1130 = vmul.f32 %v1034, %v1088
  %v1131 = vmul.f32 %v1049, %v1089
  %v1132 = vadd.f32 %v1128, %v1130
  %v1133 = vadd.f32 %v1129, %v1131
  %v1134 = vtanh.pop %v1132
  %v1135 = vtanh.pop %v1133
  %v1136 = vmul.f32 %v1112, %v1134
  %v1137 = vmul.f32 %v1127, %v1135
  %1138 = vst [vmem:[#allocation2] sm:$0xff] %v1136
  %1139 = vst [vmem:[#allocation2 + $0x8] sm:$0xff] %v1137
  %s1140 = scalar_lea.vmem %s0, 64
  %v1141 = vld [vmem:[%s1140] sm:$0xff]
  %v1142 = vld [vmem:[%s1140 + $0x8] sm:$0xff]
  %v1143 = vld [vmem:[%s1140 + $0x10] sm:$0xff]
  %v1144 = vld [vmem:[%s1140 + $0x18] sm:$0xff]
  %v1145 = vld [vmem:[%s1140 + $0x20] sm:$0xff]
  %v1146 = vld [vmem:[%s1140 + $0x28] sm:$0xff]
  %v1147 = vld [vmem:[%s1140 + $0x30] sm:$0xff]
  %v1148 = vld [vmem:[%s1140 + $0x38] sm:$0xff]
  %v1149 = vpack.c.bf16 %v1136, %v1136
  %v1150 = vpack.c.bf16 %v1137, %v1137
  %1151 = vmatpush.bf16.msra.mxu0 %v596
  %1152 = vmatpush.bf16.msra.mxu0 %v588
  %1153 = vmatpush.bf16.msra.mxu0 %v580
  %1154 = vmatpush.bf16.msra.mxu0 %v572
  %1155 = vmatpush.bf16.msra.mxu0 %v564
  %1156 = vmatpush.bf16.msra.mxu0 %v556
  %1157 = vmatpush.bf16.msra.mxu0 %v548
  %1158 = vmatpush.bf16.msra.mxu0 %v540
  %1159 = vmatmul.bf16.gmra.mxu0 %v1149
  %v1160 = vpop.f32.mrf.mxu0
  %v1161 = vadd.f32 0.0, %v1160
  %v1162 = vpop.f32.mrf.mxu0
  %1163 = vdwg.mxu0
  %1164 = vmatpush.bf16.msra.mxu0 %v660
  %1165 = vmatpush.bf16.msra.mxu0 %v652
  %1166 = vmatpush.bf16.msra.mxu0 %v644
  %1167 = vmatpush.bf16.msra.mxu0 %v636
  %1168 = vmatpush.bf16.msra.mxu0 %v628
  %1169 = vmatpush.bf16.msra.mxu0 %v620
  %1170 = vmatpush.bf16.msra.mxu0 %v612
  %1171 = vmatpush.bf16.msra.mxu0 %v604
  %1172 = vmatmul.bf16.gmra.mxu0 %v1150
  %v1173 = vpop.f32.mrf.mxu0
  %v1174 = vadd.f32 %v1161, %v1173
  %v1175 = vpop.f32.mrf.mxu0
  %1176 = vdwg.mxu0
  %1177 = vmatpush.bf16.msra.mxu0 %v597
  %1178 = vmatpush.bf16.msra.mxu0 %v589
  %1179 = vmatpush.bf16.msra.mxu0 %v581
  %1180 = vmatpush.bf16.msra.mxu0 %v573
  %1181 = vmatpush.bf16.msra.mxu0 %v565
  %1182 = vmatpush.bf16.msra.mxu0 %v557
  %1183 = vmatpush.bf16.msra.mxu0 %v549
  %1184 = vmatpush.bf16.msra.mxu0 %v541
  %1185 = vmatmul.bf16.gmra.mxu0 %v1149
  %v1186 = vpop.f32.mrf.mxu0
  %v1187 = vadd.f32 0.0, %v1186
  %v1188 = vpop.f32.mrf.mxu0
  %1189 = vdwg.mxu0
  %1190 = vmatpush.bf16.msra.mxu0 %v661
  %1191 = vmatpush.bf16.msra.mxu0 %v653
  %1192 = vmatpush.bf16.msra.mxu0 %v645
  %1193 = vmatpush.bf16.msra.mxu0 %v637
  %1194 = vmatpush.bf16.msra.mxu0 %v629
  %1195 = vmatpush.bf16.msra.mxu0 %v621
  %1196 = vmatpush.bf16.msra.mxu0 %v613
  %1197 = vmatpush.bf16.msra.mxu0 %v605
  %1198 = vmatmul.bf16.gmra.mxu0 %v1150
  %v1199 = vpop.f32.mrf.mxu0
  %v1200 = vadd.f32 %v1187, %v1199
  %v1201 = vpop.f32.mrf.mxu0
  %1202 = vdwg.mxu0
  %1203 = vmatpush.bf16.msra.mxu0 %v598
  %1204 = vmatpush.bf16.msra.mxu0 %v590
  %1205 = vmatpush.bf16.msra.mxu0 %v582
  %1206 = vmatpush.bf16.msra.mxu0 %v574
  %1207 = vmatpush.bf16.msra.mxu0 %v566
  %1208 = vmatpush.bf16.msra.mxu0 %v558
  %1209 = vmatpush.bf16.msra.mxu0 %v550
  %1210 = vmatpush.bf16.msra.mxu0 %v542
  %1211 = vmatmul.bf16.gmra.mxu0 %v1149
  %v1212 = vpop.f32.mrf.mxu0
  %v1213 = vadd.f32 0.0, %v1212
  %v1214 = vpop.f32.mrf.mxu0
  %1215 = vdwg.mxu0
  %1216 = vmatpush.bf16.msra.mxu0 %v662
  %1217 = vmatpush.bf16.msra.mxu0 %v654
  %1218 = vmatpush.bf16.msra.mxu0 %v646
  %1219 = vmatpush.bf16.msra.mxu0 %v638
  %1220 = vmatpush.bf16.msra.mxu0 %v630
  %1221 = vmatpush.bf16.msra.mxu0 %v622
  %1222 = vmatpush.bf16.msra.mxu0 %v614
  %1223 = vmatpush.bf16.msra.mxu0 %v606
  %1224 = vmatmul.bf16.gmra.mxu0 %v1150
  %v1225 = vpop.f32.mrf.mxu0
  %v1226 = vadd.f32 %v1213, %v1225
  %v1227 = vpop.f32.mrf.mxu0
  %1228 = vdwg.mxu0
  %1229 = vmatpush.bf16.msra.mxu0 %v599
  %1230 = vmatpush.bf16.msra.mxu0 %v591
  %1231 = vmatpush.bf16.msra.mxu0 %v583
  %1232 = vmatpush.bf16.msra.mxu0 %v575
  %1233 = vmatpush.bf16.msra.mxu0 %v567
  %1234 = vmatpush.bf16.msra.mxu0 %v559
  %1235 = vmatpush.bf16.msra.mxu0 %v551
  %1236 = vmatpush.bf16.msra.mxu0 %v543
  %1237 = vmatmul.bf16.gmra.mxu0 %v1149
  %v1238 = vpop.f32.mrf.mxu0
  %v1239 = vadd.f32 0.0, %v1238
  %v1240 = vpop.f32.mrf.mxu0
  %1241 = vdwg.mxu0
  %1242 = vmatpush.bf16.msra.mxu0 %v663
  %1243 = vmatpush.bf16.msra.mxu0 %v655
  %1244 = vmatpush.bf16.msra.mxu0 %v647
  %1245 = vmatpush.bf16.msra.mxu0 %v639
  %1246 = vmatpush.bf16.msra.mxu0 %v631
  %1247 = vmatpush.bf16.msra.mxu0 %v623
  %1248 = vmatpush.bf16.msra.mxu0 %v615
  %1249 = vmatpush.bf16.msra.mxu0 %v607
  %1250 = vmatmul.bf16.gmra.mxu0 %v1150
  %v1251 = vpop.f32.mrf.mxu0
  %v1252 = vadd.f32 %v1239, %v1251
  %v1253 = vpop.f32.mrf.mxu0
  %1254 = vdwg.mxu0
  %1255 = vmatpush.bf16.msra.mxu0 %v600
  %1256 = vmatpush.bf16.msra.mxu0 %v592
  %1257 = vmatpush.bf16.msra.mxu0 %v584
  %1258 = vmatpush.bf16.msra.mxu0 %v576
  %1259 = vmatpush.bf16.msra.mxu0 %v568
  %1260 = vmatpush.bf16.msra.mxu0 %v560
  %1261 = vmatpush.bf16.msra.mxu0 %v552
  %1262 = vmatpush.bf16.msra.mxu0 %v544
  %1263 = vmatmul.bf16.gmra.mxu0 %v1149
  %v1264 = vpop.f32.mrf.mxu0
  %v1265 = vadd.f32 0.0, %v1264
  %v1266 = vpop.f32.mrf.mxu0
  %1267 = vdwg.mxu0
  %1268 = vmatpush.bf16.msra.mxu0 %v664
  %1269 = vmatpush.bf16.msra.mxu0 %v656
  %1270 = vmatpush.bf16.msra.mxu0 %v648
  %1271 = vmatpush.bf16.msra.mxu0 %v640
  %1272 = vmatpush.bf16.msra.mxu0 %v632
  %1273 = vmatpush.bf16.msra.mxu0 %v624
  %1274 = vmatpush.bf16.msra.mxu0 %v616
  %1275 = vmatpush.bf16.msra.mxu0 %v608
  %1276 = vmatmul.bf16.gmra.mxu0 %v1150
  %v1277 = vpop.f32.mrf.mxu0
  %v1278 = vadd.f32 %v1265, %v1277
  %v1279 = vpop.f32.mrf.mxu0
  %1280 = vdwg.mxu0
  %1281 = vmatpush.bf16.msra.mxu0 %v601
  %1282 = vmatpush.bf16.msra.mxu0 %v593
  %1283 = vmatpush.bf16.msra.mxu0 %v585
  %1284 = vmatpush.bf16.msra.mxu0 %v577
  %1285 = vmatpush.bf16.msra.mxu0 %v569
  %1286 = vmatpush.bf16.msra.mxu0 %v561
  %1287 = vmatpush.bf16.msra.mxu0 %v553
  %1288 = vmatpush.bf16.msra.mxu0 %v545
  %1289 = vmatmul.bf16.gmra.mxu0 %v1149
  %v1290 = vpop.f32.mrf.mxu0
  %v1291 = vadd.f32 0.0, %v1290
  %v1292 = vpop.f32.mrf.mxu0
  %1293 = vdwg.mxu0
  %1294 = vmatpush.bf16.msra.mxu0 %v665
  %1295 = vmatpush.bf16.msra.mxu0 %v657
  %1296 = vmatpush.bf16.msra.mxu0 %v649
  %1297 = vmatpush.bf16.msra.mxu0 %v641
  %1298 = vmatpush.bf16.msra.mxu0 %v633
  %1299 = vmatpush.bf16.msra.mxu0 %v625
  %1300 = vmatpush.bf16.msra.mxu0 %v617
  %1301 = vmatpush.bf16.msra.mxu0 %v609
  %1302 = vmatmul.bf16.gmra.mxu0 %v1150
  %v1303 = vpop.f32.mrf.mxu0
  %v1304 = vadd.f32 %v1291, %v1303
  %v1305 = vpop.f32.mrf.mxu0
  %1306 = vdwg.mxu0
  %1307 = vmatpush.bf16.msra.mxu0 %v602
  %1308 = vmatpush.bf16.msra.mxu0 %v594
  %1309 = vmatpush.bf16.msra.mxu0 %v586
  %1310 = vmatpush.bf16.msra.mxu0 %v578
  %1311 = vmatpush.bf16.msra.mxu0 %v570
  %1312 = vmatpush.bf16.msra.mxu0 %v562
  %1313 = vmatpush.bf16.msra.mxu0 %v554
  %1314 = vmatpush.bf16.msra.mxu0 %v546
  %1315 = vmatmul.bf16.gmra.mxu0 %v1149
  %v1316 = vpop.f32.mrf.mxu0
  %v1317 = vadd.f32 0.0, %v1316
  %v1318 = vpop.f32.mrf.mxu0
  %1319 = vdwg.mxu0
  %1320 = vmatpush.bf16.msra.mxu0 %v666
  %1321 = vmatpush.bf16.msra.mxu0 %v658
  %1322 = vmatpush.bf16.msra.mxu0 %v650
  %1323 = vmatpush.bf16.msra.mxu0 %v642
  %1324 = vmatpush.bf16.msra.mxu0 %v634
  %1325 = vmatpush.bf16.msra.mxu0 %v626
  %1326 = vmatpush.bf16.msra.mxu0 %v618
  %1327 = vmatpush.bf16.msra.mxu0 %v610
  %1328 = vmatmul.bf16.gmra.mxu0 %v1150
  %v1329 = vpop.f32.mrf.mxu0
  %v1330 = vadd.f32 %v1317, %v1329
  %v1331 = vpop.f32.mrf.mxu0
  %1332 = vdwg.mxu0
  %1333 = vmatpush.bf16.msra.mxu0 %v603
  %1334 = vmatpush.bf16.msra.mxu0 %v595
  %1335 = vmatpush.bf16.msra.mxu0 %v587
  %1336 = vmatpush.bf16.msra.mxu0 %v579
  %1337 = vmatpush.bf16.msra.mxu0 %v571
  %1338 = vmatpush.bf16.msra.mxu0 %v563
  %1339 = vmatpush.bf16.msra.mxu0 %v555
  %1340 = vmatpush.bf16.msra.mxu0 %v547
  %1341 = vmatmul.bf16.gmra.mxu0 %v1149
  %v1342 = vpop.f32.mrf.mxu0
  %v1343 = vadd.f32 0.0, %v1342
  %v1344 = vpop.f32.mrf.mxu0
  %1345 = vdwg.mxu0
  %1346 = vmatpush.bf16.msra.mxu0 %v667
  %1347 = vmatpush.bf16.msra.mxu0 %v659
  %1348 = vmatpush.bf16.msra.mxu0 %v651
  %1349 = vmatpush.bf16.msra.mxu0 %v643
  %1350 = vmatpush.bf16.msra.mxu0 %v635
  %1351 = vmatpush.bf16.msra.mxu0 %v627
  %1352 = vmatpush.bf16.msra.mxu0 %v619
  %1353 = vmatpush.bf16.msra.mxu0 %v611
  %1354 = vmatmul.bf16.gmra.mxu0 %v1150
  %v1355 = vpop.f32.mrf.mxu0
  %v1356 = vadd.f32 %v1343, %v1355
  %v1357 = vpop.f32.mrf.mxu0
  %1358 = vdwg.mxu0
  %v1359 = vadd.f32 %v1141, %v1174
  %v1360 = vadd.f32 %v1142, %v1200
  %v1361 = vadd.f32 %v1143, %v1226
  %v1362 = vadd.f32 %v1144, %v1252
  %v1363 = vadd.f32 %v1145, %v1278
  %v1364 = vadd.f32 %v1146, %v1304
  %v1365 = vadd.f32 %v1147, %v1330
  %v1366 = vadd.f32 %v1148, %v1356
  %v1367 = vxor.u32 %v1359, 2147483648
  %v1368 = vxor.u32 %v1360, 2147483648
  %v1369 = vmul.f32 %v1367, 1.442695
  %v1370 = vpow.pop %v1369
  %v1371 = vmul.f32 %v1368, 1.442695
  %v1372 = vpow.pop %v1371
  %v1373 = vadd.f32 %v1370, 1.0
  %v1374 = vadd.f32 %v1372, 1.0
  %v1375 = vrcp.pop %v1373
  %v1376 = vmul.f32 %v1373, %v1375
  %v1377 = vsub.f32 1.0, %v1376
  %v1378 = vmul.f32 %v1375, %v1377
  %v1379 = vadd.f32 %v1375, %v1378
  %vm1380 = vweird.f32 %v1373
  %vm1381 = vweird.f32 %v1375
  %vm1382 = vmor %vm1380, %vm1381
  %v1383 = vsel %vm1382, %v1375, %v1379
  %v1384 = vand.u32 2147483647, %v1373
  %vm1385 = vcmp.eq.f32.partialorder %v1384, 8.507059e+37
  %v1386 = vand.u32 %v1373, 2147483648
  %v1387 = vor.u32 1.1754944e-38, %v1386
  %v1388 = vsel %vm1385, %v1387, %v1383
  %v1389 = vmul.f32 1.0, %v1388
  %v1390 = vrcp.pop %v1374
  %v1391 = vmul.f32 %v1374, %v1390
  %v1392 = vsub.f32 1.0, %v1391
  %v1393 = vmul.f32 %v1390, %v1392
  %v1394 = vadd.f32 %v1390, %v1393
  %vm1395 = vweird.f32 %v1374
  %vm1396 = vweird.f32 %v1390
  %vm1397 = vmor %vm1395, %vm1396
  %v1398 = vsel %vm1397, %v1390, %v1394
  %v1399 = vand.u32 2147483647, %v1374
  %vm1400 = vcmp.eq.f32.partialorder %v1399, 8.507059e+37
  %v1401 = vand.u32 %v1374, 2147483648
  %v1402 = vor.u32 1.1754944e-38, %v1401
  %v1403 = vsel %vm1400, %v1402, %v1398
  %v1404 = vmul.f32 1.0, %v1403
  %v1405 = vxor.u32 %v1361, 2147483648
  %v1406 = vxor.u32 %v1362, 2147483648
  %v1407 = vmul.f32 %v1405, 1.442695
  %v1408 = vpow.pop %v1407
  %v1409 = vmul.f32 %v1406, 1.442695
  %v1410 = vpow.pop %v1409
  %v1411 = vadd.f32 %v1408, 1.0
  %v1412 = vadd.f32 %v1410, 1.0
  %v1413 = vrcp.pop %v1411
  %v1414 = vmul.f32 %v1411, %v1413
  %v1415 = vsub.f32 1.0, %v1414
  %v1416 = vmul.f32 %v1413, %v1415
  %v1417 = vadd.f32 %v1413, %v1416
  %vm1418 = vweird.f32 %v1411
  %vm1419 = vweird.f32 %v1413
  %vm1420 = vmor %vm1418, %vm1419
  %v1421 = vsel %vm1420, %v1413, %v1417
  %v1422 = vand.u32 2147483647, %v1411
  %vm1423 = vcmp.eq.f32.partialorder %v1422, 8.507059e+37
  %v1424 = vand.u32 %v1411, 2147483648
  %v1425 = vor.u32 1.1754944e-38, %v1424
  %v1426 = vsel %vm1423, %v1425, %v1421
  %v1427 = vmul.f32 1.0, %v1426
  %v1428 = vrcp.pop %v1412
  %v1429 = vmul.f32 %v1412, %v1428
  %v1430 = vsub.f32 1.0, %v1429
  %v1431 = vmul.f32 %v1428, %v1430
  %v1432 = vadd.f32 %v1428, %v1431
  %vm1433 = vweird.f32 %v1412
  %vm1434 = vweird.f32 %v1428
  %vm1435 = vmor %vm1433, %vm1434
  %v1436 = vsel %vm1435, %v1428, %v1432
  %v1437 = vand.u32 2147483647, %v1412
  %vm1438 = vcmp.eq.f32.partialorder %v1437, 8.507059e+37
  %v1439 = vand.u32 %v1412, 2147483648
  %v1440 = vor.u32 1.1754944e-38, %v1439
  %v1441 = vsel %vm1438, %v1440, %v1436
  %v1442 = vmul.f32 1.0, %v1441
  %v1443 = vtanh.pop %v1363
  %v1444 = vtanh.pop %v1364
  %v1445 = vxor.u32 %v1365, 2147483648
  %v1446 = vxor.u32 %v1366, 2147483648
  %v1447 = vmul.f32 %v1445, 1.442695
  %v1448 = vpow.pop %v1447
  %v1449 = vmul.f32 %v1446, 1.442695
  %v1450 = vpow.pop %v1449
  %v1451 = vadd.f32 %v1448, 1.0
  %v1452 = vadd.f32 %v1450, 1.0
  %v1453 = vrcp.pop %v1451
  %v1454 = vmul.f32 %v1451, %v1453
  %v1455 = vsub.f32 1.0, %v1454
  %v1456 = vmul.f32 %v1453, %v1455
  %v1457 = vadd.f32 %v1453, %v1456
  %vm1458 = vweird.f32 %v1451
  %vm1459 = vweird.f32 %v1453
  %vm1460 = vmor %vm1458, %vm1459
  %v1461 = vsel %vm1460, %v1453, %v1457
  %v1462 = vand.u32 2147483647, %v1451
  %vm1463 = vcmp.eq.f32.partialorder %v1462, 8.507059e+37
  %v1464 = vand.u32 %v1451, 2147483648
  %v1465 = vor.u32 1.1754944e-38, %v1464
  %v1466 = vsel %vm1463, %v1465, %v1461
  %v1467 = vmul.f32 1.0, %v1466
  %v1468 = vrcp.pop %v1452
  %v1469 = vmul.f32 %v1452, %v1468
  %v1470 = vsub.f32 1.0, %v1469
  %v1471 = vmul.f32 %v1468, %v1470
  %v1472 = vadd.f32 %v1468, %v1471
  %vm1473 = vweird.f32 %v1452
  %vm1474 = vweird.f32 %v1468
  %vm1475 = vmor %vm1473, %vm1474
  %v1476 = vsel %vm1475, %v1468, %v1472
  %v1477 = vand.u32 2147483647, %v1452
  %vm1478 = vcmp.eq.f32.partialorder %v1477, 8.507059e+37
  %v1479 = vand.u32 %v1452, 2147483648
  %v1480 = vor.u32 1.1754944e-38, %v1479
  %v1481 = vsel %vm1478, %v1480, %v1476
  %v1482 = vmul.f32 1.0, %v1481
  %v1483 = vmul.f32 %v1427, %v1132
  %v1484 = vmul.f32 %v1442, %v1133
  %v1485 = vmul.f32 %v1389, %v1443
  %v1486 = vmul.f32 %v1404, %v1444
  %v1487 = vadd.f32 %v1483, %v1485
  %v1488 = vadd.f32 %v1484, %v1486
  %v1489 = vtanh.pop %v1487
  %v1490 = vtanh.pop %v1488
  %v1491 = vmul.f32 %v1467, %v1489
  %v1492 = vmul.f32 %v1482, %v1490
  %s1493 = scalar_lea.vmem [#allocation2], 16
  %1494 = vst [vmem:[%s1493] sm:$0xff] %v1491
  %1495 = vst [vmem:[%s1493 + $0x8] sm:$0xff] %v1492
  %s1496 = scalar_lea.vmem %s0, 128
  %v1497 = vld [vmem:[%s1496] sm:$0xff]
  %v1498 = vld [vmem:[%s1496 + $0x8] sm:$0xff]
  %v1499 = vld [vmem:[%s1496 + $0x10] sm:$0xff]
  %v1500 = vld [vmem:[%s1496 + $0x18] sm:$0xff]
  %v1501 = vld [vmem:[%s1496 + $0x20] sm:$0xff]
  %v1502 = vld [vmem:[%s1496 + $0x28] sm:$0xff]
  %v1503 = vld [vmem:[%s1496 + $0x30] sm:$0xff]
  %v1504 = vld [vmem:[%s1496 + $0x38] sm:$0xff]
  %v1505 = vpack.c.bf16 %v1491, %v1491
  %v1506 = vpack.c.bf16 %v1492, %v1492
  %1507 = vmatpush.bf16.msra.mxu0 %v596
  %1508 = vmatpush.bf16.msra.mxu0 %v588
  %1509 = vmatpush.bf16.msra.mxu0 %v580
  %1510 = vmatpush.bf16.msra.mxu0 %v572
  %1511 = vmatpush.bf16.msra.mxu0 %v564
  %1512 = vmatpush.bf16.msra.mxu0 %v556
  %1513 = vmatpush.bf16.msra.mxu0 %v548
  %1514 = vmatpush.bf16.msra.mxu0 %v540
  %1515 = vmatmul.bf16.gmra.mxu0 %v1505
  %v1516 = vpop.f32.mrf.mxu0
  %v1517 = vadd.f32 0.0, %v1516
  %v1518 = vpop.f32.mrf.mxu0
  %1519 = vdwg.mxu0
  %1520 = vmatpush.bf16.msra.mxu0 %v660
  %1521 = vmatpush.bf16.msra.mxu0 %v652
  %1522 = vmatpush.bf16.msra.mxu0 %v644
  %1523 = vmatpush.bf16.msra.mxu0 %v636
  %1524 = vmatpush.bf16.msra.mxu0 %v628
  %1525 = vmatpush.bf16.msra.mxu0 %v620
  %1526 = vmatpush.bf16.msra.mxu0 %v612
  %1527 = vmatpush.bf16.msra.mxu0 %v604
  %1528 = vmatmul.bf16.gmra.mxu0 %v1506
  %v1529 = vpop.f32.mrf.mxu0
  %v1530 = vadd.f32 %v1517, %v1529
  %v1531 = vpop.f32.mrf.mxu0
  %1532 = vdwg.mxu0
  %1533 = vmatpush.bf16.msra.mxu0 %v597
  %1534 = vmatpush.bf16.msra.mxu0 %v589
  %1535 = vmatpush.bf16.msra.mxu0 %v581
  %1536 = vmatpush.bf16.msra.mxu0 %v573
  %1537 = vmatpush.bf16.msra.mxu0 %v565
  %1538 = vmatpush.bf16.msra.mxu0 %v557
  %1539 = vmatpush.bf16.msra.mxu0 %v549
  %1540 = vmatpush.bf16.msra.mxu0 %v541
  %1541 = vmatmul.bf16.gmra.mxu0 %v1505
  %v1542 = vpop.f32.mrf.mxu0
  %v1543 = vadd.f32 0.0, %v1542
  %v1544 = vpop.f32.mrf.mxu0
  %1545 = vdwg.mxu0
  %1546 = vmatpush.bf16.msra.mxu0 %v661
  %1547 = vmatpush.bf16.msra.mxu0 %v653
  %1548 = vmatpush.bf16.msra.mxu0 %v645
  %1549 = vmatpush.bf16.msra.mxu0 %v637
  %1550 = vmatpush.bf16.msra.mxu0 %v629
  %1551 = vmatpush.bf16.msra.mxu0 %v621
  %1552 = vmatpush.bf16.msra.mxu0 %v613
  %1553 = vmatpush.bf16.msra.mxu0 %v605
  %1554 = vmatmul.bf16.gmra.mxu0 %v1506
  %v1555 = vpop.f32.mrf.mxu0
  %v1556 = vadd.f32 %v1543, %v1555
  %v1557 = vpop.f32.mrf.mxu0
  %1558 = vdwg.mxu0
  %1559 = vmatpush.bf16.msra.mxu0 %v598
  %1560 = vmatpush.bf16.msra.mxu0 %v590
  %1561 = vmatpush.bf16.msra.mxu0 %v582
  %1562 = vmatpush.bf16.msra.mxu0 %v574
  %1563 = vmatpush.bf16.msra.mxu0 %v566
  %1564 = vmatpush.bf16.msra.mxu0 %v558
  %1565 = vmatpush.bf16.msra.mxu0 %v550
  %1566 = vmatpush.bf16.msra.mxu0 %v542
  %1567 = vmatmul.bf16.gmra.mxu0 %v1505
  %v1568 = vpop.f32.mrf.mxu0
  %v1569 = vadd.f32 0.0, %v1568
  %v1570 = vpop.f32.mrf.mxu0
  %1571 = vdwg.mxu0
  %1572 = vmatpush.bf16.msra.mxu0 %v662
  %1573 = vmatpush.bf16.msra.mxu0 %v654
  %1574 = vmatpush.bf16.msra.mxu0 %v646
  %1575 = vmatpush.bf16.msra.mxu0 %v638
  %1576 = vmatpush.bf16.msra.mxu0 %v630
  %1577 = vmatpush.bf16.msra.mxu0 %v622
  %1578 = vmatpush.bf16.msra.mxu0 %v614
  %1579 = vmatpush.bf16.msra.mxu0 %v606
  %1580 = vmatmul.bf16.gmra.mxu0 %v1506
  %v1581 = vpop.f32.mrf.mxu0
  %v1582 = vadd.f32 %v1569, %v1581
  %v1583 = vpop.f32.mrf.mxu0
  %1584 = vdwg.mxu0
  %1585 = vmatpush.bf16.msra.mxu0 %v599
  %1586 = vmatpush.bf16.msra.mxu0 %v591
  %1587 = vmatpush.bf16.msra.mxu0 %v583
  %1588 = vmatpush.bf16.msra.mxu0 %v575
  %1589 = vmatpush.bf16.msra.mxu0 %v567
  %1590 = vmatpush.bf16.msra.mxu0 %v559
  %1591 = vmatpush.bf16.msra.mxu0 %v551
  %1592 = vmatpush.bf16.msra.mxu0 %v543
  %1593 = vmatmul.bf16.gmra.mxu0 %v1505
  %v1594 = vpop.f32.mrf.mxu0
  %v1595 = vadd.f32 0.0, %v1594
  %v1596 = vpop.f32.mrf.mxu0
  %1597 = vdwg.mxu0
  %1598 = vmatpush.bf16.msra.mxu0 %v663
  %1599 = vmatpush.bf16.msra.mxu0 %v655
  %1600 = vmatpush.bf16.msra.mxu0 %v647
  %1601 = vmatpush.bf16.msra.mxu0 %v639
  %1602 = vmatpush.bf16.msra.mxu0 %v631
  %1603 = vmatpush.bf16.msra.mxu0 %v623
  %1604 = vmatpush.bf16.msra.mxu0 %v615
  %1605 = vmatpush.bf16.msra.mxu0 %v607
  %1606 = vmatmul.bf16.gmra.mxu0 %v1506
  %v1607 = vpop.f32.mrf.mxu0
  %v1608 = vadd.f32 %v1595, %v1607
  %v1609 = vpop.f32.mrf.mxu0
  %1610 = vdwg.mxu0
  %1611 = vmatpush.bf16.msra.mxu0 %v600
  %1612 = vmatpush.bf16.msra.mxu0 %v592
  %1613 = vmatpush.bf16.msra.mxu0 %v584
  %1614 = vmatpush.bf16.msra.mxu0 %v576
  %1615 = vmatpush.bf16.msra.mxu0 %v568
  %1616 = vmatpush.bf16.msra.mxu0 %v560
  %1617 = vmatpush.bf16.msra.mxu0 %v552
  %1618 = vmatpush.bf16.msra.mxu0 %v544
  %1619 = vmatmul.bf16.gmra.mxu0 %v1505
  %v1620 = vpop.f32.mrf.mxu0
  %v1621 = vadd.f32 0.0, %v1620
  %v1622 = vpop.f32.mrf.mxu0
  %1623 = vdwg.mxu0
  %1624 = vmatpush.bf16.msra.mxu0 %v664
  %1625 = vmatpush.bf16.msra.mxu0 %v656
  %1626 = vmatpush.bf16.msra.mxu0 %v648
  %1627 = vmatpush.bf16.msra.mxu0 %v640
  %1628 = vmatpush.bf16.msra.mxu0 %v632
  %1629 = vmatpush.bf16.msra.mxu0 %v624
  %1630 = vmatpush.bf16.msra.mxu0 %v616
  %1631 = vmatpush.bf16.msra.mxu0 %v608
  %1632 = vmatmul.bf16.gmra.mxu0 %v1506
  %v1633 = vpop.f32.mrf.mxu0
  %v1634 = vadd.f32 %v1621, %v1633
  %v1635 = vpop.f32.mrf.mxu0
  %1636 = vdwg.mxu0
  %1637 = vmatpush.bf16.msra.mxu0 %v601
  %1638 = vmatpush.bf16.msra.mxu0 %v593
  %1639 = vmatpush.bf16.msra.mxu0 %v585
  %1640 = vmatpush.bf16.msra.mxu0 %v577
  %1641 = vmatpush.bf16.msra.mxu0 %v569
  %1642 = vmatpush.bf16.msra.mxu0 %v561
  %1643 = vmatpush.bf16.msra.mxu0 %v553
  %1644 = vmatpush.bf16.msra.mxu0 %v545
  %1645 = vmatmul.bf16.gmra.mxu0 %v1505
  %v1646 = vpop.f32.mrf.mxu0
  %v1647 = vadd.f32 0.0, %v1646
  %v1648 = vpop.f32.mrf.mxu0
  %1649 = vdwg.mxu0
  %1650 = vmatpush.bf16.msra.mxu0 %v665
  %1651 = vmatpush.bf16.msra.mxu0 %v657
  %1652 = vmatpush.bf16.msra.mxu0 %v649
  %1653 = vmatpush.bf16.msra.mxu0 %v641
  %1654 = vmatpush.bf16.msra.mxu0 %v633
  %1655 = vmatpush.bf16.msra.mxu0 %v625
  %1656 = vmatpush.bf16.msra.mxu0 %v617
  %1657 = vmatpush.bf16.msra.mxu0 %v609
  %1658 = vmatmul.bf16.gmra.mxu0 %v1506
  %v1659 = vpop.f32.mrf.mxu0
  %v1660 = vadd.f32 %v1647, %v1659
  %v1661 = vpop.f32.mrf.mxu0
  %1662 = vdwg.mxu0
  %1663 = vmatpush.bf16.msra.mxu0 %v602
  %1664 = vmatpush.bf16.msra.mxu0 %v594
  %1665 = vmatpush.bf16.msra.mxu0 %v586
  %1666 = vmatpush.bf16.msra.mxu0 %v578
  %1667 = vmatpush.bf16.msra.mxu0 %v570
  %1668 = vmatpush.bf16.msra.mxu0 %v562
  %1669 = vmatpush.bf16.msra.mxu0 %v554
  %1670 = vmatpush.bf16.msra.mxu0 %v546
  %1671 = vmatmul.bf16.gmra.mxu0 %v1505
  %v1672 = vpop.f32.mrf.mxu0
  %v1673 = vadd.f32 0.0, %v1672
  %v1674 = vpop.f32.mrf.mxu0
  %1675 = vdwg.mxu0
  %1676 = vmatpush.bf16.msra.mxu0 %v666
  %1677 = vmatpush.bf16.msra.mxu0 %v658
  %1678 = vmatpush.bf16.msra.mxu0 %v650
  %1679 = vmatpush.bf16.msra.mxu0 %v642
  %1680 = vmatpush.bf16.msra.mxu0 %v634
  %1681 = vmatpush.bf16.msra.mxu0 %v626
  %1682 = vmatpush.bf16.msra.mxu0 %v618
  %1683 = vmatpush.bf16.msra.mxu0 %v610
  %1684 = vmatmul.bf16.gmra.mxu0 %v1506
  %v1685 = vpop.f32.mrf.mxu0
  %v1686 = vadd.f32 %v1673, %v1685
  %v1687 = vpop.f32.mrf.mxu0
  %1688 = vdwg.mxu0
  %1689 = vmatpush.bf16.msra.mxu0 %v603
  %1690 = vmatpush.bf16.msra.mxu0 %v595
  %1691 = vmatpush.bf16.msra.mxu0 %v587
  %1692 = vmatpush.bf16.msra.mxu0 %v579
  %1693 = vmatpush.bf16.msra.mxu0 %v571
  %1694 = vmatpush.bf16.msra.mxu0 %v563
  %1695 = vmatpush.bf16.msra.mxu0 %v555
  %1696 = vmatpush.bf16.msra.mxu0 %v547
  %1697 = vmatmul.bf16.gmra.mxu0 %v1505
  %v1698 = vpop.f32.mrf.mxu0
  %v1699 = vadd.f32 0.0, %v1698
  %v1700 = vpop.f32.mrf.mxu0
  %1701 = vdwg.mxu0
  %1702 = vmatpush.bf16.msra.mxu0 %v667
  %1703 = vmatpush.bf16.msra.mxu0 %v659
  %1704 = vmatpush.bf16.msra.mxu0 %v651
  %1705 = vmatpush.bf16.msra.mxu0 %v643
  %1706 = vmatpush.bf16.msra.mxu0 %v635
  %1707 = vmatpush.bf16.msra.mxu0 %v627
  %1708 = vmatpush.bf16.msra.mxu0 %v619
  %1709 = vmatpush.bf16.msra.mxu0 %v611
  %1710 = vmatmul.bf16.gmra.mxu0 %v1506
  %v1711 = vpop.f32.mrf.mxu0
  %v1712 = vadd.f32 %v1699, %v1711
  %v1713 = vpop.f32.mrf.mxu0
  %1714 = vdwg.mxu0
  %v1715 = vadd.f32 %v1497, %v1530
  %v1716 = vadd.f32 %v1498, %v1556
  %v1717 = vadd.f32 %v1499, %v1582
  %v1718 = vadd.f32 %v1500, %v1608
  %v1719 = vadd.f32 %v1501, %v1634
  %v1720 = vadd.f32 %v1502, %v1660
  %v1721 = vadd.f32 %v1503, %v1686
  %v1722 = vadd.f32 %v1504, %v1712
  %v1723 = vxor.u32 %v1715, 2147483648
  %v1724 = vxor.u32 %v1716, 2147483648
  %v1725 = vmul.f32 %v1723, 1.442695
  %v1726 = vpow.pop %v1725
  %v1727 = vmul.f32 %v1724, 1.442695
  %v1728 = vpow.pop %v1727
  %v1729 = vadd.f32 %v1726, 1.0
  %v1730 = vadd.f32 %v1728, 1.0
  %v1731 = vrcp.pop %v1729
  %v1732 = vmul.f32 %v1729, %v1731
  %v1733 = vsub.f32 1.0, %v1732
  %v1734 = vmul.f32 %v1731, %v1733
  %v1735 = vadd.f32 %v1731, %v1734
  %vm1736 = vweird.f32 %v1729
  %vm1737 = vweird.f32 %v1731
  %vm1738 = vmor %vm1736, %vm1737
  %v1739 = vsel %vm1738, %v1731, %v1735
  %v1740 = vand.u32 2147483647, %v1729
  %vm1741 = vcmp.eq.f32.partialorder %v1740, 8.507059e+37
  %v1742 = vand.u32 %v1729, 2147483648
  %v1743 = vor.u32 1.1754944e-38, %v1742
  %v1744 = vsel %vm1741, %v1743, %v1739
  %v1745 = vmul.f32 1.0, %v1744
  %v1746 = vrcp.pop %v1730
  %v1747 = vmul.f32 %v1730, %v1746
  %v1748 = vsub.f32 1.0, %v1747
  %v1749 = vmul.f32 %v1746, %v1748
  %v1750 = vadd.f32 %v1746, %v1749
  %vm1751 = vweird.f32 %v1730
  %vm1752 = vweird.f32 %v1746
  %vm1753 = vmor %vm1751, %vm1752
  %v1754 = vsel %vm1753, %v1746, %v1750
  %v1755 = vand.u32 2147483647, %v1730
  %vm1756 = vcmp.eq.f32.partialorder %v1755, 8.507059e+37
  %v1757 = vand.u32 %v1730, 2147483648
  %v1758 = vor.u32 1.1754944e-38, %v1757
  %v1759 = vsel %vm1756, %v1758, %v1754
  %v1760 = vmul.f32 1.0, %v1759
  %v1761 = vxor.u32 %v1717, 2147483648
  %v1762 = vxor.u32 %v1718, 2147483648
  %v1763 = vmul.f32 %v1761, 1.442695
  %v1764 = vpow.pop %v1763
  %v1765 = vmul.f32 %v1762, 1.442695
  %v1766 = vpow.pop %v1765
  %v1767 = vadd.f32 %v1764, 1.0
  %v1768 = vadd.f32 %v1766, 1.0
  %v1769 = vrcp.pop %v1767
  %v1770 = vmul.f32 %v1767, %v1769
  %v1771 = vsub.f32 1.0, %v1770
  %v1772 = vmul.f32 %v1769, %v1771
  %v1773 = vadd.f32 %v1769, %v1772
  %vm1774 = vweird.f32 %v1767
  %vm1775 = vweird.f32 %v1769
  %vm1776 = vmor %vm1774, %vm1775
  %v1777 = vsel %vm1776, %v1769, %v1773
  %v1778 = vand.u32 2147483647, %v1767
  %vm1779 = vcmp.eq.f32.partialorder %v1778, 8.507059e+37
  %v1780 = vand.u32 %v1767, 2147483648
  %v1781 = vor.u32 1.1754944e-38, %v1780
  %v1782 = vsel %vm1779, %v1781, %v1777
  %v1783 = vmul.f32 1.0, %v1782
  %v1784 = vrcp.pop %v1768
  %v1785 = vmul.f32 %v1768, %v1784
  %v1786 = vsub.f32 1.0, %v1785
  %v1787 = vmul.f32 %v1784, %v1786
  %v1788 = vadd.f32 %v1784, %v1787
  %vm1789 = vweird.f32 %v1768
  %vm1790 = vweird.f32 %v1784
  %vm1791 = vmor %vm1789, %vm1790
  %v1792 = vsel %vm1791, %v1784, %v1788
  %v1793 = vand.u32 2147483647, %v1768
  %vm1794 = vcmp.eq.f32.partialorder %v1793, 8.507059e+37
  %v1795 = vand.u32 %v1768, 2147483648
  %v1796 = vor.u32 1.1754944e-38, %v1795
  %v1797 = vsel %vm1794, %v1796, %v1792
  %v1798 = vmul.f32 1.0, %v1797
  %v1799 = vtanh.pop %v1719
  %v1800 = vtanh.pop %v1720
  %v1801 = vxor.u32 %v1721, 2147483648
  %v1802 = vxor.u32 %v1722, 2147483648
  %v1803 = vmul.f32 %v1801, 1.442695
  %v1804 = vpow.pop %v1803
  %v1805 = vmul.f32 %v1802, 1.442695
  %v1806 = vpow.pop %v1805
  %v1807 = vadd.f32 %v1804, 1.0
  %v1808 = vadd.f32 %v1806, 1.0
  %v1809 = vrcp.pop %v1807
  %v1810 = vmul.f32 %v1807, %v1809
  %v1811 = vsub.f32 1.0, %v1810
  %v1812 = vmul.f32 %v1809, %v1811
  %v1813 = vadd.f32 %v1809, %v1812
  %vm1814 = vweird.f32 %v1807
  %vm1815 = vweird.f32 %v1809
  %vm1816 = vmor %vm1814, %vm1815
  %v1817 = vsel %vm1816, %v1809, %v1813
  %v1818 = vand.u32 2147483647, %v1807
  %vm1819 = vcmp.eq.f32.partialorder %v1818, 8.507059e+37
  %v1820 = vand.u32 %v1807, 2147483648
  %v1821 = vor.u32 1.1754944e-38, %v1820
  %v1822 = vsel %vm1819, %v1821, %v1817
  %v1823 = vmul.f32 1.0, %v1822
  %v1824 = vrcp.pop %v1808
  %v1825 = vmul.f32 %v1808, %v1824
  %v1826 = vsub.f32 1.0, %v1825
  %v1827 = vmul.f32 %v1824, %v1826
  %v1828 = vadd.f32 %v1824, %v1827
  %vm1829 = vweird.f32 %v1808
  %vm1830 = vweird.f32 %v1824
  %vm1831 = vmor %vm1829, %vm1830
  %v1832 = vsel %vm1831, %v1824, %v1828
  %v1833 = vand.u32 2147483647, %v1808
  %vm1834 = vcmp.eq.f32.partialorder %v1833, 8.507059e+37
  %v1835 = vand.u32 %v1808, 2147483648
  %v1836 = vor.u32 1.1754944e-38, %v1835
  %v1837 = vsel %vm1834, %v1836, %v1832
  %v1838 = vmul.f32 1.0, %v1837
  %v1839 = vmul.f32 %v1783, %v1487
  %v1840 = vmul.f32 %v1798, %v1488
  %v1841 = vmul.f32 %v1745, %v1799
  %v1842 = vmul.f32 %v1760, %v1800
  %v1843 = vadd.f32 %v1839, %v1841
  %v1844 = vadd.f32 %v1840, %v1842
  %v1845 = vtanh.pop %v1843
  %v1846 = vtanh.pop %v1844
  %v1847 = vmul.f32 %v1823, %v1845
  %v1848 = vmul.f32 %v1838, %v1846
  %s1849 = scalar_lea.vmem [#allocation2], 32
  %1850 = vst [vmem:[%s1849] sm:$0xff] %v1847
  %1851 = vst [vmem:[%s1849 + $0x8] sm:$0xff] %v1848
  %s1852 = scalar_lea.vmem %s0, 192
  %v1853 = vld [vmem:[%s1852] sm:$0xff]
  %v1854 = vld [vmem:[%s1852 + $0x8] sm:$0xff]
  %v1855 = vld [vmem:[%s1852 + $0x10] sm:$0xff]
  %v1856 = vld [vmem:[%s1852 + $0x18] sm:$0xff]
  %v1857 = vld [vmem:[%s1852 + $0x20] sm:$0xff]
  %v1858 = vld [vmem:[%s1852 + $0x28] sm:$0xff]
  %v1859 = vld [vmem:[%s1852 + $0x30] sm:$0xff]
  %v1860 = vld [vmem:[%s1852 + $0x38] sm:$0xff]
  %v1861 = vpack.c.bf16 %v1847, %v1847
  %v1862 = vpack.c.bf16 %v1848, %v1848
  %1863 = vmatpush.bf16.msra.mxu0 %v596
  %1864 = vmatpush.bf16.msra.mxu0 %v588
  %1865 = vmatpush.bf16.msra.mxu0 %v580
  %1866 = vmatpush.bf16.msra.mxu0 %v572
  %1867 = vmatpush.bf16.msra.mxu0 %v564
  %1868 = vmatpush.bf16.msra.mxu0 %v556
  %1869 = vmatpush.bf16.msra.mxu0 %v548
  %1870 = vmatpush.bf16.msra.mxu0 %v540
  %1871 = vmatmul.bf16.gmra.mxu0 %v1861
  %v1872 = vpop.f32.mrf.mxu0
  %v1873 = vadd.f32 0.0, %v1872
  %v1874 = vpop.f32.mrf.mxu0
  %1875 = vdwg.mxu0
  %1876 = vmatpush.bf16.msra.mxu0 %v660
  %1877 = vmatpush.bf16.msra.mxu0 %v652
  %1878 = vmatpush.bf16.msra.mxu0 %v644
  %1879 = vmatpush.bf16.msra.mxu0 %v636
  %1880 = vmatpush.bf16.msra.mxu0 %v628
  %1881 = vmatpush.bf16.msra.mxu0 %v620
  %1882 = vmatpush.bf16.msra.mxu0 %v612
  %1883 = vmatpush.bf16.msra.mxu0 %v604
  %1884 = vmatmul.bf16.gmra.mxu0 %v1862
  %v1885 = vpop.f32.mrf.mxu0
  %v1886 = vadd.f32 %v1873, %v1885
  %v1887 = vpop.f32.mrf.mxu0
  %1888 = vdwg.mxu0
  %1889 = vmatpush.bf16.msra.mxu0 %v597
  %1890 = vmatpush.bf16.msra.mxu0 %v589
  %1891 = vmatpush.bf16.msra.mxu0 %v581
  %1892 = vmatpush.bf16.msra.mxu0 %v573
  %1893 = vmatpush.bf16.msra.mxu0 %v565
  %1894 = vmatpush.bf16.msra.mxu0 %v557
  %1895 = vmatpush.bf16.msra.mxu0 %v549
  %1896 = vmatpush.bf16.msra.mxu0 %v541
  %1897 = vmatmul.bf16.gmra.mxu0 %v1861
  %v1898 = vpop.f32.mrf.mxu0
  %v1899 = vadd.f32 0.0, %v1898
  %v1900 = vpop.f32.mrf.mxu0
  %1901 = vdwg.mxu0
  %1902 = vmatpush.bf16.msra.mxu0 %v661
  %1903 = vmatpush.bf16.msra.mxu0 %v653
  %1904 = vmatpush.bf16.msra.mxu0 %v645
  %1905 = vmatpush.bf16.msra.mxu0 %v637
  %1906 = vmatpush.bf16.msra.mxu0 %v629
  %1907 = vmatpush.bf16.msra.mxu0 %v621
  %1908 = vmatpush.bf16.msra.mxu0 %v613
  %1909 = vmatpush.bf16.msra.mxu0 %v605
  %1910 = vmatmul.bf16.gmra.mxu0 %v1862
  %v1911 = vpop.f32.mrf.mxu0
  %v1912 = vadd.f32 %v1899, %v1911
  %v1913 = vpop.f32.mrf.mxu0
  %1914 = vdwg.mxu0
  %1915 = vmatpush.bf16.msra.mxu0 %v598
  %1916 = vmatpush.bf16.msra.mxu0 %v590
  %1917 = vmatpush.bf16.msra.mxu0 %v582
  %1918 = vmatpush.bf16.msra.mxu0 %v574
  %1919 = vmatpush.bf16.msra.mxu0 %v566
  %1920 = vmatpush.bf16.msra.mxu0 %v558
  %1921 = vmatpush.bf16.msra.mxu0 %v550
  %1922 = vmatpush.bf16.msra.mxu0 %v542
  %1923 = vmatmul.bf16.gmra.mxu0 %v1861
  %v1924 = vpop.f32.mrf.mxu0
  %v1925 = vadd.f32 0.0, %v1924
  %v1926 = vpop.f32.mrf.mxu0
  %1927 = vdwg.mxu0
  %1928 = vmatpush.bf16.msra.mxu0 %v662
  %1929 = vmatpush.bf16.msra.mxu0 %v654
  %1930 = vmatpush.bf16.msra.mxu0 %v646
  %1931 = vmatpush.bf16.msra.mxu0 %v638
  %1932 = vmatpush.bf16.msra.mxu0 %v630
  %1933 = vmatpush.bf16.msra.mxu0 %v622
  %1934 = vmatpush.bf16.msra.mxu0 %v614
  %1935 = vmatpush.bf16.msra.mxu0 %v606
  %1936 = vmatmul.bf16.gmra.mxu0 %v1862
  %v1937 = vpop.f32.mrf.mxu0
  %v1938 = vadd.f32 %v1925, %v1937
  %v1939 = vpop.f32.mrf.mxu0
  %1940 = vdwg.mxu0
  %1941 = vmatpush.bf16.msra.mxu0 %v599
  %1942 = vmatpush.bf16.msra.mxu0 %v591
  %1943 = vmatpush.bf16.msra.mxu0 %v583
  %1944 = vmatpush.bf16.msra.mxu0 %v575
  %1945 = vmatpush.bf16.msra.mxu0 %v567
  %1946 = vmatpush.bf16.msra.mxu0 %v559
  %1947 = vmatpush.bf16.msra.mxu0 %v551
  %1948 = vmatpush.bf16.msra.mxu0 %v543
  %1949 = vmatmul.bf16.gmra.mxu0 %v1861
  %v1950 = vpop.f32.mrf.mxu0
  %v1951 = vadd.f32 0.0, %v1950
  %v1952 = vpop.f32.mrf.mxu0
  %1953 = vdwg.mxu0
  %1954 = vmatpush.bf16.msra.mxu0 %v663
  %1955 = vmatpush.bf16.msra.mxu0 %v655
  %1956 = vmatpush.bf16.msra.mxu0 %v647
  %1957 = vmatpush.bf16.msra.mxu0 %v639
  %1958 = vmatpush.bf16.msra.mxu0 %v631
  %1959 = vmatpush.bf16.msra.mxu0 %v623
  %1960 = vmatpush.bf16.msra.mxu0 %v615
  %1961 = vmatpush.bf16.msra.mxu0 %v607
  %1962 = vmatmul.bf16.gmra.mxu0 %v1862
  %v1963 = vpop.f32.mrf.mxu0
  %v1964 = vadd.f32 %v1951, %v1963
  %v1965 = vpop.f32.mrf.mxu0
  %1966 = vdwg.mxu0
  %1967 = vmatpush.bf16.msra.mxu0 %v600
  %1968 = vmatpush.bf16.msra.mxu0 %v592
  %1969 = vmatpush.bf16.msra.mxu0 %v584
  %1970 = vmatpush.bf16.msra.mxu0 %v576
  %1971 = vmatpush.bf16.msra.mxu0 %v568
  %1972 = vmatpush.bf16.msra.mxu0 %v560
  %1973 = vmatpush.bf16.msra.mxu0 %v552
  %1974 = vmatpush.bf16.msra.mxu0 %v544
  %1975 = vmatmul.bf16.gmra.mxu0 %v1861
  %v1976 = vpop.f32.mrf.mxu0
  %v1977 = vadd.f32 0.0, %v1976
  %v1978 = vpop.f32.mrf.mxu0
  %1979 = vdwg.mxu0
  %1980 = vmatpush.bf16.msra.mxu0 %v664
  %1981 = vmatpush.bf16.msra.mxu0 %v656
  %1982 = vmatpush.bf16.msra.mxu0 %v648
  %1983 = vmatpush.bf16.msra.mxu0 %v640
  %1984 = vmatpush.bf16.msra.mxu0 %v632
  %1985 = vmatpush.bf16.msra.mxu0 %v624
  %1986 = vmatpush.bf16.msra.mxu0 %v616
  %1987 = vmatpush.bf16.msra.mxu0 %v608
  %1988 = vmatmul.bf16.gmra.mxu0 %v1862
  %v1989 = vpop.f32.mrf.mxu0
  %v1990 = vadd.f32 %v1977, %v1989
  %v1991 = vpop.f32.mrf.mxu0
  %1992 = vdwg.mxu0
  %1993 = vmatpush.bf16.msra.mxu0 %v601
  %1994 = vmatpush.bf16.msra.mxu0 %v593
  %1995 = vmatpush.bf16.msra.mxu0 %v585
  %1996 = vmatpush.bf16.msra.mxu0 %v577
  %1997 = vmatpush.bf16.msra.mxu0 %v569
  %1998 = vmatpush.bf16.msra.mxu0 %v561
  %1999 = vmatpush.bf16.msra.mxu0 %v553
  %2000 = vmatpush.bf16.msra.mxu0 %v545
  %2001 = vmatmul.bf16.gmra.mxu0 %v1861
  %v2002 = vpop.f32.mrf.mxu0
  %v2003 = vadd.f32 0.0, %v2002
  %v2004 = vpop.f32.mrf.mxu0
  %2005 = vdwg.mxu0
  %2006 = vmatpush.bf16.msra.mxu0 %v665
  %2007 = vmatpush.bf16.msra.mxu0 %v657
  %2008 = vmatpush.bf16.msra.mxu0 %v649
  %2009 = vmatpush.bf16.msra.mxu0 %v641
  %2010 = vmatpush.bf16.msra.mxu0 %v633
  %2011 = vmatpush.bf16.msra.mxu0 %v625
  %2012 = vmatpush.bf16.msra.mxu0 %v617
  %2013 = vmatpush.bf16.msra.mxu0 %v609
  %2014 = vmatmul.bf16.gmra.mxu0 %v1862
  %v2015 = vpop.f32.mrf.mxu0
  %v2016 = vadd.f32 %v2003, %v2015
  %v2017 = vpop.f32.mrf.mxu0
  %2018 = vdwg.mxu0
  %2019 = vmatpush.bf16.msra.mxu0 %v602
  %2020 = vmatpush.bf16.msra.mxu0 %v594
  %2021 = vmatpush.bf16.msra.mxu0 %v586
  %2022 = vmatpush.bf16.msra.mxu0 %v578
  %2023 = vmatpush.bf16.msra.mxu0 %v570
  %2024 = vmatpush.bf16.msra.mxu0 %v562
  %2025 = vmatpush.bf16.msra.mxu0 %v554
  %2026 = vmatpush.bf16.msra.mxu0 %v546
  %2027 = vmatmul.bf16.gmra.mxu0 %v1861
  %v2028 = vpop.f32.mrf.mxu0
  %v2029 = vadd.f32 0.0, %v2028
  %v2030 = vpop.f32.mrf.mxu0
  %2031 = vdwg.mxu0
  %2032 = vmatpush.bf16.msra.mxu0 %v666
  %2033 = vmatpush.bf16.msra.mxu0 %v658
  %2034 = vmatpush.bf16.msra.mxu0 %v650
  %2035 = vmatpush.bf16.msra.mxu0 %v642
  %2036 = vmatpush.bf16.msra.mxu0 %v634
  %2037 = vmatpush.bf16.msra.mxu0 %v626
  %2038 = vmatpush.bf16.msra.mxu0 %v618
  %2039 = vmatpush.bf16.msra.mxu0 %v610
  %2040 = vmatmul.bf16.gmra.mxu0 %v1862
  %v2041 = vpop.f32.mrf.mxu0
  %v2042 = vadd.f32 %v2029, %v2041
  %v2043 = vpop.f32.mrf.mxu0
  %2044 = vdwg.mxu0
  %2045 = vmatpush.bf16.msra.mxu0 %v603
  %2046 = vmatpush.bf16.msra.mxu0 %v595
  %2047 = vmatpush.bf16.msra.mxu0 %v587
  %2048 = vmatpush.bf16.msra.mxu0 %v579
  %2049 = vmatpush.bf16.msra.mxu0 %v571
  %2050 = vmatpush.bf16.msra.mxu0 %v563
  %2051 = vmatpush.bf16.msra.mxu0 %v555
  %2052 = vmatpush.bf16.msra.mxu0 %v547
  %2053 = vmatmul.bf16.gmra.mxu0 %v1861
  %v2054 = vpop.f32.mrf.mxu0
  %v2055 = vadd.f32 0.0, %v2054
  %v2056 = vpop.f32.mrf.mxu0
  %2057 = vdwg.mxu0
  %2058 = vmatpush.bf16.msra.mxu0 %v667
  %2059 = vmatpush.bf16.msra.mxu0 %v659
  %2060 = vmatpush.bf16.msra.mxu0 %v651
  %2061 = vmatpush.bf16.msra.mxu0 %v643
  %2062 = vmatpush.bf16.msra.mxu0 %v635
  %2063 = vmatpush.bf16.msra.mxu0 %v627
  %2064 = vmatpush.bf16.msra.mxu0 %v619
  %2065 = vmatpush.bf16.msra.mxu0 %v611
  %2066 = vmatmul.bf16.gmra.mxu0 %v1862
  %v2067 = vpop.f32.mrf.mxu0
  %v2068 = vadd.f32 %v2055, %v2067
  %v2069 = vpop.f32.mrf.mxu0
  %2070 = vdwg.mxu0
  %v2071 = vadd.f32 %v1853, %v1886
  %v2072 = vadd.f32 %v1854, %v1912
  %v2073 = vadd.f32 %v1855, %v1938
  %v2074 = vadd.f32 %v1856, %v1964
  %v2075 = vadd.f32 %v1857, %v1990
  %v2076 = vadd.f32 %v1858, %v2016
  %v2077 = vadd.f32 %v1859, %v2042
  %v2078 = vadd.f32 %v1860, %v2068
  %v2079 = vxor.u32 %v2071, 2147483648
  %v2080 = vxor.u32 %v2072, 2147483648
  %v2081 = vmul.f32 %v2079, 1.442695
  %v2082 = vpow.pop %v2081
  %v2083 = vmul.f32 %v2080, 1.442695
  %v2084 = vpow.pop %v2083
  %v2085 = vadd.f32 %v2082, 1.0
  %v2086 = vadd.f32 %v2084, 1.0
  %v2087 = vrcp.pop %v2085
  %v2088 = vmul.f32 %v2085, %v2087
  %v2089 = vsub.f32 1.0, %v2088
  %v2090 = vmul.f32 %v2087, %v2089
  %v2091 = vadd.f32 %v2087, %v2090
  %vm2092 = vweird.f32 %v2085
  %vm2093 = vweird.f32 %v2087
  %vm2094 = vmor %vm2092, %vm2093
  %v2095 = vsel %vm2094, %v2087, %v2091
  %v2096 = vand.u32 2147483647, %v2085
  %vm2097 = vcmp.eq.f32.partialorder %v2096, 8.507059e+37
  %v2098 = vand.u32 %v2085, 2147483648
  %v2099 = vor.u32 1.1754944e-38, %v2098
  %v2100 = vsel %vm2097, %v2099, %v2095
  %v2101 = vmul.f32 1.0, %v2100
  %v2102 = vrcp.pop %v2086
  %v2103 = vmul.f32 %v2086, %v2102
  %v2104 = vsub.f32 1.0, %v2103
  %v2105 = vmul.f32 %v2102, %v2104
  %v2106 = vadd.f32 %v2102, %v2105
  %vm2107 = vweird.f32 %v2086
  %vm2108 = vweird.f32 %v2102
  %vm2109 = vmor %vm2107, %vm2108
  %v2110 = vsel %vm2109, %v2102, %v2106
  %v2111 = vand.u32 2147483647, %v2086
  %vm2112 = vcmp.eq.f32.partialorder %v2111, 8.507059e+37
  %v2113 = vand.u32 %v2086, 2147483648
  %v2114 = vor.u32 1.1754944e-38, %v2113
  %v2115 = vsel %vm2112, %v2114, %v2110
  %v2116 = vmul.f32 1.0, %v2115
  %v2117 = vxor.u32 %v2073, 2147483648
  %v2118 = vxor.u32 %v2074, 2147483648
  %v2119 = vmul.f32 %v2117, 1.442695
  %v2120 = vpow.pop %v2119
  %v2121 = vmul.f32 %v2118, 1.442695
  %v2122 = vpow.pop %v2121
  %v2123 = vadd.f32 %v2120, 1.0
  %v2124 = vadd.f32 %v2122, 1.0
  %v2125 = vrcp.pop %v2123
  %v2126 = vmul.f32 %v2123, %v2125
  %v2127 = vsub.f32 1.0, %v2126
  %v2128 = vmul.f32 %v2125, %v2127
  %v2129 = vadd.f32 %v2125, %v2128
  %vm2130 = vweird.f32 %v2123
  %vm2131 = vweird.f32 %v2125
  %vm2132 = vmor %vm2130, %vm2131
  %v2133 = vsel %vm2132, %v2125, %v2129
  %v2134 = vand.u32 2147483647, %v2123
  %vm2135 = vcmp.eq.f32.partialorder %v2134, 8.507059e+37
  %v2136 = vand.u32 %v2123, 2147483648
  %v2137 = vor.u32 1.1754944e-38, %v2136
  %v2138 = vsel %vm2135, %v2137, %v2133
  %v2139 = vmul.f32 1.0, %v2138
  %v2140 = vrcp.pop %v2124
  %v2141 = vmul.f32 %v2124, %v2140
  %v2142 = vsub.f32 1.0, %v2141
  %v2143 = vmul.f32 %v2140, %v2142
  %v2144 = vadd.f32 %v2140, %v2143
  %vm2145 = vweird.f32 %v2124
  %vm2146 = vweird.f32 %v2140
  %vm2147 = vmor %vm2145, %vm2146
  %v2148 = vsel %vm2147, %v2140, %v2144
  %v2149 = vand.u32 2147483647, %v2124
  %vm2150 = vcmp.eq.f32.partialorder %v2149, 8.507059e+37
  %v2151 = vand.u32 %v2124, 2147483648
  %v2152 = vor.u32 1.1754944e-38, %v2151
  %v2153 = vsel %vm2150, %v2152, %v2148
  %v2154 = vmul.f32 1.0, %v2153
  %v2155 = vtanh.pop %v2075
  %v2156 = vtanh.pop %v2076
  %v2157 = vxor.u32 %v2077, 2147483648
  %v2158 = vxor.u32 %v2078, 2147483648
  %v2159 = vmul.f32 %v2157, 1.442695
  %v2160 = vpow.pop %v2159
  %v2161 = vmul.f32 %v2158, 1.442695
  %v2162 = vpow.pop %v2161
  %v2163 = vadd.f32 %v2160, 1.0
  %v2164 = vadd.f32 %v2162, 1.0
  %v2165 = vrcp.pop %v2163
  %v2166 = vmul.f32 %v2163, %v2165
  %v2167 = vsub.f32 1.0, %v2166
  %v2168 = vmul.f32 %v2165, %v2167
  %v2169 = vadd.f32 %v2165, %v2168
  %vm2170 = vweird.f32 %v2163
  %vm2171 = vweird.f32 %v2165
  %vm2172 = vmor %vm2170, %vm2171
  %v2173 = vsel %vm2172, %v2165, %v2169
  %v2174 = vand.u32 2147483647, %v2163
  %vm2175 = vcmp.eq.f32.partialorder %v2174, 8.507059e+37
  %v2176 = vand.u32 %v2163, 2147483648
  %v2177 = vor.u32 1.1754944e-38, %v2176
  %v2178 = vsel %vm2175, %v2177, %v2173
  %v2179 = vmul.f32 1.0, %v2178
  %v2180 = vrcp.pop %v2164
  %v2181 = vmul.f32 %v2164, %v2180
  %v2182 = vsub.f32 1.0, %v2181
  %v2183 = vmul.f32 %v2180, %v2182
  %v2184 = vadd.f32 %v2180, %v2183
  %vm2185 = vweird.f32 %v2164
  %vm2186 = vweird.f32 %v2180
  %vm2187 = vmor %vm2185, %vm2186
  %v2188 = vsel %vm2187, %v2180, %v2184
  %v2189 = vand.u32 2147483647, %v2164
  %vm2190 = vcmp.eq.f32.partialorder %v2189, 8.507059e+37
  %v2191 = vand.u32 %v2164, 2147483648
  %v2192 = vor.u32 1.1754944e-38, %v2191
  %v2193 = vsel %vm2190, %v2192, %v2188
  %v2194 = vmul.f32 1.0, %v2193
  %v2195 = vmul.f32 %v2139, %v1843
  %v2196 = vmul.f32 %v2154, %v1844
  %v2197 = vmul.f32 %v2101, %v2155
  %v2198 = vmul.f32 %v2116, %v2156
  %v2199 = vadd.f32 %v2195, %v2197
  %v2200 = vadd.f32 %v2196, %v2198
  %v2201 = vtanh.pop %v2199
  %v2202 = vtanh.pop %v2200
  %v2203 = vmul.f32 %v2179, %v2201
  %v2204 = vmul.f32 %v2194, %v2202
  %s2205 = scalar_lea.vmem [#allocation2], 48
  %2206 = vst [vmem:[%s2205] sm:$0xff] %v2203
  %2207 = vst [vmem:[%s2205 + $0x8] sm:$0xff] %v2204
  %s2208 = scalar_lea.vmem %s0, 256
  %v2209 = vld [vmem:[%s2208] sm:$0xff]
  %v2210 = vld [vmem:[%s2208 + $0x8] sm:$0xff]
  %v2211 = vld [vmem:[%s2208 + $0x10] sm:$0xff]
  %v2212 = vld [vmem:[%s2208 + $0x18] sm:$0xff]
  %v2213 = vld [vmem:[%s2208 + $0x20] sm:$0xff]
  %v2214 = vld [vmem:[%s2208 + $0x28] sm:$0xff]
  %v2215 = vld [vmem:[%s2208 + $0x30] sm:$0xff]
  %v2216 = vld [vmem:[%s2208 + $0x38] sm:$0xff]
  %v2217 = vpack.c.bf16 %v2203, %v2203
  %v2218 = vpack.c.bf16 %v2204, %v2204
  %2219 = vmatpush.bf16.msra.mxu0 %v596
  %2220 = vmatpush.bf16.msra.mxu0 %v588
  %2221 = vmatpush.bf16.msra.mxu0 %v580
  %2222 = vmatpush.bf16.msra.mxu0 %v572
  %2223 = vmatpush.bf16.msra.mxu0 %v564
  %2224 = vmatpush.bf16.msra.mxu0 %v556
  %2225 = vmatpush.bf16.msra.mxu0 %v548
  %2226 = vmatpush.bf16.msra.mxu0 %v540
  %2227 = vmatmul.bf16.gmra.mxu0 %v2217
  %v2228 = vpop.f32.mrf.mxu0
  %v2229 = vadd.f32 0.0, %v2228
  %v2230 = vpop.f32.mrf.mxu0
  %2231 = vdwg.mxu0
  %2232 = vmatpush.bf16.msra.mxu0 %v660
  %2233 = vmatpush.bf16.msra.mxu0 %v652
  %2234 = vmatpush.bf16.msra.mxu0 %v644
  %2235 = vmatpush.bf16.msra.mxu0 %v636
  %2236 = vmatpush.bf16.msra.mxu0 %v628
  %2237 = vmatpush.bf16.msra.mxu0 %v620
  %2238 = vmatpush.bf16.msra.mxu0 %v612
  %2239 = vmatpush.bf16.msra.mxu0 %v604
  %2240 = vmatmul.bf16.gmra.mxu0 %v2218
  %v2241 = vpop.f32.mrf.mxu0
  %v2242 = vadd.f32 %v2229, %v2241
  %v2243 = vpop.f32.mrf.mxu0
  %2244 = vdwg.mxu0
  %2245 = vmatpush.bf16.msra.mxu0 %v597
  %2246 = vmatpush.bf16.msra.mxu0 %v589
  %2247 = vmatpush.bf16.msra.mxu0 %v581
  %2248 = vmatpush.bf16.msra.mxu0 %v573
  %2249 = vmatpush.bf16.msra.mxu0 %v565
  %2250 = vmatpush.bf16.msra.mxu0 %v557
  %2251 = vmatpush.bf16.msra.mxu0 %v549
  %2252 = vmatpush.bf16.msra.mxu0 %v541
  %2253 = vmatmul.bf16.gmra.mxu0 %v2217
  %v2254 = vpop.f32.mrf.mxu0
  %v2255 = vadd.f32 0.0, %v2254
  %v2256 = vpop.f32.mrf.mxu0
  %2257 = vdwg.mxu0
  %2258 = vmatpush.bf16.msra.mxu0 %v661
  %2259 = vmatpush.bf16.msra.mxu0 %v653
  %2260 = vmatpush.bf16.msra.mxu0 %v645
  %2261 = vmatpush.bf16.msra.mxu0 %v637
  %2262 = vmatpush.bf16.msra.mxu0 %v629
  %2263 = vmatpush.bf16.msra.mxu0 %v621
  %2264 = vmatpush.bf16.msra.mxu0 %v613
  %2265 = vmatpush.bf16.msra.mxu0 %v605
  %2266 = vmatmul.bf16.gmra.mxu0 %v2218
  %v2267 = vpop.f32.mrf.mxu0
  %v2268 = vadd.f32 %v2255, %v2267
  %v2269 = vpop.f32.mrf.mxu0
  %2270 = vdwg.mxu0
  %2271 = vmatpush.bf16.msra.mxu0 %v598
  %2272 = vmatpush.bf16.msra.mxu0 %v590
  %2273 = vmatpush.bf16.msra.mxu0 %v582
  %2274 = vmatpush.bf16.msra.mxu0 %v574
  %2275 = vmatpush.bf16.msra.mxu0 %v566
  %2276 = vmatpush.bf16.msra.mxu0 %v558
  %2277 = vmatpush.bf16.msra.mxu0 %v550
  %2278 = vmatpush.bf16.msra.mxu0 %v542
  %2279 = vmatmul.bf16.gmra.mxu0 %v2217
  %v2280 = vpop.f32.mrf.mxu0
  %v2281 = vadd.f32 0.0, %v2280
  %v2282 = vpop.f32.mrf.mxu0
  %2283 = vdwg.mxu0
  %2284 = vmatpush.bf16.msra.mxu0 %v662
  %2285 = vmatpush.bf16.msra.mxu0 %v654
  %2286 = vmatpush.bf16.msra.mxu0 %v646
  %2287 = vmatpush.bf16.msra.mxu0 %v638
  %2288 = vmatpush.bf16.msra.mxu0 %v630
  %2289 = vmatpush.bf16.msra.mxu0 %v622
  %2290 = vmatpush.bf16.msra.mxu0 %v614
  %2291 = vmatpush.bf16.msra.mxu0 %v606
  %2292 = vmatmul.bf16.gmra.mxu0 %v2218
  %v2293 = vpop.f32.mrf.mxu0
  %v2294 = vadd.f32 %v2281, %v2293
  %v2295 = vpop.f32.mrf.mxu0
  %2296 = vdwg.mxu0
  %2297 = vmatpush.bf16.msra.mxu0 %v599
  %2298 = vmatpush.bf16.msra.mxu0 %v591
  %2299 = vmatpush.bf16.msra.mxu0 %v583
  %2300 = vmatpush.bf16.msra.mxu0 %v575
  %2301 = vmatpush.bf16.msra.mxu0 %v567
  %2302 = vmatpush.bf16.msra.mxu0 %v559
  %2303 = vmatpush.bf16.msra.mxu0 %v551
  %2304 = vmatpush.bf16.msra.mxu0 %v543
  %2305 = vmatmul.bf16.gmra.mxu0 %v2217
  %v2306 = vpop.f32.mrf.mxu0
  %v2307 = vadd.f32 0.0, %v2306
  %v2308 = vpop.f32.mrf.mxu0
  %2309 = vdwg.mxu0
  %2310 = vmatpush.bf16.msra.mxu0 %v663
  %2311 = vmatpush.bf16.msra.mxu0 %v655
  %2312 = vmatpush.bf16.msra.mxu0 %v647
  %2313 = vmatpush.bf16.msra.mxu0 %v639
  %2314 = vmatpush.bf16.msra.mxu0 %v631
  %2315 = vmatpush.bf16.msra.mxu0 %v623
  %2316 = vmatpush.bf16.msra.mxu0 %v615
  %2317 = vmatpush.bf16.msra.mxu0 %v607
  %2318 = vmatmul.bf16.gmra.mxu0 %v2218
  %v2319 = vpop.f32.mrf.mxu0
  %v2320 = vadd.f32 %v2307, %v2319
  %v2321 = vpop.f32.mrf.mxu0
  %2322 = vdwg.mxu0
  %2323 = vmatpush.bf16.msra.mxu0 %v600
  %2324 = vmatpush.bf16.msra.mxu0 %v592
  %2325 = vmatpush.bf16.msra.mxu0 %v584
  %2326 = vmatpush.bf16.msra.mxu0 %v576
  %2327 = vmatpush.bf16.msra.mxu0 %v568
  %2328 = vmatpush.bf16.msra.mxu0 %v560
  %2329 = vmatpush.bf16.msra.mxu0 %v552
  %2330 = vmatpush.bf16.msra.mxu0 %v544
  %2331 = vmatmul.bf16.gmra.mxu0 %v2217
  %v2332 = vpop.f32.mrf.mxu0
  %v2333 = vadd.f32 0.0, %v2332
  %v2334 = vpop.f32.mrf.mxu0
  %2335 = vdwg.mxu0
  %2336 = vmatpush.bf16.msra.mxu0 %v664
  %2337 = vmatpush.bf16.msra.mxu0 %v656
  %2338 = vmatpush.bf16.msra.mxu0 %v648
  %2339 = vmatpush.bf16.msra.mxu0 %v640
  %2340 = vmatpush.bf16.msra.mxu0 %v632
  %2341 = vmatpush.bf16.msra.mxu0 %v624
  %2342 = vmatpush.bf16.msra.mxu0 %v616
  %2343 = vmatpush.bf16.msra.mxu0 %v608
  %2344 = vmatmul.bf16.gmra.mxu0 %v2218
  %v2345 = vpop.f32.mrf.mxu0
  %v2346 = vadd.f32 %v2333, %v2345
  %v2347 = vpop.f32.mrf.mxu0
  %2348 = vdwg.mxu0
  %2349 = vmatpush.bf16.msra.mxu0 %v601
  %2350 = vmatpush.bf16.msra.mxu0 %v593
  %2351 = vmatpush.bf16.msra.mxu0 %v585
  %2352 = vmatpush.bf16.msra.mxu0 %v577
  %2353 = vmatpush.bf16.msra.mxu0 %v569
  %2354 = vmatpush.bf16.msra.mxu0 %v561
  %2355 = vmatpush.bf16.msra.mxu0 %v553
  %2356 = vmatpush.bf16.msra.mxu0 %v545
  %2357 = vmatmul.bf16.gmra.mxu0 %v2217
  %v2358 = vpop.f32.mrf.mxu0
  %v2359 = vadd.f32 0.0, %v2358
  %v2360 = vpop.f32.mrf.mxu0
  %2361 = vdwg.mxu0
  %2362 = vmatpush.bf16.msra.mxu0 %v665
  %2363 = vmatpush.bf16.msra.mxu0 %v657
  %2364 = vmatpush.bf16.msra.mxu0 %v649
  %2365 = vmatpush.bf16.msra.mxu0 %v641
  %2366 = vmatpush.bf16.msra.mxu0 %v633
  %2367 = vmatpush.bf16.msra.mxu0 %v625
  %2368 = vmatpush.bf16.msra.mxu0 %v617
  %2369 = vmatpush.bf16.msra.mxu0 %v609
  %2370 = vmatmul.bf16.gmra.mxu0 %v2218
  %v2371 = vpop.f32.mrf.mxu0
  %v2372 = vadd.f32 %v2359, %v2371
  %v2373 = vpop.f32.mrf.mxu0
  %2374 = vdwg.mxu0
  %2375 = vmatpush.bf16.msra.mxu0 %v602
  %2376 = vmatpush.bf16.msra.mxu0 %v594
  %2377 = vmatpush.bf16.msra.mxu0 %v586
  %2378 = vmatpush.bf16.msra.mxu0 %v578
  %2379 = vmatpush.bf16.msra.mxu0 %v570
  %2380 = vmatpush.bf16.msra.mxu0 %v562
  %2381 = vmatpush.bf16.msra.mxu0 %v554
  %2382 = vmatpush.bf16.msra.mxu0 %v546
  %2383 = vmatmul.bf16.gmra.mxu0 %v2217
  %v2384 = vpop.f32.mrf.mxu0
  %v2385 = vadd.f32 0.0, %v2384
  %v2386 = vpop.f32.mrf.mxu0
  %2387 = vdwg.mxu0
  %2388 = vmatpush.bf16.msra.mxu0 %v666
  %2389 = vmatpush.bf16.msra.mxu0 %v658
  %2390 = vmatpush.bf16.msra.mxu0 %v650
  %2391 = vmatpush.bf16.msra.mxu0 %v642
  %2392 = vmatpush.bf16.msra.mxu0 %v634
  %2393 = vmatpush.bf16.msra.mxu0 %v626
  %2394 = vmatpush.bf16.msra.mxu0 %v618
  %2395 = vmatpush.bf16.msra.mxu0 %v610
  %2396 = vmatmul.bf16.gmra.mxu0 %v2218
  %v2397 = vpop.f32.mrf.mxu0
  %v2398 = vadd.f32 %v2385, %v2397
  %v2399 = vpop.f32.mrf.mxu0
  %2400 = vdwg.mxu0
  %2401 = vmatpush.bf16.msra.mxu0 %v603
  %2402 = vmatpush.bf16.msra.mxu0 %v595
  %2403 = vmatpush.bf16.msra.mxu0 %v587
  %2404 = vmatpush.bf16.msra.mxu0 %v579
  %2405 = vmatpush.bf16.msra.mxu0 %v571
  %2406 = vmatpush.bf16.msra.mxu0 %v563
  %2407 = vmatpush.bf16.msra.mxu0 %v555
  %2408 = vmatpush.bf16.msra.mxu0 %v547
  %2409 = vmatmul.bf16.gmra.mxu0 %v2217
  %v2410 = vpop.f32.mrf.mxu0
  %v2411 = vadd.f32 0.0, %v2410
  %v2412 = vpop.f32.mrf.mxu0
  %2413 = vdwg.mxu0
  %2414 = vmatpush.bf16.msra.mxu0 %v667
  %2415 = vmatpush.bf16.msra.mxu0 %v659
  %2416 = vmatpush.bf16.msra.mxu0 %v651
  %2417 = vmatpush.bf16.msra.mxu0 %v643
  %2418 = vmatpush.bf16.msra.mxu0 %v635
  %2419 = vmatpush.bf16.msra.mxu0 %v627
  %2420 = vmatpush.bf16.msra.mxu0 %v619
  %2421 = vmatpush.bf16.msra.mxu0 %v611
  %2422 = vmatmul.bf16.gmra.mxu0 %v2218
  %v2423 = vpop.f32.mrf.mxu0
  %v2424 = vadd.f32 %v2411, %v2423
  %v2425 = vpop.f32.mrf.mxu0
  %2426 = vdwg.mxu0
  %v2427 = vadd.f32 %v2209, %v2242
  %v2428 = vadd.f32 %v2210, %v2268
  %v2429 = vadd.f32 %v2211, %v2294
  %v2430 = vadd.f32 %v2212, %v2320
  %v2431 = vadd.f32 %v2213, %v2346
  %v2432 = vadd.f32 %v2214, %v2372
  %v2433 = vadd.f32 %v2215, %v2398
  %v2434 = vadd.f32 %v2216, %v2424
  %v2435 = vxor.u32 %v2427, 2147483648
  %v2436 = vxor.u32 %v2428, 2147483648
  %v2437 = vmul.f32 %v2435, 1.442695
  %v2438 = vpow.pop %v2437
  %v2439 = vmul.f32 %v2436, 1.442695
  %v2440 = vpow.pop %v2439
  %v2441 = vadd.f32 %v2438, 1.0
  %v2442 = vadd.f32 %v2440, 1.0
  %v2443 = vrcp.pop %v2441
  %v2444 = vmul.f32 %v2441, %v2443
  %v2445 = vsub.f32 1.0, %v2444
  %v2446 = vmul.f32 %v2443, %v2445
  %v2447 = vadd.f32 %v2443, %v2446
  %vm2448 = vweird.f32 %v2441
  %vm2449 = vweird.f32 %v2443
  %vm2450 = vmor %vm2448, %vm2449
  %v2451 = vsel %vm2450, %v2443, %v2447
  %v2452 = vand.u32 2147483647, %v2441
  %vm2453 = vcmp.eq.f32.partialorder %v2452, 8.507059e+37
  %v2454 = vand.u32 %v2441, 2147483648
  %v2455 = vor.u32 1.1754944e-38, %v2454
  %v2456 = vsel %vm2453, %v2455, %v2451
  %v2457 = vmul.f32 1.0, %v2456
  %v2458 = vrcp.pop %v2442
  %v2459 = vmul.f32 %v2442, %v2458
  %v2460 = vsub.f32 1.0, %v2459
  %v2461 = vmul.f32 %v2458, %v2460
  %v2462 = vadd.f32 %v2458, %v2461
  %vm2463 = vweird.f32 %v2442
  %vm2464 = vweird.f32 %v2458
  %vm2465 = vmor %vm2463, %vm2464
  %v2466 = vsel %vm2465, %v2458, %v2462
  %v2467 = vand.u32 2147483647, %v2442
  %vm2468 = vcmp.eq.f32.partialorder %v2467, 8.507059e+37
  %v2469 = vand.u32 %v2442, 2147483648
  %v2470 = vor.u32 1.1754944e-38, %v2469
  %v2471 = vsel %vm2468, %v2470, %v2466
  %v2472 = vmul.f32 1.0, %v2471
  %v2473 = vxor.u32 %v2429, 2147483648
  %v2474 = vxor.u32 %v2430, 2147483648
  %v2475 = vmul.f32 %v2473, 1.442695
  %v2476 = vpow.pop %v2475
  %v2477 = vmul.f32 %v2474, 1.442695
  %v2478 = vpow.pop %v2477
  %v2479 = vadd.f32 %v2476, 1.0
  %v2480 = vadd.f32 %v2478, 1.0
  %v2481 = vrcp.pop %v2479
  %v2482 = vmul.f32 %v2479, %v2481
  %v2483 = vsub.f32 1.0, %v2482
  %v2484 = vmul.f32 %v2481, %v2483
  %v2485 = vadd.f32 %v2481, %v2484
  %vm2486 = vweird.f32 %v2479
  %vm2487 = vweird.f32 %v2481
  %vm2488 = vmor %vm2486, %vm2487
  %v2489 = vsel %vm2488, %v2481, %v2485
  %v2490 = vand.u32 2147483647, %v2479
  %vm2491 = vcmp.eq.f32.partialorder %v2490, 8.507059e+37
  %v2492 = vand.u32 %v2479, 2147483648
  %v2493 = vor.u32 1.1754944e-38, %v2492
  %v2494 = vsel %vm2491, %v2493, %v2489
  %v2495 = vmul.f32 1.0, %v2494
  %v2496 = vrcp.pop %v2480
  %v2497 = vmul.f32 %v2480, %v2496
  %v2498 = vsub.f32 1.0, %v2497
  %v2499 = vmul.f32 %v2496, %v2498
  %v2500 = vadd.f32 %v2496, %v2499
  %vm2501 = vweird.f32 %v2480
  %vm2502 = vweird.f32 %v2496
  %vm2503 = vmor %vm2501, %vm2502
  %v2504 = vsel %vm2503, %v2496, %v2500
  %v2505 = vand.u32 2147483647, %v2480
  %vm2506 = vcmp.eq.f32.partialorder %v2505, 8.507059e+37
  %v2507 = vand.u32 %v2480, 2147483648
  %v2508 = vor.u32 1.1754944e-38, %v2507
  %v2509 = vsel %vm2506, %v2508, %v2504
  %v2510 = vmul.f32 1.0, %v2509
  %v2511 = vtanh.pop %v2431
  %v2512 = vtanh.pop %v2432
  %v2513 = vxor.u32 %v2433, 2147483648
  %v2514 = vxor.u32 %v2434, 2147483648
  %v2515 = vmul.f32 %v2513, 1.442695
  %v2516 = vpow.pop %v2515
  %v2517 = vmul.f32 %v2514, 1.442695
  %v2518 = vpow.pop %v2517
  %v2519 = vadd.f32 %v2516, 1.0
  %v2520 = vadd.f32 %v2518, 1.0
  %v2521 = vrcp.pop %v2519
  %v2522 = vmul.f32 %v2519, %v2521
  %v2523 = vsub.f32 1.0, %v2522
  %v2524 = vmul.f32 %v2521, %v2523
  %v2525 = vadd.f32 %v2521, %v2524
  %vm2526 = vweird.f32 %v2519
  %vm2527 = vweird.f32 %v2521
  %vm2528 = vmor %vm2526, %vm2527
  %v2529 = vsel %vm2528, %v2521, %v2525
  %v2530 = vand.u32 2147483647, %v2519
  %vm2531 = vcmp.eq.f32.partialorder %v2530, 8.507059e+37
  %v2532 = vand.u32 %v2519, 2147483648
  %v2533 = vor.u32 1.1754944e-38, %v2532
  %v2534 = vsel %vm2531, %v2533, %v2529
  %v2535 = vmul.f32 1.0, %v2534
  %v2536 = vrcp.pop %v2520
  %v2537 = vmul.f32 %v2520, %v2536
  %v2538 = vsub.f32 1.0, %v2537
  %v2539 = vmul.f32 %v2536, %v2538
  %v2540 = vadd.f32 %v2536, %v2539
  %vm2541 = vweird.f32 %v2520
  %vm2542 = vweird.f32 %v2536
  %vm2543 = vmor %vm2541, %vm2542
  %v2544 = vsel %vm2543, %v2536, %v2540
  %v2545 = vand.u32 2147483647, %v2520
  %vm2546 = vcmp.eq.f32.partialorder %v2545, 8.507059e+37
  %v2547 = vand.u32 %v2520, 2147483648
  %v2548 = vor.u32 1.1754944e-38, %v2547
  %v2549 = vsel %vm2546, %v2548, %v2544
  %v2550 = vmul.f32 1.0, %v2549
  %v2551 = vmul.f32 %v2495, %v2199
  %v2552 = vmul.f32 %v2510, %v2200
  %v2553 = vmul.f32 %v2457, %v2511
  %v2554 = vmul.f32 %v2472, %v2512
  %v2555 = vadd.f32 %v2551, %v2553
  %v2556 = vadd.f32 %v2552, %v2554
  %v2557 = vtanh.pop %v2555
  %v2558 = vtanh.pop %v2556
  %v2559 = vmul.f32 %v2535, %v2557
  %v2560 = vmul.f32 %v2550, %v2558
  %s2561 = scalar_lea.vmem [#allocation2], 64
  %2562 = vst [vmem:[%s2561] sm:$0xff] %v2559
  %2563 = vst [vmem:[%s2561 + $0x8] sm:$0xff] %v2560
  %s2564 = scalar_lea.vmem %s0, 320
  %v2565 = vld [vmem:[%s2564] sm:$0xff]
  %v2566 = vld [vmem:[%s2564 + $0x8] sm:$0xff]
  %v2567 = vld [vmem:[%s2564 + $0x10] sm:$0xff]
  %v2568 = vld [vmem:[%s2564 + $0x18] sm:$0xff]
  %v2569 = vld [vmem:[%s2564 + $0x20] sm:$0xff]
  %v2570 = vld [vmem:[%s2564 + $0x28] sm:$0xff]
  %v2571 = vld [vmem:[%s2564 + $0x30] sm:$0xff]
  %v2572 = vld [vmem:[%s2564 + $0x38] sm:$0xff]
  %v2573 = vpack.c.bf16 %v2559, %v2559
  %v2574 = vpack.c.bf16 %v2560, %v2560
  %2575 = vmatpush.bf16.msra.mxu0 %v596
  %2576 = vmatpush.bf16.msra.mxu0 %v588
  %2577 = vmatpush.bf16.msra.mxu0 %v580
  %2578 = vmatpush.bf16.msra.mxu0 %v572
  %2579 = vmatpush.bf16.msra.mxu0 %v564
  %2580 = vmatpush.bf16.msra.mxu0 %v556
  %2581 = vmatpush.bf16.msra.mxu0 %v548
  %2582 = vmatpush.bf16.msra.mxu0 %v540
  %2583 = vmatmul.bf16.gmra.mxu0 %v2573
  %v2584 = vpop.f32.mrf.mxu0
  %v2585 = vadd.f32 0.0, %v2584
  %v2586 = vpop.f32.mrf.mxu0
  %2587 = vdwg.mxu0
  %2588 = vmatpush.bf16.msra.mxu0 %v660
  %2589 = vmatpush.bf16.msra.mxu0 %v652
  %2590 = vmatpush.bf16.msra.mxu0 %v644
  %2591 = vmatpush.bf16.msra.mxu0 %v636
  %2592 = vmatpush.bf16.msra.mxu0 %v628
  %2593 = vmatpush.bf16.msra.mxu0 %v620
  %2594 = vmatpush.bf16.msra.mxu0 %v612
  %2595 = vmatpush.bf16.msra.mxu0 %v604
  %2596 = vmatmul.bf16.gmra.mxu0 %v2574
  %v2597 = vpop.f32.mrf.mxu0
  %v2598 = vadd.f32 %v2585, %v2597
  %v2599 = vpop.f32.mrf.mxu0
  %2600 = vdwg.mxu0
  %2601 = vmatpush.bf16.msra.mxu0 %v597
  %2602 = vmatpush.bf16.msra.mxu0 %v589
  %2603 = vmatpush.bf16.msra.mxu0 %v581
  %2604 = vmatpush.bf16.msra.mxu0 %v573
  %2605 = vmatpush.bf16.msra.mxu0 %v565
  %2606 = vmatpush.bf16.msra.mxu0 %v557
  %2607 = vmatpush.bf16.msra.mxu0 %v549
  %2608 = vmatpush.bf16.msra.mxu0 %v541
  %2609 = vmatmul.bf16.gmra.mxu0 %v2573
  %v2610 = vpop.f32.mrf.mxu0
  %v2611 = vadd.f32 0.0, %v2610
  %v2612 = vpop.f32.mrf.mxu0
  %2613 = vdwg.mxu0
  %2614 = vmatpush.bf16.msra.mxu0 %v661
  %2615 = vmatpush.bf16.msra.mxu0 %v653
  %2616 = vmatpush.bf16.msra.mxu0 %v645
  %2617 = vmatpush.bf16.msra.mxu0 %v637
  %2618 = vmatpush.bf16.msra.mxu0 %v629
  %2619 = vmatpush.bf16.msra.mxu0 %v621
  %2620 = vmatpush.bf16.msra.mxu0 %v613
  %2621 = vmatpush.bf16.msra.mxu0 %v605
  %2622 = vmatmul.bf16.gmra.mxu0 %v2574
  %v2623 = vpop.f32.mrf.mxu0
  %v2624 = vadd.f32 %v2611, %v2623
  %v2625 = vpop.f32.mrf.mxu0
  %2626 = vdwg.mxu0
  %2627 = vmatpush.bf16.msra.mxu0 %v598
  %2628 = vmatpush.bf16.msra.mxu0 %v590
  %2629 = vmatpush.bf16.msra.mxu0 %v582
  %2630 = vmatpush.bf16.msra.mxu0 %v574
  %2631 = vmatpush.bf16.msra.mxu0 %v566
  %2632 = vmatpush.bf16.msra.mxu0 %v558
  %2633 = vmatpush.bf16.msra.mxu0 %v550
  %2634 = vmatpush.bf16.msra.mxu0 %v542
  %2635 = vmatmul.bf16.gmra.mxu0 %v2573
  %v2636 = vpop.f32.mrf.mxu0
  %v2637 = vadd.f32 0.0, %v2636
  %v2638 = vpop.f32.mrf.mxu0
  %2639 = vdwg.mxu0
  %2640 = vmatpush.bf16.msra.mxu0 %v662
  %2641 = vmatpush.bf16.msra.mxu0 %v654
  %2642 = vmatpush.bf16.msra.mxu0 %v646
  %2643 = vmatpush.bf16.msra.mxu0 %v638
  %2644 = vmatpush.bf16.msra.mxu0 %v630
  %2645 = vmatpush.bf16.msra.mxu0 %v622
  %2646 = vmatpush.bf16.msra.mxu0 %v614
  %2647 = vmatpush.bf16.msra.mxu0 %v606
  %2648 = vmatmul.bf16.gmra.mxu0 %v2574
  %v2649 = vpop.f32.mrf.mxu0
  %v2650 = vadd.f32 %v2637, %v2649
  %v2651 = vpop.f32.mrf.mxu0
  %2652 = vdwg.mxu0
  %2653 = vmatpush.bf16.msra.mxu0 %v599
  %2654 = vmatpush.bf16.msra.mxu0 %v591
  %2655 = vmatpush.bf16.msra.mxu0 %v583
  %2656 = vmatpush.bf16.msra.mxu0 %v575
  %2657 = vmatpush.bf16.msra.mxu0 %v567
  %2658 = vmatpush.bf16.msra.mxu0 %v559
  %2659 = vmatpush.bf16.msra.mxu0 %v551
  %2660 = vmatpush.bf16.msra.mxu0 %v543
  %2661 = vmatmul.bf16.gmra.mxu0 %v2573
  %v2662 = vpop.f32.mrf.mxu0
  %v2663 = vadd.f32 0.0, %v2662
  %v2664 = vpop.f32.mrf.mxu0
  %2665 = vdwg.mxu0
  %2666 = vmatpush.bf16.msra.mxu0 %v663
  %2667 = vmatpush.bf16.msra.mxu0 %v655
  %2668 = vmatpush.bf16.msra.mxu0 %v647
  %2669 = vmatpush.bf16.msra.mxu0 %v639
  %2670 = vmatpush.bf16.msra.mxu0 %v631
  %2671 = vmatpush.bf16.msra.mxu0 %v623
  %2672 = vmatpush.bf16.msra.mxu0 %v615
  %2673 = vmatpush.bf16.msra.mxu0 %v607
  %2674 = vmatmul.bf16.gmra.mxu0 %v2574
  %v2675 = vpop.f32.mrf.mxu0
  %v2676 = vadd.f32 %v2663, %v2675
  %v2677 = vpop.f32.mrf.mxu0
  %2678 = vdwg.mxu0
  %2679 = vmatpush.bf16.msra.mxu0 %v600
  %2680 = vmatpush.bf16.msra.mxu0 %v592
  %2681 = vmatpush.bf16.msra.mxu0 %v584
  %2682 = vmatpush.bf16.msra.mxu0 %v576
  %2683 = vmatpush.bf16.msra.mxu0 %v568
  %2684 = vmatpush.bf16.msra.mxu0 %v560
  %2685 = vmatpush.bf16.msra.mxu0 %v552
  %2686 = vmatpush.bf16.msra.mxu0 %v544
  %2687 = vmatmul.bf16.gmra.mxu0 %v2573
  %v2688 = vpop.f32.mrf.mxu0
  %v2689 = vadd.f32 0.0, %v2688
  %v2690 = vpop.f32.mrf.mxu0
  %2691 = vdwg.mxu0
  %2692 = vmatpush.bf16.msra.mxu0 %v664
  %2693 = vmatpush.bf16.msra.mxu0 %v656
  %2694 = vmatpush.bf16.msra.mxu0 %v648
  %2695 = vmatpush.bf16.msra.mxu0 %v640
  %2696 = vmatpush.bf16.msra.mxu0 %v632
  %2697 = vmatpush.bf16.msra.mxu0 %v624
  %2698 = vmatpush.bf16.msra.mxu0 %v616
  %2699 = vmatpush.bf16.msra.mxu0 %v608
  %2700 = vmatmul.bf16.gmra.mxu0 %v2574
  %v2701 = vpop.f32.mrf.mxu0
  %v2702 = vadd.f32 %v2689, %v2701
  %v2703 = vpop.f32.mrf.mxu0
  %2704 = vdwg.mxu0
  %2705 = vmatpush.bf16.msra.mxu0 %v601
  %2706 = vmatpush.bf16.msra.mxu0 %v593
  %2707 = vmatpush.bf16.msra.mxu0 %v585
  %2708 = vmatpush.bf16.msra.mxu0 %v577
  %2709 = vmatpush.bf16.msra.mxu0 %v569
  %2710 = vmatpush.bf16.msra.mxu0 %v561
  %2711 = vmatpush.bf16.msra.mxu0 %v553
  %2712 = vmatpush.bf16.msra.mxu0 %v545
  %2713 = vmatmul.bf16.gmra.mxu0 %v2573
  %v2714 = vpop.f32.mrf.mxu0
  %v2715 = vadd.f32 0.0, %v2714
  %v2716 = vpop.f32.mrf.mxu0
  %2717 = vdwg.mxu0
  %2718 = vmatpush.bf16.msra.mxu0 %v665
  %2719 = vmatpush.bf16.msra.mxu0 %v657
  %2720 = vmatpush.bf16.msra.mxu0 %v649
  %2721 = vmatpush.bf16.msra.mxu0 %v641
  %2722 = vmatpush.bf16.msra.mxu0 %v633
  %2723 = vmatpush.bf16.msra.mxu0 %v625
  %2724 = vmatpush.bf16.msra.mxu0 %v617
  %2725 = vmatpush.bf16.msra.mxu0 %v609
  %2726 = vmatmul.bf16.gmra.mxu0 %v2574
  %v2727 = vpop.f32.mrf.mxu0
  %v2728 = vadd.f32 %v2715, %v2727
  %v2729 = vpop.f32.mrf.mxu0
  %2730 = vdwg.mxu0
  %2731 = vmatpush.bf16.msra.mxu0 %v602
  %2732 = vmatpush.bf16.msra.mxu0 %v594
  %2733 = vmatpush.bf16.msra.mxu0 %v586
  %2734 = vmatpush.bf16.msra.mxu0 %v578
  %2735 = vmatpush.bf16.msra.mxu0 %v570
  %2736 = vmatpush.bf16.msra.mxu0 %v562
  %2737 = vmatpush.bf16.msra.mxu0 %v554
  %2738 = vmatpush.bf16.msra.mxu0 %v546
  %2739 = vmatmul.bf16.gmra.mxu0 %v2573
  %v2740 = vpop.f32.mrf.mxu0
  %v2741 = vadd.f32 0.0, %v2740
  %v2742 = vpop.f32.mrf.mxu0
  %2743 = vdwg.mxu0
  %2744 = vmatpush.bf16.msra.mxu0 %v666
  %2745 = vmatpush.bf16.msra.mxu0 %v658
  %2746 = vmatpush.bf16.msra.mxu0 %v650
  %2747 = vmatpush.bf16.msra.mxu0 %v642
  %2748 = vmatpush.bf16.msra.mxu0 %v634
  %2749 = vmatpush.bf16.msra.mxu0 %v626
  %2750 = vmatpush.bf16.msra.mxu0 %v618
  %2751 = vmatpush.bf16.msra.mxu0 %v610
  %2752 = vmatmul.bf16.gmra.mxu0 %v2574
  %v2753 = vpop.f32.mrf.mxu0
  %v2754 = vadd.f32 %v2741, %v2753
  %v2755 = vpop.f32.mrf.mxu0
  %2756 = vdwg.mxu0
  %2757 = vmatpush.bf16.msra.mxu0 %v603
  %2758 = vmatpush.bf16.msra.mxu0 %v595
  %2759 = vmatpush.bf16.msra.mxu0 %v587
  %2760 = vmatpush.bf16.msra.mxu0 %v579
  %2761 = vmatpush.bf16.msra.mxu0 %v571
  %2762 = vmatpush.bf16.msra.mxu0 %v563
  %2763 = vmatpush.bf16.msra.mxu0 %v555
  %2764 = vmatpush.bf16.msra.mxu0 %v547
  %2765 = vmatmul.bf16.gmra.mxu0 %v2573
  %v2766 = vpop.f32.mrf.mxu0
  %v2767 = vadd.f32 0.0, %v2766
  %v2768 = vpop.f32.mrf.mxu0
  %2769 = vdwg.mxu0
  %2770 = vmatpush.bf16.msra.mxu0 %v667
  %2771 = vmatpush.bf16.msra.mxu0 %v659
  %2772 = vmatpush.bf16.msra.mxu0 %v651
  %2773 = vmatpush.bf16.msra.mxu0 %v643
  %2774 = vmatpush.bf16.msra.mxu0 %v635
  %2775 = vmatpush.bf16.msra.mxu0 %v627
  %2776 = vmatpush.bf16.msra.mxu0 %v619
  %2777 = vmatpush.bf16.msra.mxu0 %v611
  %2778 = vmatmul.bf16.gmra.mxu0 %v2574
  %v2779 = vpop.f32.mrf.mxu0
  %v2780 = vadd.f32 %v2767, %v2779
  %v2781 = vpop.f32.mrf.mxu0
  %2782 = vdwg.mxu0
  %v2783 = vadd.f32 %v2565, %v2598
  %v2784 = vadd.f32 %v2566, %v2624
  %v2785 = vadd.f32 %v2567, %v2650
  %v2786 = vadd.f32 %v2568, %v2676
  %v2787 = vadd.f32 %v2569, %v2702
  %v2788 = vadd.f32 %v2570, %v2728
  %v2789 = vadd.f32 %v2571, %v2754
  %v2790 = vadd.f32 %v2572, %v2780
  %v2791 = vxor.u32 %v2783, 2147483648
  %v2792 = vxor.u32 %v2784, 2147483648
  %v2793 = vmul.f32 %v2791, 1.442695
  %v2794 = vpow.pop %v2793
  %v2795 = vmul.f32 %v2792, 1.442695
  %v2796 = vpow.pop %v2795
  %v2797 = vadd.f32 %v2794, 1.0
  %v2798 = vadd.f32 %v2796, 1.0
  %v2799 = vrcp.pop %v2797
  %v2800 = vmul.f32 %v2797, %v2799
  %v2801 = vsub.f32 1.0, %v2800
  %v2802 = vmul.f32 %v2799, %v2801
  %v2803 = vadd.f32 %v2799, %v2802
  %vm2804 = vweird.f32 %v2797
  %vm2805 = vweird.f32 %v2799
  %vm2806 = vmor %vm2804, %vm2805
  %v2807 = vsel %vm2806, %v2799, %v2803
  %v2808 = vand.u32 2147483647, %v2797
  %vm2809 = vcmp.eq.f32.partialorder %v2808, 8.507059e+37
  %v2810 = vand.u32 %v2797, 2147483648
  %v2811 = vor.u32 1.1754944e-38, %v2810
  %v2812 = vsel %vm2809, %v2811, %v2807
  %v2813 = vmul.f32 1.0, %v2812
  %v2814 = vrcp.pop %v2798
  %v2815 = vmul.f32 %v2798, %v2814
  %v2816 = vsub.f32 1.0, %v2815
  %v2817 = vmul.f32 %v2814, %v2816
  %v2818 = vadd.f32 %v2814, %v2817
  %vm2819 = vweird.f32 %v2798
  %vm2820 = vweird.f32 %v2814
  %vm2821 = vmor %vm2819, %vm2820
  %v2822 = vsel %vm2821, %v2814, %v2818
  %v2823 = vand.u32 2147483647, %v2798
  %vm2824 = vcmp.eq.f32.partialorder %v2823, 8.507059e+37
  %v2825 = vand.u32 %v2798, 2147483648
  %v2826 = vor.u32 1.1754944e-38, %v2825
  %v2827 = vsel %vm2824, %v2826, %v2822
  %v2828 = vmul.f32 1.0, %v2827
  %v2829 = vxor.u32 %v2785, 2147483648
  %v2830 = vxor.u32 %v2786, 2147483648
  %v2831 = vmul.f32 %v2829, 1.442695
  %v2832 = vpow.pop %v2831
  %v2833 = vmul.f32 %v2830, 1.442695
  %v2834 = vpow.pop %v2833
  %v2835 = vadd.f32 %v2832, 1.0
  %v2836 = vadd.f32 %v2834, 1.0
  %v2837 = vrcp.pop %v2835
  %v2838 = vmul.f32 %v2835, %v2837
  %v2839 = vsub.f32 1.0, %v2838
  %v2840 = vmul.f32 %v2837, %v2839
  %v2841 = vadd.f32 %v2837, %v2840
  %vm2842 = vweird.f32 %v2835
  %vm2843 = vweird.f32 %v2837
  %vm2844 = vmor %vm2842, %vm2843
  %v2845 = vsel %vm2844, %v2837, %v2841
  %v2846 = vand.u32 2147483647, %v2835
  %vm2847 = vcmp.eq.f32.partialorder %v2846, 8.507059e+37
  %v2848 = vand.u32 %v2835, 2147483648
  %v2849 = vor.u32 1.1754944e-38, %v2848
  %v2850 = vsel %vm2847, %v2849, %v2845
  %v2851 = vmul.f32 1.0, %v2850
  %v2852 = vrcp.pop %v2836
  %v2853 = vmul.f32 %v2836, %v2852
  %v2854 = vsub.f32 1.0, %v2853
  %v2855 = vmul.f32 %v2852, %v2854
  %v2856 = vadd.f32 %v2852, %v2855
  %vm2857 = vweird.f32 %v2836
  %vm2858 = vweird.f32 %v2852
  %vm2859 = vmor %vm2857, %vm2858
  %v2860 = vsel %vm2859, %v2852, %v2856
  %v2861 = vand.u32 2147483647, %v2836
  %vm2862 = vcmp.eq.f32.partialorder %v2861, 8.507059e+37
  %v2863 = vand.u32 %v2836, 2147483648
  %v2864 = vor.u32 1.1754944e-38, %v2863
  %v2865 = vsel %vm2862, %v2864, %v2860
  %v2866 = vmul.f32 1.0, %v2865
  %v2867 = vtanh.pop %v2787
  %v2868 = vtanh.pop %v2788
  %v2869 = vxor.u32 %v2789, 2147483648
  %v2870 = vxor.u32 %v2790, 2147483648
  %v2871 = vmul.f32 %v2869, 1.442695
  %v2872 = vpow.pop %v2871
  %v2873 = vmul.f32 %v2870, 1.442695
  %v2874 = vpow.pop %v2873
  %v2875 = vadd.f32 %v2872, 1.0
  %v2876 = vadd.f32 %v2874, 1.0
  %v2877 = vrcp.pop %v2875
  %v2878 = vmul.f32 %v2875, %v2877
  %v2879 = vsub.f32 1.0, %v2878
  %v2880 = vmul.f32 %v2877, %v2879
  %v2881 = vadd.f32 %v2877, %v2880
  %vm2882 = vweird.f32 %v2875
  %vm2883 = vweird.f32 %v2877
  %vm2884 = vmor %vm2882, %vm2883
  %v2885 = vsel %vm2884, %v2877, %v2881
  %v2886 = vand.u32 2147483647, %v2875
  %vm2887 = vcmp.eq.f32.partialorder %v2886, 8.507059e+37
  %v2888 = vand.u32 %v2875, 2147483648
  %v2889 = vor.u32 1.1754944e-38, %v2888
  %v2890 = vsel %vm2887, %v2889, %v2885
  %v2891 = vmul.f32 1.0, %v2890
  %v2892 = vrcp.pop %v2876
  %v2893 = vmul.f32 %v2876, %v2892
  %v2894 = vsub.f32 1.0, %v2893
  %v2895 = vmul.f32 %v2892, %v2894
  %v2896 = vadd.f32 %v2892, %v2895
  %vm2897 = vweird.f32 %v2876
  %vm2898 = vweird.f32 %v2892
  %vm2899 = vmor %vm2897, %vm2898
  %v2900 = vsel %vm2899, %v2892, %v2896
  %v2901 = vand.u32 2147483647, %v2876
  %vm2902 = vcmp.eq.f32.partialorder %v2901, 8.507059e+37
  %v2903 = vand.u32 %v2876, 2147483648
  %v2904 = vor.u32 1.1754944e-38, %v2903
  %v2905 = vsel %vm2902, %v2904, %v2900
  %v2906 = vmul.f32 1.0, %v2905
  %v2907 = vmul.f32 %v2851, %v2555
  %v2908 = vmul.f32 %v2866, %v2556
  %v2909 = vmul.f32 %v2813, %v2867
  %v2910 = vmul.f32 %v2828, %v2868
  %v2911 = vadd.f32 %v2907, %v2909
  %v2912 = vadd.f32 %v2908, %v2910
  %v2913 = vtanh.pop %v2911
  %v2914 = vtanh.pop %v2912
  %v2915 = vmul.f32 %v2891, %v2913
  %v2916 = vmul.f32 %v2906, %v2914
  %s2917 = scalar_lea.vmem [#allocation2], 80
  %2918 = vst [vmem:[%s2917] sm:$0xff] %v2915
  %2919 = vst [vmem:[%s2917 + $0x8] sm:$0xff] %v2916
  %s2920 = scalar_lea.vmem %s0, 384
  %v2921 = vld [vmem:[%s2920] sm:$0xff]
  %v2922 = vld [vmem:[%s2920 + $0x8] sm:$0xff]
  %v2923 = vld [vmem:[%s2920 + $0x10] sm:$0xff]
  %v2924 = vld [vmem:[%s2920 + $0x18] sm:$0xff]
  %v2925 = vld [vmem:[%s2920 + $0x20] sm:$0xff]
  %v2926 = vld [vmem:[%s2920 + $0x28] sm:$0xff]
  %v2927 = vld [vmem:[%s2920 + $0x30] sm:$0xff]
  %v2928 = vld [vmem:[%s2920 + $0x38] sm:$0xff]
  %v2929 = vpack.c.bf16 %v2915, %v2915
  %v2930 = vpack.c.bf16 %v2916, %v2916
  %2931 = vmatpush.bf16.msra.mxu0 %v596
  %2932 = vmatpush.bf16.msra.mxu0 %v588
  %2933 = vmatpush.bf16.msra.mxu0 %v580
  %2934 = vmatpush.bf16.msra.mxu0 %v572
  %2935 = vmatpush.bf16.msra.mxu0 %v564
  %2936 = vmatpush.bf16.msra.mxu0 %v556
  %2937 = vmatpush.bf16.msra.mxu0 %v548
  %2938 = vmatpush.bf16.msra.mxu0 %v540
  %2939 = vmatmul.bf16.gmra.mxu0 %v2929
  %v2940 = vpop.f32.mrf.mxu0
  %v2941 = vadd.f32 0.0, %v2940
  %v2942 = vpop.f32.mrf.mxu0
  %2943 = vdwg.mxu0
  %2944 = vmatpush.bf16.msra.mxu0 %v660
  %2945 = vmatpush.bf16.msra.mxu0 %v652
  %2946 = vmatpush.bf16.msra.mxu0 %v644
  %2947 = vmatpush.bf16.msra.mxu0 %v636
  %2948 = vmatpush.bf16.msra.mxu0 %v628
  %2949 = vmatpush.bf16.msra.mxu0 %v620
  %2950 = vmatpush.bf16.msra.mxu0 %v612
  %2951 = vmatpush.bf16.msra.mxu0 %v604
  %2952 = vmatmul.bf16.gmra.mxu0 %v2930
  %v2953 = vpop.f32.mrf.mxu0
  %v2954 = vadd.f32 %v2941, %v2953
  %v2955 = vpop.f32.mrf.mxu0
  %2956 = vdwg.mxu0
  %2957 = vmatpush.bf16.msra.mxu0 %v597
  %2958 = vmatpush.bf16.msra.mxu0 %v589
  %2959 = vmatpush.bf16.msra.mxu0 %v581
  %2960 = vmatpush.bf16.msra.mxu0 %v573
  %2961 = vmatpush.bf16.msra.mxu0 %v565
  %2962 = vmatpush.bf16.msra.mxu0 %v557
  %2963 = vmatpush.bf16.msra.mxu0 %v549
  %2964 = vmatpush.bf16.msra.mxu0 %v541
  %2965 = vmatmul.bf16.gmra.mxu0 %v2929
  %v2966 = vpop.f32.mrf.mxu0
  %v2967 = vadd.f32 0.0, %v2966
  %v2968 = vpop.f32.mrf.mxu0
  %2969 = vdwg.mxu0
  %2970 = vmatpush.bf16.msra.mxu0 %v661
  %2971 = vmatpush.bf16.msra.mxu0 %v653
  %2972 = vmatpush.bf16.msra.mxu0 %v645
  %2973 = vmatpush.bf16.msra.mxu0 %v637
  %2974 = vmatpush.bf16.msra.mxu0 %v629
  %2975 = vmatpush.bf16.msra.mxu0 %v621
  %2976 = vmatpush.bf16.msra.mxu0 %v613
  %2977 = vmatpush.bf16.msra.mxu0 %v605
  %2978 = vmatmul.bf16.gmra.mxu0 %v2930
  %v2979 = vpop.f32.mrf.mxu0
  %v2980 = vadd.f32 %v2967, %v2979
  %v2981 = vpop.f32.mrf.mxu0
  %2982 = vdwg.mxu0
  %2983 = vmatpush.bf16.msra.mxu0 %v598
  %2984 = vmatpush.bf16.msra.mxu0 %v590
  %2985 = vmatpush.bf16.msra.mxu0 %v582
  %2986 = vmatpush.bf16.msra.mxu0 %v574
  %2987 = vmatpush.bf16.msra.mxu0 %v566
  %2988 = vmatpush.bf16.msra.mxu0 %v558
  %2989 = vmatpush.bf16.msra.mxu0 %v550
  %2990 = vmatpush.bf16.msra.mxu0 %v542
  %2991 = vmatmul.bf16.gmra.mxu0 %v2929
  %v2992 = vpop.f32.mrf.mxu0
  %v2993 = vadd.f32 0.0, %v2992
  %v2994 = vpop.f32.mrf.mxu0
  %2995 = vdwg.mxu0
  %2996 = vmatpush.bf16.msra.mxu0 %v662
  %2997 = vmatpush.bf16.msra.mxu0 %v654
  %2998 = vmatpush.bf16.msra.mxu0 %v646
  %2999 = vmatpush.bf16.msra.mxu0 %v638
  %3000 = vmatpush.bf16.msra.mxu0 %v630
  %3001 = vmatpush.bf16.msra.mxu0 %v622
  %3002 = vmatpush.bf16.msra.mxu0 %v614
  %3003 = vmatpush.bf16.msra.mxu0 %v606
  %3004 = vmatmul.bf16.gmra.mxu0 %v2930
  %v3005 = vpop.f32.mrf.mxu0
  %v3006 = vadd.f32 %v2993, %v3005
  %v3007 = vpop.f32.mrf.mxu0
  %3008 = vdwg.mxu0
  %3009 = vmatpush.bf16.msra.mxu0 %v599
  %3010 = vmatpush.bf16.msra.mxu0 %v591
  %3011 = vmatpush.bf16.msra.mxu0 %v583
  %3012 = vmatpush.bf16.msra.mxu0 %v575
  %3013 = vmatpush.bf16.msra.mxu0 %v567
  %3014 = vmatpush.bf16.msra.mxu0 %v559
  %3015 = vmatpush.bf16.msra.mxu0 %v551
  %3016 = vmatpush.bf16.msra.mxu0 %v543
  %3017 = vmatmul.bf16.gmra.mxu0 %v2929
  %v3018 = vpop.f32.mrf.mxu0
  %v3019 = vadd.f32 0.0, %v3018
  %v3020 = vpop.f32.mrf.mxu0
  %3021 = vdwg.mxu0
  %3022 = vmatpush.bf16.msra.mxu0 %v663
  %3023 = vmatpush.bf16.msra.mxu0 %v655
  %3024 = vmatpush.bf16.msra.mxu0 %v647
  %3025 = vmatpush.bf16.msra.mxu0 %v639
  %3026 = vmatpush.bf16.msra.mxu0 %v631
  %3027 = vmatpush.bf16.msra.mxu0 %v623
  %3028 = vmatpush.bf16.msra.mxu0 %v615
  %3029 = vmatpush.bf16.msra.mxu0 %v607
  %3030 = vmatmul.bf16.gmra.mxu0 %v2930
  %v3031 = vpop.f32.mrf.mxu0
  %v3032 = vadd.f32 %v3019, %v3031
  %v3033 = vpop.f32.mrf.mxu0
  %3034 = vdwg.mxu0
  %3035 = vmatpush.bf16.msra.mxu0 %v600
  %3036 = vmatpush.bf16.msra.mxu0 %v592
  %3037 = vmatpush.bf16.msra.mxu0 %v584
  %3038 = vmatpush.bf16.msra.mxu0 %v576
  %3039 = vmatpush.bf16.msra.mxu0 %v568
  %3040 = vmatpush.bf16.msra.mxu0 %v560
  %3041 = vmatpush.bf16.msra.mxu0 %v552
  %3042 = vmatpush.bf16.msra.mxu0 %v544
  %3043 = vmatmul.bf16.gmra.mxu0 %v2929
  %v3044 = vpop.f32.mrf.mxu0
  %v3045 = vadd.f32 0.0, %v3044
  %v3046 = vpop.f32.mrf.mxu0
  %3047 = vdwg.mxu0
  %3048 = vmatpush.bf16.msra.mxu0 %v664
  %3049 = vmatpush.bf16.msra.mxu0 %v656
  %3050 = vmatpush.bf16.msra.mxu0 %v648
  %3051 = vmatpush.bf16.msra.mxu0 %v640
  %3052 = vmatpush.bf16.msra.mxu0 %v632
  %3053 = vmatpush.bf16.msra.mxu0 %v624
  %3054 = vmatpush.bf16.msra.mxu0 %v616
  %3055 = vmatpush.bf16.msra.mxu0 %v608
  %3056 = vmatmul.bf16.gmra.mxu0 %v2930
  %v3057 = vpop.f32.mrf.mxu0
  %v3058 = vadd.f32 %v3045, %v3057
  %v3059 = vpop.f32.mrf.mxu0
  %3060 = vdwg.mxu0
  %3061 = vmatpush.bf16.msra.mxu0 %v601
  %3062 = vmatpush.bf16.msra.mxu0 %v593
  %3063 = vmatpush.bf16.msra.mxu0 %v585
  %3064 = vmatpush.bf16.msra.mxu0 %v577
  %3065 = vmatpush.bf16.msra.mxu0 %v569
  %3066 = vmatpush.bf16.msra.mxu0 %v561
  %3067 = vmatpush.bf16.msra.mxu0 %v553
  %3068 = vmatpush.bf16.msra.mxu0 %v545
  %3069 = vmatmul.bf16.gmra.mxu0 %v2929
  %v3070 = vpop.f32.mrf.mxu0
  %v3071 = vadd.f32 0.0, %v3070
  %v3072 = vpop.f32.mrf.mxu0
  %3073 = vdwg.mxu0
  %3074 = vmatpush.bf16.msra.mxu0 %v665
  %3075 = vmatpush.bf16.msra.mxu0 %v657
  %3076 = vmatpush.bf16.msra.mxu0 %v649
  %3077 = vmatpush.bf16.msra.mxu0 %v641
  %3078 = vmatpush.bf16.msra.mxu0 %v633
  %3079 = vmatpush.bf16.msra.mxu0 %v625
  %3080 = vmatpush.bf16.msra.mxu0 %v617
  %3081 = vmatpush.bf16.msra.mxu0 %v609
  %3082 = vmatmul.bf16.gmra.mxu0 %v2930
  %v3083 = vpop.f32.mrf.mxu0
  %v3084 = vadd.f32 %v3071, %v3083
  %v3085 = vpop.f32.mrf.mxu0
  %3086 = vdwg.mxu0
  %3087 = vmatpush.bf16.msra.mxu0 %v602
  %3088 = vmatpush.bf16.msra.mxu0 %v594
  %3089 = vmatpush.bf16.msra.mxu0 %v586
  %3090 = vmatpush.bf16.msra.mxu0 %v578
  %3091 = vmatpush.bf16.msra.mxu0 %v570
  %3092 = vmatpush.bf16.msra.mxu0 %v562
  %3093 = vmatpush.bf16.msra.mxu0 %v554
  %3094 = vmatpush.bf16.msra.mxu0 %v546
  %3095 = vmatmul.bf16.gmra.mxu0 %v2929
  %v3096 = vpop.f32.mrf.mxu0
  %v3097 = vadd.f32 0.0, %v3096
  %v3098 = vpop.f32.mrf.mxu0
  %3099 = vdwg.mxu0
  %3100 = vmatpush.bf16.msra.mxu0 %v666
  %3101 = vmatpush.bf16.msra.mxu0 %v658
  %3102 = vmatpush.bf16.msra.mxu0 %v650
  %3103 = vmatpush.bf16.msra.mxu0 %v642
  %3104 = vmatpush.bf16.msra.mxu0 %v634
  %3105 = vmatpush.bf16.msra.mxu0 %v626
  %3106 = vmatpush.bf16.msra.mxu0 %v618
  %3107 = vmatpush.bf16.msra.mxu0 %v610
  %3108 = vmatmul.bf16.gmra.mxu0 %v2930
  %v3109 = vpop.f32.mrf.mxu0
  %v3110 = vadd.f32 %v3097, %v3109
  %v3111 = vpop.f32.mrf.mxu0
  %3112 = vdwg.mxu0
  %3113 = vmatpush.bf16.msra.mxu0 %v603
  %3114 = vmatpush.bf16.msra.mxu0 %v595
  %3115 = vmatpush.bf16.msra.mxu0 %v587
  %3116 = vmatpush.bf16.msra.mxu0 %v579
  %3117 = vmatpush.bf16.msra.mxu0 %v571
  %3118 = vmatpush.bf16.msra.mxu0 %v563
  %3119 = vmatpush.bf16.msra.mxu0 %v555
  %3120 = vmatpush.bf16.msra.mxu0 %v547
  %3121 = vmatmul.bf16.gmra.mxu0 %v2929
  %v3122 = vpop.f32.mrf.mxu0
  %v3123 = vadd.f32 0.0, %v3122
  %v3124 = vpop.f32.mrf.mxu0
  %3125 = vdwg.mxu0
  %3126 = vmatpush.bf16.msra.mxu0 %v667
  %3127 = vmatpush.bf16.msra.mxu0 %v659
  %3128 = vmatpush.bf16.msra.mxu0 %v651
  %3129 = vmatpush.bf16.msra.mxu0 %v643
  %3130 = vmatpush.bf16.msra.mxu0 %v635
  %3131 = vmatpush.bf16.msra.mxu0 %v627
  %3132 = vmatpush.bf16.msra.mxu0 %v619
  %3133 = vmatpush.bf16.msra.mxu0 %v611
  %3134 = vmatmul.bf16.gmra.mxu0 %v2930
  %v3135 = vpop.f32.mrf.mxu0
  %v3136 = vadd.f32 %v3123, %v3135
  %v3137 = vpop.f32.mrf.mxu0
  %3138 = vdwg.mxu0
  %v3139 = vadd.f32 %v2921, %v2954
  %v3140 = vadd.f32 %v2922, %v2980
  %v3141 = vadd.f32 %v2923, %v3006
  %v3142 = vadd.f32 %v2924, %v3032
  %v3143 = vadd.f32 %v2925, %v3058
  %v3144 = vadd.f32 %v2926, %v3084
  %v3145 = vadd.f32 %v2927, %v3110
  %v3146 = vadd.f32 %v2928, %v3136
  %v3147 = vxor.u32 %v3139, 2147483648
  %v3148 = vxor.u32 %v3140, 2147483648
  %v3149 = vmul.f32 %v3147, 1.442695
  %v3150 = vpow.pop %v3149
  %v3151 = vmul.f32 %v3148, 1.442695
  %v3152 = vpow.pop %v3151
  %v3153 = vadd.f32 %v3150, 1.0
  %v3154 = vadd.f32 %v3152, 1.0
  %v3155 = vrcp.pop %v3153
  %v3156 = vmul.f32 %v3153, %v3155
  %v3157 = vsub.f32 1.0, %v3156
  %v3158 = vmul.f32 %v3155, %v3157
  %v3159 = vadd.f32 %v3155, %v3158
  %vm3160 = vweird.f32 %v3153
  %vm3161 = vweird.f32 %v3155
  %vm3162 = vmor %vm3160, %vm3161
  %v3163 = vsel %vm3162, %v3155, %v3159
  %v3164 = vand.u32 2147483647, %v3153
  %vm3165 = vcmp.eq.f32.partialorder %v3164, 8.507059e+37
  %v3166 = vand.u32 %v3153, 2147483648
  %v3167 = vor.u32 1.1754944e-38, %v3166
  %v3168 = vsel %vm3165, %v3167, %v3163
  %v3169 = vmul.f32 1.0, %v3168
  %v3170 = vrcp.pop %v3154
  %v3171 = vmul.f32 %v3154, %v3170
  %v3172 = vsub.f32 1.0, %v3171
  %v3173 = vmul.f32 %v3170, %v3172
  %v3174 = vadd.f32 %v3170, %v3173
  %vm3175 = vweird.f32 %v3154
  %vm3176 = vweird.f32 %v3170
  %vm3177 = vmor %vm3175, %vm3176
  %v3178 = vsel %vm3177, %v3170, %v3174
  %v3179 = vand.u32 2147483647, %v3154
  %vm3180 = vcmp.eq.f32.partialorder %v3179, 8.507059e+37
  %v3181 = vand.u32 %v3154, 2147483648
  %v3182 = vor.u32 1.1754944e-38, %v3181
  %v3183 = vsel %vm3180, %v3182, %v3178
  %v3184 = vmul.f32 1.0, %v3183
  %v3185 = vxor.u32 %v3141, 2147483648
  %v3186 = vxor.u32 %v3142, 2147483648
  %v3187 = vmul.f32 %v3185, 1.442695
  %v3188 = vpow.pop %v3187
  %v3189 = vmul.f32 %v3186, 1.442695
  %v3190 = vpow.pop %v3189
  %v3191 = vadd.f32 %v3188, 1.0
  %v3192 = vadd.f32 %v3190, 1.0
  %v3193 = vrcp.pop %v3191
  %v3194 = vmul.f32 %v3191, %v3193
  %v3195 = vsub.f32 1.0, %v3194
  %v3196 = vmul.f32 %v3193, %v3195
  %v3197 = vadd.f32 %v3193, %v3196
  %vm3198 = vweird.f32 %v3191
  %vm3199 = vweird.f32 %v3193
  %vm3200 = vmor %vm3198, %vm3199
  %v3201 = vsel %vm3200, %v3193, %v3197
  %v3202 = vand.u32 2147483647, %v3191
  %vm3203 = vcmp.eq.f32.partialorder %v3202, 8.507059e+37
  %v3204 = vand.u32 %v3191, 2147483648
  %v3205 = vor.u32 1.1754944e-38, %v3204
  %v3206 = vsel %vm3203, %v3205, %v3201
  %v3207 = vmul.f32 1.0, %v3206
  %v3208 = vrcp.pop %v3192
  %v3209 = vmul.f32 %v3192, %v3208
  %v3210 = vsub.f32 1.0, %v3209
  %v3211 = vmul.f32 %v3208, %v3210
  %v3212 = vadd.f32 %v3208, %v3211
  %vm3213 = vweird.f32 %v3192
  %vm3214 = vweird.f32 %v3208
  %vm3215 = vmor %vm3213, %vm3214
  %v3216 = vsel %vm3215, %v3208, %v3212
  %v3217 = vand.u32 2147483647, %v3192
  %vm3218 = vcmp.eq.f32.partialorder %v3217, 8.507059e+37
  %v3219 = vand.u32 %v3192, 2147483648
  %v3220 = vor.u32 1.1754944e-38, %v3219
  %v3221 = vsel %vm3218, %v3220, %v3216
  %v3222 = vmul.f32 1.0, %v3221
  %v3223 = vtanh.pop %v3143
  %v3224 = vtanh.pop %v3144
  %v3225 = vxor.u32 %v3145, 2147483648
  %v3226 = vxor.u32 %v3146, 2147483648
  %v3227 = vmul.f32 %v3225, 1.442695
  %v3228 = vpow.pop %v3227
  %v3229 = vmul.f32 %v3226, 1.442695
  %v3230 = vpow.pop %v3229
  %v3231 = vadd.f32 %v3228, 1.0
  %v3232 = vadd.f32 %v3230, 1.0
  %v3233 = vrcp.pop %v3231
  %v3234 = vmul.f32 %v3231, %v3233
  %v3235 = vsub.f32 1.0, %v3234
  %v3236 = vmul.f32 %v3233, %v3235
  %v3237 = vadd.f32 %v3233, %v3236
  %vm3238 = vweird.f32 %v3231
  %vm3239 = vweird.f32 %v3233
  %vm3240 = vmor %vm3238, %vm3239
  %v3241 = vsel %vm3240, %v3233, %v3237
  %v3242 = vand.u32 2147483647, %v3231
  %vm3243 = vcmp.eq.f32.partialorder %v3242, 8.507059e+37
  %v3244 = vand.u32 %v3231, 2147483648
  %v3245 = vor.u32 1.1754944e-38, %v3244
  %v3246 = vsel %vm3243, %v3245, %v3241
  %v3247 = vmul.f32 1.0, %v3246
  %v3248 = vrcp.pop %v3232
  %v3249 = vmul.f32 %v3232, %v3248
  %v3250 = vsub.f32 1.0, %v3249
  %v3251 = vmul.f32 %v3248, %v3250
  %v3252 = vadd.f32 %v3248, %v3251
  %vm3253 = vweird.f32 %v3232
  %vm3254 = vweird.f32 %v3248
  %vm3255 = vmor %vm3253, %vm3254
  %v3256 = vsel %vm3255, %v3248, %v3252
  %v3257 = vand.u32 2147483647, %v3232
  %vm3258 = vcmp.eq.f32.partialorder %v3257, 8.507059e+37
  %v3259 = vand.u32 %v3232, 2147483648
  %v3260 = vor.u32 1.1754944e-38, %v3259
  %v3261 = vsel %vm3258, %v3260, %v3256
  %v3262 = vmul.f32 1.0, %v3261
  %v3263 = vmul.f32 %v3207, %v2911
  %v3264 = vmul.f32 %v3222, %v2912
  %v3265 = vmul.f32 %v3169, %v3223
  %v3266 = vmul.f32 %v3184, %v3224
  %v3267 = vadd.f32 %v3263, %v3265
  %v3268 = vadd.f32 %v3264, %v3266
  %v3269 = vtanh.pop %v3267
  %v3270 = vtanh.pop %v3268
  %v3271 = vmul.f32 %v3247, %v3269
  %v3272 = vmul.f32 %v3262, %v3270
  %s3273 = scalar_lea.vmem [#allocation2], 96
  %3274 = vst [vmem:[%s3273] sm:$0xff] %v3271
  %3275 = vst [vmem:[%s3273 + $0x8] sm:$0xff] %v3272
  %s3276 = scalar_lea.vmem %s0, 448
  %v3277 = vld [vmem:[%s3276] sm:$0xff]
  %v3278 = vld [vmem:[%s3276 + $0x8] sm:$0xff]
  %v3279 = vld [vmem:[%s3276 + $0x10] sm:$0xff]
  %v3280 = vld [vmem:[%s3276 + $0x18] sm:$0xff]
  %v3281 = vld [vmem:[%s3276 + $0x20] sm:$0xff]
  %v3282 = vld [vmem:[%s3276 + $0x28] sm:$0xff]
  %v3283 = vld [vmem:[%s3276 + $0x30] sm:$0xff]
  %v3284 = vld [vmem:[%s3276 + $0x38] sm:$0xff]
  %v3285 = vpack.c.bf16 %v3271, %v3271
  %v3286 = vpack.c.bf16 %v3272, %v3272
  %3287 = vmatpush.bf16.msra.mxu0 %v596
  %3288 = vmatpush.bf16.msra.mxu0 %v588
  %3289 = vmatpush.bf16.msra.mxu0 %v580
  %3290 = vmatpush.bf16.msra.mxu0 %v572
  %3291 = vmatpush.bf16.msra.mxu0 %v564
  %3292 = vmatpush.bf16.msra.mxu0 %v556
  %3293 = vmatpush.bf16.msra.mxu0 %v548
  %3294 = vmatpush.bf16.msra.mxu0 %v540
  %3295 = vmatmul.bf16.gmra.mxu0 %v3285
  %v3296 = vpop.f32.mrf.mxu0
  %v3297 = vadd.f32 0.0, %v3296
  %v3298 = vpop.f32.mrf.mxu0
  %3299 = vdwg.mxu0
  %3300 = vmatpush.bf16.msra.mxu0 %v660
  %3301 = vmatpush.bf16.msra.mxu0 %v652
  %3302 = vmatpush.bf16.msra.mxu0 %v644
  %3303 = vmatpush.bf16.msra.mxu0 %v636
  %3304 = vmatpush.bf16.msra.mxu0 %v628
  %3305 = vmatpush.bf16.msra.mxu0 %v620
  %3306 = vmatpush.bf16.msra.mxu0 %v612
  %3307 = vmatpush.bf16.msra.mxu0 %v604
  %3308 = vmatmul.bf16.gmra.mxu0 %v3286
  %v3309 = vpop.f32.mrf.mxu0
  %v3310 = vadd.f32 %v3297, %v3309
  %v3311 = vpop.f32.mrf.mxu0
  %3312 = vdwg.mxu0
  %3313 = vmatpush.bf16.msra.mxu0 %v597
  %3314 = vmatpush.bf16.msra.mxu0 %v589
  %3315 = vmatpush.bf16.msra.mxu0 %v581
  %3316 = vmatpush.bf16.msra.mxu0 %v573
  %3317 = vmatpush.bf16.msra.mxu0 %v565
  %3318 = vmatpush.bf16.msra.mxu0 %v557
  %3319 = vmatpush.bf16.msra.mxu0 %v549
  %3320 = vmatpush.bf16.msra.mxu0 %v541
  %3321 = vmatmul.bf16.gmra.mxu0 %v3285
  %v3322 = vpop.f32.mrf.mxu0
  %v3323 = vadd.f32 0.0, %v3322
  %v3324 = vpop.f32.mrf.mxu0
  %3325 = vdwg.mxu0
  %3326 = vmatpush.bf16.msra.mxu0 %v661
  %3327 = vmatpush.bf16.msra.mxu0 %v653
  %3328 = vmatpush.bf16.msra.mxu0 %v645
  %3329 = vmatpush.bf16.msra.mxu0 %v637
  %3330 = vmatpush.bf16.msra.mxu0 %v629
  %3331 = vmatpush.bf16.msra.mxu0 %v621
  %3332 = vmatpush.bf16.msra.mxu0 %v613
  %3333 = vmatpush.bf16.msra.mxu0 %v605
  %3334 = vmatmul.bf16.gmra.mxu0 %v3286
  %v3335 = vpop.f32.mrf.mxu0
  %v3336 = vadd.f32 %v3323, %v3335
  %v3337 = vpop.f32.mrf.mxu0
  %3338 = vdwg.mxu0
  %3339 = vmatpush.bf16.msra.mxu0 %v598
  %3340 = vmatpush.bf16.msra.mxu0 %v590
  %3341 = vmatpush.bf16.msra.mxu0 %v582
  %3342 = vmatpush.bf16.msra.mxu0 %v574
  %3343 = vmatpush.bf16.msra.mxu0 %v566
  %3344 = vmatpush.bf16.msra.mxu0 %v558
  %3345 = vmatpush.bf16.msra.mxu0 %v550
  %3346 = vmatpush.bf16.msra.mxu0 %v542
  %3347 = vmatmul.bf16.gmra.mxu0 %v3285
  %v3348 = vpop.f32.mrf.mxu0
  %v3349 = vadd.f32 0.0, %v3348
  %v3350 = vpop.f32.mrf.mxu0
  %3351 = vdwg.mxu0
  %3352 = vmatpush.bf16.msra.mxu0 %v662
  %3353 = vmatpush.bf16.msra.mxu0 %v654
  %3354 = vmatpush.bf16.msra.mxu0 %v646
  %3355 = vmatpush.bf16.msra.mxu0 %v638
  %3356 = vmatpush.bf16.msra.mxu0 %v630
  %3357 = vmatpush.bf16.msra.mxu0 %v622
  %3358 = vmatpush.bf16.msra.mxu0 %v614
  %3359 = vmatpush.bf16.msra.mxu0 %v606
  %3360 = vmatmul.bf16.gmra.mxu0 %v3286
  %v3361 = vpop.f32.mrf.mxu0
  %v3362 = vadd.f32 %v3349, %v3361
  %v3363 = vpop.f32.mrf.mxu0
  %3364 = vdwg.mxu0
  %3365 = vmatpush.bf16.msra.mxu0 %v599
  %3366 = vmatpush.bf16.msra.mxu0 %v591
  %3367 = vmatpush.bf16.msra.mxu0 %v583
  %3368 = vmatpush.bf16.msra.mxu0 %v575
  %3369 = vmatpush.bf16.msra.mxu0 %v567
  %3370 = vmatpush.bf16.msra.mxu0 %v559
  %3371 = vmatpush.bf16.msra.mxu0 %v551
  %3372 = vmatpush.bf16.msra.mxu0 %v543
  %3373 = vmatmul.bf16.gmra.mxu0 %v3285
  %v3374 = vpop.f32.mrf.mxu0
  %v3375 = vadd.f32 0.0, %v3374
  %v3376 = vpop.f32.mrf.mxu0
  %3377 = vdwg.mxu0
  %3378 = vmatpush.bf16.msra.mxu0 %v663
  %3379 = vmatpush.bf16.msra.mxu0 %v655
  %3380 = vmatpush.bf16.msra.mxu0 %v647
  %3381 = vmatpush.bf16.msra.mxu0 %v639
  %3382 = vmatpush.bf16.msra.mxu0 %v631
  %3383 = vmatpush.bf16.msra.mxu0 %v623
  %3384 = vmatpush.bf16.msra.mxu0 %v615
  %3385 = vmatpush.bf16.msra.mxu0 %v607
  %3386 = vmatmul.bf16.gmra.mxu0 %v3286
  %v3387 = vpop.f32.mrf.mxu0
  %v3388 = vadd.f32 %v3375, %v3387
  %v3389 = vpop.f32.mrf.mxu0
  %3390 = vdwg.mxu0
  %3391 = vmatpush.bf16.msra.mxu0 %v600
  %3392 = vmatpush.bf16.msra.mxu0 %v592
  %3393 = vmatpush.bf16.msra.mxu0 %v584
  %3394 = vmatpush.bf16.msra.mxu0 %v576
  %3395 = vmatpush.bf16.msra.mxu0 %v568
  %3396 = vmatpush.bf16.msra.mxu0 %v560
  %3397 = vmatpush.bf16.msra.mxu0 %v552
  %3398 = vmatpush.bf16.msra.mxu0 %v544
  %3399 = vmatmul.bf16.gmra.mxu0 %v3285
  %v3400 = vpop.f32.mrf.mxu0
  %v3401 = vadd.f32 0.0, %v3400
  %v3402 = vpop.f32.mrf.mxu0
  %3403 = vdwg.mxu0
  %3404 = vmatpush.bf16.msra.mxu0 %v664
  %3405 = vmatpush.bf16.msra.mxu0 %v656
  %3406 = vmatpush.bf16.msra.mxu0 %v648
  %3407 = vmatpush.bf16.msra.mxu0 %v640
  %3408 = vmatpush.bf16.msra.mxu0 %v632
  %3409 = vmatpush.bf16.msra.mxu0 %v624
  %3410 = vmatpush.bf16.msra.mxu0 %v616
  %3411 = vmatpush.bf16.msra.mxu0 %v608
  %3412 = vmatmul.bf16.gmra.mxu0 %v3286
  %v3413 = vpop.f32.mrf.mxu0
  %v3414 = vadd.f32 %v3401, %v3413
  %v3415 = vpop.f32.mrf.mxu0
  %3416 = vdwg.mxu0
  %3417 = vmatpush.bf16.msra.mxu0 %v601
  %3418 = vmatpush.bf16.msra.mxu0 %v593
  %3419 = vmatpush.bf16.msra.mxu0 %v585
  %3420 = vmatpush.bf16.msra.mxu0 %v577
  %3421 = vmatpush.bf16.msra.mxu0 %v569
  %3422 = vmatpush.bf16.msra.mxu0 %v561
  %3423 = vmatpush.bf16.msra.mxu0 %v553
  %3424 = vmatpush.bf16.msra.mxu0 %v545
  %3425 = vmatmul.bf16.gmra.mxu0 %v3285
  %v3426 = vpop.f32.mrf.mxu0
  %v3427 = vadd.f32 0.0, %v3426
  %v3428 = vpop.f32.mrf.mxu0
  %3429 = vdwg.mxu0
  %3430 = vmatpush.bf16.msra.mxu0 %v665
  %3431 = vmatpush.bf16.msra.mxu0 %v657
  %3432 = vmatpush.bf16.msra.mxu0 %v649
  %3433 = vmatpush.bf16.msra.mxu0 %v641
  %3434 = vmatpush.bf16.msra.mxu0 %v633
  %3435 = vmatpush.bf16.msra.mxu0 %v625
  %3436 = vmatpush.bf16.msra.mxu0 %v617
  %3437 = vmatpush.bf16.msra.mxu0 %v609
  %3438 = vmatmul.bf16.gmra.mxu0 %v3286
  %v3439 = vpop.f32.mrf.mxu0
  %v3440 = vadd.f32 %v3427, %v3439
  %v3441 = vpop.f32.mrf.mxu0
  %3442 = vdwg.mxu0
  %3443 = vmatpush.bf16.msra.mxu0 %v602
  %3444 = vmatpush.bf16.msra.mxu0 %v594
  %3445 = vmatpush.bf16.msra.mxu0 %v586
  %3446 = vmatpush.bf16.msra.mxu0 %v578
  %3447 = vmatpush.bf16.msra.mxu0 %v570
  %3448 = vmatpush.bf16.msra.mxu0 %v562
  %3449 = vmatpush.bf16.msra.mxu0 %v554
  %3450 = vmatpush.bf16.msra.mxu0 %v546
  %3451 = vmatmul.bf16.gmra.mxu0 %v3285
  %v3452 = vpop.f32.mrf.mxu0
  %v3453 = vadd.f32 0.0, %v3452
  %v3454 = vpop.f32.mrf.mxu0
  %3455 = vdwg.mxu0
  %3456 = vmatpush.bf16.msra.mxu0 %v666
  %3457 = vmatpush.bf16.msra.mxu0 %v658
  %3458 = vmatpush.bf16.msra.mxu0 %v650
  %3459 = vmatpush.bf16.msra.mxu0 %v642
  %3460 = vmatpush.bf16.msra.mxu0 %v634
  %3461 = vmatpush.bf16.msra.mxu0 %v626
  %3462 = vmatpush.bf16.msra.mxu0 %v618
  %3463 = vmatpush.bf16.msra.mxu0 %v610
  %3464 = vmatmul.bf16.gmra.mxu0 %v3286
  %v3465 = vpop.f32.mrf.mxu0
  %v3466 = vadd.f32 %v3453, %v3465
  %v3467 = vpop.f32.mrf.mxu0
  %3468 = vdwg.mxu0
  %3469 = vmatpush.bf16.msra.mxu0 %v603
  %3470 = vmatpush.bf16.msra.mxu0 %v595
  %3471 = vmatpush.bf16.msra.mxu0 %v587
  %3472 = vmatpush.bf16.msra.mxu0 %v579
  %3473 = vmatpush.bf16.msra.mxu0 %v571
  %3474 = vmatpush.bf16.msra.mxu0 %v563
  %3475 = vmatpush.bf16.msra.mxu0 %v555
  %3476 = vmatpush.bf16.msra.mxu0 %v547
  %3477 = vmatmul.bf16.gmra.mxu0 %v3285
  %v3478 = vpop.f32.mrf.mxu0
  %v3479 = vadd.f32 0.0, %v3478
  %v3480 = vpop.f32.mrf.mxu0
  %3481 = vdwg.mxu0
  %3482 = vmatpush.bf16.msra.mxu0 %v667
  %3483 = vmatpush.bf16.msra.mxu0 %v659
  %3484 = vmatpush.bf16.msra.mxu0 %v651
  %3485 = vmatpush.bf16.msra.mxu0 %v643
  %3486 = vmatpush.bf16.msra.mxu0 %v635
  %3487 = vmatpush.bf16.msra.mxu0 %v627
  %3488 = vmatpush.bf16.msra.mxu0 %v619
  %3489 = vmatpush.bf16.msra.mxu0 %v611
  %3490 = vmatmul.bf16.gmra.mxu0 %v3286
  %v3491 = vpop.f32.mrf.mxu0
  %v3492 = vadd.f32 %v3479, %v3491
  %v3493 = vpop.f32.mrf.mxu0
  %3494 = vdwg.mxu0
  %v3495 = vadd.f32 %v3277, %v3310
  %v3496 = vadd.f32 %v3278, %v3336
  %v3497 = vadd.f32 %v3279, %v3362
  %v3498 = vadd.f32 %v3280, %v3388
  %v3499 = vadd.f32 %v3281, %v3414
  %v3500 = vadd.f32 %v3282, %v3440
  %v3501 = vadd.f32 %v3283, %v3466
  %v3502 = vadd.f32 %v3284, %v3492
  %v3503 = vxor.u32 %v3495, 2147483648
  %v3504 = vxor.u32 %v3496, 2147483648
  %v3505 = vmul.f32 %v3503, 1.442695
  %v3506 = vpow.pop %v3505
  %v3507 = vmul.f32 %v3504, 1.442695
  %v3508 = vpow.pop %v3507
  %v3509 = vadd.f32 %v3506, 1.0
  %v3510 = vadd.f32 %v3508, 1.0
  %v3511 = vrcp.pop %v3509
  %v3512 = vmul.f32 %v3509, %v3511
  %v3513 = vsub.f32 1.0, %v3512
  %v3514 = vmul.f32 %v3511, %v3513
  %v3515 = vadd.f32 %v3511, %v3514
  %vm3516 = vweird.f32 %v3509
  %vm3517 = vweird.f32 %v3511
  %vm3518 = vmor %vm3516, %vm3517
  %v3519 = vsel %vm3518, %v3511, %v3515
  %v3520 = vand.u32 2147483647, %v3509
  %vm3521 = vcmp.eq.f32.partialorder %v3520, 8.507059e+37
  %v3522 = vand.u32 %v3509, 2147483648
  %v3523 = vor.u32 1.1754944e-38, %v3522
  %v3524 = vsel %vm3521, %v3523, %v3519
  %v3525 = vmul.f32 1.0, %v3524
  %v3526 = vrcp.pop %v3510
  %v3527 = vmul.f32 %v3510, %v3526
  %v3528 = vsub.f32 1.0, %v3527
  %v3529 = vmul.f32 %v3526, %v3528
  %v3530 = vadd.f32 %v3526, %v3529
  %vm3531 = vweird.f32 %v3510
  %vm3532 = vweird.f32 %v3526
  %vm3533 = vmor %vm3531, %vm3532
  %v3534 = vsel %vm3533, %v3526, %v3530
  %v3535 = vand.u32 2147483647, %v3510
  %vm3536 = vcmp.eq.f32.partialorder %v3535, 8.507059e+37
  %v3537 = vand.u32 %v3510, 2147483648
  %v3538 = vor.u32 1.1754944e-38, %v3537
  %v3539 = vsel %vm3536, %v3538, %v3534
  %v3540 = vmul.f32 1.0, %v3539
  %v3541 = vxor.u32 %v3497, 2147483648
  %v3542 = vxor.u32 %v3498, 2147483648
  %v3543 = vmul.f32 %v3541, 1.442695
  %v3544 = vpow.pop %v3543
  %v3545 = vmul.f32 %v3542, 1.442695
  %v3546 = vpow.pop %v3545
  %v3547 = vadd.f32 %v3544, 1.0
  %v3548 = vadd.f32 %v3546, 1.0
  %v3549 = vrcp.pop %v3547
  %v3550 = vmul.f32 %v3547, %v3549
  %v3551 = vsub.f32 1.0, %v3550
  %v3552 = vmul.f32 %v3549, %v3551
  %v3553 = vadd.f32 %v3549, %v3552
  %vm3554 = vweird.f32 %v3547
  %vm3555 = vweird.f32 %v3549
  %vm3556 = vmor %vm3554, %vm3555
  %v3557 = vsel %vm3556, %v3549, %v3553
  %v3558 = vand.u32 2147483647, %v3547
  %vm3559 = vcmp.eq.f32.partialorder %v3558, 8.507059e+37
  %v3560 = vand.u32 %v3547, 2147483648
  %v3561 = vor.u32 1.1754944e-38, %v3560
  %v3562 = vsel %vm3559, %v3561, %v3557
  %v3563 = vmul.f32 1.0, %v3562
  %v3564 = vrcp.pop %v3548
  %v3565 = vmul.f32 %v3548, %v3564
  %v3566 = vsub.f32 1.0, %v3565
  %v3567 = vmul.f32 %v3564, %v3566
  %v3568 = vadd.f32 %v3564, %v3567
  %vm3569 = vweird.f32 %v3548
  %vm3570 = vweird.f32 %v3564
  %vm3571 = vmor %vm3569, %vm3570
  %v3572 = vsel %vm3571, %v3564, %v3568
  %v3573 = vand.u32 2147483647, %v3548
  %vm3574 = vcmp.eq.f32.partialorder %v3573, 8.507059e+37
  %v3575 = vand.u32 %v3548, 2147483648
  %v3576 = vor.u32 1.1754944e-38, %v3575
  %v3577 = vsel %vm3574, %v3576, %v3572
  %v3578 = vmul.f32 1.0, %v3577
  %v3579 = vtanh.pop %v3499
  %v3580 = vtanh.pop %v3500
  %v3581 = vxor.u32 %v3501, 2147483648
  %v3582 = vxor.u32 %v3502, 2147483648
  %v3583 = vmul.f32 %v3581, 1.442695
  %v3584 = vpow.pop %v3583
  %v3585 = vmul.f32 %v3582, 1.442695
  %v3586 = vpow.pop %v3585
  %v3587 = vadd.f32 %v3584, 1.0
  %v3588 = vadd.f32 %v3586, 1.0
  %v3589 = vrcp.pop %v3587
  %v3590 = vmul.f32 %v3587, %v3589
  %v3591 = vsub.f32 1.0, %v3590
  %v3592 = vmul.f32 %v3589, %v3591
  %v3593 = vadd.f32 %v3589, %v3592
  %vm3594 = vweird.f32 %v3587
  %vm3595 = vweird.f32 %v3589
  %vm3596 = vmor %vm3594, %vm3595
  %v3597 = vsel %vm3596, %v3589, %v3593
  %v3598 = vand.u32 2147483647, %v3587
  %vm3599 = vcmp.eq.f32.partialorder %v3598, 8.507059e+37
  %v3600 = vand.u32 %v3587, 2147483648
  %v3601 = vor.u32 1.1754944e-38, %v3600
  %v3602 = vsel %vm3599, %v3601, %v3597
  %v3603 = vmul.f32 1.0, %v3602
  %v3604 = vrcp.pop %v3588
  %v3605 = vmul.f32 %v3588, %v3604
  %v3606 = vsub.f32 1.0, %v3605
  %v3607 = vmul.f32 %v3604, %v3606
  %v3608 = vadd.f32 %v3604, %v3607
  %vm3609 = vweird.f32 %v3588
  %vm3610 = vweird.f32 %v3604
  %vm3611 = vmor %vm3609, %vm3610
  %v3612 = vsel %vm3611, %v3604, %v3608
  %v3613 = vand.u32 2147483647, %v3588
  %vm3614 = vcmp.eq.f32.partialorder %v3613, 8.507059e+37
  %v3615 = vand.u32 %v3588, 2147483648
  %v3616 = vor.u32 1.1754944e-38, %v3615
  %v3617 = vsel %vm3614, %v3616, %v3612
  %v3618 = vmul.f32 1.0, %v3617
  %v3619 = vmul.f32 %v3563, %v3267
  %v3620 = vmul.f32 %v3578, %v3268
  %v3621 = vmul.f32 %v3525, %v3579
  %v3622 = vmul.f32 %v3540, %v3580
  %v3623 = vadd.f32 %v3619, %v3621
  %v3624 = vadd.f32 %v3620, %v3622
  %v3625 = vtanh.pop %v3623
  %v3626 = vtanh.pop %v3624
  %v3627 = vmul.f32 %v3603, %v3625
  %v3628 = vmul.f32 %v3618, %v3626
  %s3629 = scalar_lea.vmem [#allocation2], 112
  %3630 = vst [vmem:[%s3629] sm:$0xff] %v3627
  %3631 = vst [vmem:[%s3629 + $0x8] sm:$0xff] %v3628
  %v3632 = vld [vmem:[#allocation2] sm:$0xff]
  %v3633 = vld [vmem:[#allocation2 + $0x8] sm:$0xff]
  %v3634 = vld [vmem:[#allocation2 + $0x10] sm:$0xff]
  %v3635 = vld [vmem:[#allocation2 + $0x18] sm:$0xff]
  %v3636 = vld [vmem:[#allocation2 + $0x20] sm:$0xff]
  %v3637 = vld [vmem:[#allocation2 + $0x28] sm:$0xff]
  %v3638 = vld [vmem:[#allocation2 + $0x30] sm:$0xff]
  %v3639 = vld [vmem:[#allocation2 + $0x38] sm:$0xff]
  %v3640 = vld [vmem:[#allocation2 + $0x40] sm:$0xff]
  %v3641 = vld [vmem:[#allocation2 + $0x48] sm:$0xff]
  %v3642 = vld [vmem:[#allocation2 + $0x50] sm:$0xff]
  %v3643 = vld [vmem:[#allocation2 + $0x58] sm:$0xff]
  %v3644 = vld [vmem:[#allocation2 + $0x60] sm:$0xff]
  %v3645 = vld [vmem:[#allocation2 + $0x68] sm:$0xff]
  %v3646 = vld [vmem:[#allocation2 + $0x70] sm:$0xff]
  %v3647 = vld [vmem:[#allocation2 + $0x78] sm:$0xff]
  %v3648 = vpack.c.bf16 %v3634, %v3632
  %v3649 = vpack.c.bf16 %v3635, %v3633
  %v3650 = vpack.c.bf16 %v3638, %v3636
  %v3651 = vpack.c.bf16 %v3639, %v3637
  %v3652 = vpack.c.bf16 %v3642, %v3640
  %v3653 = vpack.c.bf16 %v3643, %v3641
  %v3654 = vpack.c.bf16 %v3646, %v3644
  %v3655 = vpack.c.bf16 %v3647, %v3645
  %v3656 = vld [vmem:[%s1] sm:$0xff]
  %v3657 = vld [vmem:[%s1 + $0x8] sm:$0xff]
  %v3658 = vld [vmem:[%s1 + $0x10] sm:$0xff]
  %v3659 = vld [vmem:[%s1 + $0x18] sm:$0xff]
  %v3660 = vld [vmem:[%s1 + $0x20] sm:$0xff]
  %v3661 = vld [vmem:[%s1 + $0x28] sm:$0xff]
  %v3662 = vld [vmem:[%s1 + $0x30] sm:$0xff]
  %v3663 = vld [vmem:[%s1 + $0x38] sm:$0xff]
  %v3664 = vld [vmem:[%s1 + $0x40] sm:$0xff]
  %v3665 = vld [vmem:[%s1 + $0x48] sm:$0xff]
  %v3666 = vld [vmem:[%s1 + $0x50] sm:$0xff]
  %v3667 = vld [vmem:[%s1 + $0x58] sm:$0xff]
  %v3668 = vld [vmem:[%s1 + $0x60] sm:$0xff]
  %v3669 = vld [vmem:[%s1 + $0x68] sm:$0xff]
  %v3670 = vld [vmem:[%s1 + $0x70] sm:$0xff]
  %v3671 = vld [vmem:[%s1 + $0x78] sm:$0xff]
  %v3672 = vld [vmem:[%s1 + $0x80] sm:$0xff]
  %v3673 = vld [vmem:[%s1 + $0x88] sm:$0xff]
  %v3674 = vld [vmem:[%s1 + $0x90] sm:$0xff]
  %v3675 = vld [vmem:[%s1 + $0x98] sm:$0xff]
  %v3676 = vld [vmem:[%s1 + $0xa0] sm:$0xff]
  %v3677 = vld [vmem:[%s1 + $0xa8] sm:$0xff]
  %v3678 = vld [vmem:[%s1 + $0xb0] sm:$0xff]
  %v3679 = vld [vmem:[%s1 + $0xb8] sm:$0xff]
  %v3680 = vld [vmem:[%s1 + $0xc0] sm:$0xff]
  %v3681 = vld [vmem:[%s1 + $0xc8] sm:$0xff]
  %v3682 = vld [vmem:[%s1 + $0xd0] sm:$0xff]
  %v3683 = vld [vmem:[%s1 + $0xd8] sm:$0xff]
  %v3684 = vld [vmem:[%s1 + $0xe0] sm:$0xff]
  %v3685 = vld [vmem:[%s1 + $0xe8] sm:$0xff]
  %v3686 = vld [vmem:[%s1 + $0xf0] sm:$0xff]
  %v3687 = vld [vmem:[%s1 + $0xf8] sm:$0xff]
  %v3688 = vld [vmem:[%s1 + $0x100] sm:$0xff]
  %v3689 = vld [vmem:[%s1 + $0x108] sm:$0xff]
  %v3690 = vld [vmem:[%s1 + $0x110] sm:$0xff]
  %v3691 = vld [vmem:[%s1 + $0x118] sm:$0xff]
  %v3692 = vld [vmem:[%s1 + $0x120] sm:$0xff]
  %v3693 = vld [vmem:[%s1 + $0x128] sm:$0xff]
  %v3694 = vld [vmem:[%s1 + $0x130] sm:$0xff]
  %v3695 = vld [vmem:[%s1 + $0x138] sm:$0xff]
  %v3696 = vld [vmem:[%s1 + $0x140] sm:$0xff]
  %v3697 = vld [vmem:[%s1 + $0x148] sm:$0xff]
  %v3698 = vld [vmem:[%s1 + $0x150] sm:$0xff]
  %v3699 = vld [vmem:[%s1 + $0x158] sm:$0xff]
  %v3700 = vld [vmem:[%s1 + $0x160] sm:$0xff]
  %v3701 = vld [vmem:[%s1 + $0x168] sm:$0xff]
  %v3702 = vld [vmem:[%s1 + $0x170] sm:$0xff]
  %v3703 = vld [vmem:[%s1 + $0x178] sm:$0xff]
  %v3704 = vld [vmem:[%s1 + $0x180] sm:$0xff]
  %v3705 = vld [vmem:[%s1 + $0x188] sm:$0xff]
  %v3706 = vld [vmem:[%s1 + $0x190] sm:$0xff]
  %v3707 = vld [vmem:[%s1 + $0x198] sm:$0xff]
  %v3708 = vld [vmem:[%s1 + $0x1a0] sm:$0xff]
  %v3709 = vld [vmem:[%s1 + $0x1a8] sm:$0xff]
  %v3710 = vld [vmem:[%s1 + $0x1b0] sm:$0xff]
  %v3711 = vld [vmem:[%s1 + $0x1b8] sm:$0xff]
  %v3712 = vld [vmem:[%s1 + $0x1c0] sm:$0xff]
  %v3713 = vld [vmem:[%s1 + $0x1c8] sm:$0xff]
  %v3714 = vld [vmem:[%s1 + $0x1d0] sm:$0xff]
  %v3715 = vld [vmem:[%s1 + $0x1d8] sm:$0xff]
  %v3716 = vld [vmem:[%s1 + $0x1e0] sm:$0xff]
  %v3717 = vld [vmem:[%s1 + $0x1e8] sm:$0xff]
  %v3718 = vld [vmem:[%s1 + $0x1f0] sm:$0xff]
  %v3719 = vld [vmem:[%s1 + $0x1f8] sm:$0xff]
  %v3720 = vld [vmem:[%s1 + $0x200] sm:$0xff]
  %v3721 = vld [vmem:[%s1 + $0x208] sm:$0xff]
  %v3722 = vld [vmem:[%s1 + $0x210] sm:$0xff]
  %v3723 = vld [vmem:[%s1 + $0x218] sm:$0xff]
  %v3724 = vld [vmem:[%s1 + $0x220] sm:$0xff]
  %v3725 = vld [vmem:[%s1 + $0x228] sm:$0xff]
  %v3726 = vld [vmem:[%s1 + $0x230] sm:$0xff]
  %v3727 = vld [vmem:[%s1 + $0x238] sm:$0xff]
  %v3728 = vld [vmem:[%s1 + $0x240] sm:$0xff]
  %v3729 = vld [vmem:[%s1 + $0x248] sm:$0xff]
  %v3730 = vld [vmem:[%s1 + $0x250] sm:$0xff]
  %v3731 = vld [vmem:[%s1 + $0x258] sm:$0xff]
  %v3732 = vld [vmem:[%s1 + $0x260] sm:$0xff]
  %v3733 = vld [vmem:[%s1 + $0x268] sm:$0xff]
  %v3734 = vld [vmem:[%s1 + $0x270] sm:$0xff]
  %v3735 = vld [vmem:[%s1 + $0x278] sm:$0xff]
  %v3736 = vld [vmem:[%s1 + $0x280] sm:$0xff]
  %v3737 = vld [vmem:[%s1 + $0x288] sm:$0xff]
  %v3738 = vld [vmem:[%s1 + $0x290] sm:$0xff]
  %v3739 = vld [vmem:[%s1 + $0x298] sm:$0xff]
  %v3740 = vld [vmem:[%s1 + $0x2a0] sm:$0xff]
  %v3741 = vld [vmem:[%s1 + $0x2a8] sm:$0xff]
  %v3742 = vld [vmem:[%s1 + $0x2b0] sm:$0xff]
  %v3743 = vld [vmem:[%s1 + $0x2b8] sm:$0xff]
  %v3744 = vld [vmem:[%s1 + $0x2c0] sm:$0xff]
  %v3745 = vld [vmem:[%s1 + $0x2c8] sm:$0xff]
  %v3746 = vld [vmem:[%s1 + $0x2d0] sm:$0xff]
  %v3747 = vld [vmem:[%s1 + $0x2d8] sm:$0xff]
  %v3748 = vld [vmem:[%s1 + $0x2e0] sm:$0xff]
  %v3749 = vld [vmem:[%s1 + $0x2e8] sm:$0xff]
  %v3750 = vld [vmem:[%s1 + $0x2f0] sm:$0xff]
  %v3751 = vld [vmem:[%s1 + $0x2f8] sm:$0xff]
  %v3752 = vld [vmem:[%s1 + $0x300] sm:$0xff]
  %v3753 = vld [vmem:[%s1 + $0x308] sm:$0xff]
  %v3754 = vld [vmem:[%s1 + $0x310] sm:$0xff]
  %v3755 = vld [vmem:[%s1 + $0x318] sm:$0xff]
  %v3756 = vld [vmem:[%s1 + $0x320] sm:$0xff]
  %v3757 = vld [vmem:[%s1 + $0x328] sm:$0xff]
  %v3758 = vld [vmem:[%s1 + $0x330] sm:$0xff]
  %v3759 = vld [vmem:[%s1 + $0x338] sm:$0xff]
  %v3760 = vld [vmem:[%s1 + $0x340] sm:$0xff]
  %v3761 = vld [vmem:[%s1 + $0x348] sm:$0xff]
  %v3762 = vld [vmem:[%s1 + $0x350] sm:$0xff]
  %v3763 = vld [vmem:[%s1 + $0x358] sm:$0xff]
  %v3764 = vld [vmem:[%s1 + $0x360] sm:$0xff]
  %v3765 = vld [vmem:[%s1 + $0x368] sm:$0xff]
  %v3766 = vld [vmem:[%s1 + $0x370] sm:$0xff]
  %v3767 = vld [vmem:[%s1 + $0x378] sm:$0xff]
  %v3768 = vld [vmem:[%s1 + $0x380] sm:$0xff]
  %v3769 = vld [vmem:[%s1 + $0x388] sm:$0xff]
  %v3770 = vld [vmem:[%s1 + $0x390] sm:$0xff]
  %v3771 = vld [vmem:[%s1 + $0x398] sm:$0xff]
  %v3772 = vld [vmem:[%s1 + $0x3a0] sm:$0xff]
  %v3773 = vld [vmem:[%s1 + $0x3a8] sm:$0xff]
  %v3774 = vld [vmem:[%s1 + $0x3b0] sm:$0xff]
  %v3775 = vld [vmem:[%s1 + $0x3b8] sm:$0xff]
  %v3776 = vld [vmem:[%s1 + $0x3c0] sm:$0xff]
  %v3777 = vld [vmem:[%s1 + $0x3c8] sm:$0xff]
  %v3778 = vld [vmem:[%s1 + $0x3d0] sm:$0xff]
  %v3779 = vld [vmem:[%s1 + $0x3d8] sm:$0xff]
  %v3780 = vld [vmem:[%s1 + $0x3e0] sm:$0xff]
  %v3781 = vld [vmem:[%s1 + $0x3e8] sm:$0xff]
  %v3782 = vld [vmem:[%s1 + $0x3f0] sm:$0xff]
  %v3783 = vld [vmem:[%s1 + $0x3f8] sm:$0xff]
  %v3784 = vld [vmem:[%s3] sm:$0xff]
  %v3786 = vperm.slane %v3784, 0
  %v3787 = vperm.slane %v3784, 1
  %v3788 = vperm.slane %v3784, 2
  %v3789 = vperm.slane %v3784, 3
  %v3790 = vperm.slane %v3784, 4
  %v3791 = vperm.slane %v3784, 5
  %v3792 = vperm.slane %v3784, 6
  %v3793 = vperm.slane %v3784, 7
  %v3930 = vunpack.c.l.b16 %v3656
  %v3931 = vunpack.c.h.b16 %v3656
  %v3932 = vunpack.c.l.b16 %v3657
  %v3933 = vunpack.c.h.b16 %v3657
  %v3934 = vunpack.c.l.b16 %v3658
  %v3935 = vunpack.c.h.b16 %v3658
  %v3936 = vunpack.c.l.b16 %v3659
  %v3937 = vunpack.c.h.b16 %v3659
  %v3938 = vunpack.c.l.b16 %v3660
  %v3939 = vunpack.c.h.b16 %v3660
  %v3940 = vunpack.c.l.b16 %v3661
  %v3941 = vunpack.c.h.b16 %v3661
  %v3942 = vunpack.c.l.b16 %v3662
  %v3943 = vunpack.c.h.b16 %v3662
  %v3944 = vunpack.c.l.b16 %v3663
  %v3945 = vunpack.c.h.b16 %v3663
  %v3946 = vunpack.c.l.b16 %v3664
  %v3947 = vunpack.c.h.b16 %v3664
  %v3948 = vunpack.c.l.b16 %v3665
  %v3949 = vunpack.c.h.b16 %v3665
  %v3950 = vunpack.c.l.b16 %v3666
  %v3951 = vunpack.c.h.b16 %v3666
  %v3952 = vunpack.c.l.b16 %v3667
  %v3953 = vunpack.c.h.b16 %v3667
  %v3954 = vunpack.c.l.b16 %v3668
  %v3955 = vunpack.c.h.b16 %v3668
  %v3956 = vunpack.c.l.b16 %v3669
  %v3957 = vunpack.c.h.b16 %v3669
  %v3958 = vunpack.c.l.b16 %v3670
  %v3959 = vunpack.c.h.b16 %v3670
  %v3960 = vunpack.c.l.b16 %v3671
  %v3961 = vunpack.c.h.b16 %v3671
  %v3962 = vunpack.c.l.b16 %v3672
  %v3963 = vunpack.c.h.b16 %v3672
  %v3964 = vunpack.c.l.b16 %v3673
  %v3965 = vunpack.c.h.b16 %v3673
  %v3966 = vunpack.c.l.b16 %v3674
  %v3967 = vunpack.c.h.b16 %v3674
  %v3968 = vunpack.c.l.b16 %v3675
  %v3969 = vunpack.c.h.b16 %v3675
  %v3970 = vunpack.c.l.b16 %v3676
  %v3971 = vunpack.c.h.b16 %v3676
  %v3972 = vunpack.c.l.b16 %v3677
  %v3973 = vunpack.c.h.b16 %v3677
  %v3974 = vunpack.c.l.b16 %v3678
  %v3975 = vunpack.c.h.b16 %v3678
  %v3976 = vunpack.c.l.b16 %v3679
  %v3977 = vunpack.c.h.b16 %v3679
  %v3978 = vunpack.c.l.b16 %v3680
  %v3979 = vunpack.c.h.b16 %v3680
  %v3980 = vunpack.c.l.b16 %v3681
  %v3981 = vunpack.c.h.b16 %v3681
  %v3982 = vunpack.c.l.b16 %v3682
  %v3983 = vunpack.c.h.b16 %v3682
  %v3984 = vunpack.c.l.b16 %v3683
  %v3985 = vunpack.c.h.b16 %v3683
  %v3986 = vunpack.c.l.b16 %v3684
  %v3987 = vunpack.c.h.b16 %v3684
  %v3988 = vunpack.c.l.b16 %v3685
  %v3989 = vunpack.c.h.b16 %v3685
  %v3990 = vunpack.c.l.b16 %v3686
  %v3991 = vunpack.c.h.b16 %v3686
  %v3992 = vunpack.c.l.b16 %v3687
  %v3993 = vunpack.c.h.b16 %v3687
  %v3994 = vunpack.c.l.b16 %v3688
  %v3995 = vunpack.c.h.b16 %v3688
  %v3996 = vunpack.c.l.b16 %v3689
  %v3997 = vunpack.c.h.b16 %v3689
  %v3998 = vunpack.c.l.b16 %v3690
  %v3999 = vunpack.c.h.b16 %v3690
  %v4000 = vunpack.c.l.b16 %v3691
  %v4001 = vunpack.c.h.b16 %v3691
  %v4002 = vunpack.c.l.b16 %v3692
  %v4003 = vunpack.c.h.b16 %v3692
  %v4004 = vunpack.c.l.b16 %v3693
  %v4005 = vunpack.c.h.b16 %v3693
  %v4006 = vunpack.c.l.b16 %v3694
  %v4007 = vunpack.c.h.b16 %v3694
  %v4008 = vunpack.c.l.b16 %v3695
  %v4009 = vunpack.c.h.b16 %v3695
  %v4010 = vunpack.c.l.b16 %v3696
  %v4011 = vunpack.c.h.b16 %v3696
  %v4012 = vunpack.c.l.b16 %v3697
  %v4013 = vunpack.c.h.b16 %v3697
  %v4014 = vunpack.c.l.b16 %v3698
  %v4015 = vunpack.c.h.b16 %v3698
  %v4016 = vunpack.c.l.b16 %v3699
  %v4017 = vunpack.c.h.b16 %v3699
  %v4018 = vunpack.c.l.b16 %v3700
  %v4019 = vunpack.c.h.b16 %v3700
  %v4020 = vunpack.c.l.b16 %v3701
  %v4021 = vunpack.c.h.b16 %v3701
  %v4022 = vunpack.c.l.b16 %v3702
  %v4023 = vunpack.c.h.b16 %v3702
  %v4024 = vunpack.c.l.b16 %v3703
  %v4025 = vunpack.c.h.b16 %v3703
  %v4026 = vunpack.c.l.b16 %v3704
  %v4027 = vunpack.c.h.b16 %v3704
  %v4028 = vunpack.c.l.b16 %v3705
  %v4029 = vunpack.c.h.b16 %v3705
  %v4030 = vunpack.c.l.b16 %v3706
  %v4031 = vunpack.c.h.b16 %v3706
  %v4032 = vunpack.c.l.b16 %v3707
  %v4033 = vunpack.c.h.b16 %v3707
  %v4034 = vunpack.c.l.b16 %v3708
  %v4035 = vunpack.c.h.b16 %v3708
  %v4036 = vunpack.c.l.b16 %v3709
  %v4037 = vunpack.c.h.b16 %v3709
  %v4038 = vunpack.c.l.b16 %v3710
  %v4039 = vunpack.c.h.b16 %v3710
  %v4040 = vunpack.c.l.b16 %v3711
  %v4041 = vunpack.c.h.b16 %v3711
  %v4042 = vunpack.c.l.b16 %v3712
  %v4043 = vunpack.c.h.b16 %v3712
  %v4044 = vunpack.c.l.b16 %v3713
  %v4045 = vunpack.c.h.b16 %v3713
  %v4046 = vunpack.c.l.b16 %v3714
  %v4047 = vunpack.c.h.b16 %v3714
  %v4048 = vunpack.c.l.b16 %v3715
  %v4049 = vunpack.c.h.b16 %v3715
  %v4050 = vunpack.c.l.b16 %v3716
  %v4051 = vunpack.c.h.b16 %v3716
  %v4052 = vunpack.c.l.b16 %v3717
  %v4053 = vunpack.c.h.b16 %v3717
  %v4054 = vunpack.c.l.b16 %v3718
  %v4055 = vunpack.c.h.b16 %v3718
  %v4056 = vunpack.c.l.b16 %v3719
  %v4057 = vunpack.c.h.b16 %v3719
  %v4058 = vunpack.c.l.b16 %v3720
  %v4059 = vunpack.c.h.b16 %v3720
  %v4060 = vunpack.c.l.b16 %v3721
  %v4061 = vunpack.c.h.b16 %v3721
  %v4062 = vunpack.c.l.b16 %v3722
  %v4063 = vunpack.c.h.b16 %v3722
  %v4064 = vunpack.c.l.b16 %v3723
  %v4065 = vunpack.c.h.b16 %v3723
  %v4066 = vunpack.c.l.b16 %v3724
  %v4067 = vunpack.c.h.b16 %v3724
  %v4068 = vunpack.c.l.b16 %v3725
  %v4069 = vunpack.c.h.b16 %v3725
  %v4070 = vunpack.c.l.b16 %v3726
  %v4071 = vunpack.c.h.b16 %v3726
  %v4072 = vunpack.c.l.b16 %v3727
  %v4073 = vunpack.c.h.b16 %v3727
  %v4074 = vunpack.c.l.b16 %v3728
  %v4075 = vunpack.c.h.b16 %v3728
  %v4076 = vunpack.c.l.b16 %v3729
  %v4077 = vunpack.c.h.b16 %v3729
  %v4078 = vunpack.c.l.b16 %v3730
  %v4079 = vunpack.c.h.b16 %v3730
  %v4080 = vunpack.c.l.b16 %v3731
  %v4081 = vunpack.c.h.b16 %v3731
  %v4082 = vunpack.c.l.b16 %v3732
  %v4083 = vunpack.c.h.b16 %v3732
  %v4084 = vunpack.c.l.b16 %v3733
  %v4085 = vunpack.c.h.b16 %v3733
  %v4086 = vunpack.c.l.b16 %v3734
  %v4087 = vunpack.c.h.b16 %v3734
  %v4088 = vunpack.c.l.b16 %v3735
  %v4089 = vunpack.c.h.b16 %v3735
  %v4090 = vunpack.c.l.b16 %v3736
  %v4091 = vunpack.c.h.b16 %v3736
  %v4092 = vunpack.c.l.b16 %v3737
  %v4093 = vunpack.c.h.b16 %v3737
  %v4094 = vunpack.c.l.b16 %v3738
  %v4095 = vunpack.c.h.b16 %v3738
  %v4096 = vunpack.c.l.b16 %v3739
  %v4097 = vunpack.c.h.b16 %v3739
  %v4098 = vunpack.c.l.b16 %v3740
  %v4099 = vunpack.c.h.b16 %v3740
  %v4100 = vunpack.c.l.b16 %v3741
  %v4101 = vunpack.c.h.b16 %v3741
  %v4102 = vunpack.c.l.b16 %v3742
  %v4103 = vunpack.c.h.b16 %v3742
  %v4104 = vunpack.c.l.b16 %v3743
  %v4105 = vunpack.c.h.b16 %v3743
  %v4106 = vunpack.c.l.b16 %v3744
  %v4107 = vunpack.c.h.b16 %v3744
  %v4108 = vunpack.c.l.b16 %v3745
  %v4109 = vunpack.c.h.b16 %v3745
  %v4110 = vunpack.c.l.b16 %v3746
  %v4111 = vunpack.c.h.b16 %v3746
  %v4112 = vunpack.c.l.b16 %v3747
  %v4113 = vunpack.c.h.b16 %v3747
  %v4114 = vunpack.c.l.b16 %v3748
  %v4115 = vunpack.c.h.b16 %v3748
  %v4116 = vunpack.c.l.b16 %v3749
  %v4117 = vunpack.c.h.b16 %v3749
  %v4118 = vunpack.c.l.b16 %v3750
  %v4119 = vunpack.c.h.b16 %v3750
  %v4120 = vunpack.c.l.b16 %v3751
  %v4121 = vunpack.c.h.b16 %v3751
  %v4122 = vunpack.c.l.b16 %v3752
  %v4123 = vunpack.c.h.b16 %v3752
  %v4124 = vunpack.c.l.b16 %v3753
  %v4125 = vunpack.c.h.b16 %v3753
  %v4126 = vunpack.c.l.b16 %v3754
  %v4127 = vunpack.c.h.b16 %v3754
  %v4128 = vunpack.c.l.b16 %v3755
  %v4129 = vunpack.c.h.b16 %v3755
  %v4130 = vunpack.c.l.b16 %v3756
  %v4131 = vunpack.c.h.b16 %v3756
  %v4132 = vunpack.c.l.b16 %v3757
  %v4133 = vunpack.c.h.b16 %v3757
  %v4134 = vunpack.c.l.b16 %v3758
  %v4135 = vunpack.c.h.b16 %v3758
  %v4136 = vunpack.c.l.b16 %v3759
  %v4137 = vunpack.c.h.b16 %v3759
  %v4138 = vunpack.c.l.b16 %v3760
  %v4139 = vunpack.c.h.b16 %v3760
  %v4140 = vunpack.c.l.b16 %v3761
  %v4141 = vunpack.c.h.b16 %v3761
  %v4142 = vunpack.c.l.b16 %v3762
  %v4143 = vunpack.c.h.b16 %v3762
  %v4144 = vunpack.c.l.b16 %v3763
  %v4145 = vunpack.c.h.b16 %v3763
  %v4146 = vunpack.c.l.b16 %v3764
  %v4147 = vunpack.c.h.b16 %v3764
  %v4148 = vunpack.c.l.b16 %v3765
  %v4149 = vunpack.c.h.b16 %v3765
  %v4150 = vunpack.c.l.b16 %v3766
  %v4151 = vunpack.c.h.b16 %v3766
  %v4152 = vunpack.c.l.b16 %v3767
  %v4153 = vunpack.c.h.b16 %v3767
  %v4154 = vunpack.c.l.b16 %v3768
  %v4155 = vunpack.c.h.b16 %v3768
  %v4156 = vunpack.c.l.b16 %v3769
  %v4157 = vunpack.c.h.b16 %v3769
  %v4158 = vunpack.c.l.b16 %v3770
  %v4159 = vunpack.c.h.b16 %v3770
  %v4160 = vunpack.c.l.b16 %v3771
  %v4161 = vunpack.c.h.b16 %v3771
  %v4162 = vunpack.c.l.b16 %v3772
  %v4163 = vunpack.c.h.b16 %v3772
  %v4164 = vunpack.c.l.b16 %v3773
  %v4165 = vunpack.c.h.b16 %v3773
  %v4166 = vunpack.c.l.b16 %v3774
  %v4167 = vunpack.c.h.b16 %v3774
  %v4168 = vunpack.c.l.b16 %v3775
  %v4169 = vunpack.c.h.b16 %v3775
  %v4170 = vunpack.c.l.b16 %v3776
  %v4171 = vunpack.c.h.b16 %v3776
  %v4172 = vunpack.c.l.b16 %v3777
  %v4173 = vunpack.c.h.b16 %v3777
  %v4174 = vunpack.c.l.b16 %v3778
  %v4175 = vunpack.c.h.b16 %v3778
  %v4176 = vunpack.c.l.b16 %v3779
  %v4177 = vunpack.c.h.b16 %v3779
  %v4178 = vunpack.c.l.b16 %v3780
  %v4179 = vunpack.c.h.b16 %v3780
  %v4180 = vunpack.c.l.b16 %v3781
  %v4181 = vunpack.c.h.b16 %v3781
  %v4182 = vunpack.c.l.b16 %v3782
  %v4183 = vunpack.c.h.b16 %v3782
  %v4184 = vunpack.c.l.b16 %v3783
  %v4185 = vunpack.c.h.b16 %v3783
  %v4186 = vpack.c.b16 %v3938, %v3930
  %v4187 = vpack.c.b16 %v3939, %v3931
  %v4188 = vpack.c.b16 %v3940, %v3932
  %v4189 = vpack.c.b16 %v3941, %v3933
  %v4190 = vpack.c.b16 %v3942, %v3934
  %v4191 = vpack.c.b16 %v3943, %v3935
  %v4192 = vpack.c.b16 %v3944, %v3936
  %v4193 = vpack.c.b16 %v3945, %v3937
  %v4194 = vpack.c.b16 %v3954, %v3946
  %v4195 = vpack.c.b16 %v3955, %v3947
  %v4196 = vpack.c.b16 %v3956, %v3948
  %v4197 = vpack.c.b16 %v3957, %v3949
  %v4198 = vpack.c.b16 %v3958, %v3950
  %v4199 = vpack.c.b16 %v3959, %v3951
  %v4200 = vpack.c.b16 %v3960, %v3952
  %v4201 = vpack.c.b16 %v3961, %v3953
  %v4202 = vpack.c.b16 %v3970, %v3962
  %v4203 = vpack.c.b16 %v3971, %v3963
  %v4204 = vpack.c.b16 %v3972, %v3964
  %v4205 = vpack.c.b16 %v3973, %v3965
  %v4206 = vpack.c.b16 %v3974, %v3966
  %v4207 = vpack.c.b16 %v3975, %v3967
  %v4208 = vpack.c.b16 %v3976, %v3968
  %v4209 = vpack.c.b16 %v3977, %v3969
  %v4210 = vpack.c.b16 %v3986, %v3978
  %v4211 = vpack.c.b16 %v3987, %v3979
  %v4212 = vpack.c.b16 %v3988, %v3980
  %v4213 = vpack.c.b16 %v3989, %v3981
  %v4214 = vpack.c.b16 %v3990, %v3982
  %v4215 = vpack.c.b16 %v3991, %v3983
  %v4216 = vpack.c.b16 %v3992, %v3984
  %v4217 = vpack.c.b16 %v3993, %v3985
  %v4218 = vpack.c.b16 %v4002, %v3994
  %v4219 = vpack.c.b16 %v4003, %v3995
  %v4220 = vpack.c.b16 %v4004, %v3996
  %v4221 = vpack.c.b16 %v4005, %v3997
  %v4222 = vpack.c.b16 %v4006, %v3998
  %v4223 = vpack.c.b16 %v4007, %v3999
  %v4224 = vpack.c.b16 %v4008, %v4000
  %v4225 = vpack.c.b16 %v4009, %v4001
  %v4226 = vpack.c.b16 %v4018, %v4010
  %v4227 = vpack.c.b16 %v4019, %v4011
  %v4228 = vpack.c.b16 %v4020, %v4012
  %v4229 = vpack.c.b16 %v4021, %v4013
  %v4230 = vpack.c.b16 %v4022, %v4014
  %v4231 = vpack.c.b16 %v4023, %v4015
  %v4232 = vpack.c.b16 %v4024, %v4016
  %v4233 = vpack.c.b16 %v4025, %v4017
  %v4234 = vpack.c.b16 %v4034, %v4026
  %v4235 = vpack.c.b16 %v4035, %v4027
  %v4236 = vpack.c.b16 %v4036, %v4028
  %v4237 = vpack.c.b16 %v4037, %v4029
  %v4238 = vpack.c.b16 %v4038, %v4030
  %v4239 = vpack.c.b16 %v4039, %v4031
  %v4240 = vpack.c.b16 %v4040, %v4032
  %v4241 = vpack.c.b16 %v4041, %v4033
  %v4242 = vpack.c.b16 %v4050, %v4042
  %v4243 = vpack.c.b16 %v4051, %v4043
  %v4244 = vpack.c.b16 %v4052, %v4044
  %v4245 = vpack.c.b16 %v4053, %v4045
  %v4246 = vpack.c.b16 %v4054, %v4046
  %v4247 = vpack.c.b16 %v4055, %v4047
  %v4248 = vpack.c.b16 %v4056, %v4048
  %v4249 = vpack.c.b16 %v4057, %v4049
  %v4250 = vpack.c.b16 %v4066, %v4058
  %v4251 = vpack.c.b16 %v4067, %v4059
  %v4252 = vpack.c.b16 %v4068, %v4060
  %v4253 = vpack.c.b16 %v4069, %v4061
  %v4254 = vpack.c.b16 %v4070, %v4062
  %v4255 = vpack.c.b16 %v4071, %v4063
  %v4256 = vpack.c.b16 %v4072, %v4064
  %v4257 = vpack.c.b16 %v4073, %v4065
  %v4258 = vpack.c.b16 %v4082, %v4074
  %v4259 = vpack.c.b16 %v4083, %v4075
  %v4260 = vpack.c.b16 %v4084, %v4076
  %v4261 = vpack.c.b16 %v4085, %v4077
  %v4262 = vpack.c.b16 %v4086, %v4078
  %v4263 = vpack.c.b16 %v4087, %v4079
  %v4264 = vpack.c.b16 %v4088, %v4080
  %v4265 = vpack.c.b16 %v4089, %v4081
  %v4266 = vpack.c.b16 %v4098, %v4090
  %v4267 = vpack.c.b16 %v4099, %v4091
  %v4268 = vpack.c.b16 %v4100, %v4092
  %v4269 = vpack.c.b16 %v4101, %v4093
  %v4270 = vpack.c.b16 %v4102, %v4094
  %v4271 = vpack.c.b16 %v4103, %v4095
  %v4272 = vpack.c.b16 %v4104, %v4096
  %v4273 = vpack.c.b16 %v4105, %v4097
  %v4274 = vpack.c.b16 %v4114, %v4106
  %v4275 = vpack.c.b16 %v4115, %v4107
  %v4276 = vpack.c.b16 %v4116, %v4108
  %v4277 = vpack.c.b16 %v4117, %v4109
  %v4278 = vpack.c.b16 %v4118, %v4110
  %v4279 = vpack.c.b16 %v4119, %v4111
  %v4280 = vpack.c.b16 %v4120, %v4112
  %v4281 = vpack.c.b16 %v4121, %v4113
  %v4282 = vpack.c.b16 %v4130, %v4122
  %v4283 = vpack.c.b16 %v4131, %v4123
  %v4284 = vpack.c.b16 %v4132, %v4124
  %v4285 = vpack.c.b16 %v4133, %v4125
  %v4286 = vpack.c.b16 %v4134, %v4126
  %v4287 = vpack.c.b16 %v4135, %v4127
  %v4288 = vpack.c.b16 %v4136, %v4128
  %v4289 = vpack.c.b16 %v4137, %v4129
  %v4290 = vpack.c.b16 %v4146, %v4138
  %v4291 = vpack.c.b16 %v4147, %v4139
  %v4292 = vpack.c.b16 %v4148, %v4140
  %v4293 = vpack.c.b16 %v4149, %v4141
  %v4294 = vpack.c.b16 %v4150, %v4142
  %v4295 = vpack.c.b16 %v4151, %v4143
  %v4296 = vpack.c.b16 %v4152, %v4144
  %v4297 = vpack.c.b16 %v4153, %v4145
  %v4298 = vpack.c.b16 %v4162, %v4154
  %v4299 = vpack.c.b16 %v4163, %v4155
  %v4300 = vpack.c.b16 %v4164, %v4156
  %v4301 = vpack.c.b16 %v4165, %v4157
  %v4302 = vpack.c.b16 %v4166, %v4158
  %v4303 = vpack.c.b16 %v4167, %v4159
  %v4304 = vpack.c.b16 %v4168, %v4160
  %v4305 = vpack.c.b16 %v4169, %v4161
  %v4306 = vpack.c.b16 %v4178, %v4170
  %v4307 = vpack.c.b16 %v4179, %v4171
  %v4308 = vpack.c.b16 %v4180, %v4172
  %v4309 = vpack.c.b16 %v4181, %v4173
  %v4310 = vpack.c.b16 %v4182, %v4174
  %v4311 = vpack.c.b16 %v4183, %v4175
  %v4312 = vpack.c.b16 %v4184, %v4176
  %v4313 = vpack.c.b16 %v4185, %v4177
  %4442 = vmatpush.bf16.msra.mxu0 %v4242
  %4443 = vmatpush.bf16.msra.mxu0 %v4234
  %4444 = vmatpush.bf16.msra.mxu0 %v4226
  %4445 = vmatpush.bf16.msra.mxu0 %v4218
  %4446 = vmatpush.bf16.msra.mxu0 %v4210
  %4447 = vmatpush.bf16.msra.mxu0 %v4202
  %4448 = vmatpush.bf16.msra.mxu0 %v4194
  %4449 = vmatpush.bf16.msra.mxu0 %v4186
  %4450 = vmatmul.bf16.gmra.mxu0 %v3648
  %v4451 = vpop.f32.mrf.mxu0
  %v4452 = vadd.f32 %v3786, %v4451
  %v4453 = vpop.f32.mrf.mxu0
  %v4454 = vadd.f32 %v3786, %v4453
  %4455 = vmatmul.bf16.gmra.mxu0 %v3650
  %v4456 = vpop.f32.mrf.mxu0
  %v4457 = vadd.f32 %v3786, %v4456
  %v4458 = vpop.f32.mrf.mxu0
  %v4459 = vadd.f32 %v3786, %v4458
  %4460 = vmatmul.bf16.gmra.mxu0 %v3652
  %v4461 = vpop.f32.mrf.mxu0
  %v4462 = vadd.f32 %v3786, %v4461
  %v4463 = vpop.f32.mrf.mxu0
  %v4464 = vadd.f32 %v3786, %v4463
  %4465 = vmatmul.bf16.gmra.mxu0 %v3654
  %v4466 = vpop.f32.mrf.mxu0
  %v4467 = vadd.f32 %v3786, %v4466
  %v4468 = vpop.f32.mrf.mxu0
  %v4469 = vadd.f32 %v3786, %v4468
  %4470 = vdwg.mxu0
  %4471 = vmatpush.bf16.msra.mxu0 %v4306
  %4472 = vmatpush.bf16.msra.mxu0 %v4298
  %4473 = vmatpush.bf16.msra.mxu0 %v4290
  %4474 = vmatpush.bf16.msra.mxu0 %v4282
  %4475 = vmatpush.bf16.msra.mxu0 %v4274
  %4476 = vmatpush.bf16.msra.mxu0 %v4266
  %4477 = vmatpush.bf16.msra.mxu0 %v4258
  %4478 = vmatpush.bf16.msra.mxu0 %v4250
  %4479 = vmatmul.bf16.gmra.mxu0 %v3649
  %v4480 = vpop.f32.mrf.mxu0
  %v4481 = vadd.f32 %v4452, %v4480
  %v4482 = vpop.f32.mrf.mxu0
  %v4483 = vadd.f32 %v4454, %v4482
  %4484 = vmatmul.bf16.gmra.mxu0 %v3651
  %v4485 = vpop.f32.mrf.mxu0
  %v4486 = vadd.f32 %v4457, %v4485
  %v4487 = vpop.f32.mrf.mxu0
  %v4488 = vadd.f32 %v4459, %v4487
  %4489 = vmatmul.bf16.gmra.mxu0 %v3653
  %v4490 = vpop.f32.mrf.mxu0
  %v4491 = vadd.f32 %v4462, %v4490
  %v4492 = vpop.f32.mrf.mxu0
  %v4493 = vadd.f32 %v4464, %v4492
  %4494 = vmatmul.bf16.gmra.mxu0 %v3655
  %v4495 = vpop.f32.mrf.mxu0
  %v4496 = vadd.f32 %v4467, %v4495
  %v4497 = vpop.f32.mrf.mxu0
  %v4498 = vadd.f32 %v4469, %v4497
  %4499 = vdwg.mxu0
  %4500 = vmatpush.bf16.msra.mxu0 %v4243
  %4501 = vmatpush.bf16.msra.mxu0 %v4235
  %4502 = vmatpush.bf16.msra.mxu0 %v4227
  %4503 = vmatpush.bf16.msra.mxu0 %v4219
  %4504 = vmatpush.bf16.msra.mxu0 %v4211
  %4505 = vmatpush.bf16.msra.mxu0 %v4203
  %4506 = vmatpush.bf16.msra.mxu0 %v4195
  %4507 = vmatpush.bf16.msra.mxu0 %v4187
  %4508 = vmatmul.bf16.gmra.mxu0 %v3648
  %v4509 = vpop.f32.mrf.mxu0
  %v4510 = vadd.f32 %v3787, %v4509
  %v4511 = vpop.f32.mrf.mxu0
  %v4512 = vadd.f32 %v3787, %v4511
  %4513 = vmatmul.bf16.gmra.mxu0 %v3650
  %v4514 = vpop.f32.mrf.mxu0
  %v4515 = vadd.f32 %v3787, %v4514
  %v4516 = vpop.f32.mrf.mxu0
  %v4517 = vadd.f32 %v3787, %v4516
  %4518 = vmatmul.bf16.gmra.mxu0 %v3652
  %v4519 = vpop.f32.mrf.mxu0
  %v4520 = vadd.f32 %v3787, %v4519
  %v4521 = vpop.f32.mrf.mxu0
  %v4522 = vadd.f32 %v3787, %v4521
  %4523 = vmatmul.bf16.gmra.mxu0 %v3654
  %v4524 = vpop.f32.mrf.mxu0
  %v4525 = vadd.f32 %v3787, %v4524
  %v4526 = vpop.f32.mrf.mxu0
  %v4527 = vadd.f32 %v3787, %v4526
  %4528 = vdwg.mxu0
  %4529 = vmatpush.bf16.msra.mxu0 %v4307
  %4530 = vmatpush.bf16.msra.mxu0 %v4299
  %4531 = vmatpush.bf16.msra.mxu0 %v4291
  %4532 = vmatpush.bf16.msra.mxu0 %v4283
  %4533 = vmatpush.bf16.msra.mxu0 %v4275
  %4534 = vmatpush.bf16.msra.mxu0 %v4267
  %4535 = vmatpush.bf16.msra.mxu0 %v4259
  %4536 = vmatpush.bf16.msra.mxu0 %v4251
  %4537 = vmatmul.bf16.gmra.mxu0 %v3649
  %v4538 = vpop.f32.mrf.mxu0
  %v4539 = vadd.f32 %v4510, %v4538
  %v4540 = vpop.f32.mrf.mxu0
  %v4541 = vadd.f32 %v4512, %v4540
  %4542 = vmatmul.bf16.gmra.mxu0 %v3651
  %v4543 = vpop.f32.mrf.mxu0
  %v4544 = vadd.f32 %v4515, %v4543
  %v4545 = vpop.f32.mrf.mxu0
  %v4546 = vadd.f32 %v4517, %v4545
  %4547 = vmatmul.bf16.gmra.mxu0 %v3653
  %v4548 = vpop.f32.mrf.mxu0
  %v4549 = vadd.f32 %v4520, %v4548
  %v4550 = vpop.f32.mrf.mxu0
  %v4551 = vadd.f32 %v4522, %v4550
  %4552 = vmatmul.bf16.gmra.mxu0 %v3655
  %v4553 = vpop.f32.mrf.mxu0
  %v4554 = vadd.f32 %v4525, %v4553
  %v4555 = vpop.f32.mrf.mxu0
  %v4556 = vadd.f32 %v4527, %v4555
  %4557 = vdwg.mxu0
  %4558 = vmatpush.bf16.msra.mxu0 %v4244
  %4559 = vmatpush.bf16.msra.mxu0 %v4236
  %4560 = vmatpush.bf16.msra.mxu0 %v4228
  %4561 = vmatpush.bf16.msra.mxu0 %v4220
  %4562 = vmatpush.bf16.msra.mxu0 %v4212
  %4563 = vmatpush.bf16.msra.mxu0 %v4204
  %4564 = vmatpush.bf16.msra.mxu0 %v4196
  %4565 = vmatpush.bf16.msra.mxu0 %v4188
  %4566 = vmatmul.bf16.gmra.mxu0 %v3648
  %v4567 = vpop.f32.mrf.mxu0
  %v4568 = vadd.f32 %v3788, %v4567
  %v4569 = vpop.f32.mrf.mxu0
  %v4570 = vadd.f32 %v3788, %v4569
  %4571 = vmatmul.bf16.gmra.mxu0 %v3650
  %v4572 = vpop.f32.mrf.mxu0
  %v4573 = vadd.f32 %v3788, %v4572
  %v4574 = vpop.f32.mrf.mxu0
  %v4575 = vadd.f32 %v3788, %v4574
  %4576 = vmatmul.bf16.gmra.mxu0 %v3652
  %v4577 = vpop.f32.mrf.mxu0
  %v4578 = vadd.f32 %v3788, %v4577
  %v4579 = vpop.f32.mrf.mxu0
  %v4580 = vadd.f32 %v3788, %v4579
  %4581 = vmatmul.bf16.gmra.mxu0 %v3654
  %v4582 = vpop.f32.mrf.mxu0
  %v4583 = vadd.f32 %v3788, %v4582
  %v4584 = vpop.f32.mrf.mxu0
  %v4585 = vadd.f32 %v3788, %v4584
  %4586 = vdwg.mxu0
  %4587 = vmatpush.bf16.msra.mxu0 %v4308
  %4588 = vmatpush.bf16.msra.mxu0 %v4300
  %4589 = vmatpush.bf16.msra.mxu0 %v4292
  %4590 = vmatpush.bf16.msra.mxu0 %v4284
  %4591 = vmatpush.bf16.msra.mxu0 %v4276
  %4592 = vmatpush.bf16.msra.mxu0 %v4268
  %4593 = vmatpush.bf16.msra.mxu0 %v4260
  %4594 = vmatpush.bf16.msra.mxu0 %v4252
  %4595 = vmatmul.bf16.gmra.mxu0 %v3649
  %v4596 = vpop.f32.mrf.mxu0
  %v4597 = vadd.f32 %v4568, %v4596
  %v4598 = vpop.f32.mrf.mxu0
  %v4599 = vadd.f32 %v4570, %v4598
  %4600 = vmatmul.bf16.gmra.mxu0 %v3651
  %v4601 = vpop.f32.mrf.mxu0
  %v4602 = vadd.f32 %v4573, %v4601
  %v4603 = vpop.f32.mrf.mxu0
  %v4604 = vadd.f32 %v4575, %v4603
  %4605 = vmatmul.bf16.gmra.mxu0 %v3653
  %v4606 = vpop.f32.mrf.mxu0
  %v4607 = vadd.f32 %v4578, %v4606
  %v4608 = vpop.f32.mrf.mxu0
  %v4609 = vadd.f32 %v4580, %v4608
  %4610 = vmatmul.bf16.gmra.mxu0 %v3655
  %v4611 = vpop.f32.mrf.mxu0
  %v4612 = vadd.f32 %v4583, %v4611
  %v4613 = vpop.f32.mrf.mxu0
  %v4614 = vadd.f32 %v4585, %v4613
  %4615 = vdwg.mxu0
  %4616 = vmatpush.bf16.msra.mxu0 %v4245
  %4617 = vmatpush.bf16.msra.mxu0 %v4237
  %4618 = vmatpush.bf16.msra.mxu0 %v4229
  %4619 = vmatpush.bf16.msra.mxu0 %v4221
  %4620 = vmatpush.bf16.msra.mxu0 %v4213
  %4621 = vmatpush.bf16.msra.mxu0 %v4205
  %4622 = vmatpush.bf16.msra.mxu0 %v4197
  %4623 = vmatpush.bf16.msra.mxu0 %v4189
  %4624 = vmatmul.bf16.gmra.mxu0 %v3648
  %v4625 = vpop.f32.mrf.mxu0
  %v4626 = vadd.f32 %v3789, %v4625
  %v4627 = vpop.f32.mrf.mxu0
  %v4628 = vadd.f32 %v3789, %v4627
  %4629 = vmatmul.bf16.gmra.mxu0 %v3650
  %v4630 = vpop.f32.mrf.mxu0
  %v4631 = vadd.f32 %v3789, %v4630
  %v4632 = vpop.f32.mrf.mxu0
  %v4633 = vadd.f32 %v3789, %v4632
  %4634 = vmatmul.bf16.gmra.mxu0 %v3652
  %v4635 = vpop.f32.mrf.mxu0
  %v4636 = vadd.f32 %v3789, %v4635
  %v4637 = vpop.f32.mrf.mxu0
  %v4638 = vadd.f32 %v3789, %v4637
  %4639 = vmatmul.bf16.gmra.mxu0 %v3654
  %v4640 = vpop.f32.mrf.mxu0
  %v4641 = vadd.f32 %v3789, %v4640
  %v4642 = vpop.f32.mrf.mxu0
  %v4643 = vadd.f32 %v3789, %v4642
  %4644 = vdwg.mxu0
  %4645 = vmatpush.bf16.msra.mxu0 %v4309
  %4646 = vmatpush.bf16.msra.mxu0 %v4301
  %4647 = vmatpush.bf16.msra.mxu0 %v4293
  %4648 = vmatpush.bf16.msra.mxu0 %v4285
  %4649 = vmatpush.bf16.msra.mxu0 %v4277
  %4650 = vmatpush.bf16.msra.mxu0 %v4269
  %4651 = vmatpush.bf16.msra.mxu0 %v4261
  %4652 = vmatpush.bf16.msra.mxu0 %v4253
  %4653 = vmatmul.bf16.gmra.mxu0 %v3649
  %v4654 = vpop.f32.mrf.mxu0
  %v4655 = vadd.f32 %v4626, %v4654
  %v4656 = vpop.f32.mrf.mxu0
  %v4657 = vadd.f32 %v4628, %v4656
  %4658 = vmatmul.bf16.gmra.mxu0 %v3651
  %v4659 = vpop.f32.mrf.mxu0
  %v4660 = vadd.f32 %v4631, %v4659
  %v4661 = vpop.f32.mrf.mxu0
  %v4662 = vadd.f32 %v4633, %v4661
  %4663 = vmatmul.bf16.gmra.mxu0 %v3653
  %v4664 = vpop.f32.mrf.mxu0
  %v4665 = vadd.f32 %v4636, %v4664
  %v4666 = vpop.f32.mrf.mxu0
  %v4667 = vadd.f32 %v4638, %v4666
  %4668 = vmatmul.bf16.gmra.mxu0 %v3655
  %v4669 = vpop.f32.mrf.mxu0
  %v4670 = vadd.f32 %v4641, %v4669
  %v4671 = vpop.f32.mrf.mxu0
  %v4672 = vadd.f32 %v4643, %v4671
  %4673 = vdwg.mxu0
  %4674 = vmatpush.bf16.msra.mxu0 %v4246
  %4675 = vmatpush.bf16.msra.mxu0 %v4238
  %4676 = vmatpush.bf16.msra.mxu0 %v4230
  %4677 = vmatpush.bf16.msra.mxu0 %v4222
  %4678 = vmatpush.bf16.msra.mxu0 %v4214
  %4679 = vmatpush.bf16.msra.mxu0 %v4206
  %4680 = vmatpush.bf16.msra.mxu0 %v4198
  %4681 = vmatpush.bf16.msra.mxu0 %v4190
  %4682 = vmatmul.bf16.gmra.mxu0 %v3648
  %v4683 = vpop.f32.mrf.mxu0
  %v4684 = vadd.f32 %v3790, %v4683
  %v4685 = vpop.f32.mrf.mxu0
  %v4686 = vadd.f32 %v3790, %v4685
  %4687 = vmatmul.bf16.gmra.mxu0 %v3650
  %v4688 = vpop.f32.mrf.mxu0
  %v4689 = vadd.f32 %v3790, %v4688
  %v4690 = vpop.f32.mrf.mxu0
  %v4691 = vadd.f32 %v3790, %v4690
  %4692 = vmatmul.bf16.gmra.mxu0 %v3652
  %v4693 = vpop.f32.mrf.mxu0
  %v4694 = vadd.f32 %v3790, %v4693
  %v4695 = vpop.f32.mrf.mxu0
  %v4696 = vadd.f32 %v3790, %v4695
  %4697 = vmatmul.bf16.gmra.mxu0 %v3654
  %v4698 = vpop.f32.mrf.mxu0
  %v4699 = vadd.f32 %v3790, %v4698
  %v4700 = vpop.f32.mrf.mxu0
  %v4701 = vadd.f32 %v3790, %v4700
  %4702 = vdwg.mxu0
  %4703 = vmatpush.bf16.msra.mxu0 %v4310
  %4704 = vmatpush.bf16.msra.mxu0 %v4302
  %4705 = vmatpush.bf16.msra.mxu0 %v4294
  %4706 = vmatpush.bf16.msra.mxu0 %v4286
  %4707 = vmatpush.bf16.msra.mxu0 %v4278
  %4708 = vmatpush.bf16.msra.mxu0 %v4270
  %4709 = vmatpush.bf16.msra.mxu0 %v4262
  %4710 = vmatpush.bf16.msra.mxu0 %v4254
  %4711 = vmatmul.bf16.gmra.mxu0 %v3649
  %v4712 = vpop.f32.mrf.mxu0
  %v4713 = vadd.f32 %v4684, %v4712
  %v4714 = vpop.f32.mrf.mxu0
  %v4715 = vadd.f32 %v4686, %v4714
  %4716 = vmatmul.bf16.gmra.mxu0 %v3651
  %v4717 = vpop.f32.mrf.mxu0
  %v4718 = vadd.f32 %v4689, %v4717
  %v4719 = vpop.f32.mrf.mxu0
  %v4720 = vadd.f32 %v4691, %v4719
  %4721 = vmatmul.bf16.gmra.mxu0 %v3653
  %v4722 = vpop.f32.mrf.mxu0
  %v4723 = vadd.f32 %v4694, %v4722
  %v4724 = vpop.f32.mrf.mxu0
  %v4725 = vadd.f32 %v4696, %v4724
  %4726 = vmatmul.bf16.gmra.mxu0 %v3655
  %v4727 = vpop.f32.mrf.mxu0
  %v4728 = vadd.f32 %v4699, %v4727
  %v4729 = vpop.f32.mrf.mxu0
  %v4730 = vadd.f32 %v4701, %v4729
  %4731 = vdwg.mxu0
  %4732 = vmatpush.bf16.msra.mxu0 %v4247
  %4733 = vmatpush.bf16.msra.mxu0 %v4239
  %4734 = vmatpush.bf16.msra.mxu0 %v4231
  %4735 = vmatpush.bf16.msra.mxu0 %v4223
  %4736 = vmatpush.bf16.msra.mxu0 %v4215
  %4737 = vmatpush.bf16.msra.mxu0 %v4207
  %4738 = vmatpush.bf16.msra.mxu0 %v4199
  %4739 = vmatpush.bf16.msra.mxu0 %v4191
  %4740 = vmatmul.bf16.gmra.mxu0 %v3648
  %v4741 = vpop.f32.mrf.mxu0
  %v4742 = vadd.f32 %v3791, %v4741
  %v4743 = vpop.f32.mrf.mxu0
  %v4744 = vadd.f32 %v3791, %v4743
  %4745 = vmatmul.bf16.gmra.mxu0 %v3650
  %v4746 = vpop.f32.mrf.mxu0
  %v4747 = vadd.f32 %v3791, %v4746
  %v4748 = vpop.f32.mrf.mxu0
  %v4749 = vadd.f32 %v3791, %v4748
  %4750 = vmatmul.bf16.gmra.mxu0 %v3652
  %v4751 = vpop.f32.mrf.mxu0
  %v4752 = vadd.f32 %v3791, %v4751
  %v4753 = vpop.f32.mrf.mxu0
  %v4754 = vadd.f32 %v3791, %v4753
  %4755 = vmatmul.bf16.gmra.mxu0 %v3654
  %v4756 = vpop.f32.mrf.mxu0
  %v4757 = vadd.f32 %v3791, %v4756
  %v4758 = vpop.f32.mrf.mxu0
  %v4759 = vadd.f32 %v3791, %v4758
  %4760 = vdwg.mxu0
  %4761 = vmatpush.bf16.msra.mxu0 %v4311
  %4762 = vmatpush.bf16.msra.mxu0 %v4303
  %4763 = vmatpush.bf16.msra.mxu0 %v4295
  %4764 = vmatpush.bf16.msra.mxu0 %v4287
  %4765 = vmatpush.bf16.msra.mxu0 %v4279
  %4766 = vmatpush.bf16.msra.mxu0 %v4271
  %4767 = vmatpush.bf16.msra.mxu0 %v4263
  %4768 = vmatpush.bf16.msra.mxu0 %v4255
  %4769 = vmatmul.bf16.gmra.mxu0 %v3649
  %v4770 = vpop.f32.mrf.mxu0
  %v4771 = vadd.f32 %v4742, %v4770
  %v4772 = vpop.f32.mrf.mxu0
  %v4773 = vadd.f32 %v4744, %v4772
  %4774 = vmatmul.bf16.gmra.mxu0 %v3651
  %v4775 = vpop.f32.mrf.mxu0
  %v4776 = vadd.f32 %v4747, %v4775
  %v4777 = vpop.f32.mrf.mxu0
  %v4778 = vadd.f32 %v4749, %v4777
  %4779 = vmatmul.bf16.gmra.mxu0 %v3653
  %v4780 = vpop.f32.mrf.mxu0
  %v4781 = vadd.f32 %v4752, %v4780
  %v4782 = vpop.f32.mrf.mxu0
  %v4783 = vadd.f32 %v4754, %v4782
  %4784 = vmatmul.bf16.gmra.mxu0 %v3655
  %v4785 = vpop.f32.mrf.mxu0
  %v4786 = vadd.f32 %v4757, %v4785
  %v4787 = vpop.f32.mrf.mxu0
  %v4788 = vadd.f32 %v4759, %v4787
  %4789 = vdwg.mxu0
  %4790 = vmatpush.bf16.msra.mxu0 %v4248
  %4791 = vmatpush.bf16.msra.mxu0 %v4240
  %4792 = vmatpush.bf16.msra.mxu0 %v4232
  %4793 = vmatpush.bf16.msra.mxu0 %v4224
  %4794 = vmatpush.bf16.msra.mxu0 %v4216
  %4795 = vmatpush.bf16.msra.mxu0 %v4208
  %4796 = vmatpush.bf16.msra.mxu0 %v4200
  %4797 = vmatpush.bf16.msra.mxu0 %v4192
  %4798 = vmatmul.bf16.gmra.mxu0 %v3648
  %v4799 = vpop.f32.mrf.mxu0
  %v4800 = vadd.f32 %v3792, %v4799
  %v4801 = vpop.f32.mrf.mxu0
  %v4802 = vadd.f32 %v3792, %v4801
  %4803 = vmatmul.bf16.gmra.mxu0 %v3650
  %v4804 = vpop.f32.mrf.mxu0
  %v4805 = vadd.f32 %v3792, %v4804
  %v4806 = vpop.f32.mrf.mxu0
  %v4807 = vadd.f32 %v3792, %v4806
  %4808 = vmatmul.bf16.gmra.mxu0 %v3652
  %v4809 = vpop.f32.mrf.mxu0
  %v4810 = vadd.f32 %v3792, %v4809
  %v4811 = vpop.f32.mrf.mxu0
  %v4812 = vadd.f32 %v3792, %v4811
  %4813 = vmatmul.bf16.gmra.mxu0 %v3654
  %v4814 = vpop.f32.mrf.mxu0
  %v4815 = vadd.f32 %v3792, %v4814
  %v4816 = vpop.f32.mrf.mxu0
  %v4817 = vadd.f32 %v3792, %v4816
  %4818 = vdwg.mxu0
  %4819 = vmatpush.bf16.msra.mxu0 %v4312
  %4820 = vmatpush.bf16.msra.mxu0 %v4304
  %4821 = vmatpush.bf16.msra.mxu0 %v4296
  %4822 = vmatpush.bf16.msra.mxu0 %v4288
  %4823 = vmatpush.bf16.msra.mxu0 %v4280
  %4824 = vmatpush.bf16.msra.mxu0 %v4272
  %4825 = vmatpush.bf16.msra.mxu0 %v4264
  %4826 = vmatpush.bf16.msra.mxu0 %v4256
  %4827 = vmatmul.bf16.gmra.mxu0 %v3649
  %v4828 = vpop.f32.mrf.mxu0
  %v4829 = vadd.f32 %v4800, %v4828
  %v4830 = vpop.f32.mrf.mxu0
  %v4831 = vadd.f32 %v4802, %v4830
  %4832 = vmatmul.bf16.gmra.mxu0 %v3651
  %v4833 = vpop.f32.mrf.mxu0
  %v4834 = vadd.f32 %v4805, %v4833
  %v4835 = vpop.f32.mrf.mxu0
  %v4836 = vadd.f32 %v4807, %v4835
  %4837 = vmatmul.bf16.gmra.mxu0 %v3653
  %v4838 = vpop.f32.mrf.mxu0
  %v4839 = vadd.f32 %v4810, %v4838
  %v4840 = vpop.f32.mrf.mxu0
  %v4841 = vadd.f32 %v4812, %v4840
  %4842 = vmatmul.bf16.gmra.mxu0 %v3655
  %v4843 = vpop.f32.mrf.mxu0
  %v4844 = vadd.f32 %v4815, %v4843
  %v4845 = vpop.f32.mrf.mxu0
  %v4846 = vadd.f32 %v4817, %v4845
  %4847 = vdwg.mxu0
  %4848 = vmatpush.bf16.msra.mxu0 %v4249
  %4849 = vmatpush.bf16.msra.mxu0 %v4241
  %4850 = vmatpush.bf16.msra.mxu0 %v4233
  %4851 = vmatpush.bf16.msra.mxu0 %v4225
  %4852 = vmatpush.bf16.msra.mxu0 %v4217
  %4853 = vmatpush.bf16.msra.mxu0 %v4209
  %4854 = vmatpush.bf16.msra.mxu0 %v4201
  %4855 = vmatpush.bf16.msra.mxu0 %v4193
  %4856 = vmatmul.bf16.gmra.mxu0 %v3648
  %v4857 = vpop.f32.mrf.mxu0
  %v4858 = vadd.f32 %v3793, %v4857
  %v4859 = vpop.f32.mrf.mxu0
  %v4860 = vadd.f32 %v3793, %v4859
  %4861 = vmatmul.bf16.gmra.mxu0 %v3650
  %v4862 = vpop.f32.mrf.mxu0
  %v4863 = vadd.f32 %v3793, %v4862
  %v4864 = vpop.f32.mrf.mxu0
  %v4865 = vadd.f32 %v3793, %v4864
  %4866 = vmatmul.bf16.gmra.mxu0 %v3652
  %v4867 = vpop.f32.mrf.mxu0
  %v4868 = vadd.f32 %v3793, %v4867
  %v4869 = vpop.f32.mrf.mxu0
  %v4870 = vadd.f32 %v3793, %v4869
  %4871 = vmatmul.bf16.gmra.mxu0 %v3654
  %v4872 = vpop.f32.mrf.mxu0
  %v4873 = vadd.f32 %v3793, %v4872
  %v4874 = vpop.f32.mrf.mxu0
  %v4875 = vadd.f32 %v3793, %v4874
  %4876 = vdwg.mxu0
  %4877 = vmatpush.bf16.msra.mxu0 %v4313
  %4878 = vmatpush.bf16.msra.mxu0 %v4305
  %4879 = vmatpush.bf16.msra.mxu0 %v4297
  %4880 = vmatpush.bf16.msra.mxu0 %v4289
  %4881 = vmatpush.bf16.msra.mxu0 %v4281
  %4882 = vmatpush.bf16.msra.mxu0 %v4273
  %4883 = vmatpush.bf16.msra.mxu0 %v4265
  %4884 = vmatpush.bf16.msra.mxu0 %v4257
  %4885 = vmatmul.bf16.gmra.mxu0 %v3649
  %v4886 = vpop.f32.mrf.mxu0
  %v4887 = vadd.f32 %v4858, %v4886
  %v4888 = vpop.f32.mrf.mxu0
  %v4889 = vadd.f32 %v4860, %v4888
  %4890 = vmatmul.bf16.gmra.mxu0 %v3651
  %v4891 = vpop.f32.mrf.mxu0
  %v4892 = vadd.f32 %v4863, %v4891
  %v4893 = vpop.f32.mrf.mxu0
  %v4894 = vadd.f32 %v4865, %v4893
  %4895 = vmatmul.bf16.gmra.mxu0 %v3653
  %v4896 = vpop.f32.mrf.mxu0
  %v4897 = vadd.f32 %v4868, %v4896
  %v4898 = vpop.f32.mrf.mxu0
  %v4899 = vadd.f32 %v4870, %v4898
  %4900 = vmatmul.bf16.gmra.mxu0 %v3655
  %v4901 = vpop.f32.mrf.mxu0
  %v4902 = vadd.f32 %v4873, %v4901
  %v4903 = vpop.f32.mrf.mxu0
  %v4904 = vadd.f32 %v4875, %v4903
  %4905 = vdwg.mxu0
  %4906 = vst [vmem:[#allocation3] sm:$0xff] %v4481
  %4907 = vst [vmem:[#allocation3 + $0x8] sm:$0xff] %v4539
  %4908 = vst [vmem:[#allocation3 + $0x10] sm:$0xff] %v4597
  %4909 = vst [vmem:[#allocation3 + $0x18] sm:$0xff] %v4655
  %4910 = vst [vmem:[#allocation3 + $0x20] sm:$0xff] %v4713
  %4911 = vst [vmem:[#allocation3 + $0x28] sm:$0xff] %v4771
  %4912 = vst [vmem:[#allocation3 + $0x30] sm:$0xff] %v4829
  %4913 = vst [vmem:[#allocation3 + $0x38] sm:$0xff] %v4887
  %4914 = vst [vmem:[#allocation3 + $0x40] sm:$0xff] %v4483
  %4915 = vst [vmem:[#allocation3 + $0x48] sm:$0xff] %v4541
  %4916 = vst [vmem:[#allocation3 + $0x50] sm:$0xff] %v4599
  %4917 = vst [vmem:[#allocation3 + $0x58] sm:$0xff] %v4657
  %4918 = vst [vmem:[#allocation3 + $0x60] sm:$0xff] %v4715
  %4919 = vst [vmem:[#allocation3 + $0x68] sm:$0xff] %v4773
  %4920 = vst [vmem:[#allocation3 + $0x70] sm:$0xff] %v4831
  %4921 = vst [vmem:[#allocation3 + $0x78] sm:$0xff] %v4889
  %4922 = vst [vmem:[#allocation3 + $0x80] sm:$0xff] %v4486
  %4923 = vst [vmem:[#allocation3 + $0x88] sm:$0xff] %v4544
  %4924 = vst [vmem:[#allocation3 + $0x90] sm:$0xff] %v4602
  %4925 = vst [vmem:[#allocation3 + $0x98] sm:$0xff] %v4660
  %4926 = vst [vmem:[#allocation3 + $0xa0] sm:$0xff] %v4718
  %4927 = vst [vmem:[#allocation3 + $0xa8] sm:$0xff] %v4776
  %4928 = vst [vmem:[#allocation3 + $0xb0] sm:$0xff] %v4834
  %4929 = vst [vmem:[#allocation3 + $0xb8] sm:$0xff] %v4892
  %4930 = vst [vmem:[#allocation3 + $0xc0] sm:$0xff] %v4488
  %4931 = vst [vmem:[#allocation3 + $0xc8] sm:$0xff] %v4546
  %4932 = vst [vmem:[#allocation3 + $0xd0] sm:$0xff] %v4604
  %4933 = vst [vmem:[#allocation3 + $0xd8] sm:$0xff] %v4662
  %4934 = vst [vmem:[#allocation3 + $0xe0] sm:$0xff] %v4720
  %4935 = vst [vmem:[#allocation3 + $0xe8] sm:$0xff] %v4778
  %4936 = vst [vmem:[#allocation3 + $0xf0] sm:$0xff] %v4836
  %4937 = vst [vmem:[#allocation3 + $0xf8] sm:$0xff] %v4894
  %4938 = vst [vmem:[#allocation3 + $0x100] sm:$0xff] %v4491
  %4939 = vst [vmem:[#allocation3 + $0x108] sm:$0xff] %v4549
  %4940 = vst [vmem:[#allocation3 + $0x110] sm:$0xff] %v4607
  %4941 = vst [vmem:[#allocation3 + $0x118] sm:$0xff] %v4665
  %4942 = vst [vmem:[#allocation3 + $0x120] sm:$0xff] %v4723
  %4943 = vst [vmem:[#allocation3 + $0x128] sm:$0xff] %v4781
  %4944 = vst [vmem:[#allocation3 + $0x130] sm:$0xff] %v4839
  %4945 = vst [vmem:[#allocation3 + $0x138] sm:$0xff] %v4897
  %4946 = vst [vmem:[#allocation3 + $0x140] sm:$0xff] %v4493
  %4947 = vst [vmem:[#allocation3 + $0x148] sm:$0xff] %v4551
  %4948 = vst [vmem:[#allocation3 + $0x150] sm:$0xff] %v4609
  %4949 = vst [vmem:[#allocation3 + $0x158] sm:$0xff] %v4667
  %4950 = vst [vmem:[#allocation3 + $0x160] sm:$0xff] %v4725
  %4951 = vst [vmem:[#allocation3 + $0x168] sm:$0xff] %v4783
  %4952 = vst [vmem:[#allocation3 + $0x170] sm:$0xff] %v4841
  %4953 = vst [vmem:[#allocation3 + $0x178] sm:$0xff] %v4899
  %4954 = vst [vmem:[#allocation3 + $0x180] sm:$0xff] %v4496
  %4955 = vst [vmem:[#allocation3 + $0x188] sm:$0xff] %v4554
  %4956 = vst [vmem:[#allocation3 + $0x190] sm:$0xff] %v4612
  %4957 = vst [vmem:[#allocation3 + $0x198] sm:$0xff] %v4670
  %4958 = vst [vmem:[#allocation3 + $0x1a0] sm:$0xff] %v4728
  %4959 = vst [vmem:[#allocation3 + $0x1a8] sm:$0xff] %v4786
  %4960 = vst [vmem:[#allocation3 + $0x1b0] sm:$0xff] %v4844
  %4961 = vst [vmem:[#allocation3 + $0x1b8] sm:$0xff] %v4902
  %4962 = vst [vmem:[#allocation3 + $0x1c0] sm:$0xff] %v4498
  %4963 = vst [vmem:[#allocation3 + $0x1c8] sm:$0xff] %v4556
  %4964 = vst [vmem:[#allocation3 + $0x1d0] sm:$0xff] %v4614
  %4965 = vst [vmem:[#allocation3 + $0x1d8] sm:$0xff] %v4672
  %4966 = vst [vmem:[#allocation3 + $0x1e0] sm:$0xff] %v4730
  %4967 = vst [vmem:[#allocation3 + $0x1e8] sm:$0xff] %v4788
  %4968 = vst [vmem:[#allocation3 + $0x1f0] sm:$0xff] %v4846
  %4969 = vst [vmem:[#allocation3 + $0x1f8] sm:$0xff] %v4904
  %s4970 = scalar_lea.vmem %s2, 1024
  %v4971 = vld [vmem:[%s4970] sm:$0xff]
  %v4972 = vld [vmem:[%s4970 + $0x8] sm:$0xff]
  %v4973 = vld [vmem:[%s4970 + $0x10] sm:$0xff]
  %v4974 = vld [vmem:[%s4970 + $0x18] sm:$0xff]
  %v4975 = vld [vmem:[%s4970 + $0x20] sm:$0xff]
  %v4976 = vld [vmem:[%s4970 + $0x28] sm:$0xff]
  %v4977 = vld [vmem:[%s4970 + $0x30] sm:$0xff]
  %v4978 = vld [vmem:[%s4970 + $0x38] sm:$0xff]
  %v4979 = vld [vmem:[%s4970 + $0x40] sm:$0xff]
  %v4980 = vld [vmem:[%s4970 + $0x48] sm:$0xff]
  %v4981 = vld [vmem:[%s4970 + $0x50] sm:$0xff]
  %v4982 = vld [vmem:[%s4970 + $0x58] sm:$0xff]
  %v4983 = vld [vmem:[%s4970 + $0x60] sm:$0xff]
  %v4984 = vld [vmem:[%s4970 + $0x68] sm:$0xff]
  %v4985 = vld [vmem:[%s4970 + $0x70] sm:$0xff]
  %v4986 = vld [vmem:[%s4970 + $0x78] sm:$0xff]
  %v4987 = vld [vmem:[%s4970 + $0x80] sm:$0xff]
  %v4988 = vld [vmem:[%s4970 + $0x88] sm:$0xff]
  %v4989 = vld [vmem:[%s4970 + $0x90] sm:$0xff]
  %v4990 = vld [vmem:[%s4970 + $0x98] sm:$0xff]
  %v4991 = vld [vmem:[%s4970 + $0xa0] sm:$0xff]
  %v4992 = vld [vmem:[%s4970 + $0xa8] sm:$0xff]
  %v4993 = vld [vmem:[%s4970 + $0xb0] sm:$0xff]
  %v4994 = vld [vmem:[%s4970 + $0xb8] sm:$0xff]
  %v4995 = vld [vmem:[%s4970 + $0xc0] sm:$0xff]
  %v4996 = vld [vmem:[%s4970 + $0xc8] sm:$0xff]
  %v4997 = vld [vmem:[%s4970 + $0xd0] sm:$0xff]
  %v4998 = vld [vmem:[%s4970 + $0xd8] sm:$0xff]
  %v4999 = vld [vmem:[%s4970 + $0xe0] sm:$0xff]
  %v5000 = vld [vmem:[%s4970 + $0xe8] sm:$0xff]
  %v5001 = vld [vmem:[%s4970 + $0xf0] sm:$0xff]
  %v5002 = vld [vmem:[%s4970 + $0xf8] sm:$0xff]
  %v5003 = vld [vmem:[%s4970 + $0x100] sm:$0xff]
  %v5004 = vld [vmem:[%s4970 + $0x108] sm:$0xff]
  %v5005 = vld [vmem:[%s4970 + $0x110] sm:$0xff]
  %v5006 = vld [vmem:[%s4970 + $0x118] sm:$0xff]
  %v5007 = vld [vmem:[%s4970 + $0x120] sm:$0xff]
  %v5008 = vld [vmem:[%s4970 + $0x128] sm:$0xff]
  %v5009 = vld [vmem:[%s4970 + $0x130] sm:$0xff]
  %v5010 = vld [vmem:[%s4970 + $0x138] sm:$0xff]
  %v5011 = vld [vmem:[%s4970 + $0x140] sm:$0xff]
  %v5012 = vld [vmem:[%s4970 + $0x148] sm:$0xff]
  %v5013 = vld [vmem:[%s4970 + $0x150] sm:$0xff]
  %v5014 = vld [vmem:[%s4970 + $0x158] sm:$0xff]
  %v5015 = vld [vmem:[%s4970 + $0x160] sm:$0xff]
  %v5016 = vld [vmem:[%s4970 + $0x168] sm:$0xff]
  %v5017 = vld [vmem:[%s4970 + $0x170] sm:$0xff]
  %v5018 = vld [vmem:[%s4970 + $0x178] sm:$0xff]
  %v5019 = vld [vmem:[%s4970 + $0x180] sm:$0xff]
  %v5020 = vld [vmem:[%s4970 + $0x188] sm:$0xff]
  %v5021 = vld [vmem:[%s4970 + $0x190] sm:$0xff]
  %v5022 = vld [vmem:[%s4970 + $0x198] sm:$0xff]
  %v5023 = vld [vmem:[%s4970 + $0x1a0] sm:$0xff]
  %v5024 = vld [vmem:[%s4970 + $0x1a8] sm:$0xff]
  %v5025 = vld [vmem:[%s4970 + $0x1b0] sm:$0xff]
  %v5026 = vld [vmem:[%s4970 + $0x1b8] sm:$0xff]
  %v5027 = vld [vmem:[%s4970 + $0x1c0] sm:$0xff]
  %v5028 = vld [vmem:[%s4970 + $0x1c8] sm:$0xff]
  %v5029 = vld [vmem:[%s4970 + $0x1d0] sm:$0xff]
  %v5030 = vld [vmem:[%s4970 + $0x1d8] sm:$0xff]
  %v5031 = vld [vmem:[%s4970 + $0x1e0] sm:$0xff]
  %v5032 = vld [vmem:[%s4970 + $0x1e8] sm:$0xff]
  %v5033 = vld [vmem:[%s4970 + $0x1f0] sm:$0xff]
  %v5034 = vld [vmem:[%s4970 + $0x1f8] sm:$0xff]
  %v5035 = vld [vmem:[%s4970 + $0x200] sm:$0xff]
  %v5036 = vld [vmem:[%s4970 + $0x208] sm:$0xff]
  %v5037 = vld [vmem:[%s4970 + $0x210] sm:$0xff]
  %v5038 = vld [vmem:[%s4970 + $0x218] sm:$0xff]
  %v5039 = vld [vmem:[%s4970 + $0x220] sm:$0xff]
  %v5040 = vld [vmem:[%s4970 + $0x228] sm:$0xff]
  %v5041 = vld [vmem:[%s4970 + $0x230] sm:$0xff]
  %v5042 = vld [vmem:[%s4970 + $0x238] sm:$0xff]
  %v5043 = vld [vmem:[%s4970 + $0x240] sm:$0xff]
  %v5044 = vld [vmem:[%s4970 + $0x248] sm:$0xff]
  %v5045 = vld [vmem:[%s4970 + $0x250] sm:$0xff]
  %v5046 = vld [vmem:[%s4970 + $0x258] sm:$0xff]
  %v5047 = vld [vmem:[%s4970 + $0x260] sm:$0xff]
  %v5048 = vld [vmem:[%s4970 + $0x268] sm:$0xff]
  %v5049 = vld [vmem:[%s4970 + $0x270] sm:$0xff]
  %v5050 = vld [vmem:[%s4970 + $0x278] sm:$0xff]
  %v5051 = vld [vmem:[%s4970 + $0x280] sm:$0xff]
  %v5052 = vld [vmem:[%s4970 + $0x288] sm:$0xff]
  %v5053 = vld [vmem:[%s4970 + $0x290] sm:$0xff]
  %v5054 = vld [vmem:[%s4970 + $0x298] sm:$0xff]
  %v5055 = vld [vmem:[%s4970 + $0x2a0] sm:$0xff]
  %v5056 = vld [vmem:[%s4970 + $0x2a8] sm:$0xff]
  %v5057 = vld [vmem:[%s4970 + $0x2b0] sm:$0xff]
  %v5058 = vld [vmem:[%s4970 + $0x2b8] sm:$0xff]
  %v5059 = vld [vmem:[%s4970 + $0x2c0] sm:$0xff]
  %v5060 = vld [vmem:[%s4970 + $0x2c8] sm:$0xff]
  %v5061 = vld [vmem:[%s4970 + $0x2d0] sm:$0xff]
  %v5062 = vld [vmem:[%s4970 + $0x2d8] sm:$0xff]
  %v5063 = vld [vmem:[%s4970 + $0x2e0] sm:$0xff]
  %v5064 = vld [vmem:[%s4970 + $0x2e8] sm:$0xff]
  %v5065 = vld [vmem:[%s4970 + $0x2f0] sm:$0xff]
  %v5066 = vld [vmem:[%s4970 + $0x2f8] sm:$0xff]
  %v5067 = vld [vmem:[%s4970 + $0x300] sm:$0xff]
  %v5068 = vld [vmem:[%s4970 + $0x308] sm:$0xff]
  %v5069 = vld [vmem:[%s4970 + $0x310] sm:$0xff]
  %v5070 = vld [vmem:[%s4970 + $0x318] sm:$0xff]
  %v5071 = vld [vmem:[%s4970 + $0x320] sm:$0xff]
  %v5072 = vld [vmem:[%s4970 + $0x328] sm:$0xff]
  %v5073 = vld [vmem:[%s4970 + $0x330] sm:$0xff]
  %v5074 = vld [vmem:[%s4970 + $0x338] sm:$0xff]
  %v5075 = vld [vmem:[%s4970 + $0x340] sm:$0xff]
  %v5076 = vld [vmem:[%s4970 + $0x348] sm:$0xff]
  %v5077 = vld [vmem:[%s4970 + $0x350] sm:$0xff]
  %v5078 = vld [vmem:[%s4970 + $0x358] sm:$0xff]
  %v5079 = vld [vmem:[%s4970 + $0x360] sm:$0xff]
  %v5080 = vld [vmem:[%s4970 + $0x368] sm:$0xff]
  %v5081 = vld [vmem:[%s4970 + $0x370] sm:$0xff]
  %v5082 = vld [vmem:[%s4970 + $0x378] sm:$0xff]
  %v5083 = vld [vmem:[%s4970 + $0x380] sm:$0xff]
  %v5084 = vld [vmem:[%s4970 + $0x388] sm:$0xff]
  %v5085 = vld [vmem:[%s4970 + $0x390] sm:$0xff]
  %v5086 = vld [vmem:[%s4970 + $0x398] sm:$0xff]
  %v5087 = vld [vmem:[%s4970 + $0x3a0] sm:$0xff]
  %v5088 = vld [vmem:[%s4970 + $0x3a8] sm:$0xff]
  %v5089 = vld [vmem:[%s4970 + $0x3b0] sm:$0xff]
  %v5090 = vld [vmem:[%s4970 + $0x3b8] sm:$0xff]
  %v5091 = vld [vmem:[%s4970 + $0x3c0] sm:$0xff]
  %v5092 = vld [vmem:[%s4970 + $0x3c8] sm:$0xff]
  %v5093 = vld [vmem:[%s4970 + $0x3d0] sm:$0xff]
  %v5094 = vld [vmem:[%s4970 + $0x3d8] sm:$0xff]
  %v5095 = vld [vmem:[%s4970 + $0x3e0] sm:$0xff]
  %v5096 = vld [vmem:[%s4970 + $0x3e8] sm:$0xff]
  %v5097 = vld [vmem:[%s4970 + $0x3f0] sm:$0xff]
  %v5098 = vld [vmem:[%s4970 + $0x3f8] sm:$0xff]
  %v5099 = vld [vmem:[#allocation3] sm:$0xff]
  %v5100 = vld [vmem:[#allocation3 + $0x8] sm:$0xff]
  %v5101 = vld [vmem:[#allocation3 + $0x10] sm:$0xff]
  %v5102 = vld [vmem:[#allocation3 + $0x18] sm:$0xff]
  %v5103 = vld [vmem:[#allocation3 + $0x20] sm:$0xff]
  %v5104 = vld [vmem:[#allocation3 + $0x28] sm:$0xff]
  %v5105 = vld [vmem:[#allocation3 + $0x30] sm:$0xff]
  %v5106 = vld [vmem:[#allocation3 + $0x38] sm:$0xff]
  %v5235 = vunpack.c.l.b16 %v4971
  %v5236 = vunpack.c.h.b16 %v4971
  %v5237 = vunpack.c.l.b16 %v4972
  %v5238 = vunpack.c.h.b16 %v4972
  %v5239 = vunpack.c.l.b16 %v4973
  %v5240 = vunpack.c.h.b16 %v4973
  %v5241 = vunpack.c.l.b16 %v4974
  %v5242 = vunpack.c.h.b16 %v4974
  %v5243 = vunpack.c.l.b16 %v4975
  %v5244 = vunpack.c.h.b16 %v4975
  %v5245 = vunpack.c.l.b16 %v4976
  %v5246 = vunpack.c.h.b16 %v4976
  %v5247 = vunpack.c.l.b16 %v4977
  %v5248 = vunpack.c.h.b16 %v4977
  %v5249 = vunpack.c.l.b16 %v4978
  %v5250 = vunpack.c.h.b16 %v4978
  %v5251 = vunpack.c.l.b16 %v4979
  %v5252 = vunpack.c.h.b16 %v4979
  %v5253 = vunpack.c.l.b16 %v4980
  %v5254 = vunpack.c.h.b16 %v4980
  %v5255 = vunpack.c.l.b16 %v4981
  %v5256 = vunpack.c.h.b16 %v4981
  %v5257 = vunpack.c.l.b16 %v4982
  %v5258 = vunpack.c.h.b16 %v4982
  %v5259 = vunpack.c.l.b16 %v4983
  %v5260 = vunpack.c.h.b16 %v4983
  %v5261 = vunpack.c.l.b16 %v4984
  %v5262 = vunpack.c.h.b16 %v4984
  %v5263 = vunpack.c.l.b16 %v4985
  %v5264 = vunpack.c.h.b16 %v4985
  %v5265 = vunpack.c.l.b16 %v4986
  %v5266 = vunpack.c.h.b16 %v4986
  %v5267 = vunpack.c.l.b16 %v4987
  %v5268 = vunpack.c.h.b16 %v4987
  %v5269 = vunpack.c.l.b16 %v4988
  %v5270 = vunpack.c.h.b16 %v4988
  %v5271 = vunpack.c.l.b16 %v4989
  %v5272 = vunpack.c.h.b16 %v4989
  %v5273 = vunpack.c.l.b16 %v4990
  %v5274 = vunpack.c.h.b16 %v4990
  %v5275 = vunpack.c.l.b16 %v4991
  %v5276 = vunpack.c.h.b16 %v4991
  %v5277 = vunpack.c.l.b16 %v4992
  %v5278 = vunpack.c.h.b16 %v4992
  %v5279 = vunpack.c.l.b16 %v4993
  %v5280 = vunpack.c.h.b16 %v4993
  %v5281 = vunpack.c.l.b16 %v4994
  %v5282 = vunpack.c.h.b16 %v4994
  %v5283 = vunpack.c.l.b16 %v4995
  %v5284 = vunpack.c.h.b16 %v4995
  %v5285 = vunpack.c.l.b16 %v4996
  %v5286 = vunpack.c.h.b16 %v4996
  %v5287 = vunpack.c.l.b16 %v4997
  %v5288 = vunpack.c.h.b16 %v4997
  %v5289 = vunpack.c.l.b16 %v4998
  %v5290 = vunpack.c.h.b16 %v4998
  %v5291 = vunpack.c.l.b16 %v4999
  %v5292 = vunpack.c.h.b16 %v4999
  %v5293 = vunpack.c.l.b16 %v5000
  %v5294 = vunpack.c.h.b16 %v5000
  %v5295 = vunpack.c.l.b16 %v5001
  %v5296 = vunpack.c.h.b16 %v5001
  %v5297 = vunpack.c.l.b16 %v5002
  %v5298 = vunpack.c.h.b16 %v5002
  %v5299 = vunpack.c.l.b16 %v5003
  %v5300 = vunpack.c.h.b16 %v5003
  %v5301 = vunpack.c.l.b16 %v5004
  %v5302 = vunpack.c.h.b16 %v5004
  %v5303 = vunpack.c.l.b16 %v5005
  %v5304 = vunpack.c.h.b16 %v5005
  %v5305 = vunpack.c.l.b16 %v5006
  %v5306 = vunpack.c.h.b16 %v5006
  %v5307 = vunpack.c.l.b16 %v5007
  %v5308 = vunpack.c.h.b16 %v5007
  %v5309 = vunpack.c.l.b16 %v5008
  %v5310 = vunpack.c.h.b16 %v5008
  %v5311 = vunpack.c.l.b16 %v5009
  %v5312 = vunpack.c.h.b16 %v5009
  %v5313 = vunpack.c.l.b16 %v5010
  %v5314 = vunpack.c.h.b16 %v5010
  %v5315 = vunpack.c.l.b16 %v5011
  %v5316 = vunpack.c.h.b16 %v5011
  %v5317 = vunpack.c.l.b16 %v5012
  %v5318 = vunpack.c.h.b16 %v5012
  %v5319 = vunpack.c.l.b16 %v5013
  %v5320 = vunpack.c.h.b16 %v5013
  %v5321 = vunpack.c.l.b16 %v5014
  %v5322 = vunpack.c.h.b16 %v5014
  %v5323 = vunpack.c.l.b16 %v5015
  %v5324 = vunpack.c.h.b16 %v5015
  %v5325 = vunpack.c.l.b16 %v5016
  %v5326 = vunpack.c.h.b16 %v5016
  %v5327 = vunpack.c.l.b16 %v5017
  %v5328 = vunpack.c.h.b16 %v5017
  %v5329 = vunpack.c.l.b16 %v5018
  %v5330 = vunpack.c.h.b16 %v5018
  %v5331 = vunpack.c.l.b16 %v5019
  %v5332 = vunpack.c.h.b16 %v5019
  %v5333 = vunpack.c.l.b16 %v5020
  %v5334 = vunpack.c.h.b16 %v5020
  %v5335 = vunpack.c.l.b16 %v5021
  %v5336 = vunpack.c.h.b16 %v5021
  %v5337 = vunpack.c.l.b16 %v5022
  %v5338 = vunpack.c.h.b16 %v5022
  %v5339 = vunpack.c.l.b16 %v5023
  %v5340 = vunpack.c.h.b16 %v5023
  %v5341 = vunpack.c.l.b16 %v5024
  %v5342 = vunpack.c.h.b16 %v5024
  %v5343 = vunpack.c.l.b16 %v5025
  %v5344 = vunpack.c.h.b16 %v5025
  %v5345 = vunpack.c.l.b16 %v5026
  %v5346 = vunpack.c.h.b16 %v5026
  %v5347 = vunpack.c.l.b16 %v5027
  %v5348 = vunpack.c.h.b16 %v5027
  %v5349 = vunpack.c.l.b16 %v5028
  %v5350 = vunpack.c.h.b16 %v5028
  %v5351 = vunpack.c.l.b16 %v5029
  %v5352 = vunpack.c.h.b16 %v5029
  %v5353 = vunpack.c.l.b16 %v5030
  %v5354 = vunpack.c.h.b16 %v5030
  %v5355 = vunpack.c.l.b16 %v5031
  %v5356 = vunpack.c.h.b16 %v5031
  %v5357 = vunpack.c.l.b16 %v5032
  %v5358 = vunpack.c.h.b16 %v5032
  %v5359 = vunpack.c.l.b16 %v5033
  %v5360 = vunpack.c.h.b16 %v5033
  %v5361 = vunpack.c.l.b16 %v5034
  %v5362 = vunpack.c.h.b16 %v5034
  %v5363 = vunpack.c.l.b16 %v5035
  %v5364 = vunpack.c.h.b16 %v5035
  %v5365 = vunpack.c.l.b16 %v5036
  %v5366 = vunpack.c.h.b16 %v5036
  %v5367 = vunpack.c.l.b16 %v5037
  %v5368 = vunpack.c.h.b16 %v5037
  %v5369 = vunpack.c.l.b16 %v5038
  %v5370 = vunpack.c.h.b16 %v5038
  %v5371 = vunpack.c.l.b16 %v5039
  %v5372 = vunpack.c.h.b16 %v5039
  %v5373 = vunpack.c.l.b16 %v5040
  %v5374 = vunpack.c.h.b16 %v5040
  %v5375 = vunpack.c.l.b16 %v5041
  %v5376 = vunpack.c.h.b16 %v5041
  %v5377 = vunpack.c.l.b16 %v5042
  %v5378 = vunpack.c.h.b16 %v5042
  %v5379 = vunpack.c.l.b16 %v5043
  %v5380 = vunpack.c.h.b16 %v5043
  %v5381 = vunpack.c.l.b16 %v5044
  %v5382 = vunpack.c.h.b16 %v5044
  %v5383 = vunpack.c.l.b16 %v5045
  %v5384 = vunpack.c.h.b16 %v5045
  %v5385 = vunpack.c.l.b16 %v5046
  %v5386 = vunpack.c.h.b16 %v5046
  %v5387 = vunpack.c.l.b16 %v5047
  %v5388 = vunpack.c.h.b16 %v5047
  %v5389 = vunpack.c.l.b16 %v5048
  %v5390 = vunpack.c.h.b16 %v5048
  %v5391 = vunpack.c.l.b16 %v5049
  %v5392 = vunpack.c.h.b16 %v5049
  %v5393 = vunpack.c.l.b16 %v5050
  %v5394 = vunpack.c.h.b16 %v5050
  %v5395 = vunpack.c.l.b16 %v5051
  %v5396 = vunpack.c.h.b16 %v5051
  %v5397 = vunpack.c.l.b16 %v5052
  %v5398 = vunpack.c.h.b16 %v5052
  %v5399 = vunpack.c.l.b16 %v5053
  %v5400 = vunpack.c.h.b16 %v5053
  %v5401 = vunpack.c.l.b16 %v5054
  %v5402 = vunpack.c.h.b16 %v5054
  %v5403 = vunpack.c.l.b16 %v5055
  %v5404 = vunpack.c.h.b16 %v5055
  %v5405 = vunpack.c.l.b16 %v5056
  %v5406 = vunpack.c.h.b16 %v5056
  %v5407 = vunpack.c.l.b16 %v5057
  %v5408 = vunpack.c.h.b16 %v5057
  %v5409 = vunpack.c.l.b16 %v5058
  %v5410 = vunpack.c.h.b16 %v5058
  %v5411 = vunpack.c.l.b16 %v5059
  %v5412 = vunpack.c.h.b16 %v5059
  %v5413 = vunpack.c.l.b16 %v5060
  %v5414 = vunpack.c.h.b16 %v5060
  %v5415 = vunpack.c.l.b16 %v5061
  %v5416 = vunpack.c.h.b16 %v5061
  %v5417 = vunpack.c.l.b16 %v5062
  %v5418 = vunpack.c.h.b16 %v5062
  %v5419 = vunpack.c.l.b16 %v5063
  %v5420 = vunpack.c.h.b16 %v5063
  %v5421 = vunpack.c.l.b16 %v5064
  %v5422 = vunpack.c.h.b16 %v5064
  %v5423 = vunpack.c.l.b16 %v5065
  %v5424 = vunpack.c.h.b16 %v5065
  %v5425 = vunpack.c.l.b16 %v5066
  %v5426 = vunpack.c.h.b16 %v5066
  %v5427 = vunpack.c.l.b16 %v5067
  %v5428 = vunpack.c.h.b16 %v5067
  %v5429 = vunpack.c.l.b16 %v5068
  %v5430 = vunpack.c.h.b16 %v5068
  %v5431 = vunpack.c.l.b16 %v5069
  %v5432 = vunpack.c.h.b16 %v5069
  %v5433 = vunpack.c.l.b16 %v5070
  %v5434 = vunpack.c.h.b16 %v5070
  %v5435 = vunpack.c.l.b16 %v5071
  %v5436 = vunpack.c.h.b16 %v5071
  %v5437 = vunpack.c.l.b16 %v5072
  %v5438 = vunpack.c.h.b16 %v5072
  %v5439 = vunpack.c.l.b16 %v5073
  %v5440 = vunpack.c.h.b16 %v5073
  %v5441 = vunpack.c.l.b16 %v5074
  %v5442 = vunpack.c.h.b16 %v5074
  %v5443 = vunpack.c.l.b16 %v5075
  %v5444 = vunpack.c.h.b16 %v5075
  %v5445 = vunpack.c.l.b16 %v5076
  %v5446 = vunpack.c.h.b16 %v5076
  %v5447 = vunpack.c.l.b16 %v5077
  %v5448 = vunpack.c.h.b16 %v5077
  %v5449 = vunpack.c.l.b16 %v5078
  %v5450 = vunpack.c.h.b16 %v5078
  %v5451 = vunpack.c.l.b16 %v5079
  %v5452 = vunpack.c.h.b16 %v5079
  %v5453 = vunpack.c.l.b16 %v5080
  %v5454 = vunpack.c.h.b16 %v5080
  %v5455 = vunpack.c.l.b16 %v5081
  %v5456 = vunpack.c.h.b16 %v5081
  %v5457 = vunpack.c.l.b16 %v5082
  %v5458 = vunpack.c.h.b16 %v5082
  %v5459 = vunpack.c.l.b16 %v5083
  %v5460 = vunpack.c.h.b16 %v5083
  %v5461 = vunpack.c.l.b16 %v5084
  %v5462 = vunpack.c.h.b16 %v5084
  %v5463 = vunpack.c.l.b16 %v5085
  %v5464 = vunpack.c.h.b16 %v5085
  %v5465 = vunpack.c.l.b16 %v5086
  %v5466 = vunpack.c.h.b16 %v5086
  %v5467 = vunpack.c.l.b16 %v5087
  %v5468 = vunpack.c.h.b16 %v5087
  %v5469 = vunpack.c.l.b16 %v5088
  %v5470 = vunpack.c.h.b16 %v5088
  %v5471 = vunpack.c.l.b16 %v5089
  %v5472 = vunpack.c.h.b16 %v5089
  %v5473 = vunpack.c.l.b16 %v5090
  %v5474 = vunpack.c.h.b16 %v5090
  %v5475 = vunpack.c.l.b16 %v5091
  %v5476 = vunpack.c.h.b16 %v5091
  %v5477 = vunpack.c.l.b16 %v5092
  %v5478 = vunpack.c.h.b16 %v5092
  %v5479 = vunpack.c.l.b16 %v5093
  %v5480 = vunpack.c.h.b16 %v5093
  %v5481 = vunpack.c.l.b16 %v5094
  %v5482 = vunpack.c.h.b16 %v5094
  %v5483 = vunpack.c.l.b16 %v5095
  %v5484 = vunpack.c.h.b16 %v5095
  %v5485 = vunpack.c.l.b16 %v5096
  %v5486 = vunpack.c.h.b16 %v5096
  %v5487 = vunpack.c.l.b16 %v5097
  %v5488 = vunpack.c.h.b16 %v5097
  %v5489 = vunpack.c.l.b16 %v5098
  %v5490 = vunpack.c.h.b16 %v5098
  %v5491 = vpack.c.b16 %v5243, %v5235
  %v5492 = vpack.c.b16 %v5244, %v5236
  %v5493 = vpack.c.b16 %v5245, %v5237
  %v5494 = vpack.c.b16 %v5246, %v5238
  %v5495 = vpack.c.b16 %v5247, %v5239
  %v5496 = vpack.c.b16 %v5248, %v5240
  %v5497 = vpack.c.b16 %v5249, %v5241
  %v5498 = vpack.c.b16 %v5250, %v5242
  %v5499 = vpack.c.b16 %v5259, %v5251
  %v5500 = vpack.c.b16 %v5260, %v5252
  %v5501 = vpack.c.b16 %v5261, %v5253
  %v5502 = vpack.c.b16 %v5262, %v5254
  %v5503 = vpack.c.b16 %v5263, %v5255
  %v5504 = vpack.c.b16 %v5264, %v5256
  %v5505 = vpack.c.b16 %v5265, %v5257
  %v5506 = vpack.c.b16 %v5266, %v5258
  %v5507 = vpack.c.b16 %v5275, %v5267
  %v5508 = vpack.c.b16 %v5276, %v5268
  %v5509 = vpack.c.b16 %v5277, %v5269
  %v5510 = vpack.c.b16 %v5278, %v5270
  %v5511 = vpack.c.b16 %v5279, %v5271
  %v5512 = vpack.c.b16 %v5280, %v5272
  %v5513 = vpack.c.b16 %v5281, %v5273
  %v5514 = vpack.c.b16 %v5282, %v5274
  %v5515 = vpack.c.b16 %v5291, %v5283
  %v5516 = vpack.c.b16 %v5292, %v5284
  %v5517 = vpack.c.b16 %v5293, %v5285
  %v5518 = vpack.c.b16 %v5294, %v5286
  %v5519 = vpack.c.b16 %v5295, %v5287
  %v5520 = vpack.c.b16 %v5296, %v5288
  %v5521 = vpack.c.b16 %v5297, %v5289
  %v5522 = vpack.c.b16 %v5298, %v5290
  %v5523 = vpack.c.b16 %v5307, %v5299
  %v5524 = vpack.c.b16 %v5308, %v5300
  %v5525 = vpack.c.b16 %v5309, %v5301
  %v5526 = vpack.c.b16 %v5310, %v5302
  %v5527 = vpack.c.b16 %v5311, %v5303
  %v5528 = vpack.c.b16 %v5312, %v5304
  %v5529 = vpack.c.b16 %v5313, %v5305
  %v5530 = vpack.c.b16 %v5314, %v5306
  %v5531 = vpack.c.b16 %v5323, %v5315
  %v5532 = vpack.c.b16 %v5324, %v5316
  %v5533 = vpack.c.b16 %v5325, %v5317
  %v5534 = vpack.c.b16 %v5326, %v5318
  %v5535 = vpack.c.b16 %v5327, %v5319
  %v5536 = vpack.c.b16 %v5328, %v5320
  %v5537 = vpack.c.b16 %v5329, %v5321
  %v5538 = vpack.c.b16 %v5330, %v5322
  %v5539 = vpack.c.b16 %v5339, %v5331
  %v5540 = vpack.c.b16 %v5340, %v5332
  %v5541 = vpack.c.b16 %v5341, %v5333
  %v5542 = vpack.c.b16 %v5342, %v5334
  %v5543 = vpack.c.b16 %v5343, %v5335
  %v5544 = vpack.c.b16 %v5344, %v5336
  %v5545 = vpack.c.b16 %v5345, %v5337
  %v5546 = vpack.c.b16 %v5346, %v5338
  %v5547 = vpack.c.b16 %v5355, %v5347
  %v5548 = vpack.c.b16 %v5356, %v5348
  %v5549 = vpack.c.b16 %v5357, %v5349
  %v5550 = vpack.c.b16 %v5358, %v5350
  %v5551 = vpack.c.b16 %v5359, %v5351
  %v5552 = vpack.c.b16 %v5360, %v5352
  %v5553 = vpack.c.b16 %v5361, %v5353
  %v5554 = vpack.c.b16 %v5362, %v5354
  %v5555 = vpack.c.b16 %v5371, %v5363
  %v5556 = vpack.c.b16 %v5372, %v5364
  %v5557 = vpack.c.b16 %v5373, %v5365
  %v5558 = vpack.c.b16 %v5374, %v5366
  %v5559 = vpack.c.b16 %v5375, %v5367
  %v5560 = vpack.c.b16 %v5376, %v5368
  %v5561 = vpack.c.b16 %v5377, %v5369
  %v5562 = vpack.c.b16 %v5378, %v5370
  %v5563 = vpack.c.b16 %v5387, %v5379
  %v5564 = vpack.c.b16 %v5388, %v5380
  %v5565 = vpack.c.b16 %v5389, %v5381
  %v5566 = vpack.c.b16 %v5390, %v5382
  %v5567 = vpack.c.b16 %v5391, %v5383
  %v5568 = vpack.c.b16 %v5392, %v5384
  %v5569 = vpack.c.b16 %v5393, %v5385
  %v5570 = vpack.c.b16 %v5394, %v5386
  %v5571 = vpack.c.b16 %v5403, %v5395
  %v5572 = vpack.c.b16 %v5404, %v5396
  %v5573 = vpack.c.b16 %v5405, %v5397
  %v5574 = vpack.c.b16 %v5406, %v5398
  %v5575 = vpack.c.b16 %v5407, %v5399
  %v5576 = vpack.c.b16 %v5408, %v5400
  %v5577 = vpack.c.b16 %v5409, %v5401
  %v5578 = vpack.c.b16 %v5410, %v5402
  %v5579 = vpack.c.b16 %v5419, %v5411
  %v5580 = vpack.c.b16 %v5420, %v5412
  %v5581 = vpack.c.b16 %v5421, %v5413
  %v5582 = vpack.c.b16 %v5422, %v5414
  %v5583 = vpack.c.b16 %v5423, %v5415
  %v5584 = vpack.c.b16 %v5424, %v5416
  %v5585 = vpack.c.b16 %v5425, %v5417
  %v5586 = vpack.c.b16 %v5426, %v5418
  %v5587 = vpack.c.b16 %v5435, %v5427
  %v5588 = vpack.c.b16 %v5436, %v5428
  %v5589 = vpack.c.b16 %v5437, %v5429
  %v5590 = vpack.c.b16 %v5438, %v5430
  %v5591 = vpack.c.b16 %v5439, %v5431
  %v5592 = vpack.c.b16 %v5440, %v5432
  %v5593 = vpack.c.b16 %v5441, %v5433
  %v5594 = vpack.c.b16 %v5442, %v5434
  %v5595 = vpack.c.b16 %v5451, %v5443
  %v5596 = vpack.c.b16 %v5452, %v5444
  %v5597 = vpack.c.b16 %v5453, %v5445
  %v5598 = vpack.c.b16 %v5454, %v5446
  %v5599 = vpack.c.b16 %v5455, %v5447
  %v5600 = vpack.c.b16 %v5456, %v5448
  %v5601 = vpack.c.b16 %v5457, %v5449
  %v5602 = vpack.c.b16 %v5458, %v5450
  %v5603 = vpack.c.b16 %v5467, %v5459
  %v5604 = vpack.c.b16 %v5468, %v5460
  %v5605 = vpack.c.b16 %v5469, %v5461
  %v5606 = vpack.c.b16 %v5470, %v5462
  %v5607 = vpack.c.b16 %v5471, %v5463
  %v5608 = vpack.c.b16 %v5472, %v5464
  %v5609 = vpack.c.b16 %v5473, %v5465
  %v5610 = vpack.c.b16 %v5474, %v5466
  %v5611 = vpack.c.b16 %v5483, %v5475
  %v5612 = vpack.c.b16 %v5484, %v5476
  %v5613 = vpack.c.b16 %v5485, %v5477
  %v5614 = vpack.c.b16 %v5486, %v5478
  %v5615 = vpack.c.b16 %v5487, %v5479
  %v5616 = vpack.c.b16 %v5488, %v5480
  %v5617 = vpack.c.b16 %v5489, %v5481
  %v5618 = vpack.c.b16 %v5490, %v5482
  %5747 = vmatpush.bf16.msra.mxu0 %v5547
  %5748 = vmatpush.bf16.msra.mxu0 %v5539
  %5749 = vmatpush.bf16.msra.mxu0 %v5531
  %5750 = vmatpush.bf16.msra.mxu0 %v5523
  %5751 = vmatpush.bf16.msra.mxu0 %v5515
  %5752 = vmatpush.bf16.msra.mxu0 %v5507
  %5753 = vmatpush.bf16.msra.mxu0 %v5499
  %5754 = vmatpush.bf16.msra.mxu0 %v5491
  %5755 = vmatmul.bf16.gmra.mxu0 0
  %v5756 = vpop.f32.mrf.mxu0
  %v5757 = vadd.f32 0.0, %v5756
  %v5758 = vpop.f32.mrf.mxu0
  %5759 = vdwg.mxu0
  %5760 = vmatpush.bf16.msra.mxu0 %v5611
  %5761 = vmatpush.bf16.msra.mxu0 %v5603
  %5762 = vmatpush.bf16.msra.mxu0 %v5595
  %5763 = vmatpush.bf16.msra.mxu0 %v5587
  %5764 = vmatpush.bf16.msra.mxu0 %v5579
  %5765 = vmatpush.bf16.msra.mxu0 %v5571
  %5766 = vmatpush.bf16.msra.mxu0 %v5563
  %5767 = vmatpush.bf16.msra.mxu0 %v5555
  %5768 = vmatmul.bf16.gmra.mxu0 0
  %v5769 = vpop.f32.mrf.mxu0
  %v5770 = vadd.f32 %v5757, %v5769
  %v5771 = vpop.f32.mrf.mxu0
  %5772 = vdwg.mxu0
  %5773 = vmatpush.bf16.msra.mxu0 %v5548
  %5774 = vmatpush.bf16.msra.mxu0 %v5540
  %5775 = vmatpush.bf16.msra.mxu0 %v5532
  %5776 = vmatpush.bf16.msra.mxu0 %v5524
  %5777 = vmatpush.bf16.msra.mxu0 %v5516
  %5778 = vmatpush.bf16.msra.mxu0 %v5508
  %5779 = vmatpush.bf16.msra.mxu0 %v5500
  %5780 = vmatpush.bf16.msra.mxu0 %v5492
  %5781 = vmatmul.bf16.gmra.mxu0 0
  %v5782 = vpop.f32.mrf.mxu0
  %v5783 = vadd.f32 0.0, %v5782
  %v5784 = vpop.f32.mrf.mxu0
  %5785 = vdwg.mxu0
  %5786 = vmatpush.bf16.msra.mxu0 %v5612
  %5787 = vmatpush.bf16.msra.mxu0 %v5604
  %5788 = vmatpush.bf16.msra.mxu0 %v5596
  %5789 = vmatpush.bf16.msra.mxu0 %v5588
  %5790 = vmatpush.bf16.msra.mxu0 %v5580
  %5791 = vmatpush.bf16.msra.mxu0 %v5572
  %5792 = vmatpush.bf16.msra.mxu0 %v5564
  %5793 = vmatpush.bf16.msra.mxu0 %v5556
  %5794 = vmatmul.bf16.gmra.mxu0 0
  %v5795 = vpop.f32.mrf.mxu0
  %v5796 = vadd.f32 %v5783, %v5795
  %v5797 = vpop.f32.mrf.mxu0
  %5798 = vdwg.mxu0
  %5799 = vmatpush.bf16.msra.mxu0 %v5549
  %5800 = vmatpush.bf16.msra.mxu0 %v5541
  %5801 = vmatpush.bf16.msra.mxu0 %v5533
  %5802 = vmatpush.bf16.msra.mxu0 %v5525
  %5803 = vmatpush.bf16.msra.mxu0 %v5517
  %5804 = vmatpush.bf16.msra.mxu0 %v5509
  %5805 = vmatpush.bf16.msra.mxu0 %v5501
  %5806 = vmatpush.bf16.msra.mxu0 %v5493
  %5807 = vmatmul.bf16.gmra.mxu0 0
  %v5808 = vpop.f32.mrf.mxu0
  %v5809 = vadd.f32 0.0, %v5808
  %v5810 = vpop.f32.mrf.mxu0
  %5811 = vdwg.mxu0
  %5812 = vmatpush.bf16.msra.mxu0 %v5613
  %5813 = vmatpush.bf16.msra.mxu0 %v5605
  %5814 = vmatpush.bf16.msra.mxu0 %v5597
  %5815 = vmatpush.bf16.msra.mxu0 %v5589
  %5816 = vmatpush.bf16.msra.mxu0 %v5581
  %5817 = vmatpush.bf16.msra.mxu0 %v5573
  %5818 = vmatpush.bf16.msra.mxu0 %v5565
  %5819 = vmatpush.bf16.msra.mxu0 %v5557
  %5820 = vmatmul.bf16.gmra.mxu0 0
  %v5821 = vpop.f32.mrf.mxu0
  %v5822 = vadd.f32 %v5809, %v5821
  %v5823 = vpop.f32.mrf.mxu0
  %5824 = vdwg.mxu0
  %5825 = vmatpush.bf16.msra.mxu0 %v5550
  %5826 = vmatpush.bf16.msra.mxu0 %v5542
  %5827 = vmatpush.bf16.msra.mxu0 %v5534
  %5828 = vmatpush.bf16.msra.mxu0 %v5526
  %5829 = vmatpush.bf16.msra.mxu0 %v5518
  %5830 = vmatpush.bf16.msra.mxu0 %v5510
  %5831 = vmatpush.bf16.msra.mxu0 %v5502
  %5832 = vmatpush.bf16.msra.mxu0 %v5494
  %5833 = vmatmul.bf16.gmra.mxu0 0
  %v5834 = vpop.f32.mrf.mxu0
  %v5835 = vadd.f32 0.0, %v5834
  %v5836 = vpop.f32.mrf.mxu0
  %5837 = vdwg.mxu0
  %5838 = vmatpush.bf16.msra.mxu0 %v5614
  %5839 = vmatpush.bf16.msra.mxu0 %v5606
  %5840 = vmatpush.bf16.msra.mxu0 %v5598
  %5841 = vmatpush.bf16.msra.mxu0 %v5590
  %5842 = vmatpush.bf16.msra.mxu0 %v5582
  %5843 = vmatpush.bf16.msra.mxu0 %v5574
  %5844 = vmatpush.bf16.msra.mxu0 %v5566
  %5845 = vmatpush.bf16.msra.mxu0 %v5558
  %5846 = vmatmul.bf16.gmra.mxu0 0
  %v5847 = vpop.f32.mrf.mxu0
  %v5848 = vadd.f32 %v5835, %v5847
  %v5849 = vpop.f32.mrf.mxu0
  %5850 = vdwg.mxu0
  %5851 = vmatpush.bf16.msra.mxu0 %v5551
  %5852 = vmatpush.bf16.msra.mxu0 %v5543
  %5853 = vmatpush.bf16.msra.mxu0 %v5535
  %5854 = vmatpush.bf16.msra.mxu0 %v5527
  %5855 = vmatpush.bf16.msra.mxu0 %v5519
  %5856 = vmatpush.bf16.msra.mxu0 %v5511
  %5857 = vmatpush.bf16.msra.mxu0 %v5503
  %5858 = vmatpush.bf16.msra.mxu0 %v5495
  %5859 = vmatmul.bf16.gmra.mxu0 0
  %v5860 = vpop.f32.mrf.mxu0
  %v5861 = vadd.f32 0.0, %v5860
  %v5862 = vpop.f32.mrf.mxu0
  %5863 = vdwg.mxu0
  %5864 = vmatpush.bf16.msra.mxu0 %v5615
  %5865 = vmatpush.bf16.msra.mxu0 %v5607
  %5866 = vmatpush.bf16.msra.mxu0 %v5599
  %5867 = vmatpush.bf16.msra.mxu0 %v5591
  %5868 = vmatpush.bf16.msra.mxu0 %v5583
  %5869 = vmatpush.bf16.msra.mxu0 %v5575
  %5870 = vmatpush.bf16.msra.mxu0 %v5567
  %5871 = vmatpush.bf16.msra.mxu0 %v5559
  %5872 = vmatmul.bf16.gmra.mxu0 0
  %v5873 = vpop.f32.mrf.mxu0
  %v5874 = vadd.f32 %v5861, %v5873
  %v5875 = vpop.f32.mrf.mxu0
  %5876 = vdwg.mxu0
  %5877 = vmatpush.bf16.msra.mxu0 %v5552
  %5878 = vmatpush.bf16.msra.mxu0 %v5544
  %5879 = vmatpush.bf16.msra.mxu0 %v5536
  %5880 = vmatpush.bf16.msra.mxu0 %v5528
  %5881 = vmatpush.bf16.msra.mxu0 %v5520
  %5882 = vmatpush.bf16.msra.mxu0 %v5512
  %5883 = vmatpush.bf16.msra.mxu0 %v5504
  %5884 = vmatpush.bf16.msra.mxu0 %v5496
  %5885 = vmatmul.bf16.gmra.mxu0 0
  %v5886 = vpop.f32.mrf.mxu0
  %v5887 = vadd.f32 0.0, %v5886
  %v5888 = vpop.f32.mrf.mxu0
  %5889 = vdwg.mxu0
  %5890 = vmatpush.bf16.msra.mxu0 %v5616
  %5891 = vmatpush.bf16.msra.mxu0 %v5608
  %5892 = vmatpush.bf16.msra.mxu0 %v5600
  %5893 = vmatpush.bf16.msra.mxu0 %v5592
  %5894 = vmatpush.bf16.msra.mxu0 %v5584
  %5895 = vmatpush.bf16.msra.mxu0 %v5576
  %5896 = vmatpush.bf16.msra.mxu0 %v5568
  %5897 = vmatpush.bf16.msra.mxu0 %v5560
  %5898 = vmatmul.bf16.gmra.mxu0 0
  %v5899 = vpop.f32.mrf.mxu0
  %v5900 = vadd.f32 %v5887, %v5899
  %v5901 = vpop.f32.mrf.mxu0
  %5902 = vdwg.mxu0
  %5903 = vmatpush.bf16.msra.mxu0 %v5553
  %5904 = vmatpush.bf16.msra.mxu0 %v5545
  %5905 = vmatpush.bf16.msra.mxu0 %v5537
  %5906 = vmatpush.bf16.msra.mxu0 %v5529
  %5907 = vmatpush.bf16.msra.mxu0 %v5521
  %5908 = vmatpush.bf16.msra.mxu0 %v5513
  %5909 = vmatpush.bf16.msra.mxu0 %v5505
  %5910 = vmatpush.bf16.msra.mxu0 %v5497
  %5911 = vmatmul.bf16.gmra.mxu0 0
  %v5912 = vpop.f32.mrf.mxu0
  %v5913 = vadd.f32 0.0, %v5912
  %v5914 = vpop.f32.mrf.mxu0
  %5915 = vdwg.mxu0
  %5916 = vmatpush.bf16.msra.mxu0 %v5617
  %5917 = vmatpush.bf16.msra.mxu0 %v5609
  %5918 = vmatpush.bf16.msra.mxu0 %v5601
  %5919 = vmatpush.bf16.msra.mxu0 %v5593
  %5920 = vmatpush.bf16.msra.mxu0 %v5585
  %5921 = vmatpush.bf16.msra.mxu0 %v5577
  %5922 = vmatpush.bf16.msra.mxu0 %v5569
  %5923 = vmatpush.bf16.msra.mxu0 %v5561
  %5924 = vmatmul.bf16.gmra.mxu0 0
  %v5925 = vpop.f32.mrf.mxu0
  %v5926 = vadd.f32 %v5913, %v5925
  %v5927 = vpop.f32.mrf.mxu0
  %5928 = vdwg.mxu0
  %5929 = vmatpush.bf16.msra.mxu0 %v5554
  %5930 = vmatpush.bf16.msra.mxu0 %v5546
  %5931 = vmatpush.bf16.msra.mxu0 %v5538
  %5932 = vmatpush.bf16.msra.mxu0 %v5530
  %5933 = vmatpush.bf16.msra.mxu0 %v5522
  %5934 = vmatpush.bf16.msra.mxu0 %v5514
  %5935 = vmatpush.bf16.msra.mxu0 %v5506
  %5936 = vmatpush.bf16.msra.mxu0 %v5498
  %5937 = vmatmul.bf16.gmra.mxu0 0
  %v5938 = vpop.f32.mrf.mxu0
  %v5939 = vadd.f32 0.0, %v5938
  %v5940 = vpop.f32.mrf.mxu0
  %5941 = vdwg.mxu0
  %5942 = vmatpush.bf16.msra.mxu0 %v5618
  %5943 = vmatpush.bf16.msra.mxu0 %v5610
  %5944 = vmatpush.bf16.msra.mxu0 %v5602
  %5945 = vmatpush.bf16.msra.mxu0 %v5594
  %5946 = vmatpush.bf16.msra.mxu0 %v5586
  %5947 = vmatpush.bf16.msra.mxu0 %v5578
  %5948 = vmatpush.bf16.msra.mxu0 %v5570
  %5949 = vmatpush.bf16.msra.mxu0 %v5562
  %5950 = vmatmul.bf16.gmra.mxu0 0
  %v5951 = vpop.f32.mrf.mxu0
  %v5952 = vadd.f32 %v5939, %v5951
  %v5953 = vpop.f32.mrf.mxu0
  %5954 = vdwg.mxu0
  %v5955 = vadd.f32 %v5099, %v5770
  %v5956 = vadd.f32 %v5100, %v5796
  %v5957 = vadd.f32 %v5101, %v5822
  %v5958 = vadd.f32 %v5102, %v5848
  %v5959 = vadd.f32 %v5103, %v5874
  %v5960 = vadd.f32 %v5104, %v5900
  %v5961 = vadd.f32 %v5105, %v5926
  %v5962 = vadd.f32 %v5106, %v5952
  %v5963 = vxor.u32 %v5955, 2147483648
  %v5964 = vxor.u32 %v5956, 2147483648
  %v5965 = vmul.f32 %v5963, 1.442695
  %v5966 = vpow.pop %v5965
  %v5967 = vmul.f32 %v5964, 1.442695
  %v5968 = vpow.pop %v5967
  %v5969 = vadd.f32 %v5966, 1.0
  %v5970 = vadd.f32 %v5968, 1.0
  %v5971 = vrcp.pop %v5969
  %v5972 = vmul.f32 %v5969, %v5971
  %v5973 = vsub.f32 1.0, %v5972
  %v5974 = vmul.f32 %v5971, %v5973
  %v5975 = vadd.f32 %v5971, %v5974
  %vm5976 = vweird.f32 %v5969
  %vm5977 = vweird.f32 %v5971
  %vm5978 = vmor %vm5976, %vm5977
  %v5979 = vsel %vm5978, %v5971, %v5975
  %v5980 = vand.u32 2147483647, %v5969
  %vm5981 = vcmp.eq.f32.partialorder %v5980, 8.507059e+37
  %v5982 = vand.u32 %v5969, 2147483648
  %v5983 = vor.u32 1.1754944e-38, %v5982
  %v5984 = vsel %vm5981, %v5983, %v5979
  %v5985 = vmul.f32 1.0, %v5984
  %v5986 = vrcp.pop %v5970
  %v5987 = vmul.f32 %v5970, %v5986
  %v5988 = vsub.f32 1.0, %v5987
  %v5989 = vmul.f32 %v5986, %v5988
  %v5990 = vadd.f32 %v5986, %v5989
  %vm5991 = vweird.f32 %v5970
  %vm5992 = vweird.f32 %v5986
  %vm5993 = vmor %vm5991, %vm5992
  %v5994 = vsel %vm5993, %v5986, %v5990
  %v5995 = vand.u32 2147483647, %v5970
  %vm5996 = vcmp.eq.f32.partialorder %v5995, 8.507059e+37
  %v5997 = vand.u32 %v5970, 2147483648
  %v5998 = vor.u32 1.1754944e-38, %v5997
  %v5999 = vsel %vm5996, %v5998, %v5994
  %v6000 = vmul.f32 1.0, %v5999
  %v6001 = vxor.u32 %v5957, 2147483648
  %v6002 = vxor.u32 %v5958, 2147483648
  %v6003 = vmul.f32 %v6001, 1.442695
  %v6004 = vpow.pop %v6003
  %v6005 = vmul.f32 %v6002, 1.442695
  %v6006 = vpow.pop %v6005
  %v6007 = vadd.f32 %v6004, 1.0
  %v6008 = vadd.f32 %v6006, 1.0
  %v6009 = vrcp.pop %v6007
  %v6010 = vmul.f32 %v6007, %v6009
  %v6011 = vsub.f32 1.0, %v6010
  %v6012 = vmul.f32 %v6009, %v6011
  %v6013 = vadd.f32 %v6009, %v6012
  %vm6014 = vweird.f32 %v6007
  %vm6015 = vweird.f32 %v6009
  %vm6016 = vmor %vm6014, %vm6015
  %v6017 = vsel %vm6016, %v6009, %v6013
  %v6018 = vand.u32 2147483647, %v6007
  %vm6019 = vcmp.eq.f32.partialorder %v6018, 8.507059e+37
  %v6020 = vand.u32 %v6007, 2147483648
  %v6021 = vor.u32 1.1754944e-38, %v6020
  %v6022 = vsel %vm6019, %v6021, %v6017
  %v6023 = vmul.f32 1.0, %v6022
  %v6024 = vrcp.pop %v6008
  %v6025 = vmul.f32 %v6008, %v6024
  %v6026 = vsub.f32 1.0, %v6025
  %v6027 = vmul.f32 %v6024, %v6026
  %v6028 = vadd.f32 %v6024, %v6027
  %vm6029 = vweird.f32 %v6008
  %vm6030 = vweird.f32 %v6024
  %vm6031 = vmor %vm6029, %vm6030
  %v6032 = vsel %vm6031, %v6024, %v6028
  %v6033 = vand.u32 2147483647, %v6008
  %vm6034 = vcmp.eq.f32.partialorder %v6033, 8.507059e+37
  %v6035 = vand.u32 %v6008, 2147483648
  %v6036 = vor.u32 1.1754944e-38, %v6035
  %v6037 = vsel %vm6034, %v6036, %v6032
  %v6038 = vmul.f32 1.0, %v6037
  %v6039 = vtanh.pop %v5959
  %v6040 = vtanh.pop %v5960
  %v6041 = vxor.u32 %v5961, 2147483648
  %v6042 = vxor.u32 %v5962, 2147483648
  %v6043 = vmul.f32 %v6041, 1.442695
  %v6044 = vpow.pop %v6043
  %v6045 = vmul.f32 %v6042, 1.442695
  %v6046 = vpow.pop %v6045
  %v6047 = vadd.f32 %v6044, 1.0
  %v6048 = vadd.f32 %v6046, 1.0
  %v6049 = vrcp.pop %v6047
  %v6050 = vmul.f32 %v6047, %v6049
  %v6051 = vsub.f32 1.0, %v6050
  %v6052 = vmul.f32 %v6049, %v6051
  %v6053 = vadd.f32 %v6049, %v6052
  %vm6054 = vweird.f32 %v6047
  %vm6055 = vweird.f32 %v6049
  %vm6056 = vmor %vm6054, %vm6055
  %v6057 = vsel %vm6056, %v6049, %v6053
  %v6058 = vand.u32 2147483647, %v6047
  %vm6059 = vcmp.eq.f32.partialorder %v6058, 8.507059e+37
  %v6060 = vand.u32 %v6047, 2147483648
  %v6061 = vor.u32 1.1754944e-38, %v6060
  %v6062 = vsel %vm6059, %v6061, %v6057
  %v6063 = vmul.f32 1.0, %v6062
  %v6064 = vrcp.pop %v6048
  %v6065 = vmul.f32 %v6048, %v6064
  %v6066 = vsub.f32 1.0, %v6065
  %v6067 = vmul.f32 %v6064, %v6066
  %v6068 = vadd.f32 %v6064, %v6067
  %vm6069 = vweird.f32 %v6048
  %vm6070 = vweird.f32 %v6064
  %vm6071 = vmor %vm6069, %vm6070
  %v6072 = vsel %vm6071, %v6064, %v6068
  %v6073 = vand.u32 2147483647, %v6048
  %vm6074 = vcmp.eq.f32.partialorder %v6073, 8.507059e+37
  %v6075 = vand.u32 %v6048, 2147483648
  %v6076 = vor.u32 1.1754944e-38, %v6075
  %v6077 = vsel %vm6074, %v6076, %v6072
  %v6078 = vmul.f32 1.0, %v6077
  %v6079 = vmul.f32 %v6023, 0.0
  %v6080 = vmul.f32 %v6038, 0.0
  %v6081 = vmul.f32 %v5985, %v6039
  %v6082 = vmul.f32 %v6000, %v6040
  %v6083 = vadd.f32 %v6079, %v6081
  %v6084 = vadd.f32 %v6080, %v6082
  %v6085 = vtanh.pop %v6083
  %v6086 = vtanh.pop %v6084
  %v6087 = vmul.f32 %v6063, %v6085
  %v6088 = vmul.f32 %v6078, %v6086
  %s6089 = scalar_lea.vmem [#allocation3], 64
  %v6090 = vld [vmem:[%s6089] sm:$0xff]
  %v6091 = vld [vmem:[%s6089 + $0x8] sm:$0xff]
  %v6092 = vld [vmem:[%s6089 + $0x10] sm:$0xff]
  %v6093 = vld [vmem:[%s6089 + $0x18] sm:$0xff]
  %v6094 = vld [vmem:[%s6089 + $0x20] sm:$0xff]
  %v6095 = vld [vmem:[%s6089 + $0x28] sm:$0xff]
  %v6096 = vld [vmem:[%s6089 + $0x30] sm:$0xff]
  %v6097 = vld [vmem:[%s6089 + $0x38] sm:$0xff]
  %v6098 = vpack.c.bf16 %v6087, %v6087
  %v6099 = vpack.c.bf16 %v6088, %v6088
  %6100 = vmatpush.bf16.msra.mxu0 %v5547
  %6101 = vmatpush.bf16.msra.mxu0 %v5539
  %6102 = vmatpush.bf16.msra.mxu0 %v5531
  %6103 = vmatpush.bf16.msra.mxu0 %v5523
  %6104 = vmatpush.bf16.msra.mxu0 %v5515
  %6105 = vmatpush.bf16.msra.mxu0 %v5507
  %6106 = vmatpush.bf16.msra.mxu0 %v5499
  %6107 = vmatpush.bf16.msra.mxu0 %v5491
  %6108 = vmatmul.bf16.gmra.mxu0 %v6098
  %v6109 = vpop.f32.mrf.mxu0
  %v6110 = vadd.f32 0.0, %v6109
  %v6111 = vpop.f32.mrf.mxu0
  %6112 = vdwg.mxu0
  %6113 = vmatpush.bf16.msra.mxu0 %v5611
  %6114 = vmatpush.bf16.msra.mxu0 %v5603
  %6115 = vmatpush.bf16.msra.mxu0 %v5595
  %6116 = vmatpush.bf16.msra.mxu0 %v5587
  %6117 = vmatpush.bf16.msra.mxu0 %v5579
  %6118 = vmatpush.bf16.msra.mxu0 %v5571
  %6119 = vmatpush.bf16.msra.mxu0 %v5563
  %6120 = vmatpush.bf16.msra.mxu0 %v5555
  %6121 = vmatmul.bf16.gmra.mxu0 %v6099
  %v6122 = vpop.f32.mrf.mxu0
  %v6123 = vadd.f32 %v6110, %v6122
  %v6124 = vpop.f32.mrf.mxu0
  %6125 = vdwg.mxu0
  %6126 = vmatpush.bf16.msra.mxu0 %v5548
  %6127 = vmatpush.bf16.msra.mxu0 %v5540
  %6128 = vmatpush.bf16.msra.mxu0 %v5532
  %6129 = vmatpush.bf16.msra.mxu0 %v5524
  %6130 = vmatpush.bf16.msra.mxu0 %v5516
  %6131 = vmatpush.bf16.msra.mxu0 %v5508
  %6132 = vmatpush.bf16.msra.mxu0 %v5500
  %6133 = vmatpush.bf16.msra.mxu0 %v5492
  %6134 = vmatmul.bf16.gmra.mxu0 %v6098
  %v6135 = vpop.f32.mrf.mxu0
  %v6136 = vadd.f32 0.0, %v6135
  %v6137 = vpop.f32.mrf.mxu0
  %6138 = vdwg.mxu0
  %6139 = vmatpush.bf16.msra.mxu0 %v5612
  %6140 = vmatpush.bf16.msra.mxu0 %v5604
  %6141 = vmatpush.bf16.msra.mxu0 %v5596
  %6142 = vmatpush.bf16.msra.mxu0 %v5588
  %6143 = vmatpush.bf16.msra.mxu0 %v5580
  %6144 = vmatpush.bf16.msra.mxu0 %v5572
  %6145 = vmatpush.bf16.msra.mxu0 %v5564
  %6146 = vmatpush.bf16.msra.mxu0 %v5556
  %6147 = vmatmul.bf16.gmra.mxu0 %v6099
  %v6148 = vpop.f32.mrf.mxu0
  %v6149 = vadd.f32 %v6136, %v6148
  %v6150 = vpop.f32.mrf.mxu0
  %6151 = vdwg.mxu0
  %6152 = vmatpush.bf16.msra.mxu0 %v5549
  %6153 = vmatpush.bf16.msra.mxu0 %v5541
  %6154 = vmatpush.bf16.msra.mxu0 %v5533
  %6155 = vmatpush.bf16.msra.mxu0 %v5525
  %6156 = vmatpush.bf16.msra.mxu0 %v5517
  %6157 = vmatpush.bf16.msra.mxu0 %v5509
  %6158 = vmatpush.bf16.msra.mxu0 %v5501
  %6159 = vmatpush.bf16.msra.mxu0 %v5493
  %6160 = vmatmul.bf16.gmra.mxu0 %v6098
  %v6161 = vpop.f32.mrf.mxu0
  %v6162 = vadd.f32 0.0, %v6161
  %v6163 = vpop.f32.mrf.mxu0
  %6164 = vdwg.mxu0
  %6165 = vmatpush.bf16.msra.mxu0 %v5613
  %6166 = vmatpush.bf16.msra.mxu0 %v5605
  %6167 = vmatpush.bf16.msra.mxu0 %v5597
  %6168 = vmatpush.bf16.msra.mxu0 %v5589
  %6169 = vmatpush.bf16.msra.mxu0 %v5581
  %6170 = vmatpush.bf16.msra.mxu0 %v5573
  %6171 = vmatpush.bf16.msra.mxu0 %v5565
  %6172 = vmatpush.bf16.msra.mxu0 %v5557
  %6173 = vmatmul.bf16.gmra.mxu0 %v6099
  %v6174 = vpop.f32.mrf.mxu0
  %v6175 = vadd.f32 %v6162, %v6174
  %v6176 = vpop.f32.mrf.mxu0
  %6177 = vdwg.mxu0
  %6178 = vmatpush.bf16.msra.mxu0 %v5550
  %6179 = vmatpush.bf16.msra.mxu0 %v5542
  %6180 = vmatpush.bf16.msra.mxu0 %v5534
  %6181 = vmatpush.bf16.msra.mxu0 %v5526
  %6182 = vmatpush.bf16.msra.mxu0 %v5518
  %6183 = vmatpush.bf16.msra.mxu0 %v5510
  %6184 = vmatpush.bf16.msra.mxu0 %v5502
  %6185 = vmatpush.bf16.msra.mxu0 %v5494
  %6186 = vmatmul.bf16.gmra.mxu0 %v6098
  %v6187 = vpop.f32.mrf.mxu0
  %v6188 = vadd.f32 0.0, %v6187
  %v6189 = vpop.f32.mrf.mxu0
  %6190 = vdwg.mxu0
  %6191 = vmatpush.bf16.msra.mxu0 %v5614
  %6192 = vmatpush.bf16.msra.mxu0 %v5606
  %6193 = vmatpush.bf16.msra.mxu0 %v5598
  %6194 = vmatpush.bf16.msra.mxu0 %v5590
  %6195 = vmatpush.bf16.msra.mxu0 %v5582
  %6196 = vmatpush.bf16.msra.mxu0 %v5574
  %6197 = vmatpush.bf16.msra.mxu0 %v5566
  %6198 = vmatpush.bf16.msra.mxu0 %v5558
  %6199 = vmatmul.bf16.gmra.mxu0 %v6099
  %v6200 = vpop.f32.mrf.mxu0
  %v6201 = vadd.f32 %v6188, %v6200
  %v6202 = vpop.f32.mrf.mxu0
  %6203 = vdwg.mxu0
  %6204 = vmatpush.bf16.msra.mxu0 %v5551
  %6205 = vmatpush.bf16.msra.mxu0 %v5543
  %6206 = vmatpush.bf16.msra.mxu0 %v5535
  %6207 = vmatpush.bf16.msra.mxu0 %v5527
  %6208 = vmatpush.bf16.msra.mxu0 %v5519
  %6209 = vmatpush.bf16.msra.mxu0 %v5511
  %6210 = vmatpush.bf16.msra.mxu0 %v5503
  %6211 = vmatpush.bf16.msra.mxu0 %v5495
  %6212 = vmatmul.bf16.gmra.mxu0 %v6098
  %v6213 = vpop.f32.mrf.mxu0
  %v6214 = vadd.f32 0.0, %v6213
  %v6215 = vpop.f32.mrf.mxu0
  %6216 = vdwg.mxu0
  %6217 = vmatpush.bf16.msra.mxu0 %v5615
  %6218 = vmatpush.bf16.msra.mxu0 %v5607
  %6219 = vmatpush.bf16.msra.mxu0 %v5599
  %6220 = vmatpush.bf16.msra.mxu0 %v5591
  %6221 = vmatpush.bf16.msra.mxu0 %v5583
  %6222 = vmatpush.bf16.msra.mxu0 %v5575
  %6223 = vmatpush.bf16.msra.mxu0 %v5567
  %6224 = vmatpush.bf16.msra.mxu0 %v5559
  %6225 = vmatmul.bf16.gmra.mxu0 %v6099
  %v6226 = vpop.f32.mrf.mxu0
  %v6227 = vadd.f32 %v6214, %v6226
  %v6228 = vpop.f32.mrf.mxu0
  %6229 = vdwg.mxu0
  %6230 = vmatpush.bf16.msra.mxu0 %v5552
  %6231 = vmatpush.bf16.msra.mxu0 %v5544
  %6232 = vmatpush.bf16.msra.mxu0 %v5536
  %6233 = vmatpush.bf16.msra.mxu0 %v5528
  %6234 = vmatpush.bf16.msra.mxu0 %v5520
  %6235 = vmatpush.bf16.msra.mxu0 %v5512
  %6236 = vmatpush.bf16.msra.mxu0 %v5504
  %6237 = vmatpush.bf16.msra.mxu0 %v5496
  %6238 = vmatmul.bf16.gmra.mxu0 %v6098
  %v6239 = vpop.f32.mrf.mxu0
  %v6240 = vadd.f32 0.0, %v6239
  %v6241 = vpop.f32.mrf.mxu0
  %6242 = vdwg.mxu0
  %6243 = vmatpush.bf16.msra.mxu0 %v5616
  %6244 = vmatpush.bf16.msra.mxu0 %v5608
  %6245 = vmatpush.bf16.msra.mxu0 %v5600
  %6246 = vmatpush.bf16.msra.mxu0 %v5592
  %6247 = vmatpush.bf16.msra.mxu0 %v5584
  %6248 = vmatpush.bf16.msra.mxu0 %v5576
  %6249 = vmatpush.bf16.msra.mxu0 %v5568
  %6250 = vmatpush.bf16.msra.mxu0 %v5560
  %6251 = vmatmul.bf16.gmra.mxu0 %v6099
  %v6252 = vpop.f32.mrf.mxu0
  %v6253 = vadd.f32 %v6240, %v6252
  %v6254 = vpop.f32.mrf.mxu0
  %6255 = vdwg.mxu0
  %6256 = vmatpush.bf16.msra.mxu0 %v5553
  %6257 = vmatpush.bf16.msra.mxu0 %v5545
  %6258 = vmatpush.bf16.msra.mxu0 %v5537
  %6259 = vmatpush.bf16.msra.mxu0 %v5529
  %6260 = vmatpush.bf16.msra.mxu0 %v5521
  %6261 = vmatpush.bf16.msra.mxu0 %v5513
  %6262 = vmatpush.bf16.msra.mxu0 %v5505
  %6263 = vmatpush.bf16.msra.mxu0 %v5497
  %6264 = vmatmul.bf16.gmra.mxu0 %v6098
  %v6265 = vpop.f32.mrf.mxu0
  %v6266 = vadd.f32 0.0, %v6265
  %v6267 = vpop.f32.mrf.mxu0
  %6268 = vdwg.mxu0
  %6269 = vmatpush.bf16.msra.mxu0 %v5617
  %6270 = vmatpush.bf16.msra.mxu0 %v5609
  %6271 = vmatpush.bf16.msra.mxu0 %v5601
  %6272 = vmatpush.bf16.msra.mxu0 %v5593
  %6273 = vmatpush.bf16.msra.mxu0 %v5585
  %6274 = vmatpush.bf16.msra.mxu0 %v5577
  %6275 = vmatpush.bf16.msra.mxu0 %v5569
  %6276 = vmatpush.bf16.msra.mxu0 %v5561
  %6277 = vmatmul.bf16.gmra.mxu0 %v6099
  %v6278 = vpop.f32.mrf.mxu0
  %v6279 = vadd.f32 %v6266, %v6278
  %v6280 = vpop.f32.mrf.mxu0
  %6281 = vdwg.mxu0
  %6282 = vmatpush.bf16.msra.mxu0 %v5554
  %6283 = vmatpush.bf16.msra.mxu0 %v5546
  %6284 = vmatpush.bf16.msra.mxu0 %v5538
  %6285 = vmatpush.bf16.msra.mxu0 %v5530
  %6286 = vmatpush.bf16.msra.mxu0 %v5522
  %6287 = vmatpush.bf16.msra.mxu0 %v5514
  %6288 = vmatpush.bf16.msra.mxu0 %v5506
  %6289 = vmatpush.bf16.msra.mxu0 %v5498
  %6290 = vmatmul.bf16.gmra.mxu0 %v6098
  %v6291 = vpop.f32.mrf.mxu0
  %v6292 = vadd.f32 0.0, %v6291
  %v6293 = vpop.f32.mrf.mxu0
  %6294 = vdwg.mxu0
  %6295 = vmatpush.bf16.msra.mxu0 %v5618
  %6296 = vmatpush.bf16.msra.mxu0 %v5610
  %6297 = vmatpush.bf16.msra.mxu0 %v5602
  %6298 = vmatpush.bf16.msra.mxu0 %v5594
  %6299 = vmatpush.bf16.msra.mxu0 %v5586
  %6300 = vmatpush.bf16.msra.mxu0 %v5578
  %6301 = vmatpush.bf16.msra.mxu0 %v5570
  %6302 = vmatpush.bf16.msra.mxu0 %v5562
  %6303 = vmatmul.bf16.gmra.mxu0 %v6099
  %v6304 = vpop.f32.mrf.mxu0
  %v6305 = vadd.f32 %v6292, %v6304
  %v6306 = vpop.f32.mrf.mxu0
  %6307 = vdwg.mxu0
  %v6308 = vadd.f32 %v6090, %v6123
  %v6309 = vadd.f32 %v6091, %v6149
  %v6310 = vadd.f32 %v6092, %v6175
  %v6311 = vadd.f32 %v6093, %v6201
  %v6312 = vadd.f32 %v6094, %v6227
  %v6313 = vadd.f32 %v6095, %v6253
  %v6314 = vadd.f32 %v6096, %v6279
  %v6315 = vadd.f32 %v6097, %v6305
  %v6316 = vxor.u32 %v6308, 2147483648
  %v6317 = vxor.u32 %v6309, 2147483648
  %v6318 = vmul.f32 %v6316, 1.442695
  %v6319 = vpow.pop %v6318
  %v6320 = vmul.f32 %v6317, 1.442695
  %v6321 = vpow.pop %v6320
  %v6322 = vadd.f32 %v6319, 1.0
  %v6323 = vadd.f32 %v6321, 1.0
  %v6324 = vrcp.pop %v6322
  %v6325 = vmul.f32 %v6322, %v6324
  %v6326 = vsub.f32 1.0, %v6325
  %v6327 = vmul.f32 %v6324, %v6326
  %v6328 = vadd.f32 %v6324, %v6327
  %vm6329 = vweird.f32 %v6322
  %vm6330 = vweird.f32 %v6324
  %vm6331 = vmor %vm6329, %vm6330
  %v6332 = vsel %vm6331, %v6324, %v6328
  %v6333 = vand.u32 2147483647, %v6322
  %vm6334 = vcmp.eq.f32.partialorder %v6333, 8.507059e+37
  %v6335 = vand.u32 %v6322, 2147483648
  %v6336 = vor.u32 1.1754944e-38, %v6335
  %v6337 = vsel %vm6334, %v6336, %v6332
  %v6338 = vmul.f32 1.0, %v6337
  %v6339 = vrcp.pop %v6323
  %v6340 = vmul.f32 %v6323, %v6339
  %v6341 = vsub.f32 1.0, %v6340
  %v6342 = vmul.f32 %v6339, %v6341
  %v6343 = vadd.f32 %v6339, %v6342
  %vm6344 = vweird.f32 %v6323
  %vm6345 = vweird.f32 %v6339
  %vm6346 = vmor %vm6344, %vm6345
  %v6347 = vsel %vm6346, %v6339, %v6343
  %v6348 = vand.u32 2147483647, %v6323
  %vm6349 = vcmp.eq.f32.partialorder %v6348, 8.507059e+37
  %v6350 = vand.u32 %v6323, 2147483648
  %v6351 = vor.u32 1.1754944e-38, %v6350
  %v6352 = vsel %vm6349, %v6351, %v6347
  %v6353 = vmul.f32 1.0, %v6352
  %v6354 = vxor.u32 %v6310, 2147483648
  %v6355 = vxor.u32 %v6311, 2147483648
  %v6356 = vmul.f32 %v6354, 1.442695
  %v6357 = vpow.pop %v6356
  %v6358 = vmul.f32 %v6355, 1.442695
  %v6359 = vpow.pop %v6358
  %v6360 = vadd.f32 %v6357, 1.0
  %v6361 = vadd.f32 %v6359, 1.0
  %v6362 = vrcp.pop %v6360
  %v6363 = vmul.f32 %v6360, %v6362
  %v6364 = vsub.f32 1.0, %v6363
  %v6365 = vmul.f32 %v6362, %v6364
  %v6366 = vadd.f32 %v6362, %v6365
  %vm6367 = vweird.f32 %v6360
  %vm6368 = vweird.f32 %v6362
  %vm6369 = vmor %vm6367, %vm6368
  %v6370 = vsel %vm6369, %v6362, %v6366
  %v6371 = vand.u32 2147483647, %v6360
  %vm6372 = vcmp.eq.f32.partialorder %v6371, 8.507059e+37
  %v6373 = vand.u32 %v6360, 2147483648
  %v6374 = vor.u32 1.1754944e-38, %v6373
  %v6375 = vsel %vm6372, %v6374, %v6370
  %v6376 = vmul.f32 1.0, %v6375
  %v6377 = vrcp.pop %v6361
  %v6378 = vmul.f32 %v6361, %v6377
  %v6379 = vsub.f32 1.0, %v6378
  %v6380 = vmul.f32 %v6377, %v6379
  %v6381 = vadd.f32 %v6377, %v6380
  %vm6382 = vweird.f32 %v6361
  %vm6383 = vweird.f32 %v6377
  %vm6384 = vmor %vm6382, %vm6383
  %v6385 = vsel %vm6384, %v6377, %v6381
  %v6386 = vand.u32 2147483647, %v6361
  %vm6387 = vcmp.eq.f32.partialorder %v6386, 8.507059e+37
  %v6388 = vand.u32 %v6361, 2147483648
  %v6389 = vor.u32 1.1754944e-38, %v6388
  %v6390 = vsel %vm6387, %v6389, %v6385
  %v6391 = vmul.f32 1.0, %v6390
  %v6392 = vtanh.pop %v6312
  %v6393 = vtanh.pop %v6313
  %v6394 = vxor.u32 %v6314, 2147483648
  %v6395 = vxor.u32 %v6315, 2147483648
  %v6396 = vmul.f32 %v6394, 1.442695
  %v6397 = vpow.pop %v6396
  %v6398 = vmul.f32 %v6395, 1.442695
  %v6399 = vpow.pop %v6398
  %v6400 = vadd.f32 %v6397, 1.0
  %v6401 = vadd.f32 %v6399, 1.0
  %v6402 = vrcp.pop %v6400
  %v6403 = vmul.f32 %v6400, %v6402
  %v6404 = vsub.f32 1.0, %v6403
  %v6405 = vmul.f32 %v6402, %v6404
  %v6406 = vadd.f32 %v6402, %v6405
  %vm6407 = vweird.f32 %v6400
  %vm6408 = vweird.f32 %v6402
  %vm6409 = vmor %vm6407, %vm6408
  %v6410 = vsel %vm6409, %v6402, %v6406
  %v6411 = vand.u32 2147483647, %v6400
  %vm6412 = vcmp.eq.f32.partialorder %v6411, 8.507059e+37
  %v6413 = vand.u32 %v6400, 2147483648
  %v6414 = vor.u32 1.1754944e-38, %v6413
  %v6415 = vsel %vm6412, %v6414, %v6410
  %v6416 = vmul.f32 1.0, %v6415
  %v6417 = vrcp.pop %v6401
  %v6418 = vmul.f32 %v6401, %v6417
  %v6419 = vsub.f32 1.0, %v6418
  %v6420 = vmul.f32 %v6417, %v6419
  %v6421 = vadd.f32 %v6417, %v6420
  %vm6422 = vweird.f32 %v6401
  %vm6423 = vweird.f32 %v6417
  %vm6424 = vmor %vm6422, %vm6423
  %v6425 = vsel %vm6424, %v6417, %v6421
  %v6426 = vand.u32 2147483647, %v6401
  %vm6427 = vcmp.eq.f32.partialorder %v6426, 8.507059e+37
  %v6428 = vand.u32 %v6401, 2147483648
  %v6429 = vor.u32 1.1754944e-38, %v6428
  %v6430 = vsel %vm6427, %v6429, %v6425
  %v6431 = vmul.f32 1.0, %v6430
  %v6432 = vmul.f32 %v6376, %v6083
  %v6433 = vmul.f32 %v6391, %v6084
  %v6434 = vmul.f32 %v6338, %v6392
  %v6435 = vmul.f32 %v6353, %v6393
  %v6436 = vadd.f32 %v6432, %v6434
  %v6437 = vadd.f32 %v6433, %v6435
  %v6438 = vtanh.pop %v6436
  %v6439 = vtanh.pop %v6437
  %v6440 = vmul.f32 %v6416, %v6438
  %v6441 = vmul.f32 %v6431, %v6439
  %s6442 = scalar_lea.vmem [#allocation3], 128
  %v6443 = vld [vmem:[%s6442] sm:$0xff]
  %v6444 = vld [vmem:[%s6442 + $0x8] sm:$0xff]
  %v6445 = vld [vmem:[%s6442 + $0x10] sm:$0xff]
  %v6446 = vld [vmem:[%s6442 + $0x18] sm:$0xff]
  %v6447 = vld [vmem:[%s6442 + $0x20] sm:$0xff]
  %v6448 = vld [vmem:[%s6442 + $0x28] sm:$0xff]
  %v6449 = vld [vmem:[%s6442 + $0x30] sm:$0xff]
  %v6450 = vld [vmem:[%s6442 + $0x38] sm:$0xff]
  %v6451 = vpack.c.bf16 %v6440, %v6440
  %v6452 = vpack.c.bf16 %v6441, %v6441
  %6453 = vmatpush.bf16.msra.mxu0 %v5547
  %6454 = vmatpush.bf16.msra.mxu0 %v5539
  %6455 = vmatpush.bf16.msra.mxu0 %v5531
  %6456 = vmatpush.bf16.msra.mxu0 %v5523
  %6457 = vmatpush.bf16.msra.mxu0 %v5515
  %6458 = vmatpush.bf16.msra.mxu0 %v5507
  %6459 = vmatpush.bf16.msra.mxu0 %v5499
  %6460 = vmatpush.bf16.msra.mxu0 %v5491
  %6461 = vmatmul.bf16.gmra.mxu0 %v6451
  %v6462 = vpop.f32.mrf.mxu0
  %v6463 = vadd.f32 0.0, %v6462
  %v6464 = vpop.f32.mrf.mxu0
  %6465 = vdwg.mxu0
  %6466 = vmatpush.bf16.msra.mxu0 %v5611
  %6467 = vmatpush.bf16.msra.mxu0 %v5603
  %6468 = vmatpush.bf16.msra.mxu0 %v5595
  %6469 = vmatpush.bf16.msra.mxu0 %v5587
  %6470 = vmatpush.bf16.msra.mxu0 %v5579
  %6471 = vmatpush.bf16.msra.mxu0 %v5571
  %6472 = vmatpush.bf16.msra.mxu0 %v5563
  %6473 = vmatpush.bf16.msra.mxu0 %v5555
  %6474 = vmatmul.bf16.gmra.mxu0 %v6452
  %v6475 = vpop.f32.mrf.mxu0
  %v6476 = vadd.f32 %v6463, %v6475
  %v6477 = vpop.f32.mrf.mxu0
  %6478 = vdwg.mxu0
  %6479 = vmatpush.bf16.msra.mxu0 %v5548
  %6480 = vmatpush.bf16.msra.mxu0 %v5540
  %6481 = vmatpush.bf16.msra.mxu0 %v5532
  %6482 = vmatpush.bf16.msra.mxu0 %v5524
  %6483 = vmatpush.bf16.msra.mxu0 %v5516
  %6484 = vmatpush.bf16.msra.mxu0 %v5508
  %6485 = vmatpush.bf16.msra.mxu0 %v5500
  %6486 = vmatpush.bf16.msra.mxu0 %v5492
  %6487 = vmatmul.bf16.gmra.mxu0 %v6451
  %v6488 = vpop.f32.mrf.mxu0
  %v6489 = vadd.f32 0.0, %v6488
  %v6490 = vpop.f32.mrf.mxu0
  %6491 = vdwg.mxu0
  %6492 = vmatpush.bf16.msra.mxu0 %v5612
  %6493 = vmatpush.bf16.msra.mxu0 %v5604
  %6494 = vmatpush.bf16.msra.mxu0 %v5596
  %6495 = vmatpush.bf16.msra.mxu0 %v5588
  %6496 = vmatpush.bf16.msra.mxu0 %v5580
  %6497 = vmatpush.bf16.msra.mxu0 %v5572
  %6498 = vmatpush.bf16.msra.mxu0 %v5564
  %6499 = vmatpush.bf16.msra.mxu0 %v5556
  %6500 = vmatmul.bf16.gmra.mxu0 %v6452
  %v6501 = vpop.f32.mrf.mxu0
  %v6502 = vadd.f32 %v6489, %v6501
  %v6503 = vpop.f32.mrf.mxu0
  %6504 = vdwg.mxu0
  %6505 = vmatpush.bf16.msra.mxu0 %v5549
  %6506 = vmatpush.bf16.msra.mxu0 %v5541
  %6507 = vmatpush.bf16.msra.mxu0 %v5533
  %6508 = vmatpush.bf16.msra.mxu0 %v5525
  %6509 = vmatpush.bf16.msra.mxu0 %v5517
  %6510 = vmatpush.bf16.msra.mxu0 %v5509
  %6511 = vmatpush.bf16.msra.mxu0 %v5501
  %6512 = vmatpush.bf16.msra.mxu0 %v5493
  %6513 = vmatmul.bf16.gmra.mxu0 %v6451
  %v6514 = vpop.f32.mrf.mxu0
  %v6515 = vadd.f32 0.0, %v6514
  %v6516 = vpop.f32.mrf.mxu0
  %6517 = vdwg.mxu0
  %6518 = vmatpush.bf16.msra.mxu0 %v5613
  %6519 = vmatpush.bf16.msra.mxu0 %v5605
  %6520 = vmatpush.bf16.msra.mxu0 %v5597
  %6521 = vmatpush.bf16.msra.mxu0 %v5589
  %6522 = vmatpush.bf16.msra.mxu0 %v5581
  %6523 = vmatpush.bf16.msra.mxu0 %v5573
  %6524 = vmatpush.bf16.msra.mxu0 %v5565
  %6525 = vmatpush.bf16.msra.mxu0 %v5557
  %6526 = vmatmul.bf16.gmra.mxu0 %v6452
  %v6527 = vpop.f32.mrf.mxu0
  %v6528 = vadd.f32 %v6515, %v6527
  %v6529 = vpop.f32.mrf.mxu0
  %6530 = vdwg.mxu0
  %6531 = vmatpush.bf16.msra.mxu0 %v5550
  %6532 = vmatpush.bf16.msra.mxu0 %v5542
  %6533 = vmatpush.bf16.msra.mxu0 %v5534
  %6534 = vmatpush.bf16.msra.mxu0 %v5526
  %6535 = vmatpush.bf16.msra.mxu0 %v5518
  %6536 = vmatpush.bf16.msra.mxu0 %v5510
  %6537 = vmatpush.bf16.msra.mxu0 %v5502
  %6538 = vmatpush.bf16.msra.mxu0 %v5494
  %6539 = vmatmul.bf16.gmra.mxu0 %v6451
  %v6540 = vpop.f32.mrf.mxu0
  %v6541 = vadd.f32 0.0, %v6540
  %v6542 = vpop.f32.mrf.mxu0
  %6543 = vdwg.mxu0
  %6544 = vmatpush.bf16.msra.mxu0 %v5614
  %6545 = vmatpush.bf16.msra.mxu0 %v5606
  %6546 = vmatpush.bf16.msra.mxu0 %v5598
  %6547 = vmatpush.bf16.msra.mxu0 %v5590
  %6548 = vmatpush.bf16.msra.mxu0 %v5582
  %6549 = vmatpush.bf16.msra.mxu0 %v5574
  %6550 = vmatpush.bf16.msra.mxu0 %v5566
  %6551 = vmatpush.bf16.msra.mxu0 %v5558
  %6552 = vmatmul.bf16.gmra.mxu0 %v6452
  %v6553 = vpop.f32.mrf.mxu0
  %v6554 = vadd.f32 %v6541, %v6553
  %v6555 = vpop.f32.mrf.mxu0
  %6556 = vdwg.mxu0
  %6557 = vmatpush.bf16.msra.mxu0 %v5551
  %6558 = vmatpush.bf16.msra.mxu0 %v5543
  %6559 = vmatpush.bf16.msra.mxu0 %v5535
  %6560 = vmatpush.bf16.msra.mxu0 %v5527
  %6561 = vmatpush.bf16.msra.mxu0 %v5519
  %6562 = vmatpush.bf16.msra.mxu0 %v5511
  %6563 = vmatpush.bf16.msra.mxu0 %v5503
  %6564 = vmatpush.bf16.msra.mxu0 %v5495
  %6565 = vmatmul.bf16.gmra.mxu0 %v6451
  %v6566 = vpop.f32.mrf.mxu0
  %v6567 = vadd.f32 0.0, %v6566
  %v6568 = vpop.f32.mrf.mxu0
  %6569 = vdwg.mxu0
  %6570 = vmatpush.bf16.msra.mxu0 %v5615
  %6571 = vmatpush.bf16.msra.mxu0 %v5607
  %6572 = vmatpush.bf16.msra.mxu0 %v5599
  %6573 = vmatpush.bf16.msra.mxu0 %v5591
  %6574 = vmatpush.bf16.msra.mxu0 %v5583
  %6575 = vmatpush.bf16.msra.mxu0 %v5575
  %6576 = vmatpush.bf16.msra.mxu0 %v5567
  %6577 = vmatpush.bf16.msra.mxu0 %v5559
  %6578 = vmatmul.bf16.gmra.mxu0 %v6452
  %v6579 = vpop.f32.mrf.mxu0
  %v6580 = vadd.f32 %v6567, %v6579
  %v6581 = vpop.f32.mrf.mxu0
  %6582 = vdwg.mxu0
  %6583 = vmatpush.bf16.msra.mxu0 %v5552
  %6584 = vmatpush.bf16.msra.mxu0 %v5544
  %6585 = vmatpush.bf16.msra.mxu0 %v5536
  %6586 = vmatpush.bf16.msra.mxu0 %v5528
  %6587 = vmatpush.bf16.msra.mxu0 %v5520
  %6588 = vmatpush.bf16.msra.mxu0 %v5512
  %6589 = vmatpush.bf16.msra.mxu0 %v5504
  %6590 = vmatpush.bf16.msra.mxu0 %v5496
  %6591 = vmatmul.bf16.gmra.mxu0 %v6451
  %v6592 = vpop.f32.mrf.mxu0
  %v6593 = vadd.f32 0.0, %v6592
  %v6594 = vpop.f32.mrf.mxu0
  %6595 = vdwg.mxu0
  %6596 = vmatpush.bf16.msra.mxu0 %v5616
  %6597 = vmatpush.bf16.msra.mxu0 %v5608
  %6598 = vmatpush.bf16.msra.mxu0 %v5600
  %6599 = vmatpush.bf16.msra.mxu0 %v5592
  %6600 = vmatpush.bf16.msra.mxu0 %v5584
  %6601 = vmatpush.bf16.msra.mxu0 %v5576
  %6602 = vmatpush.bf16.msra.mxu0 %v5568
  %6603 = vmatpush.bf16.msra.mxu0 %v5560
  %6604 = vmatmul.bf16.gmra.mxu0 %v6452
  %v6605 = vpop.f32.mrf.mxu0
  %v6606 = vadd.f32 %v6593, %v6605
  %v6607 = vpop.f32.mrf.mxu0
  %6608 = vdwg.mxu0
  %6609 = vmatpush.bf16.msra.mxu0 %v5553
  %6610 = vmatpush.bf16.msra.mxu0 %v5545
  %6611 = vmatpush.bf16.msra.mxu0 %v5537
  %6612 = vmatpush.bf16.msra.mxu0 %v5529
  %6613 = vmatpush.bf16.msra.mxu0 %v5521
  %6614 = vmatpush.bf16.msra.mxu0 %v5513
  %6615 = vmatpush.bf16.msra.mxu0 %v5505
  %6616 = vmatpush.bf16.msra.mxu0 %v5497
  %6617 = vmatmul.bf16.gmra.mxu0 %v6451
  %v6618 = vpop.f32.mrf.mxu0
  %v6619 = vadd.f32 0.0, %v6618
  %v6620 = vpop.f32.mrf.mxu0
  %6621 = vdwg.mxu0
  %6622 = vmatpush.bf16.msra.mxu0 %v5617
  %6623 = vmatpush.bf16.msra.mxu0 %v5609
  %6624 = vmatpush.bf16.msra.mxu0 %v5601
  %6625 = vmatpush.bf16.msra.mxu0 %v5593
  %6626 = vmatpush.bf16.msra.mxu0 %v5585
  %6627 = vmatpush.bf16.msra.mxu0 %v5577
  %6628 = vmatpush.bf16.msra.mxu0 %v5569
  %6629 = vmatpush.bf16.msra.mxu0 %v5561
  %6630 = vmatmul.bf16.gmra.mxu0 %v6452
  %v6631 = vpop.f32.mrf.mxu0
  %v6632 = vadd.f32 %v6619, %v6631
  %v6633 = vpop.f32.mrf.mxu0
  %6634 = vdwg.mxu0
  %6635 = vmatpush.bf16.msra.mxu0 %v5554
  %6636 = vmatpush.bf16.msra.mxu0 %v5546
  %6637 = vmatpush.bf16.msra.mxu0 %v5538
  %6638 = vmatpush.bf16.msra.mxu0 %v5530
  %6639 = vmatpush.bf16.msra.mxu0 %v5522
  %6640 = vmatpush.bf16.msra.mxu0 %v5514
  %6641 = vmatpush.bf16.msra.mxu0 %v5506
  %6642 = vmatpush.bf16.msra.mxu0 %v5498
  %6643 = vmatmul.bf16.gmra.mxu0 %v6451
  %v6644 = vpop.f32.mrf.mxu0
  %v6645 = vadd.f32 0.0, %v6644
  %v6646 = vpop.f32.mrf.mxu0
  %6647 = vdwg.mxu0
  %6648 = vmatpush.bf16.msra.mxu0 %v5618
  %6649 = vmatpush.bf16.msra.mxu0 %v5610
  %6650 = vmatpush.bf16.msra.mxu0 %v5602
  %6651 = vmatpush.bf16.msra.mxu0 %v5594
  %6652 = vmatpush.bf16.msra.mxu0 %v5586
  %6653 = vmatpush.bf16.msra.mxu0 %v5578
  %6654 = vmatpush.bf16.msra.mxu0 %v5570
  %6655 = vmatpush.bf16.msra.mxu0 %v5562
  %6656 = vmatmul.bf16.gmra.mxu0 %v6452
  %v6657 = vpop.f32.mrf.mxu0
  %v6658 = vadd.f32 %v6645, %v6657
  %v6659 = vpop.f32.mrf.mxu0
  %6660 = vdwg.mxu0
  %v6661 = vadd.f32 %v6443, %v6476
  %v6662 = vadd.f32 %v6444, %v6502
  %v6663 = vadd.f32 %v6445, %v6528
  %v6664 = vadd.f32 %v6446, %v6554
  %v6665 = vadd.f32 %v6447, %v6580
  %v6666 = vadd.f32 %v6448, %v6606
  %v6667 = vadd.f32 %v6449, %v6632
  %v6668 = vadd.f32 %v6450, %v6658
  %v6669 = vxor.u32 %v6661, 2147483648
  %v6670 = vxor.u32 %v6662, 2147483648
  %v6671 = vmul.f32 %v6669, 1.442695
  %v6672 = vpow.pop %v6671
  %v6673 = vmul.f32 %v6670, 1.442695
  %v6674 = vpow.pop %v6673
  %v6675 = vadd.f32 %v6672, 1.0
  %v6676 = vadd.f32 %v6674, 1.0
  %v6677 = vrcp.pop %v6675
  %v6678 = vmul.f32 %v6675, %v6677
  %v6679 = vsub.f32 1.0, %v6678
  %v6680 = vmul.f32 %v6677, %v6679
  %v6681 = vadd.f32 %v6677, %v6680
  %vm6682 = vweird.f32 %v6675
  %vm6683 = vweird.f32 %v6677
  %vm6684 = vmor %vm6682, %vm6683
  %v6685 = vsel %vm6684, %v6677, %v6681
  %v6686 = vand.u32 2147483647, %v6675
  %vm6687 = vcmp.eq.f32.partialorder %v6686, 8.507059e+37
  %v6688 = vand.u32 %v6675, 2147483648
  %v6689 = vor.u32 1.1754944e-38, %v6688
  %v6690 = vsel %vm6687, %v6689, %v6685
  %v6691 = vmul.f32 1.0, %v6690
  %v6692 = vrcp.pop %v6676
  %v6693 = vmul.f32 %v6676, %v6692
  %v6694 = vsub.f32 1.0, %v6693
  %v6695 = vmul.f32 %v6692, %v6694
  %v6696 = vadd.f32 %v6692, %v6695
  %vm6697 = vweird.f32 %v6676
  %vm6698 = vweird.f32 %v6692
  %vm6699 = vmor %vm6697, %vm6698
  %v6700 = vsel %vm6699, %v6692, %v6696
  %v6701 = vand.u32 2147483647, %v6676
  %vm6702 = vcmp.eq.f32.partialorder %v6701, 8.507059e+37
  %v6703 = vand.u32 %v6676, 2147483648
  %v6704 = vor.u32 1.1754944e-38, %v6703
  %v6705 = vsel %vm6702, %v6704, %v6700
  %v6706 = vmul.f32 1.0, %v6705
  %v6707 = vxor.u32 %v6663, 2147483648
  %v6708 = vxor.u32 %v6664, 2147483648
  %v6709 = vmul.f32 %v6707, 1.442695
  %v6710 = vpow.pop %v6709
  %v6711 = vmul.f32 %v6708, 1.442695
  %v6712 = vpow.pop %v6711
  %v6713 = vadd.f32 %v6710, 1.0
  %v6714 = vadd.f32 %v6712, 1.0
  %v6715 = vrcp.pop %v6713
  %v6716 = vmul.f32 %v6713, %v6715
  %v6717 = vsub.f32 1.0, %v6716
  %v6718 = vmul.f32 %v6715, %v6717
  %v6719 = vadd.f32 %v6715, %v6718
  %vm6720 = vweird.f32 %v6713
  %vm6721 = vweird.f32 %v6715
  %vm6722 = vmor %vm6720, %vm6721
  %v6723 = vsel %vm6722, %v6715, %v6719
  %v6724 = vand.u32 2147483647, %v6713
  %vm6725 = vcmp.eq.f32.partialorder %v6724, 8.507059e+37
  %v6726 = vand.u32 %v6713, 2147483648
  %v6727 = vor.u32 1.1754944e-38, %v6726
  %v6728 = vsel %vm6725, %v6727, %v6723
  %v6729 = vmul.f32 1.0, %v6728
  %v6730 = vrcp.pop %v6714
  %v6731 = vmul.f32 %v6714, %v6730
  %v6732 = vsub.f32 1.0, %v6731
  %v6733 = vmul.f32 %v6730, %v6732
  %v6734 = vadd.f32 %v6730, %v6733
  %vm6735 = vweird.f32 %v6714
  %vm6736 = vweird.f32 %v6730
  %vm6737 = vmor %vm6735, %vm6736
  %v6738 = vsel %vm6737, %v6730, %v6734
  %v6739 = vand.u32 2147483647, %v6714
  %vm6740 = vcmp.eq.f32.partialorder %v6739, 8.507059e+37
  %v6741 = vand.u32 %v6714, 2147483648
  %v6742 = vor.u32 1.1754944e-38, %v6741
  %v6743 = vsel %vm6740, %v6742, %v6738
  %v6744 = vmul.f32 1.0, %v6743
  %v6745 = vtanh.pop %v6665
  %v6746 = vtanh.pop %v6666
  %v6747 = vxor.u32 %v6667, 2147483648
  %v6748 = vxor.u32 %v6668, 2147483648
  %v6749 = vmul.f32 %v6747, 1.442695
  %v6750 = vpow.pop %v6749
  %v6751 = vmul.f32 %v6748, 1.442695
  %v6752 = vpow.pop %v6751
  %v6753 = vadd.f32 %v6750, 1.0
  %v6754 = vadd.f32 %v6752, 1.0
  %v6755 = vrcp.pop %v6753
  %v6756 = vmul.f32 %v6753, %v6755
  %v6757 = vsub.f32 1.0, %v6756
  %v6758 = vmul.f32 %v6755, %v6757
  %v6759 = vadd.f32 %v6755, %v6758
  %vm6760 = vweird.f32 %v6753
  %vm6761 = vweird.f32 %v6755
  %vm6762 = vmor %vm6760, %vm6761
  %v6763 = vsel %vm6762, %v6755, %v6759
  %v6764 = vand.u32 2147483647, %v6753
  %vm6765 = vcmp.eq.f32.partialorder %v6764, 8.507059e+37
  %v6766 = vand.u32 %v6753, 2147483648
  %v6767 = vor.u32 1.1754944e-38, %v6766
  %v6768 = vsel %vm6765, %v6767, %v6763
  %v6769 = vmul.f32 1.0, %v6768
  %v6770 = vrcp.pop %v6754
  %v6771 = vmul.f32 %v6754, %v6770
  %v6772 = vsub.f32 1.0, %v6771
  %v6773 = vmul.f32 %v6770, %v6772
  %v6774 = vadd.f32 %v6770, %v6773
  %vm6775 = vweird.f32 %v6754
  %vm6776 = vweird.f32 %v6770
  %vm6777 = vmor %vm6775, %vm6776
  %v6778 = vsel %vm6777, %v6770, %v6774
  %v6779 = vand.u32 2147483647, %v6754
  %vm6780 = vcmp.eq.f32.partialorder %v6779, 8.507059e+37
  %v6781 = vand.u32 %v6754, 2147483648
  %v6782 = vor.u32 1.1754944e-38, %v6781
  %v6783 = vsel %vm6780, %v6782, %v6778
  %v6784 = vmul.f32 1.0, %v6783
  %v6785 = vmul.f32 %v6729, %v6436
  %v6786 = vmul.f32 %v6744, %v6437
  %v6787 = vmul.f32 %v6691, %v6745
  %v6788 = vmul.f32 %v6706, %v6746
  %v6789 = vadd.f32 %v6785, %v6787
  %v6790 = vadd.f32 %v6786, %v6788
  %v6791 = vtanh.pop %v6789
  %v6792 = vtanh.pop %v6790
  %v6793 = vmul.f32 %v6769, %v6791
  %v6794 = vmul.f32 %v6784, %v6792
  %s6795 = scalar_lea.vmem [#allocation3], 192
  %v6796 = vld [vmem:[%s6795] sm:$0xff]
  %v6797 = vld [vmem:[%s6795 + $0x8] sm:$0xff]
  %v6798 = vld [vmem:[%s6795 + $0x10] sm:$0xff]
  %v6799 = vld [vmem:[%s6795 + $0x18] sm:$0xff]
  %v6800 = vld [vmem:[%s6795 + $0x20] sm:$0xff]
  %v6801 = vld [vmem:[%s6795 + $0x28] sm:$0xff]
  %v6802 = vld [vmem:[%s6795 + $0x30] sm:$0xff]
  %v6803 = vld [vmem:[%s6795 + $0x38] sm:$0xff]
  %v6804 = vpack.c.bf16 %v6793, %v6793
  %v6805 = vpack.c.bf16 %v6794, %v6794
  %6806 = vmatpush.bf16.msra.mxu0 %v5547
  %6807 = vmatpush.bf16.msra.mxu0 %v5539
  %6808 = vmatpush.bf16.msra.mxu0 %v5531
  %6809 = vmatpush.bf16.msra.mxu0 %v5523
  %6810 = vmatpush.bf16.msra.mxu0 %v5515
  %6811 = vmatpush.bf16.msra.mxu0 %v5507
  %6812 = vmatpush.bf16.msra.mxu0 %v5499
  %6813 = vmatpush.bf16.msra.mxu0 %v5491
  %6814 = vmatmul.bf16.gmra.mxu0 %v6804
  %v6815 = vpop.f32.mrf.mxu0
  %v6816 = vadd.f32 0.0, %v6815
  %v6817 = vpop.f32.mrf.mxu0
  %6818 = vdwg.mxu0
  %6819 = vmatpush.bf16.msra.mxu0 %v5611
  %6820 = vmatpush.bf16.msra.mxu0 %v5603
  %6821 = vmatpush.bf16.msra.mxu0 %v5595
  %6822 = vmatpush.bf16.msra.mxu0 %v5587
  %6823 = vmatpush.bf16.msra.mxu0 %v5579
  %6824 = vmatpush.bf16.msra.mxu0 %v5571
  %6825 = vmatpush.bf16.msra.mxu0 %v5563
  %6826 = vmatpush.bf16.msra.mxu0 %v5555
  %6827 = vmatmul.bf16.gmra.mxu0 %v6805
  %v6828 = vpop.f32.mrf.mxu0
  %v6829 = vadd.f32 %v6816, %v6828
  %v6830 = vpop.f32.mrf.mxu0
  %6831 = vdwg.mxu0
  %6832 = vmatpush.bf16.msra.mxu0 %v5548
  %6833 = vmatpush.bf16.msra.mxu0 %v5540
  %6834 = vmatpush.bf16.msra.mxu0 %v5532
  %6835 = vmatpush.bf16.msra.mxu0 %v5524
  %6836 = vmatpush.bf16.msra.mxu0 %v5516
  %6837 = vmatpush.bf16.msra.mxu0 %v5508
  %6838 = vmatpush.bf16.msra.mxu0 %v5500
  %6839 = vmatpush.bf16.msra.mxu0 %v5492
  %6840 = vmatmul.bf16.gmra.mxu0 %v6804
  %v6841 = vpop.f32.mrf.mxu0
  %v6842 = vadd.f32 0.0, %v6841
  %v6843 = vpop.f32.mrf.mxu0
  %6844 = vdwg.mxu0
  %6845 = vmatpush.bf16.msra.mxu0 %v5612
  %6846 = vmatpush.bf16.msra.mxu0 %v5604
  %6847 = vmatpush.bf16.msra.mxu0 %v5596
  %6848 = vmatpush.bf16.msra.mxu0 %v5588
  %6849 = vmatpush.bf16.msra.mxu0 %v5580
  %6850 = vmatpush.bf16.msra.mxu0 %v5572
  %6851 = vmatpush.bf16.msra.mxu0 %v5564
  %6852 = vmatpush.bf16.msra.mxu0 %v5556
  %6853 = vmatmul.bf16.gmra.mxu0 %v6805
  %v6854 = vpop.f32.mrf.mxu0
  %v6855 = vadd.f32 %v6842, %v6854
  %v6856 = vpop.f32.mrf.mxu0
  %6857 = vdwg.mxu0
  %6858 = vmatpush.bf16.msra.mxu0 %v5549
  %6859 = vmatpush.bf16.msra.mxu0 %v5541
  %6860 = vmatpush.bf16.msra.mxu0 %v5533
  %6861 = vmatpush.bf16.msra.mxu0 %v5525
  %6862 = vmatpush.bf16.msra.mxu0 %v5517
  %6863 = vmatpush.bf16.msra.mxu0 %v5509
  %6864 = vmatpush.bf16.msra.mxu0 %v5501
  %6865 = vmatpush.bf16.msra.mxu0 %v5493
  %6866 = vmatmul.bf16.gmra.mxu0 %v6804
  %v6867 = vpop.f32.mrf.mxu0
  %v6868 = vadd.f32 0.0, %v6867
  %v6869 = vpop.f32.mrf.mxu0
  %6870 = vdwg.mxu0
  %6871 = vmatpush.bf16.msra.mxu0 %v5613
  %6872 = vmatpush.bf16.msra.mxu0 %v5605
  %6873 = vmatpush.bf16.msra.mxu0 %v5597
  %6874 = vmatpush.bf16.msra.mxu0 %v5589
  %6875 = vmatpush.bf16.msra.mxu0 %v5581
  %6876 = vmatpush.bf16.msra.mxu0 %v5573
  %6877 = vmatpush.bf16.msra.mxu0 %v5565
  %6878 = vmatpush.bf16.msra.mxu0 %v5557
  %6879 = vmatmul.bf16.gmra.mxu0 %v6805
  %v6880 = vpop.f32.mrf.mxu0
  %v6881 = vadd.f32 %v6868, %v6880
  %v6882 = vpop.f32.mrf.mxu0
  %6883 = vdwg.mxu0
  %6884 = vmatpush.bf16.msra.mxu0 %v5550
  %6885 = vmatpush.bf16.msra.mxu0 %v5542
  %6886 = vmatpush.bf16.msra.mxu0 %v5534
  %6887 = vmatpush.bf16.msra.mxu0 %v5526
  %6888 = vmatpush.bf16.msra.mxu0 %v5518
  %6889 = vmatpush.bf16.msra.mxu0 %v5510
  %6890 = vmatpush.bf16.msra.mxu0 %v5502
  %6891 = vmatpush.bf16.msra.mxu0 %v5494
  %6892 = vmatmul.bf16.gmra.mxu0 %v6804
  %v6893 = vpop.f32.mrf.mxu0
  %v6894 = vadd.f32 0.0, %v6893
  %v6895 = vpop.f32.mrf.mxu0
  %6896 = vdwg.mxu0
  %6897 = vmatpush.bf16.msra.mxu0 %v5614
  %6898 = vmatpush.bf16.msra.mxu0 %v5606
  %6899 = vmatpush.bf16.msra.mxu0 %v5598
  %6900 = vmatpush.bf16.msra.mxu0 %v5590
  %6901 = vmatpush.bf16.msra.mxu0 %v5582
  %6902 = vmatpush.bf16.msra.mxu0 %v5574
  %6903 = vmatpush.bf16.msra.mxu0 %v5566
  %6904 = vmatpush.bf16.msra.mxu0 %v5558
  %6905 = vmatmul.bf16.gmra.mxu0 %v6805
  %v6906 = vpop.f32.mrf.mxu0
  %v6907 = vadd.f32 %v6894, %v6906
  %v6908 = vpop.f32.mrf.mxu0
  %6909 = vdwg.mxu0
  %6910 = vmatpush.bf16.msra.mxu0 %v5551
  %6911 = vmatpush.bf16.msra.mxu0 %v5543
  %6912 = vmatpush.bf16.msra.mxu0 %v5535
  %6913 = vmatpush.bf16.msra.mxu0 %v5527
  %6914 = vmatpush.bf16.msra.mxu0 %v5519
  %6915 = vmatpush.bf16.msra.mxu0 %v5511
  %6916 = vmatpush.bf16.msra.mxu0 %v5503
  %6917 = vmatpush.bf16.msra.mxu0 %v5495
  %6918 = vmatmul.bf16.gmra.mxu0 %v6804
  %v6919 = vpop.f32.mrf.mxu0
  %v6920 = vadd.f32 0.0, %v6919
  %v6921 = vpop.f32.mrf.mxu0
  %6922 = vdwg.mxu0
  %6923 = vmatpush.bf16.msra.mxu0 %v5615
  %6924 = vmatpush.bf16.msra.mxu0 %v5607
  %6925 = vmatpush.bf16.msra.mxu0 %v5599
  %6926 = vmatpush.bf16.msra.mxu0 %v5591
  %6927 = vmatpush.bf16.msra.mxu0 %v5583
  %6928 = vmatpush.bf16.msra.mxu0 %v5575
  %6929 = vmatpush.bf16.msra.mxu0 %v5567
  %6930 = vmatpush.bf16.msra.mxu0 %v5559
  %6931 = vmatmul.bf16.gmra.mxu0 %v6805
  %v6932 = vpop.f32.mrf.mxu0
  %v6933 = vadd.f32 %v6920, %v6932
  %v6934 = vpop.f32.mrf.mxu0
  %6935 = vdwg.mxu0
  %6936 = vmatpush.bf16.msra.mxu0 %v5552
  %6937 = vmatpush.bf16.msra.mxu0 %v5544
  %6938 = vmatpush.bf16.msra.mxu0 %v5536
  %6939 = vmatpush.bf16.msra.mxu0 %v5528
  %6940 = vmatpush.bf16.msra.mxu0 %v5520
  %6941 = vmatpush.bf16.msra.mxu0 %v5512
  %6942 = vmatpush.bf16.msra.mxu0 %v5504
  %6943 = vmatpush.bf16.msra.mxu0 %v5496
  %6944 = vmatmul.bf16.gmra.mxu0 %v6804
  %v6945 = vpop.f32.mrf.mxu0
  %v6946 = vadd.f32 0.0, %v6945
  %v6947 = vpop.f32.mrf.mxu0
  %6948 = vdwg.mxu0
  %6949 = vmatpush.bf16.msra.mxu0 %v5616
  %6950 = vmatpush.bf16.msra.mxu0 %v5608
  %6951 = vmatpush.bf16.msra.mxu0 %v5600
  %6952 = vmatpush.bf16.msra.mxu0 %v5592
  %6953 = vmatpush.bf16.msra.mxu0 %v5584
  %6954 = vmatpush.bf16.msra.mxu0 %v5576
  %6955 = vmatpush.bf16.msra.mxu0 %v5568
  %6956 = vmatpush.bf16.msra.mxu0 %v5560
  %6957 = vmatmul.bf16.gmra.mxu0 %v6805
  %v6958 = vpop.f32.mrf.mxu0
  %v6959 = vadd.f32 %v6946, %v6958
  %v6960 = vpop.f32.mrf.mxu0
  %6961 = vdwg.mxu0
  %6962 = vmatpush.bf16.msra.mxu0 %v5553
  %6963 = vmatpush.bf16.msra.mxu0 %v5545
  %6964 = vmatpush.bf16.msra.mxu0 %v5537
  %6965 = vmatpush.bf16.msra.mxu0 %v5529
  %6966 = vmatpush.bf16.msra.mxu0 %v5521
  %6967 = vmatpush.bf16.msra.mxu0 %v5513
  %6968 = vmatpush.bf16.msra.mxu0 %v5505
  %6969 = vmatpush.bf16.msra.mxu0 %v5497
  %6970 = vmatmul.bf16.gmra.mxu0 %v6804
  %v6971 = vpop.f32.mrf.mxu0
  %v6972 = vadd.f32 0.0, %v6971
  %v6973 = vpop.f32.mrf.mxu0
  %6974 = vdwg.mxu0
  %6975 = vmatpush.bf16.msra.mxu0 %v5617
  %6976 = vmatpush.bf16.msra.mxu0 %v5609
  %6977 = vmatpush.bf16.msra.mxu0 %v5601
  %6978 = vmatpush.bf16.msra.mxu0 %v5593
  %6979 = vmatpush.bf16.msra.mxu0 %v5585
  %6980 = vmatpush.bf16.msra.mxu0 %v5577
  %6981 = vmatpush.bf16.msra.mxu0 %v5569
  %6982 = vmatpush.bf16.msra.mxu0 %v5561
  %6983 = vmatmul.bf16.gmra.mxu0 %v6805
  %v6984 = vpop.f32.mrf.mxu0
  %v6985 = vadd.f32 %v6972, %v6984
  %v6986 = vpop.f32.mrf.mxu0
  %6987 = vdwg.mxu0
  %6988 = vmatpush.bf16.msra.mxu0 %v5554
  %6989 = vmatpush.bf16.msra.mxu0 %v5546
  %6990 = vmatpush.bf16.msra.mxu0 %v5538
  %6991 = vmatpush.bf16.msra.mxu0 %v5530
  %6992 = vmatpush.bf16.msra.mxu0 %v5522
  %6993 = vmatpush.bf16.msra.mxu0 %v5514
  %6994 = vmatpush.bf16.msra.mxu0 %v5506
  %6995 = vmatpush.bf16.msra.mxu0 %v5498
  %6996 = vmatmul.bf16.gmra.mxu0 %v6804
  %v6997 = vpop.f32.mrf.mxu0
  %v6998 = vadd.f32 0.0, %v6997
  %v6999 = vpop.f32.mrf.mxu0
  %7000 = vdwg.mxu0
  %7001 = vmatpush.bf16.msra.mxu0 %v5618
  %7002 = vmatpush.bf16.msra.mxu0 %v5610
  %7003 = vmatpush.bf16.msra.mxu0 %v5602
  %7004 = vmatpush.bf16.msra.mxu0 %v5594
  %7005 = vmatpush.bf16.msra.mxu0 %v5586
  %7006 = vmatpush.bf16.msra.mxu0 %v5578
  %7007 = vmatpush.bf16.msra.mxu0 %v5570
  %7008 = vmatpush.bf16.msra.mxu0 %v5562
  %7009 = vmatmul.bf16.gmra.mxu0 %v6805
  %v7010 = vpop.f32.mrf.mxu0
  %v7011 = vadd.f32 %v6998, %v7010
  %v7012 = vpop.f32.mrf.mxu0
  %7013 = vdwg.mxu0
  %v7014 = vadd.f32 %v6796, %v6829
  %v7015 = vadd.f32 %v6797, %v6855
  %v7016 = vadd.f32 %v6798, %v6881
  %v7017 = vadd.f32 %v6799, %v6907
  %v7018 = vadd.f32 %v6800, %v6933
  %v7019 = vadd.f32 %v6801, %v6959
  %v7020 = vadd.f32 %v6802, %v6985
  %v7021 = vadd.f32 %v6803, %v7011
  %v7022 = vxor.u32 %v7014, 2147483648
  %v7023 = vxor.u32 %v7015, 2147483648
  %v7024 = vmul.f32 %v7022, 1.442695
  %v7025 = vpow.pop %v7024
  %v7026 = vmul.f32 %v7023, 1.442695
  %v7027 = vpow.pop %v7026
  %v7028 = vadd.f32 %v7025, 1.0
  %v7029 = vadd.f32 %v7027, 1.0
  %v7030 = vrcp.pop %v7028
  %v7031 = vmul.f32 %v7028, %v7030
  %v7032 = vsub.f32 1.0, %v7031
  %v7033 = vmul.f32 %v7030, %v7032
  %v7034 = vadd.f32 %v7030, %v7033
  %vm7035 = vweird.f32 %v7028
  %vm7036 = vweird.f32 %v7030
  %vm7037 = vmor %vm7035, %vm7036
  %v7038 = vsel %vm7037, %v7030, %v7034
  %v7039 = vand.u32 2147483647, %v7028
  %vm7040 = vcmp.eq.f32.partialorder %v7039, 8.507059e+37
  %v7041 = vand.u32 %v7028, 2147483648
  %v7042 = vor.u32 1.1754944e-38, %v7041
  %v7043 = vsel %vm7040, %v7042, %v7038
  %v7044 = vmul.f32 1.0, %v7043
  %v7045 = vrcp.pop %v7029
  %v7046 = vmul.f32 %v7029, %v7045
  %v7047 = vsub.f32 1.0, %v7046
  %v7048 = vmul.f32 %v7045, %v7047
  %v7049 = vadd.f32 %v7045, %v7048
  %vm7050 = vweird.f32 %v7029
  %vm7051 = vweird.f32 %v7045
  %vm7052 = vmor %vm7050, %vm7051
  %v7053 = vsel %vm7052, %v7045, %v7049
  %v7054 = vand.u32 2147483647, %v7029
  %vm7055 = vcmp.eq.f32.partialorder %v7054, 8.507059e+37
  %v7056 = vand.u32 %v7029, 2147483648
  %v7057 = vor.u32 1.1754944e-38, %v7056
  %v7058 = vsel %vm7055, %v7057, %v7053
  %v7059 = vmul.f32 1.0, %v7058
  %v7060 = vxor.u32 %v7016, 2147483648
  %v7061 = vxor.u32 %v7017, 2147483648
  %v7062 = vmul.f32 %v7060, 1.442695
  %v7063 = vpow.pop %v7062
  %v7064 = vmul.f32 %v7061, 1.442695
  %v7065 = vpow.pop %v7064
  %v7066 = vadd.f32 %v7063, 1.0
  %v7067 = vadd.f32 %v7065, 1.0
  %v7068 = vrcp.pop %v7066
  %v7069 = vmul.f32 %v7066, %v7068
  %v7070 = vsub.f32 1.0, %v7069
  %v7071 = vmul.f32 %v7068, %v7070
  %v7072 = vadd.f32 %v7068, %v7071
  %vm7073 = vweird.f32 %v7066
  %vm7074 = vweird.f32 %v7068
  %vm7075 = vmor %vm7073, %vm7074
  %v7076 = vsel %vm7075, %v7068, %v7072
  %v7077 = vand.u32 2147483647, %v7066
  %vm7078 = vcmp.eq.f32.partialorder %v7077, 8.507059e+37
  %v7079 = vand.u32 %v7066, 2147483648
  %v7080 = vor.u32 1.1754944e-38, %v7079
  %v7081 = vsel %vm7078, %v7080, %v7076
  %v7082 = vmul.f32 1.0, %v7081
  %v7083 = vrcp.pop %v7067
  %v7084 = vmul.f32 %v7067, %v7083
  %v7085 = vsub.f32 1.0, %v7084
  %v7086 = vmul.f32 %v7083, %v7085
  %v7087 = vadd.f32 %v7083, %v7086
  %vm7088 = vweird.f32 %v7067
  %vm7089 = vweird.f32 %v7083
  %vm7090 = vmor %vm7088, %vm7089
  %v7091 = vsel %vm7090, %v7083, %v7087
  %v7092 = vand.u32 2147483647, %v7067
  %vm7093 = vcmp.eq.f32.partialorder %v7092, 8.507059e+37
  %v7094 = vand.u32 %v7067, 2147483648
  %v7095 = vor.u32 1.1754944e-38, %v7094
  %v7096 = vsel %vm7093, %v7095, %v7091
  %v7097 = vmul.f32 1.0, %v7096
  %v7098 = vtanh.pop %v7018
  %v7099 = vtanh.pop %v7019
  %v7100 = vxor.u32 %v7020, 2147483648
  %v7101 = vxor.u32 %v7021, 2147483648
  %v7102 = vmul.f32 %v7100, 1.442695
  %v7103 = vpow.pop %v7102
  %v7104 = vmul.f32 %v7101, 1.442695
  %v7105 = vpow.pop %v7104
  %v7106 = vadd.f32 %v7103, 1.0
  %v7107 = vadd.f32 %v7105, 1.0
  %v7108 = vrcp.pop %v7106
  %v7109 = vmul.f32 %v7106, %v7108
  %v7110 = vsub.f32 1.0, %v7109
  %v7111 = vmul.f32 %v7108, %v7110
  %v7112 = vadd.f32 %v7108, %v7111
  %vm7113 = vweird.f32 %v7106
  %vm7114 = vweird.f32 %v7108
  %vm7115 = vmor %vm7113, %vm7114
  %v7116 = vsel %vm7115, %v7108, %v7112
  %v7117 = vand.u32 2147483647, %v7106
  %vm7118 = vcmp.eq.f32.partialorder %v7117, 8.507059e+37
  %v7119 = vand.u32 %v7106, 2147483648
  %v7120 = vor.u32 1.1754944e-38, %v7119
  %v7121 = vsel %vm7118, %v7120, %v7116
  %v7122 = vmul.f32 1.0, %v7121
  %v7123 = vrcp.pop %v7107
  %v7124 = vmul.f32 %v7107, %v7123
  %v7125 = vsub.f32 1.0, %v7124
  %v7126 = vmul.f32 %v7123, %v7125
  %v7127 = vadd.f32 %v7123, %v7126
  %vm7128 = vweird.f32 %v7107
  %vm7129 = vweird.f32 %v7123
  %vm7130 = vmor %vm7128, %vm7129
  %v7131 = vsel %vm7130, %v7123, %v7127
  %v7132 = vand.u32 2147483647, %v7107
  %vm7133 = vcmp.eq.f32.partialorder %v7132, 8.507059e+37
  %v7134 = vand.u32 %v7107, 2147483648
  %v7135 = vor.u32 1.1754944e-38, %v7134
  %v7136 = vsel %vm7133, %v7135, %v7131
  %v7137 = vmul.f32 1.0, %v7136
  %v7138 = vmul.f32 %v7082, %v6789
  %v7139 = vmul.f32 %v7097, %v6790
  %v7140 = vmul.f32 %v7044, %v7098
  %v7141 = vmul.f32 %v7059, %v7099
  %v7142 = vadd.f32 %v7138, %v7140
  %v7143 = vadd.f32 %v7139, %v7141
  %v7144 = vtanh.pop %v7142
  %v7145 = vtanh.pop %v7143
  %v7146 = vmul.f32 %v7122, %v7144
  %v7147 = vmul.f32 %v7137, %v7145
  %s7148 = scalar_lea.vmem [#allocation3], 256
  %v7149 = vld [vmem:[%s7148] sm:$0xff]
  %v7150 = vld [vmem:[%s7148 + $0x8] sm:$0xff]
  %v7151 = vld [vmem:[%s7148 + $0x10] sm:$0xff]
  %v7152 = vld [vmem:[%s7148 + $0x18] sm:$0xff]
  %v7153 = vld [vmem:[%s7148 + $0x20] sm:$0xff]
  %v7154 = vld [vmem:[%s7148 + $0x28] sm:$0xff]
  %v7155 = vld [vmem:[%s7148 + $0x30] sm:$0xff]
  %v7156 = vld [vmem:[%s7148 + $0x38] sm:$0xff]
  %v7157 = vpack.c.bf16 %v7146, %v7146
  %v7158 = vpack.c.bf16 %v7147, %v7147
  %7159 = vmatpush.bf16.msra.mxu0 %v5547
  %7160 = vmatpush.bf16.msra.mxu0 %v5539
  %7161 = vmatpush.bf16.msra.mxu0 %v5531
  %7162 = vmatpush.bf16.msra.mxu0 %v5523
  %7163 = vmatpush.bf16.msra.mxu0 %v5515
  %7164 = vmatpush.bf16.msra.mxu0 %v5507
  %7165 = vmatpush.bf16.msra.mxu0 %v5499
  %7166 = vmatpush.bf16.msra.mxu0 %v5491
  %7167 = vmatmul.bf16.gmra.mxu0 %v7157
  %v7168 = vpop.f32.mrf.mxu0
  %v7169 = vadd.f32 0.0, %v7168
  %v7170 = vpop.f32.mrf.mxu0
  %7171 = vdwg.mxu0
  %7172 = vmatpush.bf16.msra.mxu0 %v5611
  %7173 = vmatpush.bf16.msra.mxu0 %v5603
  %7174 = vmatpush.bf16.msra.mxu0 %v5595
  %7175 = vmatpush.bf16.msra.mxu0 %v5587
  %7176 = vmatpush.bf16.msra.mxu0 %v5579
  %7177 = vmatpush.bf16.msra.mxu0 %v5571
  %7178 = vmatpush.bf16.msra.mxu0 %v5563
  %7179 = vmatpush.bf16.msra.mxu0 %v5555
  %7180 = vmatmul.bf16.gmra.mxu0 %v7158
  %v7181 = vpop.f32.mrf.mxu0
  %v7182 = vadd.f32 %v7169, %v7181
  %v7183 = vpop.f32.mrf.mxu0
  %7184 = vdwg.mxu0
  %7185 = vmatpush.bf16.msra.mxu0 %v5548
  %7186 = vmatpush.bf16.msra.mxu0 %v5540
  %7187 = vmatpush.bf16.msra.mxu0 %v5532
  %7188 = vmatpush.bf16.msra.mxu0 %v5524
  %7189 = vmatpush.bf16.msra.mxu0 %v5516
  %7190 = vmatpush.bf16.msra.mxu0 %v5508
  %7191 = vmatpush.bf16.msra.mxu0 %v5500
  %7192 = vmatpush.bf16.msra.mxu0 %v5492
  %7193 = vmatmul.bf16.gmra.mxu0 %v7157
  %v7194 = vpop.f32.mrf.mxu0
  %v7195 = vadd.f32 0.0, %v7194
  %v7196 = vpop.f32.mrf.mxu0
  %7197 = vdwg.mxu0
  %7198 = vmatpush.bf16.msra.mxu0 %v5612
  %7199 = vmatpush.bf16.msra.mxu0 %v5604
  %7200 = vmatpush.bf16.msra.mxu0 %v5596
  %7201 = vmatpush.bf16.msra.mxu0 %v5588
  %7202 = vmatpush.bf16.msra.mxu0 %v5580
  %7203 = vmatpush.bf16.msra.mxu0 %v5572
  %7204 = vmatpush.bf16.msra.mxu0 %v5564
  %7205 = vmatpush.bf16.msra.mxu0 %v5556
  %7206 = vmatmul.bf16.gmra.mxu0 %v7158
  %v7207 = vpop.f32.mrf.mxu0
  %v7208 = vadd.f32 %v7195, %v7207
  %v7209 = vpop.f32.mrf.mxu0
  %7210 = vdwg.mxu0
  %7211 = vmatpush.bf16.msra.mxu0 %v5549
  %7212 = vmatpush.bf16.msra.mxu0 %v5541
  %7213 = vmatpush.bf16.msra.mxu0 %v5533
  %7214 = vmatpush.bf16.msra.mxu0 %v5525
  %7215 = vmatpush.bf16.msra.mxu0 %v5517
  %7216 = vmatpush.bf16.msra.mxu0 %v5509
  %7217 = vmatpush.bf16.msra.mxu0 %v5501
  %7218 = vmatpush.bf16.msra.mxu0 %v5493
  %7219 = vmatmul.bf16.gmra.mxu0 %v7157
  %v7220 = vpop.f32.mrf.mxu0
  %v7221 = vadd.f32 0.0, %v7220
  %v7222 = vpop.f32.mrf.mxu0
  %7223 = vdwg.mxu0
  %7224 = vmatpush.bf16.msra.mxu0 %v5613
  %7225 = vmatpush.bf16.msra.mxu0 %v5605
  %7226 = vmatpush.bf16.msra.mxu0 %v5597
  %7227 = vmatpush.bf16.msra.mxu0 %v5589
  %7228 = vmatpush.bf16.msra.mxu0 %v5581
  %7229 = vmatpush.bf16.msra.mxu0 %v5573
  %7230 = vmatpush.bf16.msra.mxu0 %v5565
  %7231 = vmatpush.bf16.msra.mxu0 %v5557
  %7232 = vmatmul.bf16.gmra.mxu0 %v7158
  %v7233 = vpop.f32.mrf.mxu0
  %v7234 = vadd.f32 %v7221, %v7233
  %v7235 = vpop.f32.mrf.mxu0
  %7236 = vdwg.mxu0
  %7237 = vmatpush.bf16.msra.mxu0 %v5550
  %7238 = vmatpush.bf16.msra.mxu0 %v5542
  %7239 = vmatpush.bf16.msra.mxu0 %v5534
  %7240 = vmatpush.bf16.msra.mxu0 %v5526
  %7241 = vmatpush.bf16.msra.mxu0 %v5518
  %7242 = vmatpush.bf16.msra.mxu0 %v5510
  %7243 = vmatpush.bf16.msra.mxu0 %v5502
  %7244 = vmatpush.bf16.msra.mxu0 %v5494
  %7245 = vmatmul.bf16.gmra.mxu0 %v7157
  %v7246 = vpop.f32.mrf.mxu0
  %v7247 = vadd.f32 0.0, %v7246
  %v7248 = vpop.f32.mrf.mxu0
  %7249 = vdwg.mxu0
  %7250 = vmatpush.bf16.msra.mxu0 %v5614
  %7251 = vmatpush.bf16.msra.mxu0 %v5606
  %7252 = vmatpush.bf16.msra.mxu0 %v5598
  %7253 = vmatpush.bf16.msra.mxu0 %v5590
  %7254 = vmatpush.bf16.msra.mxu0 %v5582
  %7255 = vmatpush.bf16.msra.mxu0 %v5574
  %7256 = vmatpush.bf16.msra.mxu0 %v5566
  %7257 = vmatpush.bf16.msra.mxu0 %v5558
  %7258 = vmatmul.bf16.gmra.mxu0 %v7158
  %v7259 = vpop.f32.mrf.mxu0
  %v7260 = vadd.f32 %v7247, %v7259
  %v7261 = vpop.f32.mrf.mxu0
  %7262 = vdwg.mxu0
  %7263 = vmatpush.bf16.msra.mxu0 %v5551
  %7264 = vmatpush.bf16.msra.mxu0 %v5543
  %7265 = vmatpush.bf16.msra.mxu0 %v5535
  %7266 = vmatpush.bf16.msra.mxu0 %v5527
  %7267 = vmatpush.bf16.msra.mxu0 %v5519
  %7268 = vmatpush.bf16.msra.mxu0 %v5511
  %7269 = vmatpush.bf16.msra.mxu0 %v5503
  %7270 = vmatpush.bf16.msra.mxu0 %v5495
  %7271 = vmatmul.bf16.gmra.mxu0 %v7157
  %v7272 = vpop.f32.mrf.mxu0
  %v7273 = vadd.f32 0.0, %v7272
  %v7274 = vpop.f32.mrf.mxu0
  %7275 = vdwg.mxu0
  %7276 = vmatpush.bf16.msra.mxu0 %v5615
  %7277 = vmatpush.bf16.msra.mxu0 %v5607
  %7278 = vmatpush.bf16.msra.mxu0 %v5599
  %7279 = vmatpush.bf16.msra.mxu0 %v5591
  %7280 = vmatpush.bf16.msra.mxu0 %v5583
  %7281 = vmatpush.bf16.msra.mxu0 %v5575
  %7282 = vmatpush.bf16.msra.mxu0 %v5567
  %7283 = vmatpush.bf16.msra.mxu0 %v5559
  %7284 = vmatmul.bf16.gmra.mxu0 %v7158
  %v7285 = vpop.f32.mrf.mxu0
  %v7286 = vadd.f32 %v7273, %v7285
  %v7287 = vpop.f32.mrf.mxu0
  %7288 = vdwg.mxu0
  %7289 = vmatpush.bf16.msra.mxu0 %v5552
  %7290 = vmatpush.bf16.msra.mxu0 %v5544
  %7291 = vmatpush.bf16.msra.mxu0 %v5536
  %7292 = vmatpush.bf16.msra.mxu0 %v5528
  %7293 = vmatpush.bf16.msra.mxu0 %v5520
  %7294 = vmatpush.bf16.msra.mxu0 %v5512
  %7295 = vmatpush.bf16.msra.mxu0 %v5504
  %7296 = vmatpush.bf16.msra.mxu0 %v5496
  %7297 = vmatmul.bf16.gmra.mxu0 %v7157
  %v7298 = vpop.f32.mrf.mxu0
  %v7299 = vadd.f32 0.0, %v7298
  %v7300 = vpop.f32.mrf.mxu0
  %7301 = vdwg.mxu0
  %7302 = vmatpush.bf16.msra.mxu0 %v5616
  %7303 = vmatpush.bf16.msra.mxu0 %v5608
  %7304 = vmatpush.bf16.msra.mxu0 %v5600
  %7305 = vmatpush.bf16.msra.mxu0 %v5592
  %7306 = vmatpush.bf16.msra.mxu0 %v5584
  %7307 = vmatpush.bf16.msra.mxu0 %v5576
  %7308 = vmatpush.bf16.msra.mxu0 %v5568
  %7309 = vmatpush.bf16.msra.mxu0 %v5560
  %7310 = vmatmul.bf16.gmra.mxu0 %v7158
  %v7311 = vpop.f32.mrf.mxu0
  %v7312 = vadd.f32 %v7299, %v7311
  %v7313 = vpop.f32.mrf.mxu0
  %7314 = vdwg.mxu0
  %7315 = vmatpush.bf16.msra.mxu0 %v5553
  %7316 = vmatpush.bf16.msra.mxu0 %v5545
  %7317 = vmatpush.bf16.msra.mxu0 %v5537
  %7318 = vmatpush.bf16.msra.mxu0 %v5529
  %7319 = vmatpush.bf16.msra.mxu0 %v5521
  %7320 = vmatpush.bf16.msra.mxu0 %v5513
  %7321 = vmatpush.bf16.msra.mxu0 %v5505
  %7322 = vmatpush.bf16.msra.mxu0 %v5497
  %7323 = vmatmul.bf16.gmra.mxu0 %v7157
  %v7324 = vpop.f32.mrf.mxu0
  %v7325 = vadd.f32 0.0, %v7324
  %v7326 = vpop.f32.mrf.mxu0
  %7327 = vdwg.mxu0
  %7328 = vmatpush.bf16.msra.mxu0 %v5617
  %7329 = vmatpush.bf16.msra.mxu0 %v5609
  %7330 = vmatpush.bf16.msra.mxu0 %v5601
  %7331 = vmatpush.bf16.msra.mxu0 %v5593
  %7332 = vmatpush.bf16.msra.mxu0 %v5585
  %7333 = vmatpush.bf16.msra.mxu0 %v5577
  %7334 = vmatpush.bf16.msra.mxu0 %v5569
  %7335 = vmatpush.bf16.msra.mxu0 %v5561
  %7336 = vmatmul.bf16.gmra.mxu0 %v7158
  %v7337 = vpop.f32.mrf.mxu0
  %v7338 = vadd.f32 %v7325, %v7337
  %v7339 = vpop.f32.mrf.mxu0
  %7340 = vdwg.mxu0
  %7341 = vmatpush.bf16.msra.mxu0 %v5554
  %7342 = vmatpush.bf16.msra.mxu0 %v5546
  %7343 = vmatpush.bf16.msra.mxu0 %v5538
  %7344 = vmatpush.bf16.msra.mxu0 %v5530
  %7345 = vmatpush.bf16.msra.mxu0 %v5522
  %7346 = vmatpush.bf16.msra.mxu0 %v5514
  %7347 = vmatpush.bf16.msra.mxu0 %v5506
  %7348 = vmatpush.bf16.msra.mxu0 %v5498
  %7349 = vmatmul.bf16.gmra.mxu0 %v7157
  %v7350 = vpop.f32.mrf.mxu0
  %v7351 = vadd.f32 0.0, %v7350
  %v7352 = vpop.f32.mrf.mxu0
  %7353 = vdwg.mxu0
  %7354 = vmatpush.bf16.msra.mxu0 %v5618
  %7355 = vmatpush.bf16.msra.mxu0 %v5610
  %7356 = vmatpush.bf16.msra.mxu0 %v5602
  %7357 = vmatpush.bf16.msra.mxu0 %v5594
  %7358 = vmatpush.bf16.msra.mxu0 %v5586
  %7359 = vmatpush.bf16.msra.mxu0 %v5578
  %7360 = vmatpush.bf16.msra.mxu0 %v5570
  %7361 = vmatpush.bf16.msra.mxu0 %v5562
  %7362 = vmatmul.bf16.gmra.mxu0 %v7158
  %v7363 = vpop.f32.mrf.mxu0
  %v7364 = vadd.f32 %v7351, %v7363
  %v7365 = vpop.f32.mrf.mxu0
  %7366 = vdwg.mxu0
  %v7367 = vadd.f32 %v7149, %v7182
  %v7368 = vadd.f32 %v7150, %v7208
  %v7369 = vadd.f32 %v7151, %v7234
  %v7370 = vadd.f32 %v7152, %v7260
  %v7371 = vadd.f32 %v7153, %v7286
  %v7372 = vadd.f32 %v7154, %v7312
  %v7373 = vadd.f32 %v7155, %v7338
  %v7374 = vadd.f32 %v7156, %v7364
  %v7375 = vxor.u32 %v7367, 2147483648
  %v7376 = vxor.u32 %v7368, 2147483648
  %v7377 = vmul.f32 %v7375, 1.442695
  %v7378 = vpow.pop %v7377
  %v7379 = vmul.f32 %v7376, 1.442695
  %v7380 = vpow.pop %v7379
  %v7381 = vadd.f32 %v7378, 1.0
  %v7382 = vadd.f32 %v7380, 1.0
  %v7383 = vrcp.pop %v7381
  %v7384 = vmul.f32 %v7381, %v7383
  %v7385 = vsub.f32 1.0, %v7384
  %v7386 = vmul.f32 %v7383, %v7385
  %v7387 = vadd.f32 %v7383, %v7386
  %vm7388 = vweird.f32 %v7381
  %vm7389 = vweird.f32 %v7383
  %vm7390 = vmor %vm7388, %vm7389
  %v7391 = vsel %vm7390, %v7383, %v7387
  %v7392 = vand.u32 2147483647, %v7381
  %vm7393 = vcmp.eq.f32.partialorder %v7392, 8.507059e+37
  %v7394 = vand.u32 %v7381, 2147483648
  %v7395 = vor.u32 1.1754944e-38, %v7394
  %v7396 = vsel %vm7393, %v7395, %v7391
  %v7397 = vmul.f32 1.0, %v7396
  %v7398 = vrcp.pop %v7382
  %v7399 = vmul.f32 %v7382, %v7398
  %v7400 = vsub.f32 1.0, %v7399
  %v7401 = vmul.f32 %v7398, %v7400
  %v7402 = vadd.f32 %v7398, %v7401
  %vm7403 = vweird.f32 %v7382
  %vm7404 = vweird.f32 %v7398
  %vm7405 = vmor %vm7403, %vm7404
  %v7406 = vsel %vm7405, %v7398, %v7402
  %v7407 = vand.u32 2147483647, %v7382
  %vm7408 = vcmp.eq.f32.partialorder %v7407, 8.507059e+37
  %v7409 = vand.u32 %v7382, 2147483648
  %v7410 = vor.u32 1.1754944e-38, %v7409
  %v7411 = vsel %vm7408, %v7410, %v7406
  %v7412 = vmul.f32 1.0, %v7411
  %v7413 = vxor.u32 %v7369, 2147483648
  %v7414 = vxor.u32 %v7370, 2147483648
  %v7415 = vmul.f32 %v7413, 1.442695
  %v7416 = vpow.pop %v7415
  %v7417 = vmul.f32 %v7414, 1.442695
  %v7418 = vpow.pop %v7417
  %v7419 = vadd.f32 %v7416, 1.0
  %v7420 = vadd.f32 %v7418, 1.0
  %v7421 = vrcp.pop %v7419
  %v7422 = vmul.f32 %v7419, %v7421
  %v7423 = vsub.f32 1.0, %v7422
  %v7424 = vmul.f32 %v7421, %v7423
  %v7425 = vadd.f32 %v7421, %v7424
  %vm7426 = vweird.f32 %v7419
  %vm7427 = vweird.f32 %v7421
  %vm7428 = vmor %vm7426, %vm7427
  %v7429 = vsel %vm7428, %v7421, %v7425
  %v7430 = vand.u32 2147483647, %v7419
  %vm7431 = vcmp.eq.f32.partialorder %v7430, 8.507059e+37
  %v7432 = vand.u32 %v7419, 2147483648
  %v7433 = vor.u32 1.1754944e-38, %v7432
  %v7434 = vsel %vm7431, %v7433, %v7429
  %v7435 = vmul.f32 1.0, %v7434
  %v7436 = vrcp.pop %v7420
  %v7437 = vmul.f32 %v7420, %v7436
  %v7438 = vsub.f32 1.0, %v7437
  %v7439 = vmul.f32 %v7436, %v7438
  %v7440 = vadd.f32 %v7436, %v7439
  %vm7441 = vweird.f32 %v7420
  %vm7442 = vweird.f32 %v7436
  %vm7443 = vmor %vm7441, %vm7442
  %v7444 = vsel %vm7443, %v7436, %v7440
  %v7445 = vand.u32 2147483647, %v7420
  %vm7446 = vcmp.eq.f32.partialorder %v7445, 8.507059e+37
  %v7447 = vand.u32 %v7420, 2147483648
  %v7448 = vor.u32 1.1754944e-38, %v7447
  %v7449 = vsel %vm7446, %v7448, %v7444
  %v7450 = vmul.f32 1.0, %v7449
  %v7451 = vtanh.pop %v7371
  %v7452 = vtanh.pop %v7372
  %v7453 = vxor.u32 %v7373, 2147483648
  %v7454 = vxor.u32 %v7374, 2147483648
  %v7455 = vmul.f32 %v7453, 1.442695
  %v7456 = vpow.pop %v7455
  %v7457 = vmul.f32 %v7454, 1.442695
  %v7458 = vpow.pop %v7457
  %v7459 = vadd.f32 %v7456, 1.0
  %v7460 = vadd.f32 %v7458, 1.0
  %v7461 = vrcp.pop %v7459
  %v7462 = vmul.f32 %v7459, %v7461
  %v7463 = vsub.f32 1.0, %v7462
  %v7464 = vmul.f32 %v7461, %v7463
  %v7465 = vadd.f32 %v7461, %v7464
  %vm7466 = vweird.f32 %v7459
  %vm7467 = vweird.f32 %v7461
  %vm7468 = vmor %vm7466, %vm7467
  %v7469 = vsel %vm7468, %v7461, %v7465
  %v7470 = vand.u32 2147483647, %v7459
  %vm7471 = vcmp.eq.f32.partialorder %v7470, 8.507059e+37
  %v7472 = vand.u32 %v7459, 2147483648
  %v7473 = vor.u32 1.1754944e-38, %v7472
  %v7474 = vsel %vm7471, %v7473, %v7469
  %v7475 = vmul.f32 1.0, %v7474
  %v7476 = vrcp.pop %v7460
  %v7477 = vmul.f32 %v7460, %v7476
  %v7478 = vsub.f32 1.0, %v7477
  %v7479 = vmul.f32 %v7476, %v7478
  %v7480 = vadd.f32 %v7476, %v7479
  %vm7481 = vweird.f32 %v7460
  %vm7482 = vweird.f32 %v7476
  %vm7483 = vmor %vm7481, %vm7482
  %v7484 = vsel %vm7483, %v7476, %v7480
  %v7485 = vand.u32 2147483647, %v7460
  %vm7486 = vcmp.eq.f32.partialorder %v7485, 8.507059e+37
  %v7487 = vand.u32 %v7460, 2147483648
  %v7488 = vor.u32 1.1754944e-38, %v7487
  %v7489 = vsel %vm7486, %v7488, %v7484
  %v7490 = vmul.f32 1.0, %v7489
  %v7491 = vmul.f32 %v7435, %v7142
  %v7492 = vmul.f32 %v7450, %v7143
  %v7493 = vmul.f32 %v7397, %v7451
  %v7494 = vmul.f32 %v7412, %v7452
  %v7495 = vadd.f32 %v7491, %v7493
  %v7496 = vadd.f32 %v7492, %v7494
  %v7497 = vtanh.pop %v7495
  %v7498 = vtanh.pop %v7496
  %v7499 = vmul.f32 %v7475, %v7497
  %v7500 = vmul.f32 %v7490, %v7498
  %s7501 = scalar_lea.vmem [#allocation3], 320
  %v7502 = vld [vmem:[%s7501] sm:$0xff]
  %v7503 = vld [vmem:[%s7501 + $0x8] sm:$0xff]
  %v7504 = vld [vmem:[%s7501 + $0x10] sm:$0xff]
  %v7505 = vld [vmem:[%s7501 + $0x18] sm:$0xff]
  %v7506 = vld [vmem:[%s7501 + $0x20] sm:$0xff]
  %v7507 = vld [vmem:[%s7501 + $0x28] sm:$0xff]
  %v7508 = vld [vmem:[%s7501 + $0x30] sm:$0xff]
  %v7509 = vld [vmem:[%s7501 + $0x38] sm:$0xff]
  %v7510 = vpack.c.bf16 %v7499, %v7499
  %v7511 = vpack.c.bf16 %v7500, %v7500
  %7512 = vmatpush.bf16.msra.mxu0 %v5547
  %7513 = vmatpush.bf16.msra.mxu0 %v5539
  %7514 = vmatpush.bf16.msra.mxu0 %v5531
  %7515 = vmatpush.bf16.msra.mxu0 %v5523
  %7516 = vmatpush.bf16.msra.mxu0 %v5515
  %7517 = vmatpush.bf16.msra.mxu0 %v5507
  %7518 = vmatpush.bf16.msra.mxu0 %v5499
  %7519 = vmatpush.bf16.msra.mxu0 %v5491
  %7520 = vmatmul.bf16.gmra.mxu0 %v7510
  %v7521 = vpop.f32.mrf.mxu0
  %v7522 = vadd.f32 0.0, %v7521
  %v7523 = vpop.f32.mrf.mxu0
  %7524 = vdwg.mxu0
  %7525 = vmatpush.bf16.msra.mxu0 %v5611
  %7526 = vmatpush.bf16.msra.mxu0 %v5603
  %7527 = vmatpush.bf16.msra.mxu0 %v5595
  %7528 = vmatpush.bf16.msra.mxu0 %v5587
  %7529 = vmatpush.bf16.msra.mxu0 %v5579
  %7530 = vmatpush.bf16.msra.mxu0 %v5571
  %7531 = vmatpush.bf16.msra.mxu0 %v5563
  %7532 = vmatpush.bf16.msra.mxu0 %v5555
  %7533 = vmatmul.bf16.gmra.mxu0 %v7511
  %v7534 = vpop.f32.mrf.mxu0
  %v7535 = vadd.f32 %v7522, %v7534
  %v7536 = vpop.f32.mrf.mxu0
  %7537 = vdwg.mxu0
  %7538 = vmatpush.bf16.msra.mxu0 %v5548
  %7539 = vmatpush.bf16.msra.mxu0 %v5540
  %7540 = vmatpush.bf16.msra.mxu0 %v5532
  %7541 = vmatpush.bf16.msra.mxu0 %v5524
  %7542 = vmatpush.bf16.msra.mxu0 %v5516
  %7543 = vmatpush.bf16.msra.mxu0 %v5508
  %7544 = vmatpush.bf16.msra.mxu0 %v5500
  %7545 = vmatpush.bf16.msra.mxu0 %v5492
  %7546 = vmatmul.bf16.gmra.mxu0 %v7510
  %v7547 = vpop.f32.mrf.mxu0
  %v7548 = vadd.f32 0.0, %v7547
  %v7549 = vpop.f32.mrf.mxu0
  %7550 = vdwg.mxu0
  %7551 = vmatpush.bf16.msra.mxu0 %v5612
  %7552 = vmatpush.bf16.msra.mxu0 %v5604
  %7553 = vmatpush.bf16.msra.mxu0 %v5596
  %7554 = vmatpush.bf16.msra.mxu0 %v5588
  %7555 = vmatpush.bf16.msra.mxu0 %v5580
  %7556 = vmatpush.bf16.msra.mxu0 %v5572
  %7557 = vmatpush.bf16.msra.mxu0 %v5564
  %7558 = vmatpush.bf16.msra.mxu0 %v5556
  %7559 = vmatmul.bf16.gmra.mxu0 %v7511
  %v7560 = vpop.f32.mrf.mxu0
  %v7561 = vadd.f32 %v7548, %v7560
  %v7562 = vpop.f32.mrf.mxu0
  %7563 = vdwg.mxu0
  %7564 = vmatpush.bf16.msra.mxu0 %v5549
  %7565 = vmatpush.bf16.msra.mxu0 %v5541
  %7566 = vmatpush.bf16.msra.mxu0 %v5533
  %7567 = vmatpush.bf16.msra.mxu0 %v5525
  %7568 = vmatpush.bf16.msra.mxu0 %v5517
  %7569 = vmatpush.bf16.msra.mxu0 %v5509
  %7570 = vmatpush.bf16.msra.mxu0 %v5501
  %7571 = vmatpush.bf16.msra.mxu0 %v5493
  %7572 = vmatmul.bf16.gmra.mxu0 %v7510
  %v7573 = vpop.f32.mrf.mxu0
  %v7574 = vadd.f32 0.0, %v7573
  %v7575 = vpop.f32.mrf.mxu0
  %7576 = vdwg.mxu0
  %7577 = vmatpush.bf16.msra.mxu0 %v5613
  %7578 = vmatpush.bf16.msra.mxu0 %v5605
  %7579 = vmatpush.bf16.msra.mxu0 %v5597
  %7580 = vmatpush.bf16.msra.mxu0 %v5589
  %7581 = vmatpush.bf16.msra.mxu0 %v5581
  %7582 = vmatpush.bf16.msra.mxu0 %v5573
  %7583 = vmatpush.bf16.msra.mxu0 %v5565
  %7584 = vmatpush.bf16.msra.mxu0 %v5557
  %7585 = vmatmul.bf16.gmra.mxu0 %v7511
  %v7586 = vpop.f32.mrf.mxu0
  %v7587 = vadd.f32 %v7574, %v7586
  %v7588 = vpop.f32.mrf.mxu0
  %7589 = vdwg.mxu0
  %7590 = vmatpush.bf16.msra.mxu0 %v5550
  %7591 = vmatpush.bf16.msra.mxu0 %v5542
  %7592 = vmatpush.bf16.msra.mxu0 %v5534
  %7593 = vmatpush.bf16.msra.mxu0 %v5526
  %7594 = vmatpush.bf16.msra.mxu0 %v5518
  %7595 = vmatpush.bf16.msra.mxu0 %v5510
  %7596 = vmatpush.bf16.msra.mxu0 %v5502
  %7597 = vmatpush.bf16.msra.mxu0 %v5494
  %7598 = vmatmul.bf16.gmra.mxu0 %v7510
  %v7599 = vpop.f32.mrf.mxu0
  %v7600 = vadd.f32 0.0, %v7599
  %v7601 = vpop.f32.mrf.mxu0
  %7602 = vdwg.mxu0
  %7603 = vmatpush.bf16.msra.mxu0 %v5614
  %7604 = vmatpush.bf16.msra.mxu0 %v5606
  %7605 = vmatpush.bf16.msra.mxu0 %v5598
  %7606 = vmatpush.bf16.msra.mxu0 %v5590
  %7607 = vmatpush.bf16.msra.mxu0 %v5582
  %7608 = vmatpush.bf16.msra.mxu0 %v5574
  %7609 = vmatpush.bf16.msra.mxu0 %v5566
  %7610 = vmatpush.bf16.msra.mxu0 %v5558
  %7611 = vmatmul.bf16.gmra.mxu0 %v7511
  %v7612 = vpop.f32.mrf.mxu0
  %v7613 = vadd.f32 %v7600, %v7612
  %v7614 = vpop.f32.mrf.mxu0
  %7615 = vdwg.mxu0
  %7616 = vmatpush.bf16.msra.mxu0 %v5551
  %7617 = vmatpush.bf16.msra.mxu0 %v5543
  %7618 = vmatpush.bf16.msra.mxu0 %v5535
  %7619 = vmatpush.bf16.msra.mxu0 %v5527
  %7620 = vmatpush.bf16.msra.mxu0 %v5519
  %7621 = vmatpush.bf16.msra.mxu0 %v5511
  %7622 = vmatpush.bf16.msra.mxu0 %v5503
  %7623 = vmatpush.bf16.msra.mxu0 %v5495
  %7624 = vmatmul.bf16.gmra.mxu0 %v7510
  %v7625 = vpop.f32.mrf.mxu0
  %v7626 = vadd.f32 0.0, %v7625
  %v7627 = vpop.f32.mrf.mxu0
  %7628 = vdwg.mxu0
  %7629 = vmatpush.bf16.msra.mxu0 %v5615
  %7630 = vmatpush.bf16.msra.mxu0 %v5607
  %7631 = vmatpush.bf16.msra.mxu0 %v5599
  %7632 = vmatpush.bf16.msra.mxu0 %v5591
  %7633 = vmatpush.bf16.msra.mxu0 %v5583
  %7634 = vmatpush.bf16.msra.mxu0 %v5575
  %7635 = vmatpush.bf16.msra.mxu0 %v5567
  %7636 = vmatpush.bf16.msra.mxu0 %v5559
  %7637 = vmatmul.bf16.gmra.mxu0 %v7511
  %v7638 = vpop.f32.mrf.mxu0
  %v7639 = vadd.f32 %v7626, %v7638
  %v7640 = vpop.f32.mrf.mxu0
  %7641 = vdwg.mxu0
  %7642 = vmatpush.bf16.msra.mxu0 %v5552
  %7643 = vmatpush.bf16.msra.mxu0 %v5544
  %7644 = vmatpush.bf16.msra.mxu0 %v5536
  %7645 = vmatpush.bf16.msra.mxu0 %v5528
  %7646 = vmatpush.bf16.msra.mxu0 %v5520
  %7647 = vmatpush.bf16.msra.mxu0 %v5512
  %7648 = vmatpush.bf16.msra.mxu0 %v5504
  %7649 = vmatpush.bf16.msra.mxu0 %v5496
  %7650 = vmatmul.bf16.gmra.mxu0 %v7510
  %v7651 = vpop.f32.mrf.mxu0
  %v7652 = vadd.f32 0.0, %v7651
  %v7653 = vpop.f32.mrf.mxu0
  %7654 = vdwg.mxu0
  %7655 = vmatpush.bf16.msra.mxu0 %v5616
  %7656 = vmatpush.bf16.msra.mxu0 %v5608
  %7657 = vmatpush.bf16.msra.mxu0 %v5600
  %7658 = vmatpush.bf16.msra.mxu0 %v5592
  %7659 = vmatpush.bf16.msra.mxu0 %v5584
  %7660 = vmatpush.bf16.msra.mxu0 %v5576
  %7661 = vmatpush.bf16.msra.mxu0 %v5568
  %7662 = vmatpush.bf16.msra.mxu0 %v5560
  %7663 = vmatmul.bf16.gmra.mxu0 %v7511
  %v7664 = vpop.f32.mrf.mxu0
  %v7665 = vadd.f32 %v7652, %v7664
  %v7666 = vpop.f32.mrf.mxu0
  %7667 = vdwg.mxu0
  %7668 = vmatpush.bf16.msra.mxu0 %v5553
  %7669 = vmatpush.bf16.msra.mxu0 %v5545
  %7670 = vmatpush.bf16.msra.mxu0 %v5537
  %7671 = vmatpush.bf16.msra.mxu0 %v5529
  %7672 = vmatpush.bf16.msra.mxu0 %v5521
  %7673 = vmatpush.bf16.msra.mxu0 %v5513
  %7674 = vmatpush.bf16.msra.mxu0 %v5505
  %7675 = vmatpush.bf16.msra.mxu0 %v5497
  %7676 = vmatmul.bf16.gmra.mxu0 %v7510
  %v7677 = vpop.f32.mrf.mxu0
  %v7678 = vadd.f32 0.0, %v7677
  %v7679 = vpop.f32.mrf.mxu0
  %7680 = vdwg.mxu0
  %7681 = vmatpush.bf16.msra.mxu0 %v5617
  %7682 = vmatpush.bf16.msra.mxu0 %v5609
  %7683 = vmatpush.bf16.msra.mxu0 %v5601
  %7684 = vmatpush.bf16.msra.mxu0 %v5593
  %7685 = vmatpush.bf16.msra.mxu0 %v5585
  %7686 = vmatpush.bf16.msra.mxu0 %v5577
  %7687 = vmatpush.bf16.msra.mxu0 %v5569
  %7688 = vmatpush.bf16.msra.mxu0 %v5561
  %7689 = vmatmul.bf16.gmra.mxu0 %v7511
  %v7690 = vpop.f32.mrf.mxu0
  %v7691 = vadd.f32 %v7678, %v7690
  %v7692 = vpop.f32.mrf.mxu0
  %7693 = vdwg.mxu0
  %7694 = vmatpush.bf16.msra.mxu0 %v5554
  %7695 = vmatpush.bf16.msra.mxu0 %v5546
  %7696 = vmatpush.bf16.msra.mxu0 %v5538
  %7697 = vmatpush.bf16.msra.mxu0 %v5530
  %7698 = vmatpush.bf16.msra.mxu0 %v5522
  %7699 = vmatpush.bf16.msra.mxu0 %v5514
  %7700 = vmatpush.bf16.msra.mxu0 %v5506
  %7701 = vmatpush.bf16.msra.mxu0 %v5498
  %7702 = vmatmul.bf16.gmra.mxu0 %v7510
  %v7703 = vpop.f32.mrf.mxu0
  %v7704 = vadd.f32 0.0, %v7703
  %v7705 = vpop.f32.mrf.mxu0
  %7706 = vdwg.mxu0
  %7707 = vmatpush.bf16.msra.mxu0 %v5618
  %7708 = vmatpush.bf16.msra.mxu0 %v5610
  %7709 = vmatpush.bf16.msra.mxu0 %v5602
  %7710 = vmatpush.bf16.msra.mxu0 %v5594
  %7711 = vmatpush.bf16.msra.mxu0 %v5586
  %7712 = vmatpush.bf16.msra.mxu0 %v5578
  %7713 = vmatpush.bf16.msra.mxu0 %v5570
  %7714 = vmatpush.bf16.msra.mxu0 %v5562
  %7715 = vmatmul.bf16.gmra.mxu0 %v7511
  %v7716 = vpop.f32.mrf.mxu0
  %v7717 = vadd.f32 %v7704, %v7716
  %v7718 = vpop.f32.mrf.mxu0
  %7719 = vdwg.mxu0
  %v7720 = vadd.f32 %v7502, %v7535
  %v7721 = vadd.f32 %v7503, %v7561
  %v7722 = vadd.f32 %v7504, %v7587
  %v7723 = vadd.f32 %v7505, %v7613
  %v7724 = vadd.f32 %v7506, %v7639
  %v7725 = vadd.f32 %v7507, %v7665
  %v7726 = vadd.f32 %v7508, %v7691
  %v7727 = vadd.f32 %v7509, %v7717
  %v7728 = vxor.u32 %v7720, 2147483648
  %v7729 = vxor.u32 %v7721, 2147483648
  %v7730 = vmul.f32 %v7728, 1.442695
  %v7731 = vpow.pop %v7730
  %v7732 = vmul.f32 %v7729, 1.442695
  %v7733 = vpow.pop %v7732
  %v7734 = vadd.f32 %v7731, 1.0
  %v7735 = vadd.f32 %v7733, 1.0
  %v7736 = vrcp.pop %v7734
  %v7737 = vmul.f32 %v7734, %v7736
  %v7738 = vsub.f32 1.0, %v7737
  %v7739 = vmul.f32 %v7736, %v7738
  %v7740 = vadd.f32 %v7736, %v7739
  %vm7741 = vweird.f32 %v7734
  %vm7742 = vweird.f32 %v7736
  %vm7743 = vmor %vm7741, %vm7742
  %v7744 = vsel %vm7743, %v7736, %v7740
  %v7745 = vand.u32 2147483647, %v7734
  %vm7746 = vcmp.eq.f32.partialorder %v7745, 8.507059e+37
  %v7747 = vand.u32 %v7734, 2147483648
  %v7748 = vor.u32 1.1754944e-38, %v7747
  %v7749 = vsel %vm7746, %v7748, %v7744
  %v7750 = vmul.f32 1.0, %v7749
  %v7751 = vrcp.pop %v7735
  %v7752 = vmul.f32 %v7735, %v7751
  %v7753 = vsub.f32 1.0, %v7752
  %v7754 = vmul.f32 %v7751, %v7753
  %v7755 = vadd.f32 %v7751, %v7754
  %vm7756 = vweird.f32 %v7735
  %vm7757 = vweird.f32 %v7751
  %vm7758 = vmor %vm7756, %vm7757
  %v7759 = vsel %vm7758, %v7751, %v7755
  %v7760 = vand.u32 2147483647, %v7735
  %vm7761 = vcmp.eq.f32.partialorder %v7760, 8.507059e+37
  %v7762 = vand.u32 %v7735, 2147483648
  %v7763 = vor.u32 1.1754944e-38, %v7762
  %v7764 = vsel %vm7761, %v7763, %v7759
  %v7765 = vmul.f32 1.0, %v7764
  %v7766 = vxor.u32 %v7722, 2147483648
  %v7767 = vxor.u32 %v7723, 2147483648
  %v7768 = vmul.f32 %v7766, 1.442695
  %v7769 = vpow.pop %v7768
  %v7770 = vmul.f32 %v7767, 1.442695
  %v7771 = vpow.pop %v7770
  %v7772 = vadd.f32 %v7769, 1.0
  %v7773 = vadd.f32 %v7771, 1.0
  %v7774 = vrcp.pop %v7772
  %v7775 = vmul.f32 %v7772, %v7774
  %v7776 = vsub.f32 1.0, %v7775
  %v7777 = vmul.f32 %v7774, %v7776
  %v7778 = vadd.f32 %v7774, %v7777
  %vm7779 = vweird.f32 %v7772
  %vm7780 = vweird.f32 %v7774
  %vm7781 = vmor %vm7779, %vm7780
  %v7782 = vsel %vm7781, %v7774, %v7778
  %v7783 = vand.u32 2147483647, %v7772
  %vm7784 = vcmp.eq.f32.partialorder %v7783, 8.507059e+37
  %v7785 = vand.u32 %v7772, 2147483648
  %v7786 = vor.u32 1.1754944e-38, %v7785
  %v7787 = vsel %vm7784, %v7786, %v7782
  %v7788 = vmul.f32 1.0, %v7787
  %v7789 = vrcp.pop %v7773
  %v7790 = vmul.f32 %v7773, %v7789
  %v7791 = vsub.f32 1.0, %v7790
  %v7792 = vmul.f32 %v7789, %v7791
  %v7793 = vadd.f32 %v7789, %v7792
  %vm7794 = vweird.f32 %v7773
  %vm7795 = vweird.f32 %v7789
  %vm7796 = vmor %vm7794, %vm7795
  %v7797 = vsel %vm7796, %v7789, %v7793
  %v7798 = vand.u32 2147483647, %v7773
  %vm7799 = vcmp.eq.f32.partialorder %v7798, 8.507059e+37
  %v7800 = vand.u32 %v7773, 2147483648
  %v7801 = vor.u32 1.1754944e-38, %v7800
  %v7802 = vsel %vm7799, %v7801, %v7797
  %v7803 = vmul.f32 1.0, %v7802
  %v7804 = vtanh.pop %v7724
  %v7805 = vtanh.pop %v7725
  %v7806 = vxor.u32 %v7726, 2147483648
  %v7807 = vxor.u32 %v7727, 2147483648
  %v7808 = vmul.f32 %v7806, 1.442695
  %v7809 = vpow.pop %v7808
  %v7810 = vmul.f32 %v7807, 1.442695
  %v7811 = vpow.pop %v7810
  %v7812 = vadd.f32 %v7809, 1.0
  %v7813 = vadd.f32 %v7811, 1.0
  %v7814 = vrcp.pop %v7812
  %v7815 = vmul.f32 %v7812, %v7814
  %v7816 = vsub.f32 1.0, %v7815
  %v7817 = vmul.f32 %v7814, %v7816
  %v7818 = vadd.f32 %v7814, %v7817
  %vm7819 = vweird.f32 %v7812
  %vm7820 = vweird.f32 %v7814
  %vm7821 = vmor %vm7819, %vm7820
  %v7822 = vsel %vm7821, %v7814, %v7818
  %v7823 = vand.u32 2147483647, %v7812
  %vm7824 = vcmp.eq.f32.partialorder %v7823, 8.507059e+37
  %v7825 = vand.u32 %v7812, 2147483648
  %v7826 = vor.u32 1.1754944e-38, %v7825
  %v7827 = vsel %vm7824, %v7826, %v7822
  %v7828 = vmul.f32 1.0, %v7827
  %v7829 = vrcp.pop %v7813
  %v7830 = vmul.f32 %v7813, %v7829
  %v7831 = vsub.f32 1.0, %v7830
  %v7832 = vmul.f32 %v7829, %v7831
  %v7833 = vadd.f32 %v7829, %v7832
  %vm7834 = vweird.f32 %v7813
  %vm7835 = vweird.f32 %v7829
  %vm7836 = vmor %vm7834, %vm7835
  %v7837 = vsel %vm7836, %v7829, %v7833
  %v7838 = vand.u32 2147483647, %v7813
  %vm7839 = vcmp.eq.f32.partialorder %v7838, 8.507059e+37
  %v7840 = vand.u32 %v7813, 2147483648
  %v7841 = vor.u32 1.1754944e-38, %v7840
  %v7842 = vsel %vm7839, %v7841, %v7837
  %v7843 = vmul.f32 1.0, %v7842
  %v7844 = vmul.f32 %v7788, %v7495
  %v7845 = vmul.f32 %v7803, %v7496
  %v7846 = vmul.f32 %v7750, %v7804
  %v7847 = vmul.f32 %v7765, %v7805
  %v7848 = vadd.f32 %v7844, %v7846
  %v7849 = vadd.f32 %v7845, %v7847
  %v7850 = vtanh.pop %v7848
  %v7851 = vtanh.pop %v7849
  %v7852 = vmul.f32 %v7828, %v7850
  %v7853 = vmul.f32 %v7843, %v7851
  %s7854 = scalar_lea.vmem [#allocation3], 384
  %v7855 = vld [vmem:[%s7854] sm:$0xff]
  %v7856 = vld [vmem:[%s7854 + $0x8] sm:$0xff]
  %v7857 = vld [vmem:[%s7854 + $0x10] sm:$0xff]
  %v7858 = vld [vmem:[%s7854 + $0x18] sm:$0xff]
  %v7859 = vld [vmem:[%s7854 + $0x20] sm:$0xff]
  %v7860 = vld [vmem:[%s7854 + $0x28] sm:$0xff]
  %v7861 = vld [vmem:[%s7854 + $0x30] sm:$0xff]
  %v7862 = vld [vmem:[%s7854 + $0x38] sm:$0xff]
  %v7863 = vpack.c.bf16 %v7852, %v7852
  %v7864 = vpack.c.bf16 %v7853, %v7853
  %7865 = vmatpush.bf16.msra.mxu0 %v5547
  %7866 = vmatpush.bf16.msra.mxu0 %v5539
  %7867 = vmatpush.bf16.msra.mxu0 %v5531
  %7868 = vmatpush.bf16.msra.mxu0 %v5523
  %7869 = vmatpush.bf16.msra.mxu0 %v5515
  %7870 = vmatpush.bf16.msra.mxu0 %v5507
  %7871 = vmatpush.bf16.msra.mxu0 %v5499
  %7872 = vmatpush.bf16.msra.mxu0 %v5491
  %7873 = vmatmul.bf16.gmra.mxu0 %v7863
  %v7874 = vpop.f32.mrf.mxu0
  %v7875 = vadd.f32 0.0, %v7874
  %v7876 = vpop.f32.mrf.mxu0
  %7877 = vdwg.mxu0
  %7878 = vmatpush.bf16.msra.mxu0 %v5611
  %7879 = vmatpush.bf16.msra.mxu0 %v5603
  %7880 = vmatpush.bf16.msra.mxu0 %v5595
  %7881 = vmatpush.bf16.msra.mxu0 %v5587
  %7882 = vmatpush.bf16.msra.mxu0 %v5579
  %7883 = vmatpush.bf16.msra.mxu0 %v5571
  %7884 = vmatpush.bf16.msra.mxu0 %v5563
  %7885 = vmatpush.bf16.msra.mxu0 %v5555
  %7886 = vmatmul.bf16.gmra.mxu0 %v7864
  %v7887 = vpop.f32.mrf.mxu0
  %v7888 = vadd.f32 %v7875, %v7887
  %v7889 = vpop.f32.mrf.mxu0
  %7890 = vdwg.mxu0
  %7891 = vmatpush.bf16.msra.mxu0 %v5548
  %7892 = vmatpush.bf16.msra.mxu0 %v5540
  %7893 = vmatpush.bf16.msra.mxu0 %v5532
  %7894 = vmatpush.bf16.msra.mxu0 %v5524
  %7895 = vmatpush.bf16.msra.mxu0 %v5516
  %7896 = vmatpush.bf16.msra.mxu0 %v5508
  %7897 = vmatpush.bf16.msra.mxu0 %v5500
  %7898 = vmatpush.bf16.msra.mxu0 %v5492
  %7899 = vmatmul.bf16.gmra.mxu0 %v7863
  %v7900 = vpop.f32.mrf.mxu0
  %v7901 = vadd.f32 0.0, %v7900
  %v7902 = vpop.f32.mrf.mxu0
  %7903 = vdwg.mxu0
  %7904 = vmatpush.bf16.msra.mxu0 %v5612
  %7905 = vmatpush.bf16.msra.mxu0 %v5604
  %7906 = vmatpush.bf16.msra.mxu0 %v5596
  %7907 = vmatpush.bf16.msra.mxu0 %v5588
  %7908 = vmatpush.bf16.msra.mxu0 %v5580
  %7909 = vmatpush.bf16.msra.mxu0 %v5572
  %7910 = vmatpush.bf16.msra.mxu0 %v5564
  %7911 = vmatpush.bf16.msra.mxu0 %v5556
  %7912 = vmatmul.bf16.gmra.mxu0 %v7864
  %v7913 = vpop.f32.mrf.mxu0
  %v7914 = vadd.f32 %v7901, %v7913
  %v7915 = vpop.f32.mrf.mxu0
  %7916 = vdwg.mxu0
  %7917 = vmatpush.bf16.msra.mxu0 %v5549
  %7918 = vmatpush.bf16.msra.mxu0 %v5541
  %7919 = vmatpush.bf16.msra.mxu0 %v5533
  %7920 = vmatpush.bf16.msra.mxu0 %v5525
  %7921 = vmatpush.bf16.msra.mxu0 %v5517
  %7922 = vmatpush.bf16.msra.mxu0 %v5509
  %7923 = vmatpush.bf16.msra.mxu0 %v5501
  %7924 = vmatpush.bf16.msra.mxu0 %v5493
  %7925 = vmatmul.bf16.gmra.mxu0 %v7863
  %v7926 = vpop.f32.mrf.mxu0
  %v7927 = vadd.f32 0.0, %v7926
  %v7928 = vpop.f32.mrf.mxu0
  %7929 = vdwg.mxu0
  %7930 = vmatpush.bf16.msra.mxu0 %v5613
  %7931 = vmatpush.bf16.msra.mxu0 %v5605
  %7932 = vmatpush.bf16.msra.mxu0 %v5597
  %7933 = vmatpush.bf16.msra.mxu0 %v5589
  %7934 = vmatpush.bf16.msra.mxu0 %v5581
  %7935 = vmatpush.bf16.msra.mxu0 %v5573
  %7936 = vmatpush.bf16.msra.mxu0 %v5565
  %7937 = vmatpush.bf16.msra.mxu0 %v5557
  %7938 = vmatmul.bf16.gmra.mxu0 %v7864
  %v7939 = vpop.f32.mrf.mxu0
  %v7940 = vadd.f32 %v7927, %v7939
  %v7941 = vpop.f32.mrf.mxu0
  %7942 = vdwg.mxu0
  %7943 = vmatpush.bf16.msra.mxu0 %v5550
  %7944 = vmatpush.bf16.msra.mxu0 %v5542
  %7945 = vmatpush.bf16.msra.mxu0 %v5534
  %7946 = vmatpush.bf16.msra.mxu0 %v5526
  %7947 = vmatpush.bf16.msra.mxu0 %v5518
  %7948 = vmatpush.bf16.msra.mxu0 %v5510
  %7949 = vmatpush.bf16.msra.mxu0 %v5502
  %7950 = vmatpush.bf16.msra.mxu0 %v5494
  %7951 = vmatmul.bf16.gmra.mxu0 %v7863
  %v7952 = vpop.f32.mrf.mxu0
  %v7953 = vadd.f32 0.0, %v7952
  %v7954 = vpop.f32.mrf.mxu0
  %7955 = vdwg.mxu0
  %7956 = vmatpush.bf16.msra.mxu0 %v5614
  %7957 = vmatpush.bf16.msra.mxu0 %v5606
  %7958 = vmatpush.bf16.msra.mxu0 %v5598
  %7959 = vmatpush.bf16.msra.mxu0 %v5590
  %7960 = vmatpush.bf16.msra.mxu0 %v5582
  %7961 = vmatpush.bf16.msra.mxu0 %v5574
  %7962 = vmatpush.bf16.msra.mxu0 %v5566
  %7963 = vmatpush.bf16.msra.mxu0 %v5558
  %7964 = vmatmul.bf16.gmra.mxu0 %v7864
  %v7965 = vpop.f32.mrf.mxu0
  %v7966 = vadd.f32 %v7953, %v7965
  %v7967 = vpop.f32.mrf.mxu0
  %7968 = vdwg.mxu0
  %7969 = vmatpush.bf16.msra.mxu0 %v5551
  %7970 = vmatpush.bf16.msra.mxu0 %v5543
  %7971 = vmatpush.bf16.msra.mxu0 %v5535
  %7972 = vmatpush.bf16.msra.mxu0 %v5527
  %7973 = vmatpush.bf16.msra.mxu0 %v5519
  %7974 = vmatpush.bf16.msra.mxu0 %v5511
  %7975 = vmatpush.bf16.msra.mxu0 %v5503
  %7976 = vmatpush.bf16.msra.mxu0 %v5495
  %7977 = vmatmul.bf16.gmra.mxu0 %v7863
  %v7978 = vpop.f32.mrf.mxu0
  %v7979 = vadd.f32 0.0, %v7978
  %v7980 = vpop.f32.mrf.mxu0
  %7981 = vdwg.mxu0
  %7982 = vmatpush.bf16.msra.mxu0 %v5615
  %7983 = vmatpush.bf16.msra.mxu0 %v5607
  %7984 = vmatpush.bf16.msra.mxu0 %v5599
  %7985 = vmatpush.bf16.msra.mxu0 %v5591
  %7986 = vmatpush.bf16.msra.mxu0 %v5583
  %7987 = vmatpush.bf16.msra.mxu0 %v5575
  %7988 = vmatpush.bf16.msra.mxu0 %v5567
  %7989 = vmatpush.bf16.msra.mxu0 %v5559
  %7990 = vmatmul.bf16.gmra.mxu0 %v7864
  %v7991 = vpop.f32.mrf.mxu0
  %v7992 = vadd.f32 %v7979, %v7991
  %v7993 = vpop.f32.mrf.mxu0
  %7994 = vdwg.mxu0
  %7995 = vmatpush.bf16.msra.mxu0 %v5552
  %7996 = vmatpush.bf16.msra.mxu0 %v5544
  %7997 = vmatpush.bf16.msra.mxu0 %v5536
  %7998 = vmatpush.bf16.msra.mxu0 %v5528
  %7999 = vmatpush.bf16.msra.mxu0 %v5520
  %8000 = vmatpush.bf16.msra.mxu0 %v5512
  %8001 = vmatpush.bf16.msra.mxu0 %v5504
  %8002 = vmatpush.bf16.msra.mxu0 %v5496
  %8003 = vmatmul.bf16.gmra.mxu0 %v7863
  %v8004 = vpop.f32.mrf.mxu0
  %v8005 = vadd.f32 0.0, %v8004
  %v8006 = vpop.f32.mrf.mxu0
  %8007 = vdwg.mxu0
  %8008 = vmatpush.bf16.msra.mxu0 %v5616
  %8009 = vmatpush.bf16.msra.mxu0 %v5608
  %8010 = vmatpush.bf16.msra.mxu0 %v5600
  %8011 = vmatpush.bf16.msra.mxu0 %v5592
  %8012 = vmatpush.bf16.msra.mxu0 %v5584
  %8013 = vmatpush.bf16.msra.mxu0 %v5576
  %8014 = vmatpush.bf16.msra.mxu0 %v5568
  %8015 = vmatpush.bf16.msra.mxu0 %v5560
  %8016 = vmatmul.bf16.gmra.mxu0 %v7864
  %v8017 = vpop.f32.mrf.mxu0
  %v8018 = vadd.f32 %v8005, %v8017
  %v8019 = vpop.f32.mrf.mxu0
  %8020 = vdwg.mxu0
  %8021 = vmatpush.bf16.msra.mxu0 %v5553
  %8022 = vmatpush.bf16.msra.mxu0 %v5545
  %8023 = vmatpush.bf16.msra.mxu0 %v5537
  %8024 = vmatpush.bf16.msra.mxu0 %v5529
  %8025 = vmatpush.bf16.msra.mxu0 %v5521
  %8026 = vmatpush.bf16.msra.mxu0 %v5513
  %8027 = vmatpush.bf16.msra.mxu0 %v5505
  %8028 = vmatpush.bf16.msra.mxu0 %v5497
  %8029 = vmatmul.bf16.gmra.mxu0 %v7863
  %v8030 = vpop.f32.mrf.mxu0
  %v8031 = vadd.f32 0.0, %v8030
  %v8032 = vpop.f32.mrf.mxu0
  %8033 = vdwg.mxu0
  %8034 = vmatpush.bf16.msra.mxu0 %v5617
  %8035 = vmatpush.bf16.msra.mxu0 %v5609
  %8036 = vmatpush.bf16.msra.mxu0 %v5601
  %8037 = vmatpush.bf16.msra.mxu0 %v5593
  %8038 = vmatpush.bf16.msra.mxu0 %v5585
  %8039 = vmatpush.bf16.msra.mxu0 %v5577
  %8040 = vmatpush.bf16.msra.mxu0 %v5569
  %8041 = vmatpush.bf16.msra.mxu0 %v5561
  %8042 = vmatmul.bf16.gmra.mxu0 %v7864
  %v8043 = vpop.f32.mrf.mxu0
  %v8044 = vadd.f32 %v8031, %v8043
  %v8045 = vpop.f32.mrf.mxu0
  %8046 = vdwg.mxu0
  %8047 = vmatpush.bf16.msra.mxu0 %v5554
  %8048 = vmatpush.bf16.msra.mxu0 %v5546
  %8049 = vmatpush.bf16.msra.mxu0 %v5538
  %8050 = vmatpush.bf16.msra.mxu0 %v5530
  %8051 = vmatpush.bf16.msra.mxu0 %v5522
  %8052 = vmatpush.bf16.msra.mxu0 %v5514
  %8053 = vmatpush.bf16.msra.mxu0 %v5506
  %8054 = vmatpush.bf16.msra.mxu0 %v5498
  %8055 = vmatmul.bf16.gmra.mxu0 %v7863
  %v8056 = vpop.f32.mrf.mxu0
  %v8057 = vadd.f32 0.0, %v8056
  %v8058 = vpop.f32.mrf.mxu0
  %8059 = vdwg.mxu0
  %8060 = vmatpush.bf16.msra.mxu0 %v5618
  %8061 = vmatpush.bf16.msra.mxu0 %v5610
  %8062 = vmatpush.bf16.msra.mxu0 %v5602
  %8063 = vmatpush.bf16.msra.mxu0 %v5594
  %8064 = vmatpush.bf16.msra.mxu0 %v5586
  %8065 = vmatpush.bf16.msra.mxu0 %v5578
  %8066 = vmatpush.bf16.msra.mxu0 %v5570
  %8067 = vmatpush.bf16.msra.mxu0 %v5562
  %8068 = vmatmul.bf16.gmra.mxu0 %v7864
  %v8069 = vpop.f32.mrf.mxu0
  %v8070 = vadd.f32 %v8057, %v8069
  %v8071 = vpop.f32.mrf.mxu0
  %8072 = vdwg.mxu0
  %v8073 = vadd.f32 %v7855, %v7888
  %v8074 = vadd.f32 %v7856, %v7914
  %v8075 = vadd.f32 %v7857, %v7940
  %v8076 = vadd.f32 %v7858, %v7966
  %v8077 = vadd.f32 %v7859, %v7992
  %v8078 = vadd.f32 %v7860, %v8018
  %v8079 = vadd.f32 %v7861, %v8044
  %v8080 = vadd.f32 %v7862, %v8070
  %v8081 = vxor.u32 %v8073, 2147483648
  %v8082 = vxor.u32 %v8074, 2147483648
  %v8083 = vmul.f32 %v8081, 1.442695
  %v8084 = vpow.pop %v8083
  %v8085 = vmul.f32 %v8082, 1.442695
  %v8086 = vpow.pop %v8085
  %v8087 = vadd.f32 %v8084, 1.0
  %v8088 = vadd.f32 %v8086, 1.0
  %v8089 = vrcp.pop %v8087
  %v8090 = vmul.f32 %v8087, %v8089
  %v8091 = vsub.f32 1.0, %v8090
  %v8092 = vmul.f32 %v8089, %v8091
  %v8093 = vadd.f32 %v8089, %v8092
  %vm8094 = vweird.f32 %v8087
  %vm8095 = vweird.f32 %v8089
  %vm8096 = vmor %vm8094, %vm8095
  %v8097 = vsel %vm8096, %v8089, %v8093
  %v8098 = vand.u32 2147483647, %v8087
  %vm8099 = vcmp.eq.f32.partialorder %v8098, 8.507059e+37
  %v8100 = vand.u32 %v8087, 2147483648
  %v8101 = vor.u32 1.1754944e-38, %v8100
  %v8102 = vsel %vm8099, %v8101, %v8097
  %v8103 = vmul.f32 1.0, %v8102
  %v8104 = vrcp.pop %v8088
  %v8105 = vmul.f32 %v8088, %v8104
  %v8106 = vsub.f32 1.0, %v8105
  %v8107 = vmul.f32 %v8104, %v8106
  %v8108 = vadd.f32 %v8104, %v8107
  %vm8109 = vweird.f32 %v8088
  %vm8110 = vweird.f32 %v8104
  %vm8111 = vmor %vm8109, %vm8110
  %v8112 = vsel %vm8111, %v8104, %v8108
  %v8113 = vand.u32 2147483647, %v8088
  %vm8114 = vcmp.eq.f32.partialorder %v8113, 8.507059e+37
  %v8115 = vand.u32 %v8088, 2147483648
  %v8116 = vor.u32 1.1754944e-38, %v8115
  %v8117 = vsel %vm8114, %v8116, %v8112
  %v8118 = vmul.f32 1.0, %v8117
  %v8119 = vxor.u32 %v8075, 2147483648
  %v8120 = vxor.u32 %v8076, 2147483648
  %v8121 = vmul.f32 %v8119, 1.442695
  %v8122 = vpow.pop %v8121
  %v8123 = vmul.f32 %v8120, 1.442695
  %v8124 = vpow.pop %v8123
  %v8125 = vadd.f32 %v8122, 1.0
  %v8126 = vadd.f32 %v8124, 1.0
  %v8127 = vrcp.pop %v8125
  %v8128 = vmul.f32 %v8125, %v8127
  %v8129 = vsub.f32 1.0, %v8128
  %v8130 = vmul.f32 %v8127, %v8129
  %v8131 = vadd.f32 %v8127, %v8130
  %vm8132 = vweird.f32 %v8125
  %vm8133 = vweird.f32 %v8127
  %vm8134 = vmor %vm8132, %vm8133
  %v8135 = vsel %vm8134, %v8127, %v8131
  %v8136 = vand.u32 2147483647, %v8125
  %vm8137 = vcmp.eq.f32.partialorder %v8136, 8.507059e+37
  %v8138 = vand.u32 %v8125, 2147483648
  %v8139 = vor.u32 1.1754944e-38, %v8138
  %v8140 = vsel %vm8137, %v8139, %v8135
  %v8141 = vmul.f32 1.0, %v8140
  %v8142 = vrcp.pop %v8126
  %v8143 = vmul.f32 %v8126, %v8142
  %v8144 = vsub.f32 1.0, %v8143
  %v8145 = vmul.f32 %v8142, %v8144
  %v8146 = vadd.f32 %v8142, %v8145
  %vm8147 = vweird.f32 %v8126
  %vm8148 = vweird.f32 %v8142
  %vm8149 = vmor %vm8147, %vm8148
  %v8150 = vsel %vm8149, %v8142, %v8146
  %v8151 = vand.u32 2147483647, %v8126
  %vm8152 = vcmp.eq.f32.partialorder %v8151, 8.507059e+37
  %v8153 = vand.u32 %v8126, 2147483648
  %v8154 = vor.u32 1.1754944e-38, %v8153
  %v8155 = vsel %vm8152, %v8154, %v8150
  %v8156 = vmul.f32 1.0, %v8155
  %v8157 = vtanh.pop %v8077
  %v8158 = vtanh.pop %v8078
  %v8159 = vxor.u32 %v8079, 2147483648
  %v8160 = vxor.u32 %v8080, 2147483648
  %v8161 = vmul.f32 %v8159, 1.442695
  %v8162 = vpow.pop %v8161
  %v8163 = vmul.f32 %v8160, 1.442695
  %v8164 = vpow.pop %v8163
  %v8165 = vadd.f32 %v8162, 1.0
  %v8166 = vadd.f32 %v8164, 1.0
  %v8167 = vrcp.pop %v8165
  %v8168 = vmul.f32 %v8165, %v8167
  %v8169 = vsub.f32 1.0, %v8168
  %v8170 = vmul.f32 %v8167, %v8169
  %v8171 = vadd.f32 %v8167, %v8170
  %vm8172 = vweird.f32 %v8165
  %vm8173 = vweird.f32 %v8167
  %vm8174 = vmor %vm8172, %vm8173
  %v8175 = vsel %vm8174, %v8167, %v8171
  %v8176 = vand.u32 2147483647, %v8165
  %vm8177 = vcmp.eq.f32.partialorder %v8176, 8.507059e+37
  %v8178 = vand.u32 %v8165, 2147483648
  %v8179 = vor.u32 1.1754944e-38, %v8178
  %v8180 = vsel %vm8177, %v8179, %v8175
  %v8181 = vmul.f32 1.0, %v8180
  %v8182 = vrcp.pop %v8166
  %v8183 = vmul.f32 %v8166, %v8182
  %v8184 = vsub.f32 1.0, %v8183
  %v8185 = vmul.f32 %v8182, %v8184
  %v8186 = vadd.f32 %v8182, %v8185
  %vm8187 = vweird.f32 %v8166
  %vm8188 = vweird.f32 %v8182
  %vm8189 = vmor %vm8187, %vm8188
  %v8190 = vsel %vm8189, %v8182, %v8186
  %v8191 = vand.u32 2147483647, %v8166
  %vm8192 = vcmp.eq.f32.partialorder %v8191, 8.507059e+37
  %v8193 = vand.u32 %v8166, 2147483648
  %v8194 = vor.u32 1.1754944e-38, %v8193
  %v8195 = vsel %vm8192, %v8194, %v8190
  %v8196 = vmul.f32 1.0, %v8195
  %v8197 = vmul.f32 %v8141, %v7848
  %v8198 = vmul.f32 %v8156, %v7849
  %v8199 = vmul.f32 %v8103, %v8157
  %v8200 = vmul.f32 %v8118, %v8158
  %v8201 = vadd.f32 %v8197, %v8199
  %v8202 = vadd.f32 %v8198, %v8200
  %v8203 = vtanh.pop %v8201
  %v8204 = vtanh.pop %v8202
  %v8205 = vmul.f32 %v8181, %v8203
  %v8206 = vmul.f32 %v8196, %v8204
  %s8207 = scalar_lea.vmem [#allocation3], 448
  %v8208 = vld [vmem:[%s8207] sm:$0xff]
  %v8209 = vld [vmem:[%s8207 + $0x8] sm:$0xff]
  %v8210 = vld [vmem:[%s8207 + $0x10] sm:$0xff]
  %v8211 = vld [vmem:[%s8207 + $0x18] sm:$0xff]
  %v8212 = vld [vmem:[%s8207 + $0x20] sm:$0xff]
  %v8213 = vld [vmem:[%s8207 + $0x28] sm:$0xff]
  %v8214 = vld [vmem:[%s8207 + $0x30] sm:$0xff]
  %v8215 = vld [vmem:[%s8207 + $0x38] sm:$0xff]
  %v8216 = vpack.c.bf16 %v8205, %v8205
  %v8217 = vpack.c.bf16 %v8206, %v8206
  %8218 = vmatpush.bf16.msra.mxu0 %v5547
  %8219 = vmatpush.bf16.msra.mxu0 %v5539
  %8220 = vmatpush.bf16.msra.mxu0 %v5531
  %8221 = vmatpush.bf16.msra.mxu0 %v5523
  %8222 = vmatpush.bf16.msra.mxu0 %v5515
  %8223 = vmatpush.bf16.msra.mxu0 %v5507
  %8224 = vmatpush.bf16.msra.mxu0 %v5499
  %8225 = vmatpush.bf16.msra.mxu0 %v5491
  %8226 = vmatmul.bf16.gmra.mxu0 %v8216
  %v8227 = vpop.f32.mrf.mxu0
  %v8228 = vadd.f32 0.0, %v8227
  %v8229 = vpop.f32.mrf.mxu0
  %8230 = vdwg.mxu0
  %8231 = vmatpush.bf16.msra.mxu0 %v5611
  %8232 = vmatpush.bf16.msra.mxu0 %v5603
  %8233 = vmatpush.bf16.msra.mxu0 %v5595
  %8234 = vmatpush.bf16.msra.mxu0 %v5587
  %8235 = vmatpush.bf16.msra.mxu0 %v5579
  %8236 = vmatpush.bf16.msra.mxu0 %v5571
  %8237 = vmatpush.bf16.msra.mxu0 %v5563
  %8238 = vmatpush.bf16.msra.mxu0 %v5555
  %8239 = vmatmul.bf16.gmra.mxu0 %v8217
  %v8240 = vpop.f32.mrf.mxu0
  %v8241 = vadd.f32 %v8228, %v8240
  %v8242 = vpop.f32.mrf.mxu0
  %8243 = vdwg.mxu0
  %8244 = vmatpush.bf16.msra.mxu0 %v5548
  %8245 = vmatpush.bf16.msra.mxu0 %v5540
  %8246 = vmatpush.bf16.msra.mxu0 %v5532
  %8247 = vmatpush.bf16.msra.mxu0 %v5524
  %8248 = vmatpush.bf16.msra.mxu0 %v5516
  %8249 = vmatpush.bf16.msra.mxu0 %v5508
  %8250 = vmatpush.bf16.msra.mxu0 %v5500
  %8251 = vmatpush.bf16.msra.mxu0 %v5492
  %8252 = vmatmul.bf16.gmra.mxu0 %v8216
  %v8253 = vpop.f32.mrf.mxu0
  %v8254 = vadd.f32 0.0, %v8253
  %v8255 = vpop.f32.mrf.mxu0
  %8256 = vdwg.mxu0
  %8257 = vmatpush.bf16.msra.mxu0 %v5612
  %8258 = vmatpush.bf16.msra.mxu0 %v5604
  %8259 = vmatpush.bf16.msra.mxu0 %v5596
  %8260 = vmatpush.bf16.msra.mxu0 %v5588
  %8261 = vmatpush.bf16.msra.mxu0 %v5580
  %8262 = vmatpush.bf16.msra.mxu0 %v5572
  %8263 = vmatpush.bf16.msra.mxu0 %v5564
  %8264 = vmatpush.bf16.msra.mxu0 %v5556
  %8265 = vmatmul.bf16.gmra.mxu0 %v8217
  %v8266 = vpop.f32.mrf.mxu0
  %v8267 = vadd.f32 %v8254, %v8266
  %v8268 = vpop.f32.mrf.mxu0
  %8269 = vdwg.mxu0
  %8270 = vmatpush.bf16.msra.mxu0 %v5549
  %8271 = vmatpush.bf16.msra.mxu0 %v5541
  %8272 = vmatpush.bf16.msra.mxu0 %v5533
  %8273 = vmatpush.bf16.msra.mxu0 %v5525
  %8274 = vmatpush.bf16.msra.mxu0 %v5517
  %8275 = vmatpush.bf16.msra.mxu0 %v5509
  %8276 = vmatpush.bf16.msra.mxu0 %v5501
  %8277 = vmatpush.bf16.msra.mxu0 %v5493
  %8278 = vmatmul.bf16.gmra.mxu0 %v8216
  %v8279 = vpop.f32.mrf.mxu0
  %v8280 = vadd.f32 0.0, %v8279
  %v8281 = vpop.f32.mrf.mxu0
  %8282 = vdwg.mxu0
  %8283 = vmatpush.bf16.msra.mxu0 %v5613
  %8284 = vmatpush.bf16.msra.mxu0 %v5605
  %8285 = vmatpush.bf16.msra.mxu0 %v5597
  %8286 = vmatpush.bf16.msra.mxu0 %v5589
  %8287 = vmatpush.bf16.msra.mxu0 %v5581
  %8288 = vmatpush.bf16.msra.mxu0 %v5573
  %8289 = vmatpush.bf16.msra.mxu0 %v5565
  %8290 = vmatpush.bf16.msra.mxu0 %v5557
  %8291 = vmatmul.bf16.gmra.mxu0 %v8217
  %v8292 = vpop.f32.mrf.mxu0
  %v8293 = vadd.f32 %v8280, %v8292
  %v8294 = vpop.f32.mrf.mxu0
  %8295 = vdwg.mxu0
  %8296 = vmatpush.bf16.msra.mxu0 %v5550
  %8297 = vmatpush.bf16.msra.mxu0 %v5542
  %8298 = vmatpush.bf16.msra.mxu0 %v5534
  %8299 = vmatpush.bf16.msra.mxu0 %v5526
  %8300 = vmatpush.bf16.msra.mxu0 %v5518
  %8301 = vmatpush.bf16.msra.mxu0 %v5510
  %8302 = vmatpush.bf16.msra.mxu0 %v5502
  %8303 = vmatpush.bf16.msra.mxu0 %v5494
  %8304 = vmatmul.bf16.gmra.mxu0 %v8216
  %v8305 = vpop.f32.mrf.mxu0
  %v8306 = vadd.f32 0.0, %v8305
  %v8307 = vpop.f32.mrf.mxu0
  %8308 = vdwg.mxu0
  %8309 = vmatpush.bf16.msra.mxu0 %v5614
  %8310 = vmatpush.bf16.msra.mxu0 %v5606
  %8311 = vmatpush.bf16.msra.mxu0 %v5598
  %8312 = vmatpush.bf16.msra.mxu0 %v5590
  %8313 = vmatpush.bf16.msra.mxu0 %v5582
  %8314 = vmatpush.bf16.msra.mxu0 %v5574
  %8315 = vmatpush.bf16.msra.mxu0 %v5566
  %8316 = vmatpush.bf16.msra.mxu0 %v5558
  %8317 = vmatmul.bf16.gmra.mxu0 %v8217
  %v8318 = vpop.f32.mrf.mxu0
  %v8319 = vadd.f32 %v8306, %v8318
  %v8320 = vpop.f32.mrf.mxu0
  %8321 = vdwg.mxu0
  %8322 = vmatpush.bf16.msra.mxu0 %v5551
  %8323 = vmatpush.bf16.msra.mxu0 %v5543
  %8324 = vmatpush.bf16.msra.mxu0 %v5535
  %8325 = vmatpush.bf16.msra.mxu0 %v5527
  %8326 = vmatpush.bf16.msra.mxu0 %v5519
  %8327 = vmatpush.bf16.msra.mxu0 %v5511
  %8328 = vmatpush.bf16.msra.mxu0 %v5503
  %8329 = vmatpush.bf16.msra.mxu0 %v5495
  %8330 = vmatmul.bf16.gmra.mxu0 %v8216
  %v8331 = vpop.f32.mrf.mxu0
  %v8332 = vadd.f32 0.0, %v8331
  %v8333 = vpop.f32.mrf.mxu0
  %8334 = vdwg.mxu0
  %8335 = vmatpush.bf16.msra.mxu0 %v5615
  %8336 = vmatpush.bf16.msra.mxu0 %v5607
  %8337 = vmatpush.bf16.msra.mxu0 %v5599
  %8338 = vmatpush.bf16.msra.mxu0 %v5591
  %8339 = vmatpush.bf16.msra.mxu0 %v5583
  %8340 = vmatpush.bf16.msra.mxu0 %v5575
  %8341 = vmatpush.bf16.msra.mxu0 %v5567
  %8342 = vmatpush.bf16.msra.mxu0 %v5559
  %8343 = vmatmul.bf16.gmra.mxu0 %v8217
  %v8344 = vpop.f32.mrf.mxu0
  %v8345 = vadd.f32 %v8332, %v8344
  %v8346 = vpop.f32.mrf.mxu0
  %8347 = vdwg.mxu0
  %8348 = vmatpush.bf16.msra.mxu0 %v5552
  %8349 = vmatpush.bf16.msra.mxu0 %v5544
  %8350 = vmatpush.bf16.msra.mxu0 %v5536
  %8351 = vmatpush.bf16.msra.mxu0 %v5528
  %8352 = vmatpush.bf16.msra.mxu0 %v5520
  %8353 = vmatpush.bf16.msra.mxu0 %v5512
  %8354 = vmatpush.bf16.msra.mxu0 %v5504
  %8355 = vmatpush.bf16.msra.mxu0 %v5496
  %8356 = vmatmul.bf16.gmra.mxu0 %v8216
  %v8357 = vpop.f32.mrf.mxu0
  %v8358 = vadd.f32 0.0, %v8357
  %v8359 = vpop.f32.mrf.mxu0
  %8360 = vdwg.mxu0
  %8361 = vmatpush.bf16.msra.mxu0 %v5616
  %8362 = vmatpush.bf16.msra.mxu0 %v5608
  %8363 = vmatpush.bf16.msra.mxu0 %v5600
  %8364 = vmatpush.bf16.msra.mxu0 %v5592
  %8365 = vmatpush.bf16.msra.mxu0 %v5584
  %8366 = vmatpush.bf16.msra.mxu0 %v5576
  %8367 = vmatpush.bf16.msra.mxu0 %v5568
  %8368 = vmatpush.bf16.msra.mxu0 %v5560
  %8369 = vmatmul.bf16.gmra.mxu0 %v8217
  %v8370 = vpop.f32.mrf.mxu0
  %v8371 = vadd.f32 %v8358, %v8370
  %v8372 = vpop.f32.mrf.mxu0
  %8373 = vdwg.mxu0
  %8374 = vmatpush.bf16.msra.mxu0 %v5553
  %8375 = vmatpush.bf16.msra.mxu0 %v5545
  %8376 = vmatpush.bf16.msra.mxu0 %v5537
  %8377 = vmatpush.bf16.msra.mxu0 %v5529
  %8378 = vmatpush.bf16.msra.mxu0 %v5521
  %8379 = vmatpush.bf16.msra.mxu0 %v5513
  %8380 = vmatpush.bf16.msra.mxu0 %v5505
  %8381 = vmatpush.bf16.msra.mxu0 %v5497
  %8382 = vmatmul.bf16.gmra.mxu0 %v8216
  %v8383 = vpop.f32.mrf.mxu0
  %v8384 = vadd.f32 0.0, %v8383
  %v8385 = vpop.f32.mrf.mxu0
  %8386 = vdwg.mxu0
  %8387 = vmatpush.bf16.msra.mxu0 %v5617
  %8388 = vmatpush.bf16.msra.mxu0 %v5609
  %8389 = vmatpush.bf16.msra.mxu0 %v5601
  %8390 = vmatpush.bf16.msra.mxu0 %v5593
  %8391 = vmatpush.bf16.msra.mxu0 %v5585
  %8392 = vmatpush.bf16.msra.mxu0 %v5577
  %8393 = vmatpush.bf16.msra.mxu0 %v5569
  %8394 = vmatpush.bf16.msra.mxu0 %v5561
  %8395 = vmatmul.bf16.gmra.mxu0 %v8217
  %v8396 = vpop.f32.mrf.mxu0
  %v8397 = vadd.f32 %v8384, %v8396
  %v8398 = vpop.f32.mrf.mxu0
  %8399 = vdwg.mxu0
  %8400 = vmatpush.bf16.msra.mxu0 %v5554
  %8401 = vmatpush.bf16.msra.mxu0 %v5546
  %8402 = vmatpush.bf16.msra.mxu0 %v5538
  %8403 = vmatpush.bf16.msra.mxu0 %v5530
  %8404 = vmatpush.bf16.msra.mxu0 %v5522
  %8405 = vmatpush.bf16.msra.mxu0 %v5514
  %8406 = vmatpush.bf16.msra.mxu0 %v5506
  %8407 = vmatpush.bf16.msra.mxu0 %v5498
  %8408 = vmatmul.bf16.gmra.mxu0 %v8216
  %v8409 = vpop.f32.mrf.mxu0
  %v8410 = vadd.f32 0.0, %v8409
  %v8411 = vpop.f32.mrf.mxu0
  %8412 = vdwg.mxu0
  %8413 = vmatpush.bf16.msra.mxu0 %v5618
  %8414 = vmatpush.bf16.msra.mxu0 %v5610
  %8415 = vmatpush.bf16.msra.mxu0 %v5602
  %8416 = vmatpush.bf16.msra.mxu0 %v5594
  %8417 = vmatpush.bf16.msra.mxu0 %v5586
  %8418 = vmatpush.bf16.msra.mxu0 %v5578
  %8419 = vmatpush.bf16.msra.mxu0 %v5570
  %8420 = vmatpush.bf16.msra.mxu0 %v5562
  %8421 = vmatmul.bf16.gmra.mxu0 %v8217
  %v8422 = vpop.f32.mrf.mxu0
  %v8423 = vadd.f32 %v8410, %v8422
  %v8424 = vpop.f32.mrf.mxu0
  %8425 = vdwg.mxu0
  %v8426 = vadd.f32 %v8208, %v8241
  %v8427 = vadd.f32 %v8209, %v8267
  %v8428 = vadd.f32 %v8210, %v8293
  %v8429 = vadd.f32 %v8211, %v8319
  %v8430 = vadd.f32 %v8212, %v8345
  %v8431 = vadd.f32 %v8213, %v8371
  %v8432 = vadd.f32 %v8214, %v8397
  %v8433 = vadd.f32 %v8215, %v8423
  %v8434 = vxor.u32 %v8426, 2147483648
  %v8435 = vxor.u32 %v8427, 2147483648
  %v8436 = vmul.f32 %v8434, 1.442695
  %v8437 = vpow.pop %v8436
  %v8438 = vmul.f32 %v8435, 1.442695
  %v8439 = vpow.pop %v8438
  %v8440 = vadd.f32 %v8437, 1.0
  %v8441 = vadd.f32 %v8439, 1.0
  %v8442 = vrcp.pop %v8440
  %v8443 = vmul.f32 %v8440, %v8442
  %v8444 = vsub.f32 1.0, %v8443
  %v8445 = vmul.f32 %v8442, %v8444
  %v8446 = vadd.f32 %v8442, %v8445
  %vm8447 = vweird.f32 %v8440
  %vm8448 = vweird.f32 %v8442
  %vm8449 = vmor %vm8447, %vm8448
  %v8450 = vsel %vm8449, %v8442, %v8446
  %v8451 = vand.u32 2147483647, %v8440
  %vm8452 = vcmp.eq.f32.partialorder %v8451, 8.507059e+37
  %v8453 = vand.u32 %v8440, 2147483648
  %v8454 = vor.u32 1.1754944e-38, %v8453
  %v8455 = vsel %vm8452, %v8454, %v8450
  %v8456 = vmul.f32 1.0, %v8455
  %v8457 = vrcp.pop %v8441
  %v8458 = vmul.f32 %v8441, %v8457
  %v8459 = vsub.f32 1.0, %v8458
  %v8460 = vmul.f32 %v8457, %v8459
  %v8461 = vadd.f32 %v8457, %v8460
  %vm8462 = vweird.f32 %v8441
  %vm8463 = vweird.f32 %v8457
  %vm8464 = vmor %vm8462, %vm8463
  %v8465 = vsel %vm8464, %v8457, %v8461
  %v8466 = vand.u32 2147483647, %v8441
  %vm8467 = vcmp.eq.f32.partialorder %v8466, 8.507059e+37
  %v8468 = vand.u32 %v8441, 2147483648
  %v8469 = vor.u32 1.1754944e-38, %v8468
  %v8470 = vsel %vm8467, %v8469, %v8465
  %v8471 = vmul.f32 1.0, %v8470
  %v8472 = vxor.u32 %v8428, 2147483648
  %v8473 = vxor.u32 %v8429, 2147483648
  %v8474 = vmul.f32 %v8472, 1.442695
  %v8475 = vpow.pop %v8474
  %v8476 = vmul.f32 %v8473, 1.442695
  %v8477 = vpow.pop %v8476
  %v8478 = vadd.f32 %v8475, 1.0
  %v8479 = vadd.f32 %v8477, 1.0
  %v8480 = vrcp.pop %v8478
  %v8481 = vmul.f32 %v8478, %v8480
  %v8482 = vsub.f32 1.0, %v8481
  %v8483 = vmul.f32 %v8480, %v8482
  %v8484 = vadd.f32 %v8480, %v8483
  %vm8485 = vweird.f32 %v8478
  %vm8486 = vweird.f32 %v8480
  %vm8487 = vmor %vm8485, %vm8486
  %v8488 = vsel %vm8487, %v8480, %v8484
  %v8489 = vand.u32 2147483647, %v8478
  %vm8490 = vcmp.eq.f32.partialorder %v8489, 8.507059e+37
  %v8491 = vand.u32 %v8478, 2147483648
  %v8492 = vor.u32 1.1754944e-38, %v8491
  %v8493 = vsel %vm8490, %v8492, %v8488
  %v8494 = vmul.f32 1.0, %v8493
  %v8495 = vrcp.pop %v8479
  %v8496 = vmul.f32 %v8479, %v8495
  %v8497 = vsub.f32 1.0, %v8496
  %v8498 = vmul.f32 %v8495, %v8497
  %v8499 = vadd.f32 %v8495, %v8498
  %vm8500 = vweird.f32 %v8479
  %vm8501 = vweird.f32 %v8495
  %vm8502 = vmor %vm8500, %vm8501
  %v8503 = vsel %vm8502, %v8495, %v8499
  %v8504 = vand.u32 2147483647, %v8479
  %vm8505 = vcmp.eq.f32.partialorder %v8504, 8.507059e+37
  %v8506 = vand.u32 %v8479, 2147483648
  %v8507 = vor.u32 1.1754944e-38, %v8506
  %v8508 = vsel %vm8505, %v8507, %v8503
  %v8509 = vmul.f32 1.0, %v8508
  %v8510 = vtanh.pop %v8430
  %v8511 = vtanh.pop %v8431
  %v8512 = vxor.u32 %v8432, 2147483648
  %v8513 = vxor.u32 %v8433, 2147483648
  %v8514 = vmul.f32 %v8512, 1.442695
  %v8515 = vpow.pop %v8514
  %v8516 = vmul.f32 %v8513, 1.442695
  %v8517 = vpow.pop %v8516
  %v8518 = vadd.f32 %v8515, 1.0
  %v8519 = vadd.f32 %v8517, 1.0
  %v8520 = vrcp.pop %v8518
  %v8521 = vmul.f32 %v8518, %v8520
  %v8522 = vsub.f32 1.0, %v8521
  %v8523 = vmul.f32 %v8520, %v8522
  %v8524 = vadd.f32 %v8520, %v8523
  %vm8525 = vweird.f32 %v8518
  %vm8526 = vweird.f32 %v8520
  %vm8527 = vmor %vm8525, %vm8526
  %v8528 = vsel %vm8527, %v8520, %v8524
  %v8529 = vand.u32 2147483647, %v8518
  %vm8530 = vcmp.eq.f32.partialorder %v8529, 8.507059e+37
  %v8531 = vand.u32 %v8518, 2147483648
  %v8532 = vor.u32 1.1754944e-38, %v8531
  %v8533 = vsel %vm8530, %v8532, %v8528
  %v8534 = vmul.f32 1.0, %v8533
  %v8535 = vrcp.pop %v8519
  %v8536 = vmul.f32 %v8519, %v8535
  %v8537 = vsub.f32 1.0, %v8536
  %v8538 = vmul.f32 %v8535, %v8537
  %v8539 = vadd.f32 %v8535, %v8538
  %vm8540 = vweird.f32 %v8519
  %vm8541 = vweird.f32 %v8535
  %vm8542 = vmor %vm8540, %vm8541
  %v8543 = vsel %vm8542, %v8535, %v8539
  %v8544 = vand.u32 2147483647, %v8519
  %vm8545 = vcmp.eq.f32.partialorder %v8544, 8.507059e+37
  %v8546 = vand.u32 %v8519, 2147483648
  %v8547 = vor.u32 1.1754944e-38, %v8546
  %v8548 = vsel %vm8545, %v8547, %v8543
  %v8549 = vmul.f32 1.0, %v8548
  %v8550 = vmul.f32 %v8494, %v8201
  %v8551 = vmul.f32 %v8509, %v8202
  %v8552 = vmul.f32 %v8456, %v8510
  %v8553 = vmul.f32 %v8471, %v8511
  %v8554 = vadd.f32 %v8550, %v8552
  %v8555 = vadd.f32 %v8551, %v8553
  %v8556 = vtanh.pop %v8554
  %v8557 = vtanh.pop %v8555
  %v8558 = vmul.f32 %v8534, %v8556
  %v8559 = vmul.f32 %v8549, %v8557
  %8560 = vst [vmem:[%s4] sm:$0xff] %v8558
  %8561 = vst [vmem:[%s4 + $0x8] sm:$0xff] %v8559
  %8562 = vst [vmem:[%s5] sm:$0xff] %v8554
  %8563 = vst [vmem:[%s5 + $0x8] sm:$0xff] %v8555
  // Predicated region
  $region18: #{encoder_forward.1} parent=0 // pred_check
    _
  $region19: #{encoder_forward.1} parent=0 // pred_check_branch
    %8565 = sbr.rel (0) target = $region21
  $region20: #{encoder_forward.1} parent=0 // pred_region
    _
  $region21: #{encoder_forward.1} parent=0 // pred_fallthru
    _
  // Predicated region
  $region22: #{encoder_forward.1} parent=0 // pred_check
    _
  $region23: #{encoder_forward.1} parent=0 // pred_check_branch
    %8567 = sbr.rel (0) target = $region25
  $region24: #{encoder_forward.1} parent=0 // pred_region
    _
  $region25: #{encoder_forward.1} parent=0 // pred_fallthru
    _
  // Predicated region
  $region26: #{encoder_forward.1} parent=0 // pred_check
    _
  $region27: #{encoder_forward.1} parent=0 // pred_check_branch
    %8569 = sbr.rel (0) target = $region29
  $region28: #{encoder_forward.1} parent=0 // pred_region
    _
  $region29: #{encoder_forward.1} parent=0 // pred_fallthru
    _
  // Predicated region
  $region30: #{encoder_forward.1} parent=0 // pred_check
    _
  $region31: #{encoder_forward.1} parent=0 // pred_check_branch
    %8571 = sbr.rel (0) target = $region33
  $region32: #{encoder_forward.1} parent=0 // pred_region
    _
  $region33: #{encoder_forward.1} parent=0 // pred_fallthru
    _

</llo_original>
